<compile_context>
chip_gen: v5e
topology: v5e:2x2
jax: 0.10.0
libtpu: 0.0.40
codegen_flags: <defaults>
</compile_context>

<pallas_src>
import numpy as np
import jax
import jax.numpy as jnp
from jax import lax
from jax.experimental import pallas as pl
from jax.experimental.pallas import tpu as pltpu

_VMEM_LIMIT = 32 * 1024 * 1024          # safe on v5e/v6e/v7x
_VMEM_LIMIT_HEAD = 48 * 1024 * 1024     # head holds one low-res plane + out block


def _round_up(x, m):
    return (x + m - 1) // m * m


def _pad_rows(x, target):
    if x.shape[0] == target:
        return x
    return jnp.pad(x, [(0, target - x.shape[0])] + [(0, 0)] * (x.ndim - 1))


def _pick_tm(M, K):
    """Bigger M tiles where K (hence VMEM per tile) is small."""
    if K <= 64:
        cap = 4096
    elif K <= 160:
        cap = 2048
    elif K <= 384:
        cap = 1024
    else:
        cap = 512
    if M <= cap:
        return max(16, _round_up(M, 16))
    return cap


# --------------------------- matmul (+ fused BN) kernel ----------------------

def _make_matmul_kernel(TM, valid_rows, with_stats, need_mask, with_affine):
    """bf16 matmul with fp32 accumulation.  Optionally applies the *previous*
    layer's BN affine + ReLU to the loaded lhs tile (consumer-side fusion) and
    emits per-output-channel sum / sum-of-squares (this layer's BN stats)."""

    def kernel(*refs):
        if with_affine:
            x_ref, s_ref, b_ref, w_ref, y_ref, *stat_refs = refs
            x = x_ref[...].astype(jnp.float32)
            x = jnp.maximum(x * s_ref[...] + b_ref[...], 0.0).astype(jnp.bfloat16)
        else:
            x_ref, w_ref, y_ref, *stat_refs = refs
            x = x_ref[...]
        acc = jnp.dot(x, w_ref[...], preferred_element_type=jnp.float32)
        y_ref[...] = acc.astype(y_ref.dtype)
        if with_stats:
            sum_ref, sq_ref = stat_refs
            if need_mask:  # ragged / padded rows must not perturb BN stats
                rows = (lax.broadcasted_iota(jnp.int32, acc.shape, 0)
                        + pl.program_id(0) * TM)
                acc = jnp.where(rows < valid_rows, acc, 0.0)
            sum_ref[...] = jnp.sum(acc, axis=0, keepdims=True)[None]
            sq_ref[...] = jnp.sum(acc * acc, axis=0, keepdims=True)[None]

    return kernel


def pallas_matmul(x, w, *, scale_in=None, bias_in=None, with_stats=True,
                  out_dtype=jnp.bfloat16):
    """(M, K) @ (K, N) on the MXU.  Optional fused input affine+ReLU and
    fused per-output-channel batch statistics."""
    M, K = x.shape
    Kw, N = w.shape
    assert K == Kw
    with_affine = scale_in is not None
    x = x.astype(jnp.bfloat16)
    w = w.astype(jnp.bfloat16)

    TM = _pick_tm(M, K)
    if M < TM:
        x = _pad_rows(x, TM)
        Mp = TM
    else:
        Mp = M
    need_mask = (M % TM) != 0
    num_m = pl.cdiv(Mp, TM)

    in_specs = [pl.BlockSpec((TM, K), lambda i: (i, 0))]
    args = [x]
    if with_affine:
        in_specs += [pl.BlockSpec((1, K), lambda i: (0, 0)),
                     pl.BlockSpec((1, K), lambda i: (0, 0))]
        args += [scale_in.reshape(1, K).astype(jnp.float32),
                 bias_in.reshape(1, K).astype(jnp.float32)]
    in_specs.append(pl.BlockSpec((K, N), lambda i: (0, 0)))
    args.append(w)

    y_shape = jax.ShapeDtypeStruct((Mp, N), out_dtype)
    y_spec = pl.BlockSpec((TM, N), lambda i: (i, 0))
    if with_stats:
        st_shape = jax.ShapeDtypeStruct((num_m, 1, N), jnp.float32)
        st_spec = pl.BlockSpec((1, 1, N), lambda i: (i, 0, 0))
        out_shape = (y_shape, st_shape, st_shape)
        out_specs = (y_spec, st_spec, st_spec)
    else:
        out_shape, out_specs = y_shape, y_spec

    res = pl.pallas_call(
        _make_matmul_kernel(TM, M, with_stats, need_mask, with_affine),
        out_shape=out_shape,
        grid=(num_m,),
        in_specs=in_specs,
        out_specs=out_specs,
        compiler_params=pltpu.CompilerParams(
            dimension_semantics=("parallel",),
            vmem_limit_bytes=_VMEM_LIMIT),
    )(*args)

    if not with_stats:
        y = res
        return y[:M] if Mp != M else y
    y, psum, psq = res
    if Mp != M:
        y = y[:M]
    mean = jnp.sum(psum, axis=0)[0] / M
    ex2 = jnp.sum(psq, axis=0)[0] / M
    var = jnp.maximum(ex2 - mean * mean, 0.0)
    return y, mean, var


# --------------------------- direct 3x3 conv kernel --------------------------

def _make_direct3x3_kernel(TH, Ho, Wo, Cout):
    """3x3 stride-1 pad-1 conv: per output row, 9 column/row taps are sliced
    from VMEM, lane-concatenated into a (Wo, 9*Cin) patch and matmul'd once.
    BN batch statistics are accumulated in the same kernel."""

    def kernel(x_ref, w_ref, y_ref, sum_ref, sq_ref):
        hb = pl.program_id(1)
        w2 = w_ref[...]                                  # (9*Cin, Cout) bf16
        ps = jnp.zeros((1, Cout), jnp.float32)
        pq = jnp.zeros((1, Cout), jnp.float32)
        for r in range(TH):
            pieces = [x_ref[ti, r, pl.ds(tj, Wo), :]
                      for ti in range(3) for tj in range(3)]
            patch = jnp.concatenate(pieces, axis=-1)     # VMEM-only patches
            row = jnp.dot(patch, w2, preferred_element_type=jnp.float32)
            y_ref[0, r] = row.astype(y_ref.dtype)
            valid = (hb * TH + r) < Ho                   # mask ragged rows
            ps = ps + jnp.where(valid, jnp.sum(row, axis=0, keepdims=True), 0.0)
            pq = pq + jnp.where(valid, jnp.sum(row * row, axis=0, keepdims=True), 0.0)
        sum_ref[0, 0] = ps
        sq_ref[0, 0] = pq

    return kernel


def conv3x3_direct(a, w):
    """3x3, stride 1, padding 1 conv on NHWC input without an HBM im2col
    patch matrix.  Returns raw conv output (bf16) + batch mean / biased var."""
    N, H, W, Cin = a.shape
    kh, kw, Cin2, Cout = w.shape
    assert (kh, kw) == (3, 3) and Cin2 == Cin
    Ho, Wo, Wp = H, W, W + 2
    a = a.astype(jnp.bfloat16)
    xpad = jnp.pad(a, ((0, 0), (1, 1), (1, 1), (0, 0)))
    # Three row-shifted slabs stacked per batch item (3x input bytes instead of
    # the 18x write+read of a materialized 9*Cin patch matrix).
    xsh = jnp.stack([xpad[:, i:i + Ho] for i in range(3)], axis=1)
    xsh = xsh.reshape(N * 3, Ho, Wp, Cin)
    w2d = w.reshape(9 * Cin, Cout).astype(jnp.bfloat16)

    TH = min(Ho, 16)
    HB = pl.cdiv(Ho, TH)
    y, psum, psq = pl.pallas_call(
        _make_direct3x3_kernel(TH, Ho, Wo, Cout),
        out_shape=(jax.ShapeDtypeStruct((N, Ho, Wo, Cout), jnp.bfloat16),
                   jax.ShapeDtypeStruct((N, HB, 1, Cout), jnp.float32),
                   jax.ShapeDtypeStruct((N, HB, 1, Cout), jnp.float32)),
        grid=(N, HB),
        in_specs=[pl.BlockSpec((3, TH, Wp, Cin), lambda n, h: (n, h, 0, 0)),
                  pl.BlockSpec((9 * Cin, Cout), lambda n, h: (0, 0))],
        out_specs=(pl.BlockSpec((1, TH, Wo, Cout), lambda n, h: (n, h, 0, 0)),
                   pl.BlockSpec((1, 1, 1, Cout), lambda n, h: (n, h, 0, 0)),
                   pl.BlockSpec((1, 1, 1, Cout), lambda n, h: (n, h, 0, 0))),
        compiler_params=pltpu.CompilerParams(
            dimension_semantics=("parallel", "parallel"),
            vmem_limit_bytes=_VMEM_LIMIT),
    )(xsh, w2d)

    count = N * Ho * Wo
    mean = jnp.sum(psum, axis=(0, 1, 2)) / count
    ex2 = jnp.sum(psq, axis=(0, 1, 2)) / count
    var = jnp.maximum(ex2 - mean * mean, 0.0)
    return y, mean, var


# --------------------------- fused output head kernel ------------------------

def _make_head_kernel(ncls):
    """bn3b affine+ReLU -> conv3c (1x1, commuted with the upsample) ->
    separable align_corners x4 bilinear upsample -> channel softmax,
    stored lane-dense directly as NCHW class planes."""

    def kernel(x_ref, s_ref, b_ref, wc_ref, a_ref, bt_ref, o_ref):
        x = x_ref[0].astype(jnp.float32)                   # (h4, w4, 64)
        s = s_ref[...].reshape(1, 1, -1)
        b = b_ref[...].reshape(1, 1, -1)
        x = jnp.maximum(x * s + b, 0.0)
        A = a_ref[...]                                     # (TH, h4)
        Bt = bt_ref[...]                                   # (w4, Wout)
        wc = wc_ref[...]                                   # (ncls, 64)
        ups = []
        for c in range(ncls):
            w_c = wc[c:c + 1, :].reshape(1, 1, -1)
            plane = jnp.sum(x * w_c, axis=-1)              # conv3c at low res
            t = jnp.dot(A, plane, preferred_element_type=jnp.float32)
            ups.append(jnp.dot(t, Bt, preferred_element_type=jnp.float32))
        m = ups[0]
        for c in range(1, ncls):
            m = jnp.maximum(m, ups[c])
        es = [jnp.exp(u - m) for u in ups]
        den = es[0]
        for c in range(1, ncls):
            den = den + es[c]
        inv = 1.0 / den            # exact divide: per-pixel class sums == 1
        for c in range(ncls):
            o_ref[0, c] = es[c] * inv

    return kernel


def pallas_head(y3b, scale, bias, w_cls, out_h, out_w):
    N, h4, w4, C = y3b.shape
    ncls = w_cls.shape[0]
    A = _interp_matrix(out_h, h4)           # (out_h, h4)
    Bt = _interp_matrix(out_w, w4).T        # (w4, out_w)
    TH = out_h if out_h <= 256 else 256
    HB = pl.cdiv(out_h, TH)
    return pl.pallas_call(
        _make_head_kernel(ncls),
        out_shape=jax.ShapeDtypeStruct((N, ncls, out_h, out_w), jnp.float32),
        grid=(N, HB),
        in_specs=[pl.BlockSpec((1, h4, w4, C), lambda n, h: (n, 0, 0, 0)),
                  pl.BlockSpec((1, C), lambda n, h: (0, 0)),
                  pl.BlockSpec((1, C), lambda n, h: (0, 0)),
                  pl.BlockSpec((ncls, C), lambda n, h: (0, 0)),
                  pl.BlockSpec((TH, h4), lambda n, h: (h, 0)),
                  pl.BlockSpec((w4, out_w), lambda n, h: (0, 0))],
        out_specs=pl.BlockSpec((1, ncls, TH, out_w), lambda n, h: (n, 0, h, 0)),
        compiler_params=pltpu.CompilerParams(
            dimension_semantics=("parallel", "parallel"),
            vmem_limit_bytes=_VMEM_LIMIT_HEAD),
    )(y3b.astype(jnp.bfloat16),
      scale.reshape(1, C).astype(jnp.float32),
      bias.reshape(1, C).astype(jnp.float32),
      w_cls.astype(jnp.float32), A, Bt)


# --------------------------- conv / bn / resize glue --------------------------

def _interp_matrix(out_size, in_size):
    """Interpolation matrix of F.interpolate(mode='bilinear', align_corners=True)."""
    if out_size == 1:
        src = jnp.zeros((1,), jnp.float32)
    else:
        src = jnp.arange(out_size, dtype=jnp.float32) * ((in_size - 1) / (out_size - 1))
    idx = jnp.arange(in_size, dtype=jnp.float32)
    return jnp.maximum(1.0 - jnp.abs(src[:, None] - idx[None, :]), 0.0)


def bilinear_resize_nhwc(x, out_h, out_w):
    """Exact align_corners bilinear resize as two small separable matmuls
    (replaces the 4-way XLA gather used previously)."""
    A = _interp_matrix(out_h, x.shape[1])
    B = _interp_matrix(out_w, x.shape[2])
    t = jnp.einsum('Yh,nhwc->nYwc', A, x.astype(jnp.float32))
    return jnp.einsum('Xw,nYwc->nYXc', B, t)


def _im2col(a, kh, kw, stride, pad):
    """bf16 patch matrix; only used by the synthesized stride-2 backbone."""
    a = a.astype(jnp.bfloat16)
    N, H, W, C = a.shape
    if pad > 0:
        a = jnp.pad(a, ((0, 0), (pad, pad), (pad, pad), (0, 0)))
    Ho = (H + 2 * pad - kh) // stride + 1
    Wo = (W + 2 * pad - kw) // stride + 1
    if kh == 1 and kw == 1 and stride == 1:
        cols = a.reshape(N * Ho * Wo, C)
    else:
        patches = []
        for i in range(kh):
            for j in range(kw):
                patches.append(a[:, i:i + stride * Ho:stride,
                                 j:j + stride * Wo:stride, :])
        cols = jnp.concatenate(patches, axis=-1).reshape(N * Ho * Wo, kh * kw * C)
    return cols, (N, Ho, Wo)


def conv_im2col_stats(a, w, *, stride=1, pad=0):
    kh, kw, Cin, Cout = w.shape
    cols, (N, Ho, Wo) = _im2col(a, kh, kw, stride, pad)
    y, mean, var = pallas_matmul(cols, w.reshape(kh * kw * Cin, Cout),
                                 with_stats=True)
    return y.reshape(N, Ho, Wo, Cout), mean, var


def conv1x1_fused(y_raw, w, scale_in, bias_in):
    """1x1 conv reading the *raw* previous conv output: the previous layer's
    BN affine + ReLU runs on the loaded tile inside the matmul kernel."""
    N, H, W, Cin = y_raw.shape
    Cout = w.shape[-1]
    y, mean, var = pallas_matmul(y_raw.reshape(N * H * W, Cin),
                                 w.reshape(Cin, Cout),
                                 scale_in=scale_in, bias_in=bias_in,
                                 with_stats=True)
    return y.reshape(N, H, W, Cout), mean, var


def _bn_scale_bias(gamma, beta, mean, var, eps=1e-5):
    # Train-mode BatchNorm (batch statistics, biased variance), like calling
    # the PyTorch module without .eval().
    scale = gamma * lax.rsqrt(var + eps)
    return scale, beta - mean * scale


def _act(y, scale, bias):
    # Only used where the consumer is XLA code (im2col / resize einsum /
    # concat); XLA fuses this elementwise epilogue into that consumer.
    return jnp.maximum(y.astype(jnp.float32) * scale + bias, 0.0)


# --------------------------- parameters & forward ----------------------------

def init_params(key, num_classes=2):
    keys = jax.random.split(key, 10)

    def conv_w(k, ksz, cin, cout):
        fan_in = cin * ksz * ksz
        return jax.random.normal(k, (ksz, ksz, cin, cout),
                                 jnp.float32) / np.sqrt(fan_in)

    p = {}
    # TODO(synk): RegsegBackbone is not defined in the reference snippet; the
    # backbone stages out3/out2/out1 are synthesized as minimal strided
    # conv+BN+ReLU blocks matching the channel widths (48/128/320) and strides
    # (4/8/16) implied by the decoder head.
    p['bb0_w'] = conv_w(keys[0], 3, 3, 32)
    p['bb1_w'] = conv_w(keys[1], 3, 32, 48)
    p['bb2_w'] = conv_w(keys[2], 3, 48, 128)
    p['bb3_w'] = conv_w(keys[3], 3, 128, 320)
    # decoder head (shapes exactly as in RegsegModel.__init__, bias=False)
    p['conv1_w'] = conv_w(keys[4], 1, 320, 128)
    p['conv2a_w'] = conv_w(keys[5], 1, 128, 128)
    p['conv2b_w'] = conv_w(keys[6], 3, 128, 64)
    p['conv3a_w'] = conv_w(keys[7], 1, 48, 8)
    p['conv3b_w'] = conv_w(keys[8], 3, 72, 64)
    p['conv3c_w'] = conv_w(keys[9], 1, 64, num_classes)
    # BatchNorm params (PyTorch default init: weight=1, bias=0)
    for name, c in [('bb0', 32), ('bb1', 48), ('bb2', 128), ('bb3', 320),
                    ('bn1', 128), ('bn2a', 128), ('bn2b', 64),
                    ('bn3a', 8), ('bn3b', 64)]:
        p[name + '_g'] = jnp.ones((c,), jnp.float32)
        p[name + '_b'] = jnp.zeros((c,), jnp.float32)
    return p


def regseg_forward(params, x_nchw):
    p = params
    x = jnp.transpose(x_nchw, (0, 2, 3, 1))                 # NCHW -> NHWC

    # synthesized backbone (im2col path; see TODOs above)
    y0, m0, v0 = conv_im2col_stats(x, p['bb0_w'], stride=2, pad=1)
    s0, b0 = _bn_scale_bias(p['bb0_g'], p['bb0_b'], m0, v0)
    y_out3, m3, v3 = conv_im2col_stats(_act(y0, s0, b0), p['bb1_w'],
                                       stride=2, pad=1)     # 48ch  @ H/4
    s3, b3 = _bn_scale_bias(p['bb1_g'], p['bb1_b'], m3, v3)
    y_out2, m2, v2 = conv_im2col_stats(_act(y_out3, s3, b3), p['bb2_w'],
                                       stride=2, pad=1)     # 128ch @ H/8
    s2, b2 = _bn_scale_bias(p['bb2_g'], p['bb2_b'], m2, v2)
    y_out1, m1, v1 = conv_im2col_stats(_act(y_out2, s2, b2), p['bb3_w'],
                                       stride=2, pad=1)     # 320ch @ H/16
    s1, b1 = _bn_scale_bias(p['bb3_g'], p['bb3_b'], m1, v1)

    # decoder head -- mirrors the reference forward.  (The scale_factor=2
    # interpolate in the reference is dead code: up1 is immediately recomputed
    # with an explicit size, so it is skipped here.)
    y1, mm1, vv1 = conv1x1_fused(y_out1, p['conv1_w'], s1, b1)
    sc1, bi1 = _bn_scale_bias(p['bn1_g'], p['bn1_b'], mm1, vv1)
    y2a, m2a, v2a = conv1x1_fused(y_out2, p['conv2a_w'], s2, b2)
    sc2a, bi2a = _bn_scale_bias(p['bn2a_g'], p['bn2a_b'], m2a, v2a)

    up1 = bilinear_resize_nhwc(_act(y1, sc1, bi1), y2a.shape[1], y2a.shape[2])
    sum_ = (up1 + _act(y2a, sc2a, bi2a)).astype(jnp.bfloat16)   # fused add

    y2b, m2b, v2b = conv3x3_direct(sum_, p['conv2b_w'])
    sc2b, bi2b = _bn_scale_bias(p['bn2b_g'], p['bn2b_b'], m2b, v2b)

    y3a, m3a, v3a = conv1x1_fused(y_out3, p['conv3a_w'], s3, b3)
    sc3a, bi3a = _bn_scale_bias(p['bn3a_g'], p['bn3a_b'], m3a, v3a)

    up2 = bilinear_resize_nhwc(_act(y2b, sc2b, bi2b),
                               y3a.shape[1], y3a.shape[2])
    # TODO(synk): splitting conv3b's K into the up2 / o3 weight blocks would
    # avoid materializing this 72-channel concat entirely.
    cat = jnp.concatenate([up2, _act(y3a, sc3a, bi3a)],
                          axis=-1).astype(jnp.bfloat16)

    y3b, m3b, v3b = conv3x3_direct(cat, p['conv3b_w'])
    sc3b, bi3b = _bn_scale_bias(p['bn3b_g'], p['bn3b_b'], m3b, v3b)

    # fused head: bn3b+ReLU -> conv3c (commuted with the x4 upsample, exact
    # for a bias-free 1x1 conv) -> x4 align_corners upsample -> softmax,
    # written once, lane-dense, directly as NCHW probabilities.
    ncls = p['conv3c_w'].shape[-1]
    w_cls = p['conv3c_w'].reshape(p['conv3c_w'].shape[2], ncls).T
    out_h, out_w = 4 * y3b.shape[1], 4 * y3b.shape[2]
    return pallas_head(y3b, sc3b, bi3b, w_cls, out_h, out_w)


if __name__ == "__main__":
    key = jax.random.PRNGKey(0)
    pkey, xkey = jax.random.split(key)
    params = init_params(pkey, num_classes=2)
    # small NCHW input like the torch module; spatial divisible by 16
    x = jax.random.normal(xkey, (2, 3, 32, 32), jnp.float32)
    fwd = jax.jit(regseg_forward)
    out = jax.block_until_ready(fwd(params, x))
    assert out.shape == (2, 2, 32, 32), out.shape
    assert bool(jnp.all(jnp.isfinite(out)))
    # softmax sanity: per-pixel channel sums == 1
    assert bool(jnp.allclose(out.sum(axis=1), 1.0, atol=1e-5))
    print("KERNEL_OK")
</pallas_src>

<mosaic_0001>
module attributes {stable_mosaic.version = 11 : i64} {
  func.func @kernel(%arg0: i32, %arg1: memref<512x27xbf16, #tpu.memory_space<vmem>>, %arg2: memref<27x32xbf16, #tpu.memory_space<vmem>>, %arg3: memref<512x32xbf16, #tpu.memory_space<vmem>>, %arg4: memref<1x1x32xf32, #tpu.memory_space<vmem>>, %arg5: memref<1x1x32xf32, #tpu.memory_space<vmem>>) attributes {dimension_semantics = [#tpu.dimension_semantics<parallel>], iteration_bounds = array<i64: 1>, scalar_prefetch = 0 : i64, scratch_operands = 0 : i64, tpu.core_type = #tpu.core_type<tc>, window_params = [{transform_indices = @transform_0, window_bounds = array<i64: 512, 27>}, {pipeline_mode = #tpu.pipeline_mode<synchronous>, transform_indices = @transform_1, window_bounds = array<i64: 27, 32>}, {transform_indices = @transform_2, window_bounds = array<i64: 512, 32>}, {transform_indices = @transform_3, window_bounds = array<i64: 1, 1, 32>}, {transform_indices = @transform_4, window_bounds = array<i64: 1, 1, 32>}]} {
    %c0 = arith.constant 0 : index
    %c0_0 = arith.constant 0 : index
    %0 = vector.load %arg1[%c0, %c0_0] : memref<512x27xbf16, #tpu.memory_space<vmem>>, vector<512x27xbf16>
    %c0_1 = arith.constant 0 : index
    %c0_2 = arith.constant 0 : index
    %1 = vector.load %arg2[%c0_1, %c0_2] : memref<27x32xbf16, #tpu.memory_space<vmem>>, vector<27x32xbf16>
    %cst = arith.constant dense<0.000000e+00> : vector<512x32xf32>
    %2 = tpu.matmul %0, %1, %cst {dimension_numbers = #tpu.dot_dimension_numbers<[1], [0], [0], [1], [0, 0, 1, 1], [], []>} : vector<512x27xbf16>, vector<27x32xbf16>, vector<512x32xf32> -> vector<512x32xf32>
    %3 = arith.truncf %2 : vector<512x32xf32> to vector<512x32xbf16>
    %c0_3 = arith.constant 0 : index
    %c0_4 = arith.constant 0 : index
    %4 = vector.load %arg3[%c0_3, %c0_4] : memref<512x32xbf16, #tpu.memory_space<vmem>>, vector<512x32xbf16>
    tpu.vector_store %arg3[%c0_3, %c0_4], %3 {strides = array<i32>} : memref<512x32xbf16, #tpu.memory_space<vmem>>, vector<512x32xbf16>,
    %cst_5 = arith.constant dense<0.000000e+00> : vector<32xf32>
    %5 = vector.multi_reduction <add>, %2, %cst_5 [0] : vector<512x32xf32> to vector<32xf32>
    %6 = vector.shape_cast %5 : vector<32xf32> to vector<1x32xf32>
    %7 = vector.shape_cast %6 : vector<1x32xf32> to vector<1x1x32xf32>
    %c0_6 = arith.constant 0 : index
    %c0_7 = arith.constant 0 : index
    %c0_8 = arith.constant 0 : index
    %8 = vector.load %arg4[%c0_6, %c0_7, %c0_8] : memref<1x1x32xf32, #tpu.memory_space<vmem>>, vector<1x1x32xf32>
    tpu.vector_store %arg4[%c0_6, %c0_7, %c0_8], %7 {strides = array<i32>} : memref<1x1x32xf32, #tpu.memory_space<vmem>>, vector<1x1x32xf32>,
    %9 = arith.mulf %2, %2 : vector<512x32xf32>
    %cst_9 = arith.constant dense<0.000000e+00> : vector<32xf32>
    %10 = vector.multi_reduction <add>, %9, %cst_9 [0] : vector<512x32xf32> to vector<32xf32>
    %11 = vector.shape_cast %10 : vector<32xf32> to vector<1x32xf32>
    %12 = vector.shape_cast %11 : vector<1x32xf32> to vector<1x1x32xf32>
    %c0_10 = arith.constant 0 : index
    %c0_11 = arith.constant 0 : index
    %c0_12 = arith.constant 0 : index
    %13 = vector.load %arg5[%c0_10, %c0_11, %c0_12] : memref<1x1x32xf32, #tpu.memory_space<vmem>>, vector<1x1x32xf32>
    tpu.vector_store %arg5[%c0_10, %c0_11, %c0_12], %12 {strides = array<i32>} : memref<1x1x32xf32, #tpu.memory_space<vmem>>, vector<1x1x32xf32>,
    return
  }
  func.func @transform_0(%arg0: i32) -> (i32, i32) {
    %c0_i32 = arith.constant 0 : i32
    %c0_i32_0 = arith.constant 0 : i32
    return %arg0, %c0_i32 : i32, i32
  }
  func.func @transform_1(%arg0: i32) -> (i32, i32) {
    %c0_i32 = arith.constant 0 : i32
    %c0_i32_0 = arith.constant 0 : i32
    %c0_i32_1 = arith.constant 0 : i32
    return %c0_i32, %c0_i32_0 : i32, i32
  }
  func.func @transform_2(%arg0: i32) -> (i32, i32) {
    %c0_i32 = arith.constant 0 : i32
    %c0_i32_0 = arith.constant 0 : i32
    return %arg0, %c0_i32 : i32, i32
  }
  func.func @transform_3(%arg0: i32) -> (i32, i32, i32) {
    %c0_i32 = arith.constant 0 : i32
    %c0_i32_0 = arith.constant 0 : i32
    %c0_i32_1 = arith.constant 0 : i32
    return %arg0, %c0_i32, %c0_i32_0 : i32, i32, i32
  }
  func.func @transform_4(%arg0: i32) -> (i32, i32, i32) {
    %c0_i32 = arith.constant 0 : i32
    %c0_i32_0 = arith.constant 0 : i32
    %c0_i32_1 = arith.constant 0 : i32
    return %arg0, %c0_i32, %c0_i32_0 : i32, i32, i32
  }
}

module attributes {stable_mosaic.version = 11 : i64} {
  func.func @kernel(%arg0: i32, %arg1: memref<128x288xbf16, #tpu.memory_space<vmem>>, %arg2: memref<288x48xbf16, #tpu.memory_space<vmem>>, %arg3: memref<128x48xbf16, #tpu.memory_space<vmem>>, %arg4: memref<1x1x48xf32, #tpu.memory_space<vmem>>, %arg5: memref<1x1x48xf32, #tpu.memory_space<vmem>>) attributes {dimension_semantics = [#tpu.dimension_semantics<parallel>], iteration_bounds = array<i64: 1>, scalar_prefetch = 0 : i64, scratch_operands = 0 : i64, tpu.core_type = #tpu.core_type<tc>, window_params = [{transform_indices = @transform_0, window_bounds = array<i64: 128, 288>}, {pipeline_mode = #tpu.pipeline_mode<synchronous>, transform_indices = @transform_1, window_bounds = array<i64: 288, 48>}, {transform_indices = @transform_2, window_bounds = array<i64: 128, 48>}, {transform_indices = @transform_3, window_bounds = array<i64: 1, 1, 48>}, {transform_indices = @transform_4, window_bounds = array<i64: 1, 1, 48>}]} {
    %c0 = arith.constant 0 : index
    %c0_0 = arith.constant 0 : index
    %0 = vector.load %arg1[%c0, %c0_0] : memref<128x288xbf16, #tpu.memory_space<vmem>>, vector<128x288xbf16>
    %c0_1 = arith.constant 0 : index
    %c0_2 = arith.constant 0 : index
    %1 = vector.load %arg2[%c0_1, %c0_2] : memref<288x48xbf16, #tpu.memory_space<vmem>>, vector<288x48xbf16>
    %cst = arith.constant dense<0.000000e+00> : vector<128x48xf32>
    %2 = tpu.matmul %0, %1, %cst {dimension_numbers = #tpu.dot_dimension_numbers<[1], [0], [0], [1], [0, 0, 1, 1], [], []>} : vector<128x288xbf16>, vector<288x48xbf16>, vector<128x48xf32> -> vector<128x48xf32>
    %3 = arith.truncf %2 : vector<128x48xf32> to vector<128x48xbf16>
    %c0_3 = arith.constant 0 : index
    %c0_4 = arith.constant 0 : index
    %4 = vector.load %arg3[%c0_3, %c0_4] : memref<128x48xbf16, #tpu.memory_space<vmem>>, vector<128x48xbf16>
    tpu.vector_store %arg3[%c0_3, %c0_4], %3 {strides = array<i32>} : memref<128x48xbf16, #tpu.memory_space<vmem>>, vector<128x48xbf16>,
    %cst_5 = arith.constant dense<0.000000e+00> : vector<48xf32>
    %5 = vector.multi_reduction <add>, %2, %cst_5 [0] : vector<128x48xf32> to vector<48xf32>
    %6 = vector.shape_cast %5 : vector<48xf32> to vector<1x48xf32>
    %7 = vector.shape_cast %6 : vector<1x48xf32> to vector<1x1x48xf32>
    %c0_6 = arith.constant 0 : index
    %c0_7 = arith.constant 0 : index
    %c0_8 = arith.constant 0 : index
    %8 = vector.load %arg4[%c0_6, %c0_7, %c0_8] : memref<1x1x48xf32, #tpu.memory_space<vmem>>, vector<1x1x48xf32>
    tpu.vector_store %arg4[%c0_6, %c0_7, %c0_8], %7 {strides = array<i32>} : memref<1x1x48xf32, #tpu.memory_space<vmem>>, vector<1x1x48xf32>,
    %9 = arith.mulf %2, %2 : vector<128x48xf32>
    %cst_9 = arith.constant dense<0.000000e+00> : vector<48xf32>
    %10 = vector.multi_reduction <add>, %9, %cst_9 [0] : vector<128x48xf32> to vector<48xf32>
    %11 = vector.shape_cast %10 : vector<48xf32> to vector<1x48xf32>
    %12 = vector.shape_cast %11 : vector<1x48xf32> to vector<1x1x48xf32>
    %c0_10 = arith.constant 0 : index
    %c0_11 = arith.constant 0 : index
    %c0_12 = arith.constant 0 : index
    %13 = vector.load %arg5[%c0_10, %c0_11, %c0_12] : memref<1x1x48xf32, #tpu.memory_space<vmem>>, vector<1x1x48xf32>
    tpu.vector_store %arg5[%c0_10, %c0_11, %c0_12], %12 {strides = array<i32>} : memref<1x1x48xf32, #tpu.memory_space<vmem>>, vector<1x1x48xf32>,
    return
  }
  func.func @transform_0(%arg0: i32) -> (i32, i32) {
    %c0_i32 = arith.constant 0 : i32
    %c0_i32_0 = arith.constant 0 : i32
    return %arg0, %c0_i32 : i32, i32
  }
  func.func @transform_1(%arg0: i32) -> (i32, i32) {
    %c0_i32 = arith.constant 0 : i32
    %c0_i32_0 = arith.constant 0 : i32
    %c0_i32_1 = arith.constant 0 : i32
    return %c0_i32, %c0_i32_0 : i32, i32
  }
  func.func @transform_2(%arg0: i32) -> (i32, i32) {
    %c0_i32 = arith.constant 0 : i32
    %c0_i32_0 = arith.constant 0 : i32
    return %arg0, %c0_i32 : i32, i32
  }
  func.func @transform_3(%arg0: i32) -> (i32, i32, i32) {
    %c0_i32 = arith.constant 0 : i32
    %c0_i32_0 = arith.constant 0 : i32
    %c0_i32_1 = arith.constant 0 : i32
    return %arg0, %c0_i32, %c0_i32_0 : i32, i32, i32
  }
  func.func @transform_4(%arg0: i32) -> (i32, i32, i32) {
    %c0_i32 = arith.constant 0 : i32
    %c0_i32_0 = arith.constant 0 : i32
    %c0_i32_1 = arith.constant 0 : i32
    return %arg0, %c0_i32, %c0_i32_0 : i32, i32, i32
  }
}

module attributes {stable_mosaic.version = 11 : i64} {
  func.func @kernel(%arg0: i32, %arg1: memref<32x432xbf16, #tpu.memory_space<vmem>>, %arg2: memref<432x128xbf16, #tpu.memory_space<vmem>>, %arg3: memref<32x128xbf16, #tpu.memory_space<vmem>>, %arg4: memref<1x1x128xf32, #tpu.memory_space<vmem>>, %arg5: memref<1x1x128xf32, #tpu.memory_space<vmem>>) attributes {dimension_semantics = [#tpu.dimension_semantics<parallel>], iteration_bounds = array<i64: 1>, scalar_prefetch = 0 : i64, scratch_operands = 0 : i64, tpu.core_type = #tpu.core_type<tc>, window_params = [{transform_indices = @transform_0, window_bounds = array<i64: 32, 432>}, {pipeline_mode = #tpu.pipeline_mode<synchronous>, transform_indices = @transform_1, window_bounds = array<i64: 432, 128>}, {transform_indices = @transform_2, window_bounds = array<i64: 32, 128>}, {transform_indices = @transform_3, window_bounds = array<i64: 1, 1, 128>}, {transform_indices = @transform_4, window_bounds = array<i64: 1, 1, 128>}]} {
    %c0 = arith.constant 0 : index
    %c0_0 = arith.constant 0 : index
    %0 = vector.load %arg1[%c0, %c0_0] : memref<32x432xbf16, #tpu.memory_space<vmem>>, vector<32x432xbf16>
    %c0_1 = arith.constant 0 : index
    %c0_2 = arith.constant 0 : index
    %1 = vector.load %arg2[%c0_1, %c0_2] : memref<432x128xbf16, #tpu.memory_space<vmem>>, vector<432x128xbf16>
    %cst = arith.constant dense<0.000000e+00> : vector<32x128xf32>
    %2 = tpu.matmul %0, %1, %cst {dimension_numbers = #tpu.dot_dimension_numbers<[1], [0], [0], [1], [0, 0, 1, 1], [], []>} : vector<32x432xbf16>, vector<432x128xbf16>, vector<32x128xf32> -> vector<32x128xf32>
    %3 = arith.truncf %2 : vector<32x128xf32> to vector<32x128xbf16>
    %c0_3 = arith.constant 0 : index
    %c0_4 = arith.constant 0 : index
    %4 = vector.load %arg3[%c0_3, %c0_4] : memref<32x128xbf16, #tpu.memory_space<vmem>>, vector<32x128xbf16>
    tpu.vector_store %arg3[%c0_3, %c0_4], %3 {strides = array<i32>} : memref<32x128xbf16, #tpu.memory_space<vmem>>, vector<32x128xbf16>,
    %cst_5 = arith.constant dense<0.000000e+00> : vector<128xf32>
    %5 = vector.multi_reduction <add>, %2, %cst_5 [0] : vector<32x128xf32> to vector<128xf32>
    %6 = vector.shape_cast %5 : vector<128xf32> to vector<1x128xf32>
    %7 = vector.shape_cast %6 : vector<1x128xf32> to vector<1x1x128xf32>
    %c0_6 = arith.constant 0 : index
    %c0_7 = arith.constant 0 : index
    %c0_8 = arith.constant 0 : index
    %8 = vector.load %arg4[%c0_6, %c0_7, %c0_8] : memref<1x1x128xf32, #tpu.memory_space<vmem>>, vector<1x1x128xf32>
    tpu.vector_store %arg4[%c0_6, %c0_7, %c0_8], %7 {strides = array<i32>} : memref<1x1x128xf32, #tpu.memory_space<vmem>>, vector<1x1x128xf32>,
    %9 = arith.mulf %2, %2 : vector<32x128xf32>
    %cst_9 = arith.constant dense<0.000000e+00> : vector<128xf32>
    %10 = vector.multi_reduction <add>, %9, %cst_9 [0] : vector<32x128xf32> to vector<128xf32>
    %11 = vector.shape_cast %10 : vector<128xf32> to vector<1x128xf32>
    %12 = vector.shape_cast %11 : vector<1x128xf32> to vector<1x1x128xf32>
    %c0_10 = arith.constant 0 : index
    %c0_11 = arith.constant 0 : index
    %c0_12 = arith.constant 0 : index
    %13 = vector.load %arg5[%c0_10, %c0_11, %c0_12] : memref<1x1x128xf32, #tpu.memory_space<vmem>>, vector<1x1x128xf32>
    tpu.vector_store %arg5[%c0_10, %c0_11, %c0_12], %12 {strides = array<i32>} : memref<1x1x128xf32, #tpu.memory_space<vmem>>, vector<1x1x128xf32>,
    return
  }
  func.func @transform_0(%arg0: i32) -> (i32, i32) {
    %c0_i32 = arith.constant 0 : i32
    %c0_i32_0 = arith.constant 0 : i32
    return %arg0, %c0_i32 : i32, i32
  }
  func.func @transform_1(%arg0: i32) -> (i32, i32) {
    %c0_i32 = arith.constant 0 : i32
    %c0_i32_0 = arith.constant 0 : i32
    %c0_i32_1 = arith.constant 0 : i32
    return %c0_i32, %c0_i32_0 : i32, i32
  }
  func.func @transform_2(%arg0: i32) -> (i32, i32) {
    %c0_i32 = arith.constant 0 : i32
    %c0_i32_0 = arith.constant 0 : i32
    return %arg0, %c0_i32 : i32, i32
  }
  func.func @transform_3(%arg0: i32) -> (i32, i32, i32) {
    %c0_i32 = arith.constant 0 : i32
    %c0_i32_0 = arith.constant 0 : i32
    %c0_i32_1 = arith.constant 0 : i32
    return %arg0, %c0_i32, %c0_i32_0 : i32, i32, i32
  }
  func.func @transform_4(%arg0: i32) -> (i32, i32, i32) {
    %c0_i32 = arith.constant 0 : i32
    %c0_i32_0 = arith.constant 0 : i32
    %c0_i32_1 = arith.constant 0 : i32
    return %arg0, %c0_i32, %c0_i32_0 : i32, i32, i32
  }
}

module attributes {stable_mosaic.version = 11 : i64} {
  func.func @kernel(%arg0: i32, %arg1: memref<32x128xbf16, #tpu.memory_space<vmem>>, %arg2: memref<1x128xf32, #tpu.memory_space<vmem>>, %arg3: memref<1x128xf32, #tpu.memory_space<vmem>>, %arg4: memref<128x128xbf16, #tpu.memory_space<vmem>>, %arg5: memref<32x128xbf16, #tpu.memory_space<vmem>>, %arg6: memref<1x1x128xf32, #tpu.memory_space<vmem>>, %arg7: memref<1x1x128xf32, #tpu.memory_space<vmem>>) attributes {dimension_semantics = [#tpu.dimension_semantics<parallel>], iteration_bounds = array<i64: 1>, scalar_prefetch = 0 : i64, scratch_operands = 0 : i64, tpu.core_type = #tpu.core_type<tc>, window_params = [{transform_indices = @transform_0, window_bounds = array<i64: 32, 128>}, {pipeline_mode = #tpu.pipeline_mode<synchronous>, transform_indices = @transform_1, window_bounds = array<i64: 1, 128>}, {pipeline_mode = #tpu.pipeline_mode<synchronous>, transform_indices = @transform_2, window_bounds = array<i64: 1, 128>}, {pipeline_mode = #tpu.pipeline_mode<synchronous>, transform_indices = @transform_3, window_bounds = array<i64: 128, 128>}, {transform_indices = @transform_4, window_bounds = array<i64: 32, 128>}, {transform_indices = @transform_5, window_bounds = array<i64: 1, 1, 128>}, {transform_indices = @transform_6, window_bounds = array<i64: 1, 1, 128>}]} {
    %c0 = arith.constant 0 : index
    %c0_0 = arith.constant 0 : index
    %0 = vector.load %arg1[%c0, %c0_0] : memref<32x128xbf16, #tpu.memory_space<vmem>>, vector<32x128xbf16>
    %1 = arith.extf %0 : vector<32x128xbf16> to vector<32x128xf32>
    %c0_1 = arith.constant 0 : index
    %c0_2 = arith.constant 0 : index
    %2 = vector.load %arg2[%c0_1, %c0_2] : memref<1x128xf32, #tpu.memory_space<vmem>>, vector<1x128xf32>
    %3 = vector.broadcast %2 : vector<1x128xf32> to vector<32x128xf32>
    %4 = arith.mulf %1, %3 : vector<32x128xf32>
    %c0_3 = arith.constant 0 : index
    %c0_4 = arith.constant 0 : index
    %5 = vector.load %arg3[%c0_3, %c0_4] : memref<1x128xf32, #tpu.memory_space<vmem>>, vector<1x128xf32>
    %6 = vector.broadcast %5 : vector<1x128xf32> to vector<32x128xf32>
    %7 = arith.addf %4, %6 : vector<32x128xf32>
    %cst = arith.constant 0.000000e+00 : f32
    %8 = vector.broadcast %cst : f32 to vector<32x128xf32>
    %9 = arith.maximumf %7, %8 : vector<32x128xf32>
    %10 = arith.truncf %9 : vector<32x128xf32> to vector<32x128xbf16>
    %c0_5 = arith.constant 0 : index
    %c0_6 = arith.constant 0 : index
    %11 = vector.load %arg4[%c0_5, %c0_6] : memref<128x128xbf16, #tpu.memory_space<vmem>>, vector<128x128xbf16>
    %cst_7 = arith.constant dense<0.000000e+00> : vector<32x128xf32>
    %12 = tpu.matmul %10, %11, %cst_7 {dimension_numbers = #tpu.dot_dimension_numbers<[1], [0], [0], [1], [0, 0, 1, 1], [], []>} : vector<32x128xbf16>, vector<128x128xbf16>, vector<32x128xf32> -> vector<32x128xf32>
    %13 = arith.truncf %12 : vector<32x128xf32> to vector<32x128xbf16>
    %c0_8 = arith.constant 0 : index
    %c0_9 = arith.constant 0 : index
    %14 = vector.load %arg5[%c0_8, %c0_9] : memref<32x128xbf16, #tpu.memory_space<vmem>>, vector<32x128xbf16>
    tpu.vector_store %arg5[%c0_8, %c0_9], %13 {strides = array<i32>} : memref<32x128xbf16, #tpu.memory_space<vmem>>, vector<32x128xbf16>,
    %cst_10 = arith.constant dense<0.000000e+00> : vector<128xf32>
    %15 = vector.multi_reduction <add>, %12, %cst_10 [0] : vector<32x128xf32> to vector<128xf32>
    %16 = vector.shape_cast %15 : vector<128xf32> to vector<1x128xf32>
    %17 = vector.shape_cast %16 : vector<1x128xf32> to vector<1x1x128xf32>
    %c0_11 = arith.constant 0 : index
    %c0_12 = arith.constant 0 : index
    %c0_13 = arith.constant 0 : index
    %18 = vector.load %arg6[%c0_11, %c0_12, %c0_13] : memref<1x1x128xf32, #tpu.memory_space<vmem>>, vector<1x1x128xf32>
    tpu.vector_store %arg6[%c0_11, %c0_12, %c0_13], %17 {strides = array<i32>} : memref<1x1x128xf32, #tpu.memory_space<vmem>>, vector<1x1x128xf32>,
    %19 = arith.mulf %12, %12 : vector<32x128xf32>
    %cst_14 = arith.constant dense<0.000000e+00> : vector<128xf32>
    %20 = vector.multi_reduction <add>, %19, %cst_14 [0] : vector<32x128xf32> to vector<128xf32>
    %21 = vector.shape_cast %20 : vector<128xf32> to vector<1x128xf32>
    %22 = vector.shape_cast %21 : vector<1x128xf32> to vector<1x1x128xf32>
    %c0_15 = arith.constant 0 : index
    %c0_16 = arith.constant 0 : index
    %c0_17 = arith.constant 0 : index
    %23 = vector.load %arg7[%c0_15, %c0_16, %c0_17] : memref<1x1x128xf32, #tpu.memory_space<vmem>>, vector<1x1x128xf32>
    tpu.vector_store %arg7[%c0_15, %c0_16, %c0_17], %22 {strides = array<i32>} : memref<1x1x128xf32, #tpu.memory_space<vmem>>, vector<1x1x128xf32>,
    return
  }
  func.func @transform_0(%arg0: i32) -> (i32, i32) {
    %c0_i32 = arith.constant 0 : i32
    %c0_i32_0 = arith.constant 0 : i32
    return %arg0, %c0_i32 : i32, i32
  }
  func.func @transform_1(%arg0: i32) -> (i32, i32) {
    %c0_i32 = arith.constant 0 : i32
    %c0_i32_0 = arith.constant 0 : i32
    %c0_i32_1 = arith.constant 0 : i32
    return %c0_i32, %c0_i32_0 : i32, i32
  }
  func.func @transform_2(%arg0: i32) -> (i32, i32) {
    %c0_i32 = arith.constant 0 : i32
    %c0_i32_0 = arith.constant 0 : i32
    %c0_i32_1 = arith.constant 0 : i32
    return %c0_i32, %c0_i32_0 : i32, i32
  }
  func.func @transform_3(%arg0: i32) -> (i32, i32) {
    %c0_i32 = arith.constant 0 : i32
    %c0_i32_0 = arith.constant 0 : i32
    %c0_i32_1 = arith.constant 0 : i32
    return %c0_i32, %c0_i32_0 : i32, i32
  }
  func.func @transform_4(%arg0: i32) -> (i32, i32) {
    %c0_i32 = arith.constant 0 : i32
    %c0_i32_0 = arith.constant 0 : i32
    return %arg0, %c0_i32 : i32, i32
  }
  func.func @transform_5(%arg0: i32) -> (i32, i32, i32) {
    %c0_i32 = arith.constant 0 : i32
    %c0_i32_0 = arith.constant 0 : i32
    %c0_i32_1 = arith.constant 0 : i32
    return %arg0, %c0_i32, %c0_i32_0 : i32, i32, i32
  }
  func.func @transform_6(%arg0: i32) -> (i32, i32, i32) {
    %c0_i32 = arith.constant 0 : i32
    %c0_i32_0 = arith.constant 0 : i32
    %c0_i32_1 = arith.constant 0 : i32
    return %arg0, %c0_i32, %c0_i32_0 : i32, i32, i32
  }
}

module attributes {stable_mosaic.version = 11 : i64} {
  func.func @kernel(%arg0: i32, %arg1: memref<16x1152xbf16, #tpu.memory_space<vmem>>, %arg2: memref<1152x320xbf16, #tpu.memory_space<vmem>>, %arg3: memref<16x320xbf16, #tpu.memory_space<vmem>>, %arg4: memref<1x1x320xf32, #tpu.memory_space<vmem>>, %arg5: memref<1x1x320xf32, #tpu.memory_space<vmem>>) attributes {dimension_semantics = [#tpu.dimension_semantics<parallel>], iteration_bounds = array<i64: 1>, scalar_prefetch = 0 : i64, scratch_operands = 0 : i64, tpu.core_type = #tpu.core_type<tc>, window_params = [{transform_indices = @transform_0, window_bounds = array<i64: 16, 1152>}, {pipeline_mode = #tpu.pipeline_mode<synchronous>, transform_indices = @transform_1, window_bounds = array<i64: 1152, 320>}, {transform_indices = @transform_2, window_bounds = array<i64: 16, 320>}, {transform_indices = @transform_3, window_bounds = array<i64: 1, 1, 320>}, {transform_indices = @transform_4, window_bounds = array<i64: 1, 1, 320>}]} {
    %c0 = arith.constant 0 : index
    %c0_0 = arith.constant 0 : index
    %0 = vector.load %arg1[%c0, %c0_0] : memref<16x1152xbf16, #tpu.memory_space<vmem>>, vector<16x1152xbf16>
    %c0_1 = arith.constant 0 : index
    %c0_2 = arith.constant 0 : index
    %1 = vector.load %arg2[%c0_1, %c0_2] : memref<1152x320xbf16, #tpu.memory_space<vmem>>, vector<1152x320xbf16>
    %cst = arith.constant dense<0.000000e+00> : vector<16x320xf32>
    %2 = tpu.matmul %0, %1, %cst {dimension_numbers = #tpu.dot_dimension_numbers<[1], [0], [0], [1], [0, 0, 1, 1], [], []>} : vector<16x1152xbf16>, vector<1152x320xbf16>, vector<16x320xf32> -> vector<16x320xf32>
    %3 = arith.truncf %2 : vector<16x320xf32> to vector<16x320xbf16>
    %c0_3 = arith.constant 0 : index
    %c0_4 = arith.constant 0 : index
    %4 = vector.load %arg3[%c0_3, %c0_4] : memref<16x320xbf16, #tpu.memory_space<vmem>>, vector<16x320xbf16>
    tpu.vector_store %arg3[%c0_3, %c0_4], %3 {strides = array<i32>} : memref<16x320xbf16, #tpu.memory_space<vmem>>, vector<16x320xbf16>,
    %5 = tpu.iota {dimensions = array<i32: 0>} : vector<16x320xi32>
    %c16_i32 = arith.constant 16 : i32
    %6 = arith.muli %arg0, %c16_i32 : i32
    %7 = vector.broadcast %6 : i32 to vector<16x320xi32>
    %8 = arith.addi %5, %7 : vector<16x320xi32>
    %c8_i32 = arith.constant 8 : i32
    %9 = vector.broadcast %c8_i32 : i32 to vector<16x320xi32>
    %10 = arith.cmpi slt, %8, %9 : vector<16x320xi32>
    %cst_5 = arith.constant 0.000000e+00 : f32
    %11 = vector.broadcast %cst_5 : f32 to vector<16x320xf32>
    %12 = arith.select %10, %2, %11 : vector<16x320xi1>, vector<16x320xf32>
    %cst_6 = arith.constant dense<0.000000e+00> : vector<320xf32>
    %13 = vector.multi_reduction <add>, %12, %cst_6 [0] : vector<16x320xf32> to vector<320xf32>
    %14 = vector.shape_cast %13 : vector<320xf32> to vector<1x320xf32>
    %15 = vector.shape_cast %14 : vector<1x320xf32> to vector<1x1x320xf32>
    %c0_7 = arith.constant 0 : index
    %c0_8 = arith.constant 0 : index
    %c0_9 = arith.constant 0 : index
    %16 = vector.load %arg4[%c0_7, %c0_8, %c0_9] : memref<1x1x320xf32, #tpu.memory_space<vmem>>, vector<1x1x320xf32>
    tpu.vector_store %arg4[%c0_7, %c0_8, %c0_9], %15 {strides = array<i32>} : memref<1x1x320xf32, #tpu.memory_space<vmem>>, vector<1x1x320xf32>,
    %17 = arith.mulf %12, %12 : vector<16x320xf32>
    %cst_10 = arith.constant dense<0.000000e+00> : vector<320xf32>
    %18 = vector.multi_reduction <add>, %17, %cst_10 [0] : vector<16x320xf32> to vector<320xf32>
    %19 = vector.shape_cast %18 : vector<320xf32> to vector<1x320xf32>
    %20 = vector.shape_cast %19 : vector<1x320xf32> to vector<1x1x320xf32>
    %c0_11 = arith.constant 0 : index
    %c0_12 = arith.constant 0 : index
    %c0_13 = arith.constant 0 : index
    %21 = vector.load %arg5[%c0_11, %c0_12, %c0_13] : memref<1x1x320xf32, #tpu.memory_space<vmem>>, vector<1x1x320xf32>
    tpu.vector_store %arg5[%c0_11, %c0_12, %c0_13], %20 {strides = array<i32>} : memref<1x1x320xf32, #tpu.memory_space<vmem>>, vector<1x1x320xf32>,
    return
  }
  func.func @transform_0(%arg0: i32) -> (i32, i32) {
    %c0_i32 = arith.constant 0 : i32
    %c0_i32_0 = arith.constant 0 : i32
    return %arg0, %c0_i32 : i32, i32
  }
  func.func @transform_1(%arg0: i32) -> (i32, i32) {
    %c0_i32 = arith.constant 0 : i32
    %c0_i32_0 = arith.constant 0 : i32
    %c0_i32_1 = arith.constant 0 : i32
    return %c0_i32, %c0_i32_0 : i32, i32
  }
  func.func @transform_2(%arg0: i32) -> (i32, i32) {
    %c0_i32 = arith.constant 0 : i32
    %c0_i32_0 = arith.constant 0 : i32
    return %arg0, %c0_i32 : i32, i32
  }
  func.func @transform_3(%arg0: i32) -> (i32, i32, i32) {
    %c0_i32 = arith.constant 0 : i32
    %c0_i32_0 = arith.constant 0 : i32
    %c0_i32_1 = arith.constant 0 : i32
    return %arg0, %c0_i32, %c0_i32_0 : i32, i32, i32
  }
  func.func @transform_4(%arg0: i32) -> (i32, i32, i32) {
    %c0_i32 = arith.constant 0 : i32
    %c0_i32_0 = arith.constant 0 : i32
    %c0_i32_1 = arith.constant 0 : i32
    return %arg0, %c0_i32, %c0_i32_0 : i32, i32, i32
  }
}

module attributes {stable_mosaic.version = 11 : i64} {
  func.func @kernel(%arg0: i32, %arg1: memref<16x320xbf16, #tpu.memory_space<vmem>>, %arg2: memref<1x320xf32, #tpu.memory_space<vmem>>, %arg3: memref<1x320xf32, #tpu.memory_space<vmem>>, %arg4: memref<320x128xbf16, #tpu.memory_space<vmem>>, %arg5: memref<16x128xbf16, #tpu.memory_space<vmem>>, %arg6: memref<1x1x128xf32, #tpu.memory_space<vmem>>, %arg7: memref<1x1x128xf32, #tpu.memory_space<vmem>>) attributes {dimension_semantics = [#tpu.dimension_semantics<parallel>], iteration_bounds = array<i64: 1>, scalar_prefetch = 0 : i64, scratch_operands = 0 : i64, tpu.core_type = #tpu.core_type<tc>, window_params = [{transform_indices = @transform_0, window_bounds = array<i64: 16, 320>}, {pipeline_mode = #tpu.pipeline_mode<synchronous>, transform_indices = @transform_1, window_bounds = array<i64: 1, 320>}, {pipeline_mode = #tpu.pipeline_mode<synchronous>, transform_indices = @transform_2, window_bounds = array<i64: 1, 320>}, {pipeline_mode = #tpu.pipeline_mode<synchronous>, transform_indices = @transform_3, window_bounds = array<i64: 320, 128>}, {transform_indices = @transform_4, window_bounds = array<i64: 16, 128>}, {transform_indices = @transform_5, window_bounds = array<i64: 1, 1, 128>}, {transform_indices = @transform_6, window_bounds = array<i64: 1, 1, 128>}]} {
    %c0 = arith.constant 0 : index
    %c0_0 = arith.constant 0 : index
    %0 = vector.load %arg1[%c0, %c0_0] : memref<16x320xbf16, #tpu.memory_space<vmem>>, vector<16x320xbf16>
    %1 = arith.extf %0 : vector<16x320xbf16> to vector<16x320xf32>
    %c0_1 = arith.constant 0 : index
    %c0_2 = arith.constant 0 : index
    %2 = vector.load %arg2[%c0_1, %c0_2] : memref<1x320xf32, #tpu.memory_space<vmem>>, vector<1x320xf32>
    %3 = vector.broadcast %2 : vector<1x320xf32> to vector<16x320xf32>
    %4 = arith.mulf %1, %3 : vector<16x320xf32>
    %c0_3 = arith.constant 0 : index
    %c0_4 = arith.constant 0 : index
    %5 = vector.load %arg3[%c0_3, %c0_4] : memref<1x320xf32, #tpu.memory_space<vmem>>, vector<1x320xf32>
    %6 = vector.broadcast %5 : vector<1x320xf32> to vector<16x320xf32>
    %7 = arith.addf %4, %6 : vector<16x320xf32>
    %cst = arith.constant 0.000000e+00 : f32
    %8 = vector.broadcast %cst : f32 to vector<16x320xf32>
    %9 = arith.maximumf %7, %8 : vector<16x320xf32>
    %10 = arith.truncf %9 : vector<16x320xf32> to vector<16x320xbf16>
    %c0_5 = arith.constant 0 : index
    %c0_6 = arith.constant 0 : index
    %11 = vector.load %arg4[%c0_5, %c0_6] : memref<320x128xbf16, #tpu.memory_space<vmem>>, vector<320x128xbf16>
    %cst_7 = arith.constant dense<0.000000e+00> : vector<16x128xf32>
    %12 = tpu.matmul %10, %11, %cst_7 {dimension_numbers = #tpu.dot_dimension_numbers<[1], [0], [0], [1], [0, 0, 1, 1], [], []>} : vector<16x320xbf16>, vector<320x128xbf16>, vector<16x128xf32> -> vector<16x128xf32>
    %13 = arith.truncf %12 : vector<16x128xf32> to vector<16x128xbf16>
    %c0_8 = arith.constant 0 : index
    %c0_9 = arith.constant 0 : index
    %14 = vector.load %arg5[%c0_8, %c0_9] : memref<16x128xbf16, #tpu.memory_space<vmem>>, vector<16x128xbf16>
    tpu.vector_store %arg5[%c0_8, %c0_9], %13 {strides = array<i32>} : memref<16x128xbf16, #tpu.memory_space<vmem>>, vector<16x128xbf16>,
    %15 = tpu.iota {dimensions = array<i32: 0>} : vector<16x128xi32>
    %c16_i32 = arith.constant 16 : i32
    %16 = arith.muli %arg0, %c16_i32 : i32
    %17 = vector.broadcast %16 : i32 to vector<16x128xi32>
    %18 = arith.addi %15, %17 : vector<16x128xi32>
    %c8_i32 = arith.constant 8 : i32
    %19 = vector.broadcast %c8_i32 : i32 to vector<16x128xi32>
    %20 = arith.cmpi slt, %18, %19 : vector<16x128xi32>
    %cst_10 = arith.constant 0.000000e+00 : f32
    %21 = vector.broadcast %cst_10 : f32 to vector<16x128xf32>
    %22 = arith.select %20, %12, %21 : vector<16x128xi1>, vector<16x128xf32>
    %cst_11 = arith.constant dense<0.000000e+00> : vector<128xf32>
    %23 = vector.multi_reduction <add>, %22, %cst_11 [0] : vector<16x128xf32> to vector<128xf32>
    %24 = vector.shape_cast %23 : vector<128xf32> to vector<1x128xf32>
    %25 = vector.shape_cast %24 : vector<1x128xf32> to vector<1x1x128xf32>
    %c0_12 = arith.constant 0 : index
    %c0_13 = arith.constant 0 : index
    %c0_14 = arith.constant 0 : index
    %26 = vector.load %arg6[%c0_12, %c0_13, %c0_14] : memref<1x1x128xf32, #tpu.memory_space<vmem>>, vector<1x1x128xf32>
    tpu.vector_store %arg6[%c0_12, %c0_13, %c0_14], %25 {strides = array<i32>} : memref<1x1x128xf32, #tpu.memory_space<vmem>>, vector<1x1x128xf32>,
    %27 = arith.mulf %22, %22 : vector<16x128xf32>
    %cst_15 = arith.constant dense<0.000000e+00> : vector<128xf32>
    %28 = vector.multi_reduction <add>, %27, %cst_15 [0] : vector<16x128xf32> to vector<128xf32>
    %29 = vector.shape_cast %28 : vector<128xf32> to vector<1x128xf32>
    %30 = vector.shape_cast %29 : vector<1x128xf32> to vector<1x1x128xf32>
    %c0_16 = arith.constant 0 : index
    %c0_17 = arith.constant 0 : index
    %c0_18 = arith.constant 0 : index
    %31 = vector.load %arg7[%c0_16, %c0_17, %c0_18] : memref<1x1x128xf32, #tpu.memory_space<vmem>>, vector<1x1x128xf32>
    tpu.vector_store %arg7[%c0_16, %c0_17, %c0_18], %30 {strides = array<i32>} : memref<1x1x128xf32, #tpu.memory_space<vmem>>, vector<1x1x128xf32>,
    return
  }
  func.func @transform_0(%arg0: i32) -> (i32, i32) {
    %c0_i32 = arith.constant 0 : i32
    %c0_i32_0 = arith.constant 0 : i32
    return %arg0, %c0_i32 : i32, i32
  }
  func.func @transform_1(%arg0: i32) -> (i32, i32) {
    %c0_i32 = arith.constant 0 : i32
    %c0_i32_0 = arith.constant 0 : i32
    %c0_i32_1 = arith.constant 0 : i32
    return %c0_i32, %c0_i32_0 : i32, i32
  }
  func.func @transform_2(%arg0: i32) -> (i32, i32) {
    %c0_i32 = arith.constant 0 : i32
    %c0_i32_0 = arith.constant 0 : i32
    %c0_i32_1 = arith.constant 0 : i32
    return %c0_i32, %c0_i32_0 : i32, i32
  }
  func.func @transform_3(%arg0: i32) -> (i32, i32) {
    %c0_i32 = arith.constant 0 : i32
    %c0_i32_0 = arith.constant 0 : i32
    %c0_i32_1 = arith.constant 0 : i32
    return %c0_i32, %c0_i32_0 : i32, i32
  }
  func.func @transform_4(%arg0: i32) -> (i32, i32) {
    %c0_i32 = arith.constant 0 : i32
    %c0_i32_0 = arith.constant 0 : i32
    return %arg0, %c0_i32 : i32, i32
  }
  func.func @transform_5(%arg0: i32) -> (i32, i32, i32) {
    %c0_i32 = arith.constant 0 : i32
    %c0_i32_0 = arith.constant 0 : i32
    %c0_i32_1 = arith.constant 0 : i32
    return %arg0, %c0_i32, %c0_i32_0 : i32, i32, i32
  }
  func.func @transform_6(%arg0: i32) -> (i32, i32, i32) {
    %c0_i32 = arith.constant 0 : i32
    %c0_i32_0 = arith.constant 0 : i32
    %c0_i32_1 = arith.constant 0 : i32
    return %arg0, %c0_i32, %c0_i32_0 : i32, i32, i32
  }
}

module attributes {stable_mosaic.version = 11 : i64} {
  func.func @kernel(%arg0: i32, %arg1: i32, %arg2: memref<3x4x6x128xbf16, #tpu.memory_space<vmem>>, %arg3: memref<1152x64xbf16, #tpu.memory_space<vmem>>, %arg4: memref<1x4x4x64xbf16, #tpu.memory_space<vmem>>, %arg5: memref<1x1x1x64xf32, #tpu.memory_space<vmem>>, %arg6: memref<1x1x1x64xf32, #tpu.memory_space<vmem>>) attributes {dimension_semantics = [#tpu.dimension_semantics<parallel>, #tpu.dimension_semantics<parallel>], iteration_bounds = array<i64: 2, 1>, scalar_prefetch = 0 : i64, scratch_operands = 0 : i64, tpu.core_type = #tpu.core_type<tc>, window_params = [{transform_indices = @transform_0, window_bounds = array<i64: 3, 4, 6, 128>}, {pipeline_mode = #tpu.pipeline_mode<synchronous>, transform_indices = @transform_1, window_bounds = array<i64: 1152, 64>}, {transform_indices = @transform_2, window_bounds = array<i64: 1, 4, 4, 64>}, {transform_indices = @transform_3, window_bounds = array<i64: 1, 1, 1, 64>}, {transform_indices = @transform_4, window_bounds = array<i64: 1, 1, 1, 64>}]} {
    %c0 = arith.constant 0 : index
    %c0_0 = arith.constant 0 : index
    %0 = vector.load %arg3[%c0, %c0_0] : memref<1152x64xbf16, #tpu.memory_space<vmem>>, vector<1152x64xbf16>
    %cst = arith.constant 0.000000e+00 : f32
    %1 = vector.broadcast %cst : f32 to vector<1x64xf32>
    %cst_1 = arith.constant 0.000000e+00 : f32
    %2 = vector.broadcast %cst_1 : f32 to vector<1x64xf32>
    %c0_2 = arith.constant 0 : index
    %c0_3 = arith.constant 0 : index
    %c0_4 = arith.constant 0 : index
    %c0_5 = arith.constant 0 : index
    %3 = vector.load %arg2[%c0_2, %c0_3, %c0_4, %c0_5] : memref<3x4x6x128xbf16, #tpu.memory_space<vmem>>, vector<1x1x4x128xbf16>
    %4 = vector.shape_cast %3 : vector<1x1x4x128xbf16> to vector<4x128xbf16>
    %c0_6 = arith.constant 0 : index
    %c0_7 = arith.constant 0 : index
    %c1 = arith.constant 1 : index
    %c0_8 = arith.constant 0 : index
    %5 = vector.load %arg2[%c0_6, %c0_7, %c1, %c0_8] : memref<3x4x6x128xbf16, #tpu.memory_space<vmem>>, vector<1x1x4x128xbf16>
    %6 = vector.shape_cast %5 : vector<1x1x4x128xbf16> to vector<4x128xbf16>
    %c0_9 = arith.constant 0 : index
    %c0_10 = arith.constant 0 : index
    %c2 = arith.constant 2 : index
    %c0_11 = arith.constant 0 : index
    %7 = vector.load %arg2[%c0_9, %c0_10, %c2, %c0_11] : memref<3x4x6x128xbf16, #tpu.memory_space<vmem>>, vector<1x1x4x128xbf16>
    %8 = vector.shape_cast %7 : vector<1x1x4x128xbf16> to vector<4x128xbf16>
    %c1_12 = arith.constant 1 : index
    %c0_13 = arith.constant 0 : index
    %c0_14 = arith.constant 0 : index
    %c0_15 = arith.constant 0 : index
    %9 = vector.load %arg2[%c1_12, %c0_13, %c0_14, %c0_15] : memref<3x4x6x128xbf16, #tpu.memory_space<vmem>>, vector<1x1x4x128xbf16>
    %10 = vector.shape_cast %9 : vector<1x1x4x128xbf16> to vector<4x128xbf16>
    %c1_16 = arith.constant 1 : index
    %c0_17 = arith.constant 0 : index
    %c1_18 = arith.constant 1 : index
    %c0_19 = arith.constant 0 : index
    %11 = vector.load %arg2[%c1_16, %c0_17, %c1_18, %c0_19] : memref<3x4x6x128xbf16, #tpu.memory_space<vmem>>, vector<1x1x4x128xbf16>
    %12 = vector.shape_cast %11 : vector<1x1x4x128xbf16> to vector<4x128xbf16>
    %c1_20 = arith.constant 1 : index
    %c0_21 = arith.constant 0 : index
    %c2_22 = arith.constant 2 : index
    %c0_23 = arith.constant 0 : index
    %13 = vector.load %arg2[%c1_20, %c0_21, %c2_22, %c0_23] : memref<3x4x6x128xbf16, #tpu.memory_space<vmem>>, vector<1x1x4x128xbf16>
    %14 = vector.shape_cast %13 : vector<1x1x4x128xbf16> to vector<4x128xbf16>
    %c2_24 = arith.constant 2 : index
    %c0_25 = arith.constant 0 : index
    %c0_26 = arith.constant 0 : index
    %c0_27 = arith.constant 0 : index
    %15 = vector.load %arg2[%c2_24, %c0_25, %c0_26, %c0_27] : memref<3x4x6x128xbf16, #tpu.memory_space<vmem>>, vector<1x1x4x128xbf16>
    %16 = vector.shape_cast %15 : vector<1x1x4x128xbf16> to vector<4x128xbf16>
    %c2_28 = arith.constant 2 : index
    %c0_29 = arith.constant 0 : index
    %c1_30 = arith.constant 1 : index
    %c0_31 = arith.constant 0 : index
    %17 = vector.load %arg2[%c2_28, %c0_29, %c1_30, %c0_31] : memref<3x4x6x128xbf16, #tpu.memory_space<vmem>>, vector<1x1x4x128xbf16>
    %18 = vector.shape_cast %17 : vector<1x1x4x128xbf16> to vector<4x128xbf16>
    %c2_32 = arith.constant 2 : index
    %c0_33 = arith.constant 0 : index
    %c2_34 = arith.constant 2 : index
    %c0_35 = arith.constant 0 : index
    %19 = vector.load %arg2[%c2_32, %c0_33, %c2_34, %c0_35] : memref<3x4x6x128xbf16, #tpu.memory_space<vmem>>, vector<1x1x4x128xbf16>
    %20 = vector.shape_cast %19 : vector<1x1x4x128xbf16> to vector<4x128xbf16>
    %21 = tpu.concatenate %4, %6, %8, %10, %12, %14, %16, %18, %20 in 1 : vector<4x128xbf16>, vector<4x128xbf16>, vector<4x128xbf16>, vector<4x128xbf16>, vector<4x128xbf16>, vector<4x128xbf16>, vector<4x128xbf16>, vector<4x128xbf16>, vector<4x128xbf16> -> vector<4x1152xbf16>
    %cst_36 = arith.constant dense<0.000000e+00> : vector<4x64xf32>
    %22 = tpu.matmul %21, %0, %cst_36 {dimension_numbers = #tpu.dot_dimension_numbers<[1], [0], [0], [1], [0, 0, 1, 1], [], []>} : vector<4x1152xbf16>, vector<1152x64xbf16>, vector<4x64xf32> -> vector<4x64xf32>
    %23 = arith.truncf %22 : vector<4x64xf32> to vector<4x64xbf16>
    %c0_37 = arith.constant 0 : index
    %c0_38 = arith.constant 0 : index
    %c0_39 = arith.constant 0 : index
    %c0_40 = arith.constant 0 : index
    %24 = vector.load %arg4[%c0_37, %c0_38, %c0_39, %c0_40] : memref<1x4x4x64xbf16, #tpu.memory_space<vmem>>, vector<1x1x4x64xbf16>
    %25 = vector.shape_cast %24 : vector<1x1x4x64xbf16> to vector<4x64xbf16>
    %26 = vector.shape_cast %23 : vector<4x64xbf16> to vector<1x1x4x64xbf16>
    tpu.vector_store %arg4[%c0_37, %c0_38, %c0_39, %c0_40], %26 {strides = array<i32>} : memref<1x4x4x64xbf16, #tpu.memory_space<vmem>>, vector<1x1x4x64xbf16>,
    %c4_i32 = arith.constant 4 : i32
    %27 = arith.muli %arg1, %c4_i32 : i32
    %c0_i32 = arith.constant 0 : i32
    %28 = arith.addi %27, %c0_i32 : i32
    %c4_i32_41 = arith.constant 4 : i32
    %29 = arith.cmpi slt, %28, %c4_i32_41 : i32
    %cst_42 = arith.constant dense<0.000000e+00> : vector<64xf32>
    %30 = vector.multi_reduction <add>, %22, %cst_42 [0] : vector<4x64xf32> to vector<64xf32>
    %31 = vector.shape_cast %30 : vector<64xf32> to vector<1x64xf32>
    %cst_43 = arith.constant 0.000000e+00 : f32
    %32 = vector.broadcast %cst_43 : f32 to vector<1x64xf32>
    %33 = arith.select %29, %31, %32 : vector<1x64xf32>
    %34 = arith.addf %1, %33 : vector<1x64xf32>
    %35 = arith.mulf %22, %22 : vector<4x64xf32>
    %cst_44 = arith.constant dense<0.000000e+00> : vector<64xf32>
    %36 = vector.multi_reduction <add>, %35, %cst_44 [0] : vector<4x64xf32> to vector<64xf32>
    %37 = vector.shape_cast %36 : vector<64xf32> to vector<1x64xf32>
    %cst_45 = arith.constant 0.000000e+00 : f32
    %38 = vector.broadcast %cst_45 : f32 to vector<1x64xf32>
    %39 = arith.select %29, %37, %38 : vector<1x64xf32>
    %40 = arith.addf %2, %39 : vector<1x64xf32>
    %c0_46 = arith.constant 0 : index
    %c1_47 = arith.constant 1 : index
    %c0_48 = arith.constant 0 : index
    %c0_49 = arith.constant 0 : index
    %41 = vector.load %arg2[%c0_46, %c1_47, %c0_48, %c0_49] : memref<3x4x6x128xbf16, #tpu.memory_space<vmem>>, vector<1x1x4x128xbf16>
    %42 = vector.shape_cast %41 : vector<1x1x4x128xbf16> to vector<4x128xbf16>
    %c0_50 = arith.constant 0 : index
    %c1_51 = arith.constant 1 : index
    %c1_52 = arith.constant 1 : index
    %c0_53 = arith.constant 0 : index
    %43 = vector.load %arg2[%c0_50, %c1_51, %c1_52, %c0_53] : memref<3x4x6x128xbf16, #tpu.memory_space<vmem>>, vector<1x1x4x128xbf16>
    %44 = vector.shape_cast %43 : vector<1x1x4x128xbf16> to vector<4x128xbf16>
    %c0_54 = arith.constant 0 : index
    %c1_55 = arith.constant 1 : index
    %c2_56 = arith.constant 2 : index
    %c0_57 = arith.constant 0 : index
    %45 = vector.load %arg2[%c0_54, %c1_55, %c2_56, %c0_57] : memref<3x4x6x128xbf16, #tpu.memory_space<vmem>>, vector<1x1x4x128xbf16>
    %46 = vector.shape_cast %45 : vector<1x1x4x128xbf16> to vector<4x128xbf16>
    %c1_58 = arith.constant 1 : index
    %c1_59 = arith.constant 1 : index
    %c0_60 = arith.constant 0 : index
    %c0_61 = arith.constant 0 : index
    %47 = vector.load %arg2[%c1_58, %c1_59, %c0_60, %c0_61] : memref<3x4x6x128xbf16, #tpu.memory_space<vmem>>, vector<1x1x4x128xbf16>
    %48 = vector.shape_cast %47 : vector<1x1x4x128xbf16> to vector<4x128xbf16>
    %c1_62 = arith.constant 1 : index
    %c1_63 = arith.constant 1 : index
    %c1_64 = arith.constant 1 : index
    %c0_65 = arith.constant 0 : index
    %49 = vector.load %arg2[%c1_62, %c1_63, %c1_64, %c0_65] : memref<3x4x6x128xbf16, #tpu.memory_space<vmem>>, vector<1x1x4x128xbf16>
    %50 = vector.shape_cast %49 : vector<1x1x4x128xbf16> to vector<4x128xbf16>
    %c1_66 = arith.constant 1 : index
    %c1_67 = arith.constant 1 : index
    %c2_68 = arith.constant 2 : index
    %c0_69 = arith.constant 0 : index
    %51 = vector.load %arg2[%c1_66, %c1_67, %c2_68, %c0_69] : memref<3x4x6x128xbf16, #tpu.memory_space<vmem>>, vector<1x1x4x128xbf16>
    %52 = vector.shape_cast %51 : vector<1x1x4x128xbf16> to vector<4x128xbf16>
    %c2_70 = arith.constant 2 : index
    %c1_71 = arith.constant 1 : index
    %c0_72 = arith.constant 0 : index
    %c0_73 = arith.constant 0 : index
    %53 = vector.load %arg2[%c2_70, %c1_71, %c0_72, %c0_73] : memref<3x4x6x128xbf16, #tpu.memory_space<vmem>>, vector<1x1x4x128xbf16>
    %54 = vector.shape_cast %53 : vector<1x1x4x128xbf16> to vector<4x128xbf16>
    %c2_74 = arith.constant 2 : index
    %c1_75 = arith.constant 1 : index
    %c1_76 = arith.constant 1 : index
    %c0_77 = arith.constant 0 : index
    %55 = vector.load %arg2[%c2_74, %c1_75, %c1_76, %c0_77] : memref<3x4x6x128xbf16, #tpu.memory_space<vmem>>, vector<1x1x4x128xbf16>
    %56 = vector.shape_cast %55 : vector<1x1x4x128xbf16> to vector<4x128xbf16>
    %c2_78 = arith.constant 2 : index
    %c1_79 = arith.constant 1 : index
    %c2_80 = arith.constant 2 : index
    %c0_81 = arith.constant 0 : index
    %57 = vector.load %arg2[%c2_78, %c1_79, %c2_80, %c0_81] : memref<3x4x6x128xbf16, #tpu.memory_space<vmem>>, vector<1x1x4x128xbf16>
    %58 = vector.shape_cast %57 : vector<1x1x4x128xbf16> to vector<4x128xbf16>
    %59 = tpu.concatenate %42, %44, %46, %48, %50, %52, %54, %56, %58 in 1 : vector<4x128xbf16>, vector<4x128xbf16>, vector<4x128xbf16>, vector<4x128xbf16>, vector<4x128xbf16>, vector<4x128xbf16>, vector<4x128xbf16>, vector<4x128xbf16>, vector<4x128xbf16> -> vector<4x1152xbf16>
    %cst_82 = arith.constant dense<0.000000e+00> : vector<4x64xf32>
    %60 = tpu.matmul %59, %0, %cst_82 {dimension_numbers = #tpu.dot_dimension_numbers<[1], [0], [0], [1], [0, 0, 1, 1], [], []>} : vector<4x1152xbf16>, vector<1152x64xbf16>, vector<4x64xf32> -> vector<4x64xf32>
    %61 = arith.truncf %60 : vector<4x64xf32> to vector<4x64xbf16>
    %c0_83 = arith.constant 0 : index
    %c1_84 = arith.constant 1 : index
    %c0_85 = arith.constant 0 : index
    %c0_86 = arith.constant 0 : index
    %62 = vector.load %arg4[%c0_83, %c1_84, %c0_85, %c0_86] : memref<1x4x4x64xbf16, #tpu.memory_space<vmem>>, vector<1x1x4x64xbf16>
    %63 = vector.shape_cast %62 : vector<1x1x4x64xbf16> to vector<4x64xbf16>
    %64 = vector.shape_cast %61 : vector<4x64xbf16> to vector<1x1x4x64xbf16>
    tpu.vector_store %arg4[%c0_83, %c1_84, %c0_85, %c0_86], %64 {strides = array<i32>} : memref<1x4x4x64xbf16, #tpu.memory_space<vmem>>, vector<1x1x4x64xbf16>,
    %c4_i32_87 = arith.constant 4 : i32
    %65 = arith.muli %arg1, %c4_i32_87 : i32
    %c1_i32 = arith.constant 1 : i32
    %66 = arith.addi %65, %c1_i32 : i32
    %c4_i32_88 = arith.constant 4 : i32
    %67 = arith.cmpi slt, %66, %c4_i32_88 : i32
    %cst_89 = arith.constant dense<0.000000e+00> : vector<64xf32>
    %68 = vector.multi_reduction <add>, %60, %cst_89 [0] : vector<4x64xf32> to vector<64xf32>
    %69 = vector.shape_cast %68 : vector<64xf32> to vector<1x64xf32>
    %cst_90 = arith.constant 0.000000e+00 : f32
    %70 = vector.broadcast %cst_90 : f32 to vector<1x64xf32>
    %71 = arith.select %67, %69, %70 : vector<1x64xf32>
    %72 = arith.addf %34, %71 : vector<1x64xf32>
    %73 = arith.mulf %60, %60 : vector<4x64xf32>
    %cst_91 = arith.constant dense<0.000000e+00> : vector<64xf32>
    %74 = vector.multi_reduction <add>, %73, %cst_91 [0] : vector<4x64xf32> to vector<64xf32>
    %75 = vector.shape_cast %74 : vector<64xf32> to vector<1x64xf32>
    %cst_92 = arith.constant 0.000000e+00 : f32
    %76 = vector.broadcast %cst_92 : f32 to vector<1x64xf32>
    %77 = arith.select %67, %75, %76 : vector<1x64xf32>
    %78 = arith.addf %40, %77 : vector<1x64xf32>
    %c0_93 = arith.constant 0 : index
    %c2_94 = arith.constant 2 : index
    %c0_95 = arith.constant 0 : index
    %c0_96 = arith.constant 0 : index
    %79 = vector.load %arg2[%c0_93, %c2_94, %c0_95, %c0_96] : memref<3x4x6x128xbf16, #tpu.memory_space<vmem>>, vector<1x1x4x128xbf16>
    %80 = vector.shape_cast %79 : vector<1x1x4x128xbf16> to vector<4x128xbf16>
    %c0_97 = arith.constant 0 : index
    %c2_98 = arith.constant 2 : index
    %c1_99 = arith.constant 1 : index
    %c0_100 = arith.constant 0 : index
    %81 = vector.load %arg2[%c0_97, %c2_98, %c1_99, %c0_100] : memref<3x4x6x128xbf16, #tpu.memory_space<vmem>>, vector<1x1x4x128xbf16>
    %82 = vector.shape_cast %81 : vector<1x1x4x128xbf16> to vector<4x128xbf16>
    %c0_101 = arith.constant 0 : index
    %c2_102 = arith.constant 2 : index
    %c2_103 = arith.constant 2 : index
    %c0_104 = arith.constant 0 : index
    %83 = vector.load %arg2[%c0_101, %c2_102, %c2_103, %c0_104] : memref<3x4x6x128xbf16, #tpu.memory_space<vmem>>, vector<1x1x4x128xbf16>
    %84 = vector.shape_cast %83 : vector<1x1x4x128xbf16> to vector<4x128xbf16>
    %c1_105 = arith.constant 1 : index
    %c2_106 = arith.constant 2 : index
    %c0_107 = arith.constant 0 : index
    %c0_108 = arith.constant 0 : index
    %85 = vector.load %arg2[%c1_105, %c2_106, %c0_107, %c0_108] : memref<3x4x6x128xbf16, #tpu.memory_space<vmem>>, vector<1x1x4x128xbf16>
    %86 = vector.shape_cast %85 : vector<1x1x4x128xbf16> to vector<4x128xbf16>
    %c1_109 = arith.constant 1 : index
    %c2_110 = arith.constant 2 : index
    %c1_111 = arith.constant 1 : index
    %c0_112 = arith.constant 0 : index
    %87 = vector.load %arg2[%c1_109, %c2_110, %c1_111, %c0_112] : memref<3x4x6x128xbf16, #tpu.memory_space<vmem>>, vector<1x1x4x128xbf16>
    %88 = vector.shape_cast %87 : vector<1x1x4x128xbf16> to vector<4x128xbf16>
    %c1_113 = arith.constant 1 : index
    %c2_114 = arith.constant 2 : index
    %c2_115 = arith.constant 2 : index
    %c0_116 = arith.constant 0 : index
    %89 = vector.load %arg2[%c1_113, %c2_114, %c2_115, %c0_116] : memref<3x4x6x128xbf16, #tpu.memory_space<vmem>>, vector<1x1x4x128xbf16>
    %90 = vector.shape_cast %89 : vector<1x1x4x128xbf16> to vector<4x128xbf16>
    %c2_117 = arith.constant 2 : index
    %c2_118 = arith.constant 2 : index
    %c0_119 = arith.constant 0 : index
    %c0_120 = arith.constant 0 : index
    %91 = vector.load %arg2[%c2_117, %c2_118, %c0_119, %c0_120] : memref<3x4x6x128xbf16, #tpu.memory_space<vmem>>, vector<1x1x4x128xbf16>
    %92 = vector.shape_cast %91 : vector<1x1x4x128xbf16> to vector<4x128xbf16>
    %c2_121 = arith.constant 2 : index
    %c2_122 = arith.constant 2 : index
    %c1_123 = arith.constant 1 : index
    %c0_124 = arith.constant 0 : index
    %93 = vector.load %arg2[%c2_121, %c2_122, %c1_123, %c0_124] : memref<3x4x6x128xbf16, #tpu.memory_space<vmem>>, vector<1x1x4x128xbf16>
    %94 = vector.shape_cast %93 : vector<1x1x4x128xbf16> to vector<4x128xbf16>
    %c2_125 = arith.constant 2 : index
    %c2_126 = arith.constant 2 : index
    %c2_127 = arith.constant 2 : index
    %c0_128 = arith.constant 0 : index
    %95 = vector.load %arg2[%c2_125, %c2_126, %c2_127, %c0_128] : memref<3x4x6x128xbf16, #tpu.memory_space<vmem>>, vector<1x1x4x128xbf16>
    %96 = vector.shape_cast %95 : vector<1x1x4x128xbf16> to vector<4x128xbf16>
    %97 = tpu.concatenate %80, %82, %84, %86, %88, %90, %92, %94, %96 in 1 : vector<4x128xbf16>, vector<4x128xbf16>, vector<4x128xbf16>, vector<4x128xbf16>, vector<4x128xbf16>, vector<4x128xbf16>, vector<4x128xbf16>, vector<4x128xbf16>, vector<4x128xbf16> -> vector<4x1152xbf16>
    %cst_129 = arith.constant dense<0.000000e+00> : vector<4x64xf32>
    %98 = tpu.matmul %97, %0, %cst_129 {dimension_numbers = #tpu.dot_dimension_numbers<[1], [0], [0], [1], [0, 0, 1, 1], [], []>} : vector<4x1152xbf16>, vector<1152x64xbf16>, vector<4x64xf32> -> vector<4x64xf32>
    %99 = arith.truncf %98 : vector<4x64xf32> to vector<4x64xbf16>
    %c0_130 = arith.constant 0 : index
    %c2_131 = arith.constant 2 : index
    %c0_132 = arith.constant 0 : index
    %c0_133 = arith.constant 0 : index
    %100 = vector.load %arg4[%c0_130, %c2_131, %c0_132, %c0_133] : memref<1x4x4x64xbf16, #tpu.memory_space<vmem>>, vector<1x1x4x64xbf16>
    %101 = vector.shape_cast %100 : vector<1x1x4x64xbf16> to vector<4x64xbf16>
    %102 = vector.shape_cast %99 : vector<4x64xbf16> to vector<1x1x4x64xbf16>
    tpu.vector_store %arg4[%c0_130, %c2_131, %c0_132, %c0_133], %102 {strides = array<i32>} : memref<1x4x4x64xbf16, #tpu.memory_space<vmem>>, vector<1x1x4x64xbf16>,
    %c4_i32_134 = arith.constant 4 : i32
    %103 = arith.muli %arg1, %c4_i32_134 : i32
    %c2_i32 = arith.constant 2 : i32
    %104 = arith.addi %103, %c2_i32 : i32
    %c4_i32_135 = arith.constant 4 : i32
    %105 = arith.cmpi slt, %104, %c4_i32_135 : i32
    %cst_136 = arith.constant dense<0.000000e+00> : vector<64xf32>
    %106 = vector.multi_reduction <add>, %98, %cst_136 [0] : vector<4x64xf32> to vector<64xf32>
    %107 = vector.shape_cast %106 : vector<64xf32> to vector<1x64xf32>
    %cst_137 = arith.constant 0.000000e+00 : f32
    %108 = vector.broadcast %cst_137 : f32 to vector<1x64xf32>
    %109 = arith.select %105, %107, %108 : vector<1x64xf32>
    %110 = arith.addf %72, %109 : vector<1x64xf32>
    %111 = arith.mulf %98, %98 : vector<4x64xf32>
    %cst_138 = arith.constant dense<0.000000e+00> : vector<64xf32>
    %112 = vector.multi_reduction <add>, %111, %cst_138 [0] : vector<4x64xf32> to vector<64xf32>
    %113 = vector.shape_cast %112 : vector<64xf32> to vector<1x64xf32>
    %cst_139 = arith.constant 0.000000e+00 : f32
    %114 = vector.broadcast %cst_139 : f32 to vector<1x64xf32>
    %115 = arith.select %105, %113, %114 : vector<1x64xf32>
    %116 = arith.addf %78, %115 : vector<1x64xf32>
    %c0_140 = arith.constant 0 : index
    %c3 = arith.constant 3 : index
    %c0_141 = arith.constant 0 : index
    %c0_142 = arith.constant 0 : index
    %117 = vector.load %arg2[%c0_140, %c3, %c0_141, %c0_142] : memref<3x4x6x128xbf16, #tpu.memory_space<vmem>>, vector<1x1x4x128xbf16>
    %118 = vector.shape_cast %117 : vector<1x1x4x128xbf16> to vector<4x128xbf16>
    %c0_143 = arith.constant 0 : index
    %c3_144 = arith.constant 3 : index
    %c1_145 = arith.constant 1 : index
    %c0_146 = arith.constant 0 : index
    %119 = vector.load %arg2[%c0_143, %c3_144, %c1_145, %c0_146] : memref<3x4x6x128xbf16, #tpu.memory_space<vmem>>, vector<1x1x4x128xbf16>
    %120 = vector.shape_cast %119 : vector<1x1x4x128xbf16> to vector<4x128xbf16>
    %c0_147 = arith.constant 0 : index
    %c3_148 = arith.constant 3 : index
    %c2_149 = arith.constant 2 : index
    %c0_150 = arith.constant 0 : index
    %121 = vector.load %arg2[%c0_147, %c3_148, %c2_149, %c0_150] : memref<3x4x6x128xbf16, #tpu.memory_space<vmem>>, vector<1x1x4x128xbf16>
    %122 = vector.shape_cast %121 : vector<1x1x4x128xbf16> to vector<4x128xbf16>
    %c1_151 = arith.constant 1 : index
    %c3_152 = arith.constant 3 : index
    %c0_153 = arith.constant 0 : index
    %c0_154 = arith.constant 0 : index
    %123 = vector.load %arg2[%c1_151, %c3_152, %c0_153, %c0_154] : memref<3x4x6x128xbf16, #tpu.memory_space<vmem>>, vector<1x1x4x128xbf16>
    %124 = vector.shape_cast %123 : vector<1x1x4x128xbf16> to vector<4x128xbf16>
    %c1_155 = arith.constant 1 : index
    %c3_156 = arith.constant 3 : index
    %c1_157 = arith.constant 1 : index
    %c0_158 = arith.constant 0 : index
    %125 = vector.load %arg2[%c1_155, %c3_156, %c1_157, %c0_158] : memref<3x4x6x128xbf16, #tpu.memory_space<vmem>>, vector<1x1x4x128xbf16>
    %126 = vector.shape_cast %125 : vector<1x1x4x128xbf16> to vector<4x128xbf16>
    %c1_159 = arith.constant 1 : index
    %c3_160 = arith.constant 3 : index
    %c2_161 = arith.constant 2 : index
    %c0_162 = arith.constant 0 : index
    %127 = vector.load %arg2[%c1_159, %c3_160, %c2_161, %c0_162] : memref<3x4x6x128xbf16, #tpu.memory_space<vmem>>, vector<1x1x4x128xbf16>
    %128 = vector.shape_cast %127 : vector<1x1x4x128xbf16> to vector<4x128xbf16>
    %c2_163 = arith.constant 2 : index
    %c3_164 = arith.constant 3 : index
    %c0_165 = arith.constant 0 : index
    %c0_166 = arith.constant 0 : index
    %129 = vector.load %arg2[%c2_163, %c3_164, %c0_165, %c0_166] : memref<3x4x6x128xbf16, #tpu.memory_space<vmem>>, vector<1x1x4x128xbf16>
    %130 = vector.shape_cast %129 : vector<1x1x4x128xbf16> to vector<4x128xbf16>
    %c2_167 = arith.constant 2 : index
    %c3_168 = arith.constant 3 : index
    %c1_169 = arith.constant 1 : index
    %c0_170 = arith.constant 0 : index
    %131 = vector.load %arg2[%c2_167, %c3_168, %c1_169, %c0_170] : memref<3x4x6x128xbf16, #tpu.memory_space<vmem>>, vector<1x1x4x128xbf16>
    %132 = vector.shape_cast %131 : vector<1x1x4x128xbf16> to vector<4x128xbf16>
    %c2_171 = arith.constant 2 : index
    %c3_172 = arith.constant 3 : index
    %c2_173 = arith.constant 2 : index
    %c0_174 = arith.constant 0 : index
    %133 = vector.load %arg2[%c2_171, %c3_172, %c2_173, %c0_174] : memref<3x4x6x128xbf16, #tpu.memory_space<vmem>>, vector<1x1x4x128xbf16>
    %134 = vector.shape_cast %133 : vector<1x1x4x128xbf16> to vector<4x128xbf16>
    %135 = tpu.concatenate %118, %120, %122, %124, %126, %128, %130, %132, %134 in 1 : vector<4x128xbf16>, vector<4x128xbf16>, vector<4x128xbf16>, vector<4x128xbf16>, vector<4x128xbf16>, vector<4x128xbf16>, vector<4x128xbf16>, vector<4x128xbf16>, vector<4x128xbf16> -> vector<4x1152xbf16>
    %cst_175 = arith.constant dense<0.000000e+00> : vector<4x64xf32>
    %136 = tpu.matmul %135, %0, %cst_175 {dimension_numbers = #tpu.dot_dimension_numbers<[1], [0], [0], [1], [0, 0, 1, 1], [], []>} : vector<4x1152xbf16>, vector<1152x64xbf16>, vector<4x64xf32> -> vector<4x64xf32>
    %137 = arith.truncf %136 : vector<4x64xf32> to vector<4x64xbf16>
    %c0_176 = arith.constant 0 : index
    %c3_177 = arith.constant 3 : index
    %c0_178 = arith.constant 0 : index
    %c0_179 = arith.constant 0 : index
    %138 = vector.load %arg4[%c0_176, %c3_177, %c0_178, %c0_179] : memref<1x4x4x64xbf16, #tpu.memory_space<vmem>>, vector<1x1x4x64xbf16>
    %139 = vector.shape_cast %138 : vector<1x1x4x64xbf16> to vector<4x64xbf16>
    %140 = vector.shape_cast %137 : vector<4x64xbf16> to vector<1x1x4x64xbf16>
    tpu.vector_store %arg4[%c0_176, %c3_177, %c0_178, %c0_179], %140 {strides = array<i32>} : memref<1x4x4x64xbf16, #tpu.memory_space<vmem>>, vector<1x1x4x64xbf16>,
    %c4_i32_180 = arith.constant 4 : i32
    %141 = arith.muli %arg1, %c4_i32_180 : i32
    %c3_i32 = arith.constant 3 : i32
    %142 = arith.addi %141, %c3_i32 : i32
    %c4_i32_181 = arith.constant 4 : i32
    %143 = arith.cmpi slt, %142, %c4_i32_181 : i32
    %cst_182 = arith.constant dense<0.000000e+00> : vector<64xf32>
    %144 = vector.multi_reduction <add>, %136, %cst_182 [0] : vector<4x64xf32> to vector<64xf32>
    %145 = vector.shape_cast %144 : vector<64xf32> to vector<1x64xf32>
    %cst_183 = arith.constant 0.000000e+00 : f32
    %146 = vector.broadcast %cst_183 : f32 to vector<1x64xf32>
    %147 = arith.select %143, %145, %146 : vector<1x64xf32>
    %148 = arith.addf %110, %147 : vector<1x64xf32>
    %149 = arith.mulf %136, %136 : vector<4x64xf32>
    %cst_184 = arith.constant dense<0.000000e+00> : vector<64xf32>
    %150 = vector.multi_reduction <add>, %149, %cst_184 [0] : vector<4x64xf32> to vector<64xf32>
    %151 = vector.shape_cast %150 : vector<64xf32> to vector<1x64xf32>
    %cst_185 = arith.constant 0.000000e+00 : f32
    %152 = vector.broadcast %cst_185 : f32 to vector<1x64xf32>
    %153 = arith.select %143, %151, %152 : vector<1x64xf32>
    %154 = arith.addf %116, %153 : vector<1x64xf32>
    %c0_186 = arith.constant 0 : index
    %c0_187 = arith.constant 0 : index
    %c0_188 = arith.constant 0 : index
    %c0_189 = arith.constant 0 : index
    %155 = vector.load %arg5[%c0_186, %c0_187, %c0_188, %c0_189] : memref<1x1x1x64xf32, #tpu.memory_space<vmem>>, vector<1x1x1x64xf32>
    %156 = vector.shape_cast %155 : vector<1x1x1x64xf32> to vector<1x64xf32>
    %157 = vector.shape_cast %148 : vector<1x64xf32> to vector<1x1x1x64xf32>
    tpu.vector_store %arg5[%c0_186, %c0_187, %c0_188, %c0_189], %157 {strides = array<i32>} : memref<1x1x1x64xf32, #tpu.memory_space<vmem>>, vector<1x1x1x64xf32>,
    %c0_190 = arith.constant 0 : index
    %c0_191 = arith.constant 0 : index
    %c0_192 = arith.constant 0 : index
    %c0_193 = arith.constant 0 : index
    %158 = vector.load %arg6[%c0_190, %c0_191, %c0_192, %c0_193] : memref<1x1x1x64xf32, #tpu.memory_space<vmem>>, vector<1x1x1x64xf32>
    %159 = vector.shape_cast %158 : vector<1x1x1x64xf32> to vector<1x64xf32>
    %160 = vector.shape_cast %154 : vector<1x64xf32> to vector<1x1x1x64xf32>
    tpu.vector_store %arg6[%c0_190, %c0_191, %c0_192, %c0_193], %160 {strides = array<i32>} : memref<1x1x1x64xf32, #tpu.memory_space<vmem>>, vector<1x1x1x64xf32>,
    return
  }
  func.func @transform_0(%arg0: i32, %arg1: i32) -> (i32, i32, i32, i32) {
    %c0_i32 = arith.constant 0 : i32
    %c0_i32_0 = arith.constant 0 : i32
    %c0_i32_1 = arith.constant 0 : i32
    return %arg0, %arg1, %c0_i32, %c0_i32_0 : i32, i32, i32, i32
  }
  func.func @transform_1(%arg0: i32, %arg1: i32) -> (i32, i32) {
    %c0_i32 = arith.constant 0 : i32
    %c0_i32_0 = arith.constant 0 : i32
    %c0_i32_1 = arith.constant 0 : i32
    return %c0_i32, %c0_i32_0 : i32, i32
  }
  func.func @transform_2(%arg0: i32, %arg1: i32) -> (i32, i32, i32, i32) {
    %c0_i32 = arith.constant 0 : i32
    %c0_i32_0 = arith.constant 0 : i32
    %c0_i32_1 = arith.constant 0 : i32
    return %arg0, %arg1, %c0_i32, %c0_i32_0 : i32, i32, i32, i32
  }
  func.func @transform_3(%arg0: i32, %arg1: i32) -> (i32, i32, i32, i32) {
    %c0_i32 = arith.constant 0 : i32
    %c0_i32_0 = arith.constant 0 : i32
    %c0_i32_1 = arith.constant 0 : i32
    return %arg0, %arg1, %c0_i32, %c0_i32_0 : i32, i32, i32, i32
  }
  func.func @transform_4(%arg0: i32, %arg1: i32) -> (i32, i32, i32, i32) {
    %c0_i32 = arith.constant 0 : i32
    %c0_i32_0 = arith.constant 0 : i32
    %c0_i32_1 = arith.constant 0 : i32
    return %arg0, %arg1, %c0_i32, %c0_i32_0 : i32, i32, i32, i32
  }
}

module attributes {stable_mosaic.version = 11 : i64} {
  func.func @kernel(%arg0: i32, %arg1: memref<128x48xbf16, #tpu.memory_space<vmem>>, %arg2: memref<1x48xf32, #tpu.memory_space<vmem>>, %arg3: memref<1x48xf32, #tpu.memory_space<vmem>>, %arg4: memref<48x8xbf16, #tpu.memory_space<vmem>>, %arg5: memref<128x8xbf16, #tpu.memory_space<vmem>>, %arg6: memref<1x1x8xf32, #tpu.memory_space<vmem>>, %arg7: memref<1x1x8xf32, #tpu.memory_space<vmem>>) attributes {dimension_semantics = [#tpu.dimension_semantics<parallel>], iteration_bounds = array<i64: 1>, scalar_prefetch = 0 : i64, scratch_operands = 0 : i64, tpu.core_type = #tpu.core_type<tc>, window_params = [{transform_indices = @transform_0, window_bounds = array<i64: 128, 48>}, {pipeline_mode = #tpu.pipeline_mode<synchronous>, transform_indices = @transform_1, window_bounds = array<i64: 1, 48>}, {pipeline_mode = #tpu.pipeline_mode<synchronous>, transform_indices = @transform_2, window_bounds = array<i64: 1, 48>}, {pipeline_mode = #tpu.pipeline_mode<synchronous>, transform_indices = @transform_3, window_bounds = array<i64: 48, 8>}, {transform_indices = @transform_4, window_bounds = array<i64: 128, 8>}, {transform_indices = @transform_5, window_bounds = array<i64: 1, 1, 8>}, {transform_indices = @transform_6, window_bounds = array<i64: 1, 1, 8>}]} {
    %c0 = arith.constant 0 : index
    %c0_0 = arith.constant 0 : index
    %0 = vector.load %arg1[%c0, %c0_0] : memref<128x48xbf16, #tpu.memory_space<vmem>>, vector<128x48xbf16>
    %1 = arith.extf %0 : vector<128x48xbf16> to vector<128x48xf32>
    %c0_1 = arith.constant 0 : index
    %c0_2 = arith.constant 0 : index
    %2 = vector.load %arg2[%c0_1, %c0_2] : memref<1x48xf32, #tpu.memory_space<vmem>>, vector<1x48xf32>
    %3 = vector.broadcast %2 : vector<1x48xf32> to vector<128x48xf32>
    %4 = arith.mulf %1, %3 : vector<128x48xf32>
    %c0_3 = arith.constant 0 : index
    %c0_4 = arith.constant 0 : index
    %5 = vector.load %arg3[%c0_3, %c0_4] : memref<1x48xf32, #tpu.memory_space<vmem>>, vector<1x48xf32>
    %6 = vector.broadcast %5 : vector<1x48xf32> to vector<128x48xf32>
    %7 = arith.addf %4, %6 : vector<128x48xf32>
    %cst = arith.constant 0.000000e+00 : f32
    %8 = vector.broadcast %cst : f32 to vector<128x48xf32>
    %9 = arith.maximumf %7, %8 : vector<128x48xf32>
    %10 = arith.truncf %9 : vector<128x48xf32> to vector<128x48xbf16>
    %c0_5 = arith.constant 0 : index
    %c0_6 = arith.constant 0 : index
    %11 = vector.load %arg4[%c0_5, %c0_6] : memref<48x8xbf16, #tpu.memory_space<vmem>>, vector<48x8xbf16>
    %cst_7 = arith.constant dense<0.000000e+00> : vector<128x8xf32>
    %12 = tpu.matmul %10, %11, %cst_7 {dimension_numbers = #tpu.dot_dimension_numbers<[1], [0], [0], [1], [0, 0, 1, 1], [], []>} : vector<128x48xbf16>, vector<48x8xbf16>, vector<128x8xf32> -> vector<128x8xf32>
    %13 = arith.truncf %12 : vector<128x8xf32> to vector<128x8xbf16>
    %c0_8 = arith.constant 0 : index
    %c0_9 = arith.constant 0 : index
    %14 = vector.load %arg5[%c0_8, %c0_9] : memref<128x8xbf16, #tpu.memory_space<vmem>>, vector<128x8xbf16>
    tpu.vector_store %arg5[%c0_8, %c0_9], %13 {strides = array<i32>} : memref<128x8xbf16, #tpu.memory_space<vmem>>, vector<128x8xbf16>,
    %cst_10 = arith.constant dense<0.000000e+00> : vector<8xf32>
    %15 = vector.multi_reduction <add>, %12, %cst_10 [0] : vector<128x8xf32> to vector<8xf32>
    %16 = vector.shape_cast %15 : vector<8xf32> to vector<1x8xf32>
    %17 = vector.shape_cast %16 : vector<1x8xf32> to vector<1x1x8xf32>
    %c0_11 = arith.constant 0 : index
    %c0_12 = arith.constant 0 : index
    %c0_13 = arith.constant 0 : index
    %18 = vector.load %arg6[%c0_11, %c0_12, %c0_13] : memref<1x1x8xf32, #tpu.memory_space<vmem>>, vector<1x1x8xf32>
    tpu.vector_store %arg6[%c0_11, %c0_12, %c0_13], %17 {strides = array<i32>} : memref<1x1x8xf32, #tpu.memory_space<vmem>>, vector<1x1x8xf32>,
    %19 = arith.mulf %12, %12 : vector<128x8xf32>
    %cst_14 = arith.constant dense<0.000000e+00> : vector<8xf32>
    %20 = vector.multi_reduction <add>, %19, %cst_14 [0] : vector<128x8xf32> to vector<8xf32>
    %21 = vector.shape_cast %20 : vector<8xf32> to vector<1x8xf32>
    %22 = vector.shape_cast %21 : vector<1x8xf32> to vector<1x1x8xf32>
    %c0_15 = arith.constant 0 : index
    %c0_16 = arith.constant 0 : index
    %c0_17 = arith.constant 0 : index
    %23 = vector.load %arg7[%c0_15, %c0_16, %c0_17] : memref<1x1x8xf32, #tpu.memory_space<vmem>>, vector<1x1x8xf32>
    tpu.vector_store %arg7[%c0_15, %c0_16, %c0_17], %22 {strides = array<i32>} : memref<1x1x8xf32, #tpu.memory_space<vmem>>, vector<1x1x8xf32>,
    return
  }
  func.func @transform_0(%arg0: i32) -> (i32, i32) {
    %c0_i32 = arith.constant 0 : i32
    %c0_i32_0 = arith.constant 0 : i32
    return %arg0, %c0_i32 : i32, i32
  }
  func.func @transform_1(%arg0: i32) -> (i32, i32) {
    %c0_i32 = arith.constant 0 : i32
    %c0_i32_0 = arith.constant 0 : i32
    %c0_i32_1 = arith.constant 0 : i32
    return %c0_i32, %c0_i32_0 : i32, i32
  }
  func.func @transform_2(%arg0: i32) -> (i32, i32) {
    %c0_i32 = arith.constant 0 : i32
    %c0_i32_0 = arith.constant 0 : i32
    %c0_i32_1 = arith.constant 0 : i32
    return %c0_i32, %c0_i32_0 : i32, i32
  }
  func.func @transform_3(%arg0: i32) -> (i32, i32) {
    %c0_i32 = arith.constant 0 : i32
    %c0_i32_0 = arith.constant 0 : i32
    %c0_i32_1 = arith.constant 0 : i32
    return %c0_i32, %c0_i32_0 : i32, i32
  }
  func.func @transform_4(%arg0: i32) -> (i32, i32) {
    %c0_i32 = arith.constant 0 : i32
    %c0_i32_0 = arith.constant 0 : i32
    return %arg0, %c0_i32 : i32, i32
  }
  func.func @transform_5(%arg0: i32) -> (i32, i32, i32) {
    %c0_i32 = arith.constant 0 : i32
    %c0_i32_0 = arith.constant 0 : i32
    %c0_i32_1 = arith.constant 0 : i32
    return %arg0, %c0_i32, %c0_i32_0 : i32, i32, i32
  }
  func.func @transform_6(%arg0: i32) -> (i32, i32, i32) {
    %c0_i32 = arith.constant 0 : i32
    %c0_i32_0 = arith.constant 0 : i32
    %c0_i32_1 = arith.constant 0 : i32
    return %arg0, %c0_i32, %c0_i32_0 : i32, i32, i32
  }
}

module attributes {stable_mosaic.version = 11 : i64} {
  func.func @kernel(%arg0: i32, %arg1: i32, %arg2: memref<3x8x10x72xbf16, #tpu.memory_space<vmem>>, %arg3: memref<648x64xbf16, #tpu.memory_space<vmem>>, %arg4: memref<1x8x8x64xbf16, #tpu.memory_space<vmem>>, %arg5: memref<1x1x1x64xf32, #tpu.memory_space<vmem>>, %arg6: memref<1x1x1x64xf32, #tpu.memory_space<vmem>>) attributes {dimension_semantics = [#tpu.dimension_semantics<parallel>, #tpu.dimension_semantics<parallel>], iteration_bounds = array<i64: 2, 1>, scalar_prefetch = 0 : i64, scratch_operands = 0 : i64, tpu.core_type = #tpu.core_type<tc>, window_params = [{transform_indices = @transform_0, window_bounds = array<i64: 3, 8, 10, 72>}, {pipeline_mode = #tpu.pipeline_mode<synchronous>, transform_indices = @transform_1, window_bounds = array<i64: 648, 64>}, {transform_indices = @transform_2, window_bounds = array<i64: 1, 8, 8, 64>}, {transform_indices = @transform_3, window_bounds = array<i64: 1, 1, 1, 64>}, {transform_indices = @transform_4, window_bounds = array<i64: 1, 1, 1, 64>}]} {
    %c0 = arith.constant 0 : index
    %c0_0 = arith.constant 0 : index
    %0 = vector.load %arg3[%c0, %c0_0] : memref<648x64xbf16, #tpu.memory_space<vmem>>, vector<648x64xbf16>
    %cst = arith.constant 0.000000e+00 : f32
    %1 = vector.broadcast %cst : f32 to vector<1x64xf32>
    %cst_1 = arith.constant 0.000000e+00 : f32
    %2 = vector.broadcast %cst_1 : f32 to vector<1x64xf32>
    %c0_2 = arith.constant 0 : index
    %c0_3 = arith.constant 0 : index
    %c0_4 = arith.constant 0 : index
    %c0_5 = arith.constant 0 : index
    %3 = vector.load %arg2[%c0_2, %c0_3, %c0_4, %c0_5] : memref<3x8x10x72xbf16, #tpu.memory_space<vmem>>, vector<1x1x8x72xbf16>
    %4 = vector.shape_cast %3 : vector<1x1x8x72xbf16> to vector<8x72xbf16>
    %c0_6 = arith.constant 0 : index
    %c0_7 = arith.constant 0 : index
    %c1 = arith.constant 1 : index
    %c0_8 = arith.constant 0 : index
    %5 = vector.load %arg2[%c0_6, %c0_7, %c1, %c0_8] : memref<3x8x10x72xbf16, #tpu.memory_space<vmem>>, vector<1x1x8x72xbf16>
    %6 = vector.shape_cast %5 : vector<1x1x8x72xbf16> to vector<8x72xbf16>
    %c0_9 = arith.constant 0 : index
    %c0_10 = arith.constant 0 : index
    %c2 = arith.constant 2 : index
    %c0_11 = arith.constant 0 : index
    %7 = vector.load %arg2[%c0_9, %c0_10, %c2, %c0_11] : memref<3x8x10x72xbf16, #tpu.memory_space<vmem>>, vector<1x1x8x72xbf16>
    %8 = vector.shape_cast %7 : vector<1x1x8x72xbf16> to vector<8x72xbf16>
    %c1_12 = arith.constant 1 : index
    %c0_13 = arith.constant 0 : index
    %c0_14 = arith.constant 0 : index
    %c0_15 = arith.constant 0 : index
    %9 = vector.load %arg2[%c1_12, %c0_13, %c0_14, %c0_15] : memref<3x8x10x72xbf16, #tpu.memory_space<vmem>>, vector<1x1x8x72xbf16>
    %10 = vector.shape_cast %9 : vector<1x1x8x72xbf16> to vector<8x72xbf16>
    %c1_16 = arith.constant 1 : index
    %c0_17 = arith.constant 0 : index
    %c1_18 = arith.constant 1 : index
    %c0_19 = arith.constant 0 : index
    %11 = vector.load %arg2[%c1_16, %c0_17, %c1_18, %c0_19] : memref<3x8x10x72xbf16, #tpu.memory_space<vmem>>, vector<1x1x8x72xbf16>
    %12 = vector.shape_cast %11 : vector<1x1x8x72xbf16> to vector<8x72xbf16>
    %c1_20 = arith.constant 1 : index
    %c0_21 = arith.constant 0 : index
    %c2_22 = arith.constant 2 : index
    %c0_23 = arith.constant 0 : index
    %13 = vector.load %arg2[%c1_20, %c0_21, %c2_22, %c0_23] : memref<3x8x10x72xbf16, #tpu.memory_space<vmem>>, vector<1x1x8x72xbf16>
    %14 = vector.shape_cast %13 : vector<1x1x8x72xbf16> to vector<8x72xbf16>
    %c2_24 = arith.constant 2 : index
    %c0_25 = arith.constant 0 : index
    %c0_26 = arith.constant 0 : index
    %c0_27 = arith.constant 0 : index
    %15 = vector.load %arg2[%c2_24, %c0_25, %c0_26, %c0_27] : memref<3x8x10x72xbf16, #tpu.memory_space<vmem>>, vector<1x1x8x72xbf16>
    %16 = vector.shape_cast %15 : vector<1x1x8x72xbf16> to vector<8x72xbf16>
    %c2_28 = arith.constant 2 : index
    %c0_29 = arith.constant 0 : index
    %c1_30 = arith.constant 1 : index
    %c0_31 = arith.constant 0 : index
    %17 = vector.load %arg2[%c2_28, %c0_29, %c1_30, %c0_31] : memref<3x8x10x72xbf16, #tpu.memory_space<vmem>>, vector<1x1x8x72xbf16>
    %18 = vector.shape_cast %17 : vector<1x1x8x72xbf16> to vector<8x72xbf16>
    %c2_32 = arith.constant 2 : index
    %c0_33 = arith.constant 0 : index
    %c2_34 = arith.constant 2 : index
    %c0_35 = arith.constant 0 : index
    %19 = vector.load %arg2[%c2_32, %c0_33, %c2_34, %c0_35] : memref<3x8x10x72xbf16, #tpu.memory_space<vmem>>, vector<1x1x8x72xbf16>
    %20 = vector.shape_cast %19 : vector<1x1x8x72xbf16> to vector<8x72xbf16>
    %21 = tpu.concatenate %4, %6, %8, %10, %12, %14, %16, %18, %20 in 1 : vector<8x72xbf16>, vector<8x72xbf16>, vector<8x72xbf16>, vector<8x72xbf16>, vector<8x72xbf16>, vector<8x72xbf16>, vector<8x72xbf16>, vector<8x72xbf16>, vector<8x72xbf16> -> vector<8x648xbf16>
    %cst_36 = arith.constant dense<0.000000e+00> : vector<8x64xf32>
    %22 = tpu.matmul %21, %0, %cst_36 {dimension_numbers = #tpu.dot_dimension_numbers<[1], [0], [0], [1], [0, 0, 1, 1], [], []>} : vector<8x648xbf16>, vector<648x64xbf16>, vector<8x64xf32> -> vector<8x64xf32>
    %23 = arith.truncf %22 : vector<8x64xf32> to vector<8x64xbf16>
    %c0_37 = arith.constant 0 : index
    %c0_38 = arith.constant 0 : index
    %c0_39 = arith.constant 0 : index
    %c0_40 = arith.constant 0 : index
    %24 = vector.load %arg4[%c0_37, %c0_38, %c0_39, %c0_40] : memref<1x8x8x64xbf16, #tpu.memory_space<vmem>>, vector<1x1x8x64xbf16>
    %25 = vector.shape_cast %24 : vector<1x1x8x64xbf16> to vector<8x64xbf16>
    %26 = vector.shape_cast %23 : vector<8x64xbf16> to vector<1x1x8x64xbf16>
    tpu.vector_store %arg4[%c0_37, %c0_38, %c0_39, %c0_40], %26 {strides = array<i32>} : memref<1x8x8x64xbf16, #tpu.memory_space<vmem>>, vector<1x1x8x64xbf16>,
    %c8_i32 = arith.constant 8 : i32
    %27 = arith.muli %arg1, %c8_i32 : i32
    %c0_i32 = arith.constant 0 : i32
    %28 = arith.addi %27, %c0_i32 : i32
    %c8_i32_41 = arith.constant 8 : i32
    %29 = arith.cmpi slt, %28, %c8_i32_41 : i32
    %cst_42 = arith.constant dense<0.000000e+00> : vector<64xf32>
    %30 = vector.multi_reduction <add>, %22, %cst_42 [0] : vector<8x64xf32> to vector<64xf32>
    %31 = vector.shape_cast %30 : vector<64xf32> to vector<1x64xf32>
    %cst_43 = arith.constant 0.000000e+00 : f32
    %32 = vector.broadcast %cst_43 : f32 to vector<1x64xf32>
    %33 = arith.select %29, %31, %32 : vector<1x64xf32>
    %34 = arith.addf %1, %33 : vector<1x64xf32>
    %35 = arith.mulf %22, %22 : vector<8x64xf32>
    %cst_44 = arith.constant dense<0.000000e+00> : vector<64xf32>
    %36 = vector.multi_reduction <add>, %35, %cst_44 [0] : vector<8x64xf32> to vector<64xf32>
    %37 = vector.shape_cast %36 : vector<64xf32> to vector<1x64xf32>
    %cst_45 = arith.constant 0.000000e+00 : f32
    %38 = vector.broadcast %cst_45 : f32 to vector<1x64xf32>
    %39 = arith.select %29, %37, %38 : vector<1x64xf32>
    %40 = arith.addf %2, %39 : vector<1x64xf32>
    %c0_46 = arith.constant 0 : index
    %c1_47 = arith.constant 1 : index
    %c0_48 = arith.constant 0 : index
    %c0_49 = arith.constant 0 : index
    %41 = vector.load %arg2[%c0_46, %c1_47, %c0_48, %c0_49] : memref<3x8x10x72xbf16, #tpu.memory_space<vmem>>, vector<1x1x8x72xbf16>
    %42 = vector.shape_cast %41 : vector<1x1x8x72xbf16> to vector<8x72xbf16>
    %c0_50 = arith.constant 0 : index
    %c1_51 = arith.constant 1 : index
    %c1_52 = arith.constant 1 : index
    %c0_53 = arith.constant 0 : index
    %43 = vector.load %arg2[%c0_50, %c1_51, %c1_52, %c0_53] : memref<3x8x10x72xbf16, #tpu.memory_space<vmem>>, vector<1x1x8x72xbf16>
    %44 = vector.shape_cast %43 : vector<1x1x8x72xbf16> to vector<8x72xbf16>
    %c0_54 = arith.constant 0 : index
    %c1_55 = arith.constant 1 : index
    %c2_56 = arith.constant 2 : index
    %c0_57 = arith.constant 0 : index
    %45 = vector.load %arg2[%c0_54, %c1_55, %c2_56, %c0_57] : memref<3x8x10x72xbf16, #tpu.memory_space<vmem>>, vector<1x1x8x72xbf16>
    %46 = vector.shape_cast %45 : vector<1x1x8x72xbf16> to vector<8x72xbf16>
    %c1_58 = arith.constant 1 : index
    %c1_59 = arith.constant 1 : index
    %c0_60 = arith.constant 0 : index
    %c0_61 = arith.constant 0 : index
    %47 = vector.load %arg2[%c1_58, %c1_59, %c0_60, %c0_61] : memref<3x8x10x72xbf16, #tpu.memory_space<vmem>>, vector<1x1x8x72xbf16>
    %48 = vector.shape_cast %47 : vector<1x1x8x72xbf16> to vector<8x72xbf16>
    %c1_62 = arith.constant 1 : index
    %c1_63 = arith.constant 1 : index
    %c1_64 = arith.constant 1 : index
    %c0_65 = arith.constant 0 : index
    %49 = vector.load %arg2[%c1_62, %c1_63, %c1_64, %c0_65] : memref<3x8x10x72xbf16, #tpu.memory_space<vmem>>, vector<1x1x8x72xbf16>
    %50 = vector.shape_cast %49 : vector<1x1x8x72xbf16> to vector<8x72xbf16>
    %c1_66 = arith.constant 1 : index
    %c1_67 = arith.constant 1 : index
    %c2_68 = arith.constant 2 : index
    %c0_69 = arith.constant 0 : index
    %51 = vector.load %arg2[%c1_66, %c1_67, %c2_68, %c0_69] : memref<3x8x10x72xbf16, #tpu.memory_space<vmem>>, vector<1x1x8x72xbf16>
    %52 = vector.shape_cast %51 : vector<1x1x8x72xbf16> to vector<8x72xbf16>
    %c2_70 = arith.constant 2 : index
    %c1_71 = arith.constant 1 : index
    %c0_72 = arith.constant 0 : index
    %c0_73 = arith.constant 0 : index
    %53 = vector.load %arg2[%c2_70, %c1_71, %c0_72, %c0_73] : memref<3x8x10x72xbf16, #tpu.memory_space<vmem>>, vector<1x1x8x72xbf16>
    %54 = vector.shape_cast %53 : vector<1x1x8x72xbf16> to vector<8x72xbf16>
    %c2_74 = arith.constant 2 : index
    %c1_75 = arith.constant 1 : index
    %c1_76 = arith.constant 1 : index
    %c0_77 = arith.constant 0 : index
    %55 = vector.load %arg2[%c2_74, %c1_75, %c1_76, %c0_77] : memref<3x8x10x72xbf16, #tpu.memory_space<vmem>>, vector<1x1x8x72xbf16>
    %56 = vector.shape_cast %55 : vector<1x1x8x72xbf16> to vector<8x72xbf16>
    %c2_78 = arith.constant 2 : index
    %c1_79 = arith.constant 1 : index
    %c2_80 = arith.constant 2 : index
    %c0_81 = arith.constant 0 : index
    %57 = vector.load %arg2[%c2_78, %c1_79, %c2_80, %c0_81] : memref<3x8x10x72xbf16, #tpu.memory_space<vmem>>, vector<1x1x8x72xbf16>
    %58 = vector.shape_cast %57 : vector<1x1x8x72xbf16> to vector<8x72xbf16>
    %59 = tpu.concatenate %42, %44, %46, %48, %50, %52, %54, %56, %58 in 1 : vector<8x72xbf16>, vector<8x72xbf16>, vector<8x72xbf16>, vector<8x72xbf16>, vector<8x72xbf16>, vector<8x72xbf16>, vector<8x72xbf16>, vector<8x72xbf16>, vector<8x72xbf16> -> vector<8x648xbf16>
    %cst_82 = arith.constant dense<0.000000e+00> : vector<8x64xf32>
    %60 = tpu.matmul %59, %0, %cst_82 {dimension_numbers = #tpu.dot_dimension_numbers<[1], [0], [0], [1], [0, 0, 1, 1], [], []>} : vector<8x648xbf16>, vector<648x64xbf16>, vector<8x64xf32> -> vector<8x64xf32>
    %61 = arith.truncf %60 : vector<8x64xf32> to vector<8x64xbf16>
    %c0_83 = arith.constant 0 : index
    %c1_84 = arith.constant 1 : index
    %c0_85 = arith.constant 0 : index
    %c0_86 = arith.constant 0 : index
    %62 = vector.load %arg4[%c0_83, %c1_84, %c0_85, %c0_86] : memref<1x8x8x64xbf16, #tpu.memory_space<vmem>>, vector<1x1x8x64xbf16>
    %63 = vector.shape_cast %62 : vector<1x1x8x64xbf16> to vector<8x64xbf16>
    %64 = vector.shape_cast %61 : vector<8x64xbf16> to vector<1x1x8x64xbf16>
    tpu.vector_store %arg4[%c0_83, %c1_84, %c0_85, %c0_86], %64 {strides = array<i32>} : memref<1x8x8x64xbf16, #tpu.memory_space<vmem>>, vector<1x1x8x64xbf16>,
    %c8_i32_87 = arith.constant 8 : i32
    %65 = arith.muli %arg1, %c8_i32_87 : i32
    %c1_i32 = arith.constant 1 : i32
    %66 = arith.addi %65, %c1_i32 : i32
    %c8_i32_88 = arith.constant 8 : i32
    %67 = arith.cmpi slt, %66, %c8_i32_88 : i32
    %cst_89 = arith.constant dense<0.000000e+00> : vector<64xf32>
    %68 = vector.multi_reduction <add>, %60, %cst_89 [0] : vector<8x64xf32> to vector<64xf32>
    %69 = vector.shape_cast %68 : vector<64xf32> to vector<1x64xf32>
    %cst_90 = arith.constant 0.000000e+00 : f32
    %70 = vector.broadcast %cst_90 : f32 to vector<1x64xf32>
    %71 = arith.select %67, %69, %70 : vector<1x64xf32>
    %72 = arith.addf %34, %71 : vector<1x64xf32>
    %73 = arith.mulf %60, %60 : vector<8x64xf32>
    %cst_91 = arith.constant dense<0.000000e+00> : vector<64xf32>
    %74 = vector.multi_reduction <add>, %73, %cst_91 [0] : vector<8x64xf32> to vector<64xf32>
    %75 = vector.shape_cast %74 : vector<64xf32> to vector<1x64xf32>
    %cst_92 = arith.constant 0.000000e+00 : f32
    %76 = vector.broadcast %cst_92 : f32 to vector<1x64xf32>
    %77 = arith.select %67, %75, %76 : vector<1x64xf32>
    %78 = arith.addf %40, %77 : vector<1x64xf32>
    %c0_93 = arith.constant 0 : index
    %c2_94 = arith.constant 2 : index
    %c0_95 = arith.constant 0 : index
    %c0_96 = arith.constant 0 : index
    %79 = vector.load %arg2[%c0_93, %c2_94, %c0_95, %c0_96] : memref<3x8x10x72xbf16, #tpu.memory_space<vmem>>, vector<1x1x8x72xbf16>
    %80 = vector.shape_cast %79 : vector<1x1x8x72xbf16> to vector<8x72xbf16>
    %c0_97 = arith.constant 0 : index
    %c2_98 = arith.constant 2 : index
    %c1_99 = arith.constant 1 : index
    %c0_100 = arith.constant 0 : index
    %81 = vector.load %arg2[%c0_97, %c2_98, %c1_99, %c0_100] : memref<3x8x10x72xbf16, #tpu.memory_space<vmem>>, vector<1x1x8x72xbf16>
    %82 = vector.shape_cast %81 : vector<1x1x8x72xbf16> to vector<8x72xbf16>
    %c0_101 = arith.constant 0 : index
    %c2_102 = arith.constant 2 : index
    %c2_103 = arith.constant 2 : index
    %c0_104 = arith.constant 0 : index
    %83 = vector.load %arg2[%c0_101, %c2_102, %c2_103, %c0_104] : memref<3x8x10x72xbf16, #tpu.memory_space<vmem>>, vector<1x1x8x72xbf16>
    %84 = vector.shape_cast %83 : vector<1x1x8x72xbf16> to vector<8x72xbf16>
    %c1_105 = arith.constant 1 : index
    %c2_106 = arith.constant 2 : index
    %c0_107 = arith.constant 0 : index
    %c0_108 = arith.constant 0 : index
    %85 = vector.load %arg2[%c1_105, %c2_106, %c0_107, %c0_108] : memref<3x8x10x72xbf16, #tpu.memory_space<vmem>>, vector<1x1x8x72xbf16>
    %86 = vector.shape_cast %85 : vector<1x1x8x72xbf16> to vector<8x72xbf16>
    %c1_109 = arith.constant 1 : index
    %c2_110 = arith.constant 2 : index
    %c1_111 = arith.constant 1 : index
    %c0_112 = arith.constant 0 : index
    %87 = vector.load %arg2[%c1_109, %c2_110, %c1_111, %c0_112] : memref<3x8x10x72xbf16, #tpu.memory_space<vmem>>, vector<1x1x8x72xbf16>
    %88 = vector.shape_cast %87 : vector<1x1x8x72xbf16> to vector<8x72xbf16>
    %c1_113 = arith.constant 1 : index
    %c2_114 = arith.constant 2 : index
    %c2_115 = arith.constant 2 : index
    %c0_116 = arith.constant 0 : index
    %89 = vector.load %arg2[%c1_113, %c2_114, %c2_115, %c0_116] : memref<3x8x10x72xbf16, #tpu.memory_space<vmem>>, vector<1x1x8x72xbf16>
    %90 = vector.shape_cast %89 : vector<1x1x8x72xbf16> to vector<8x72xbf16>
    %c2_117 = arith.constant 2 : index
    %c2_118 = arith.constant 2 : index
    %c0_119 = arith.constant 0 : index
    %c0_120 = arith.constant 0 : index
    %91 = vector.load %arg2[%c2_117, %c2_118, %c0_119, %c0_120] : memref<3x8x10x72xbf16, #tpu.memory_space<vmem>>, vector<1x1x8x72xbf16>
    %92 = vector.shape_cast %91 : vector<1x1x8x72xbf16> to vector<8x72xbf16>
    %c2_121 = arith.constant 2 : index
    %c2_122 = arith.constant 2 : index
    %c1_123 = arith.constant 1 : index
    %c0_124 = arith.constant 0 : index
    %93 = vector.load %arg2[%c2_121, %c2_122, %c1_123, %c0_124] : memref<3x8x10x72xbf16, #tpu.memory_space<vmem>>, vector<1x1x8x72xbf16>
    %94 = vector.shape_cast %93 : vector<1x1x8x72xbf16> to vector<8x72xbf16>
    %c2_125 = arith.constant 2 : index
    %c2_126 = arith.constant 2 : index
    %c2_127 = arith.constant 2 : index
    %c0_128 = arith.constant 0 : index
    %95 = vector.load %arg2[%c2_125, %c2_126, %c2_127, %c0_128] : memref<3x8x10x72xbf16, #tpu.memory_space<vmem>>, vector<1x1x8x72xbf16>
    %96 = vector.shape_cast %95 : vector<1x1x8x72xbf16> to vector<8x72xbf16>
    %97 = tpu.concatenate %80, %82, %84, %86, %88, %90, %92, %94, %96 in 1 : vector<8x72xbf16>, vector<8x72xbf16>, vector<8x72xbf16>, vector<8x72xbf16>, vector<8x72xbf16>, vector<8x72xbf16>, vector<8x72xbf16>, vector<8x72xbf16>, vector<8x72xbf16> -> vector<8x648xbf16>
    %cst_129 = arith.constant dense<0.000000e+00> : vector<8x64xf32>
    %98 = tpu.matmul %97, %0, %cst_129 {dimension_numbers = #tpu.dot_dimension_numbers<[1], [0], [0], [1], [0, 0, 1, 1], [], []>} : vector<8x648xbf16>, vector<648x64xbf16>, vector<8x64xf32> -> vector<8x64xf32>
    %99 = arith.truncf %98 : vector<8x64xf32> to vector<8x64xbf16>
    %c0_130 = arith.constant 0 : index
    %c2_131 = arith.constant 2 : index
    %c0_132 = arith.constant 0 : index
    %c0_133 = arith.constant 0 : index
    %100 = vector.load %arg4[%c0_130, %c2_131, %c0_132, %c0_133] : memref<1x8x8x64xbf16, #tpu.memory_space<vmem>>, vector<1x1x8x64xbf16>
    %101 = vector.shape_cast %100 : vector<1x1x8x64xbf16> to vector<8x64xbf16>
    %102 = vector.shape_cast %99 : vector<8x64xbf16> to vector<1x1x8x64xbf16>
    tpu.vector_store %arg4[%c0_130, %c2_131, %c0_132, %c0_133], %102 {strides = array<i32>} : memref<1x8x8x64xbf16, #tpu.memory_space<vmem>>, vector<1x1x8x64xbf16>,
    %c8_i32_134 = arith.constant 8 : i32
    %103 = arith.muli %arg1, %c8_i32_134 : i32
    %c2_i32 = arith.constant 2 : i32
    %104 = arith.addi %103, %c2_i32 : i32
    %c8_i32_135 = arith.constant 8 : i32
    %105 = arith.cmpi slt, %104, %c8_i32_135 : i32
    %cst_136 = arith.constant dense<0.000000e+00> : vector<64xf32>
    %106 = vector.multi_reduction <add>, %98, %cst_136 [0] : vector<8x64xf32> to vector<64xf32>
    %107 = vector.shape_cast %106 : vector<64xf32> to vector<1x64xf32>
    %cst_137 = arith.constant 0.000000e+00 : f32
    %108 = vector.broadcast %cst_137 : f32 to vector<1x64xf32>
    %109 = arith.select %105, %107, %108 : vector<1x64xf32>
    %110 = arith.addf %72, %109 : vector<1x64xf32>
    %111 = arith.mulf %98, %98 : vector<8x64xf32>
    %cst_138 = arith.constant dense<0.000000e+00> : vector<64xf32>
    %112 = vector.multi_reduction <add>, %111, %cst_138 [0] : vector<8x64xf32> to vector<64xf32>
    %113 = vector.shape_cast %112 : vector<64xf32> to vector<1x64xf32>
    %cst_139 = arith.constant 0.000000e+00 : f32
    %114 = vector.broadcast %cst_139 : f32 to vector<1x64xf32>
    %115 = arith.select %105, %113, %114 : vector<1x64xf32>
    %116 = arith.addf %78, %115 : vector<1x64xf32>
    %c0_140 = arith.constant 0 : index
    %c3 = arith.constant 3 : index
    %c0_141 = arith.constant 0 : index
    %c0_142 = arith.constant 0 : index
    %117 = vector.load %arg2[%c0_140, %c3, %c0_141, %c0_142] : memref<3x8x10x72xbf16, #tpu.memory_space<vmem>>, vector<1x1x8x72xbf16>
    %118 = vector.shape_cast %117 : vector<1x1x8x72xbf16> to vector<8x72xbf16>
    %c0_143 = arith.constant 0 : index
    %c3_144 = arith.constant 3 : index
    %c1_145 = arith.constant 1 : index
    %c0_146 = arith.constant 0 : index
    %119 = vector.load %arg2[%c0_143, %c3_144, %c1_145, %c0_146] : memref<3x8x10x72xbf16, #tpu.memory_space<vmem>>, vector<1x1x8x72xbf16>
    %120 = vector.shape_cast %119 : vector<1x1x8x72xbf16> to vector<8x72xbf16>
    %c0_147 = arith.constant 0 : index
    %c3_148 = arith.constant 3 : index
    %c2_149 = arith.constant 2 : index
    %c0_150 = arith.constant 0 : index
    %121 = vector.load %arg2[%c0_147, %c3_148, %c2_149, %c0_150] : memref<3x8x10x72xbf16, #tpu.memory_space<vmem>>, vector<1x1x8x72xbf16>
    %122 = vector.shape_cast %121 : vector<1x1x8x72xbf16> to vector<8x72xbf16>
    %c1_151 = arith.constant 1 : index
    %c3_152 = arith.constant 3 : index
    %c0_153 = arith.constant 0 : index
    %c0_154 = arith.constant 0 : index
    %123 = vector.load %arg2[%c1_151, %c3_152, %c0_153, %c0_154] : memref<3x8x10x72xbf16, #tpu.memory_space<vmem>>, vector<1x1x8x72xbf16>
    %124 = vector.shape_cast %123 : vector<1x1x8x72xbf16> to vector<8x72xbf16>
    %c1_155 = arith.constant 1 : index
    %c3_156 = arith.constant 3 : index
    %c1_157 = arith.constant 1 : index
    %c0_158 = arith.constant 0 : index
    %125 = vector.load %arg2[%c1_155, %c3_156, %c1_157, %c0_158] : memref<3x8x10x72xbf16, #tpu.memory_space<vmem>>, vector<1x1x8x72xbf16>
    %126 = vector.shape_cast %125 : vector<1x1x8x72xbf16> to vector<8x72xbf16>
    %c1_159 = arith.constant 1 : index
    %c3_160 = arith.constant 3 : index
    %c2_161 = arith.constant 2 : index
    %c0_162 = arith.constant 0 : index
    %127 = vector.load %arg2[%c1_159, %c3_160, %c2_161, %c0_162] : memref<3x8x10x72xbf16, #tpu.memory_space<vmem>>, vector<1x1x8x72xbf16>
    %128 = vector.shape_cast %127 : vector<1x1x8x72xbf16> to vector<8x72xbf16>
    %c2_163 = arith.constant 2 : index
    %c3_164 = arith.constant 3 : index
    %c0_165 = arith.constant 0 : index
    %c0_166 = arith.constant 0 : index
    %129 = vector.load %arg2[%c2_163, %c3_164, %c0_165, %c0_166] : memref<3x8x10x72xbf16, #tpu.memory_space<vmem>>, vector<1x1x8x72xbf16>
    %130 = vector.shape_cast %129 : vector<1x1x8x72xbf16> to vector<8x72xbf16>
    %c2_167 = arith.constant 2 : index
    %c3_168 = arith.constant 3 : index
    %c1_169 = arith.constant 1 : index
    %c0_170 = arith.constant 0 : index
    %131 = vector.load %arg2[%c2_167, %c3_168, %c1_169, %c0_170] : memref<3x8x10x72xbf16, #tpu.memory_space<vmem>>, vector<1x1x8x72xbf16>
    %132 = vector.shape_cast %131 : vector<1x1x8x72xbf16> to vector<8x72xbf16>
    %c2_171 = arith.constant 2 : index
    %c3_172 = arith.constant 3 : index
    %c2_173 = arith.constant 2 : index
    %c0_174 = arith.constant 0 : index
    %133 = vector.load %arg2[%c2_171, %c3_172, %c2_173, %c0_174] : memref<3x8x10x72xbf16, #tpu.memory_space<vmem>>, vector<1x1x8x72xbf16>
    %134 = vector.shape_cast %133 : vector<1x1x8x72xbf16> to vector<8x72xbf16>
    %135 = tpu.concatenate %118, %120, %122, %124, %126, %128, %130, %132, %134 in 1 : vector<8x72xbf16>, vector<8x72xbf16>, vector<8x72xbf16>, vector<8x72xbf16>, vector<8x72xbf16>, vector<8x72xbf16>, vector<8x72xbf16>, vector<8x72xbf16>, vector<8x72xbf16> -> vector<8x648xbf16>
    %cst_175 = arith.constant dense<0.000000e+00> : vector<8x64xf32>
    %136 = tpu.matmul %135, %0, %cst_175 {dimension_numbers = #tpu.dot_dimension_numbers<[1], [0], [0], [1], [0, 0, 1, 1], [], []>} : vector<8x648xbf16>, vector<648x64xbf16>, vector<8x64xf32> -> vector<8x64xf32>
    %137 = arith.truncf %136 : vector<8x64xf32> to vector<8x64xbf16>
    %c0_176 = arith.constant 0 : index
    %c3_177 = arith.constant 3 : index
    %c0_178 = arith.constant 0 : index
    %c0_179 = arith.constant 0 : index
    %138 = vector.load %arg4[%c0_176, %c3_177, %c0_178, %c0_179] : memref<1x8x8x64xbf16, #tpu.memory_space<vmem>>, vector<1x1x8x64xbf16>
    %139 = vector.shape_cast %138 : vector<1x1x8x64xbf16> to vector<8x64xbf16>
    %140 = vector.shape_cast %137 : vector<8x64xbf16> to vector<1x1x8x64xbf16>
    tpu.vector_store %arg4[%c0_176, %c3_177, %c0_178, %c0_179], %140 {strides = array<i32>} : memref<1x8x8x64xbf16, #tpu.memory_space<vmem>>, vector<1x1x8x64xbf16>,
    %c8_i32_180 = arith.constant 8 : i32
    %141 = arith.muli %arg1, %c8_i32_180 : i32
    %c3_i32 = arith.constant 3 : i32
    %142 = arith.addi %141, %c3_i32 : i32
    %c8_i32_181 = arith.constant 8 : i32
    %143 = arith.cmpi slt, %142, %c8_i32_181 : i32
    %cst_182 = arith.constant dense<0.000000e+00> : vector<64xf32>
    %144 = vector.multi_reduction <add>, %136, %cst_182 [0] : vector<8x64xf32> to vector<64xf32>
    %145 = vector.shape_cast %144 : vector<64xf32> to vector<1x64xf32>
    %cst_183 = arith.constant 0.000000e+00 : f32
    %146 = vector.broadcast %cst_183 : f32 to vector<1x64xf32>
    %147 = arith.select %143, %145, %146 : vector<1x64xf32>
    %148 = arith.addf %110, %147 : vector<1x64xf32>
    %149 = arith.mulf %136, %136 : vector<8x64xf32>
    %cst_184 = arith.constant dense<0.000000e+00> : vector<64xf32>
    %150 = vector.multi_reduction <add>, %149, %cst_184 [0] : vector<8x64xf32> to vector<64xf32>
    %151 = vector.shape_cast %150 : vector<64xf32> to vector<1x64xf32>
    %cst_185 = arith.constant 0.000000e+00 : f32
    %152 = vector.broadcast %cst_185 : f32 to vector<1x64xf32>
    %153 = arith.select %143, %151, %152 : vector<1x64xf32>
    %154 = arith.addf %116, %153 : vector<1x64xf32>
    %c0_186 = arith.constant 0 : index
    %c4 = arith.constant 4 : index
    %c0_187 = arith.constant 0 : index
    %c0_188 = arith.constant 0 : index
    %155 = vector.load %arg2[%c0_186, %c4, %c0_187, %c0_188] : memref<3x8x10x72xbf16, #tpu.memory_space<vmem>>, vector<1x1x8x72xbf16>
    %156 = vector.shape_cast %155 : vector<1x1x8x72xbf16> to vector<8x72xbf16>
    %c0_189 = arith.constant 0 : index
    %c4_190 = arith.constant 4 : index
    %c1_191 = arith.constant 1 : index
    %c0_192 = arith.constant 0 : index
    %157 = vector.load %arg2[%c0_189, %c4_190, %c1_191, %c0_192] : memref<3x8x10x72xbf16, #tpu.memory_space<vmem>>, vector<1x1x8x72xbf16>
    %158 = vector.shape_cast %157 : vector<1x1x8x72xbf16> to vector<8x72xbf16>
    %c0_193 = arith.constant 0 : index
    %c4_194 = arith.constant 4 : index
    %c2_195 = arith.constant 2 : index
    %c0_196 = arith.constant 0 : index
    %159 = vector.load %arg2[%c0_193, %c4_194, %c2_195, %c0_196] : memref<3x8x10x72xbf16, #tpu.memory_space<vmem>>, vector<1x1x8x72xbf16>
    %160 = vector.shape_cast %159 : vector<1x1x8x72xbf16> to vector<8x72xbf16>
    %c1_197 = arith.constant 1 : index
    %c4_198 = arith.constant 4 : index
    %c0_199 = arith.constant 0 : index
    %c0_200 = arith.constant 0 : index
    %161 = vector.load %arg2[%c1_197, %c4_198, %c0_199, %c0_200] : memref<3x8x10x72xbf16, #tpu.memory_space<vmem>>, vector<1x1x8x72xbf16>
    %162 = vector.shape_cast %161 : vector<1x1x8x72xbf16> to vector<8x72xbf16>
    %c1_201 = arith.constant 1 : index
    %c4_202 = arith.constant 4 : index
    %c1_203 = arith.constant 1 : index
    %c0_204 = arith.constant 0 : index
    %163 = vector.load %arg2[%c1_201, %c4_202, %c1_203, %c0_204] : memref<3x8x10x72xbf16, #tpu.memory_space<vmem>>, vector<1x1x8x72xbf16>
    %164 = vector.shape_cast %163 : vector<1x1x8x72xbf16> to vector<8x72xbf16>
    %c1_205 = arith.constant 1 : index
    %c4_206 = arith.constant 4 : index
    %c2_207 = arith.constant 2 : index
    %c0_208 = arith.constant 0 : index
    %165 = vector.load %arg2[%c1_205, %c4_206, %c2_207, %c0_208] : memref<3x8x10x72xbf16, #tpu.memory_space<vmem>>, vector<1x1x8x72xbf16>
    %166 = vector.shape_cast %165 : vector<1x1x8x72xbf16> to vector<8x72xbf16>
    %c2_209 = arith.constant 2 : index
    %c4_210 = arith.constant 4 : index
    %c0_211 = arith.constant 0 : index
    %c0_212 = arith.constant 0 : index
    %167 = vector.load %arg2[%c2_209, %c4_210, %c0_211, %c0_212] : memref<3x8x10x72xbf16, #tpu.memory_space<vmem>>, vector<1x1x8x72xbf16>
    %168 = vector.shape_cast %167 : vector<1x1x8x72xbf16> to vector<8x72xbf16>
    %c2_213 = arith.constant 2 : index
    %c4_214 = arith.constant 4 : index
    %c1_215 = arith.constant 1 : index
    %c0_216 = arith.constant 0 : index
    %169 = vector.load %arg2[%c2_213, %c4_214, %c1_215, %c0_216] : memref<3x8x10x72xbf16, #tpu.memory_space<vmem>>, vector<1x1x8x72xbf16>
    %170 = vector.shape_cast %169 : vector<1x1x8x72xbf16> to vector<8x72xbf16>
    %c2_217 = arith.constant 2 : index
    %c4_218 = arith.constant 4 : index
    %c2_219 = arith.constant 2 : index
    %c0_220 = arith.constant 0 : index
    %171 = vector.load %arg2[%c2_217, %c4_218, %c2_219, %c0_220] : memref<3x8x10x72xbf16, #tpu.memory_space<vmem>>, vector<1x1x8x72xbf16>
    %172 = vector.shape_cast %171 : vector<1x1x8x72xbf16> to vector<8x72xbf16>
    %173 = tpu.concatenate %156, %158, %160, %162, %164, %166, %168, %170, %172 in 1 : vector<8x72xbf16>, vector<8x72xbf16>, vector<8x72xbf16>, vector<8x72xbf16>, vector<8x72xbf16>, vector<8x72xbf16>, vector<8x72xbf16>, vector<8x72xbf16>, vector<8x72xbf16> -> vector<8x648xbf16>
    %cst_221 = arith.constant dense<0.000000e+00> : vector<8x64xf32>
    %174 = tpu.matmul %173, %0, %cst_221 {dimension_numbers = #tpu.dot_dimension_numbers<[1], [0], [0], [1], [0, 0, 1, 1], [], []>} : vector<8x648xbf16>, vector<648x64xbf16>, vector<8x64xf32> -> vector<8x64xf32>
    %175 = arith.truncf %174 : vector<8x64xf32> to vector<8x64xbf16>
    %c0_222 = arith.constant 0 : index
    %c4_223 = arith.constant 4 : index
    %c0_224 = arith.constant 0 : index
    %c0_225 = arith.constant 0 : index
    %176 = vector.load %arg4[%c0_222, %c4_223, %c0_224, %c0_225] : memref<1x8x8x64xbf16, #tpu.memory_space<vmem>>, vector<1x1x8x64xbf16>
    %177 = vector.shape_cast %176 : vector<1x1x8x64xbf16> to vector<8x64xbf16>
    %178 = vector.shape_cast %175 : vector<8x64xbf16> to vector<1x1x8x64xbf16>
    tpu.vector_store %arg4[%c0_222, %c4_223, %c0_224, %c0_225], %178 {strides = array<i32>} : memref<1x8x8x64xbf16, #tpu.memory_space<vmem>>, vector<1x1x8x64xbf16>,
    %c8_i32_226 = arith.constant 8 : i32
    %179 = arith.muli %arg1, %c8_i32_226 : i32
    %c4_i32 = arith.constant 4 : i32
    %180 = arith.addi %179, %c4_i32 : i32
    %c8_i32_227 = arith.constant 8 : i32
    %181 = arith.cmpi slt, %180, %c8_i32_227 : i32
    %cst_228 = arith.constant dense<0.000000e+00> : vector<64xf32>
    %182 = vector.multi_reduction <add>, %174, %cst_228 [0] : vector<8x64xf32> to vector<64xf32>
    %183 = vector.shape_cast %182 : vector<64xf32> to vector<1x64xf32>
    %cst_229 = arith.constant 0.000000e+00 : f32
    %184 = vector.broadcast %cst_229 : f32 to vector<1x64xf32>
    %185 = arith.select %181, %183, %184 : vector<1x64xf32>
    %186 = arith.addf %148, %185 : vector<1x64xf32>
    %187 = arith.mulf %174, %174 : vector<8x64xf32>
    %cst_230 = arith.constant dense<0.000000e+00> : vector<64xf32>
    %188 = vector.multi_reduction <add>, %187, %cst_230 [0] : vector<8x64xf32> to vector<64xf32>
    %189 = vector.shape_cast %188 : vector<64xf32> to vector<1x64xf32>
    %cst_231 = arith.constant 0.000000e+00 : f32
    %190 = vector.broadcast %cst_231 : f32 to vector<1x64xf32>
    %191 = arith.select %181, %189, %190 : vector<1x64xf32>
    %192 = arith.addf %154, %191 : vector<1x64xf32>
    %c0_232 = arith.constant 0 : index
    %c5 = arith.constant 5 : index
    %c0_233 = arith.constant 0 : index
    %c0_234 = arith.constant 0 : index
    %193 = vector.load %arg2[%c0_232, %c5, %c0_233, %c0_234] : memref<3x8x10x72xbf16, #tpu.memory_space<vmem>>, vector<1x1x8x72xbf16>
    %194 = vector.shape_cast %193 : vector<1x1x8x72xbf16> to vector<8x72xbf16>
    %c0_235 = arith.constant 0 : index
    %c5_236 = arith.constant 5 : index
    %c1_237 = arith.constant 1 : index
    %c0_238 = arith.constant 0 : index
    %195 = vector.load %arg2[%c0_235, %c5_236, %c1_237, %c0_238] : memref<3x8x10x72xbf16, #tpu.memory_space<vmem>>, vector<1x1x8x72xbf16>
    %196 = vector.shape_cast %195 : vector<1x1x8x72xbf16> to vector<8x72xbf16>
    %c0_239 = arith.constant 0 : index
    %c5_240 = arith.constant 5 : index
    %c2_241 = arith.constant 2 : index
    %c0_242 = arith.constant 0 : index
    %197 = vector.load %arg2[%c0_239, %c5_240, %c2_241, %c0_242] : memref<3x8x10x72xbf16, #tpu.memory_space<vmem>>, vector<1x1x8x72xbf16>
    %198 = vector.shape_cast %197 : vector<1x1x8x72xbf16> to vector<8x72xbf16>
    %c1_243 = arith.constant 1 : index
    %c5_244 = arith.constant 5 : index
    %c0_245 = arith.constant 0 : index
    %c0_246 = arith.constant 0 : index
    %199 = vector.load %arg2[%c1_243, %c5_244, %c0_245, %c0_246] : memref<3x8x10x72xbf16, #tpu.memory_space<vmem>>, vector<1x1x8x72xbf16>
    %200 = vector.shape_cast %199 : vector<1x1x8x72xbf16> to vector<8x72xbf16>
    %c1_247 = arith.constant 1 : index
    %c5_248 = arith.constant 5 : index
    %c1_249 = arith.constant 1 : index
    %c0_250 = arith.constant 0 : index
    %201 = vector.load %arg2[%c1_247, %c5_248, %c1_249, %c0_250] : memref<3x8x10x72xbf16, #tpu.memory_space<vmem>>, vector<1x1x8x72xbf16>
    %202 = vector.shape_cast %201 : vector<1x1x8x72xbf16> to vector<8x72xbf16>
    %c1_251 = arith.constant 1 : index
    %c5_252 = arith.constant 5 : index
    %c2_253 = arith.constant 2 : index
    %c0_254 = arith.constant 0 : index
    %203 = vector.load %arg2[%c1_251, %c5_252, %c2_253, %c0_254] : memref<3x8x10x72xbf16, #tpu.memory_space<vmem>>, vector<1x1x8x72xbf16>
    %204 = vector.shape_cast %203 : vector<1x1x8x72xbf16> to vector<8x72xbf16>
    %c2_255 = arith.constant 2 : index
    %c5_256 = arith.constant 5 : index
    %c0_257 = arith.constant 0 : index
    %c0_258 = arith.constant 0 : index
    %205 = vector.load %arg2[%c2_255, %c5_256, %c0_257, %c0_258] : memref<3x8x10x72xbf16, #tpu.memory_space<vmem>>, vector<1x1x8x72xbf16>
    %206 = vector.shape_cast %205 : vector<1x1x8x72xbf16> to vector<8x72xbf16>
    %c2_259 = arith.constant 2 : index
    %c5_260 = arith.constant 5 : index
    %c1_261 = arith.constant 1 : index
    %c0_262 = arith.constant 0 : index
    %207 = vector.load %arg2[%c2_259, %c5_260, %c1_261, %c0_262] : memref<3x8x10x72xbf16, #tpu.memory_space<vmem>>, vector<1x1x8x72xbf16>
    %208 = vector.shape_cast %207 : vector<1x1x8x72xbf16> to vector<8x72xbf16>
    %c2_263 = arith.constant 2 : index
    %c5_264 = arith.constant 5 : index
    %c2_265 = arith.constant 2 : index
    %c0_266 = arith.constant 0 : index
    %209 = vector.load %arg2[%c2_263, %c5_264, %c2_265, %c0_266] : memref<3x8x10x72xbf16, #tpu.memory_space<vmem>>, vector<1x1x8x72xbf16>
    %210 = vector.shape_cast %209 : vector<1x1x8x72xbf16> to vector<8x72xbf16>
    %211 = tpu.concatenate %194, %196, %198, %200, %202, %204, %206, %208, %210 in 1 : vector<8x72xbf16>, vector<8x72xbf16>, vector<8x72xbf16>, vector<8x72xbf16>, vector<8x72xbf16>, vector<8x72xbf16>, vector<8x72xbf16>, vector<8x72xbf16>, vector<8x72xbf16> -> vector<8x648xbf16>
    %cst_267 = arith.constant dense<0.000000e+00> : vector<8x64xf32>
    %212 = tpu.matmul %211, %0, %cst_267 {dimension_numbers = #tpu.dot_dimension_numbers<[1], [0], [0], [1], [0, 0, 1, 1], [], []>} : vector<8x648xbf16>, vector<648x64xbf16>, vector<8x64xf32> -> vector<8x64xf32>
    %213 = arith.truncf %212 : vector<8x64xf32> to vector<8x64xbf16>
    %c0_268 = arith.constant 0 : index
    %c5_269 = arith.constant 5 : index
    %c0_270 = arith.constant 0 : index
    %c0_271 = arith.constant 0 : index
    %214 = vector.load %arg4[%c0_268, %c5_269, %c0_270, %c0_271] : memref<1x8x8x64xbf16, #tpu.memory_space<vmem>>, vector<1x1x8x64xbf16>
    %215 = vector.shape_cast %214 : vector<1x1x8x64xbf16> to vector<8x64xbf16>
    %216 = vector.shape_cast %213 : vector<8x64xbf16> to vector<1x1x8x64xbf16>
    tpu.vector_store %arg4[%c0_268, %c5_269, %c0_270, %c0_271], %216 {strides = array<i32>} : memref<1x8x8x64xbf16, #tpu.memory_space<vmem>>, vector<1x1x8x64xbf16>,
    %c8_i32_272 = arith.constant 8 : i32
    %217 = arith.muli %arg1, %c8_i32_272 : i32
    %c5_i32 = arith.constant 5 : i32
    %218 = arith.addi %217, %c5_i32 : i32
    %c8_i32_273 = arith.constant 8 : i32
    %219 = arith.cmpi slt, %218, %c8_i32_273 : i32
    %cst_274 = arith.constant dense<0.000000e+00> : vector<64xf32>
    %220 = vector.multi_reduction <add>, %212, %cst_274 [0] : vector<8x64xf32> to vector<64xf32>
    %221 = vector.shape_cast %220 : vector<64xf32> to vector<1x64xf32>
    %cst_275 = arith.constant 0.000000e+00 : f32
    %222 = vector.broadcast %cst_275 : f32 to vector<1x64xf32>
    %223 = arith.select %219, %221, %222 : vector<1x64xf32>
    %224 = arith.addf %186, %223 : vector<1x64xf32>
    %225 = arith.mulf %212, %212 : vector<8x64xf32>
    %cst_276 = arith.constant dense<0.000000e+00> : vector<64xf32>
    %226 = vector.multi_reduction <add>, %225, %cst_276 [0] : vector<8x64xf32> to vector<64xf32>
    %227 = vector.shape_cast %226 : vector<64xf32> to vector<1x64xf32>
    %cst_277 = arith.constant 0.000000e+00 : f32
    %228 = vector.broadcast %cst_277 : f32 to vector<1x64xf32>
    %229 = arith.select %219, %227, %228 : vector<1x64xf32>
    %230 = arith.addf %192, %229 : vector<1x64xf32>
    %c0_278 = arith.constant 0 : index
    %c6 = arith.constant 6 : index
    %c0_279 = arith.constant 0 : index
    %c0_280 = arith.constant 0 : index
    %231 = vector.load %arg2[%c0_278, %c6, %c0_279, %c0_280] : memref<3x8x10x72xbf16, #tpu.memory_space<vmem>>, vector<1x1x8x72xbf16>
    %232 = vector.shape_cast %231 : vector<1x1x8x72xbf16> to vector<8x72xbf16>
    %c0_281 = arith.constant 0 : index
    %c6_282 = arith.constant 6 : index
    %c1_283 = arith.constant 1 : index
    %c0_284 = arith.constant 0 : index
    %233 = vector.load %arg2[%c0_281, %c6_282, %c1_283, %c0_284] : memref<3x8x10x72xbf16, #tpu.memory_space<vmem>>, vector<1x1x8x72xbf16>
    %234 = vector.shape_cast %233 : vector<1x1x8x72xbf16> to vector<8x72xbf16>
    %c0_285 = arith.constant 0 : index
    %c6_286 = arith.constant 6 : index
    %c2_287 = arith.constant 2 : index
    %c0_288 = arith.constant 0 : index
    %235 = vector.load %arg2[%c0_285, %c6_286, %c2_287, %c0_288] : memref<3x8x10x72xbf16, #tpu.memory_space<vmem>>, vector<1x1x8x72xbf16>
    %236 = vector.shape_cast %235 : vector<1x1x8x72xbf16> to vector<8x72xbf16>
    %c1_289 = arith.constant 1 : index
    %c6_290 = arith.constant 6 : index
    %c0_291 = arith.constant 0 : index
    %c0_292 = arith.constant 0 : index
    %237 = vector.load %arg2[%c1_289, %c6_290, %c0_291, %c0_292] : memref<3x8x10x72xbf16, #tpu.memory_space<vmem>>, vector<1x1x8x72xbf16>
    %238 = vector.shape_cast %237 : vector<1x1x8x72xbf16> to vector<8x72xbf16>
    %c1_293 = arith.constant 1 : index
    %c6_294 = arith.constant 6 : index
    %c1_295 = arith.constant 1 : index
    %c0_296 = arith.constant 0 : index
    %239 = vector.load %arg2[%c1_293, %c6_294, %c1_295, %c0_296] : memref<3x8x10x72xbf16, #tpu.memory_space<vmem>>, vector<1x1x8x72xbf16>
    %240 = vector.shape_cast %239 : vector<1x1x8x72xbf16> to vector<8x72xbf16>
    %c1_297 = arith.constant 1 : index
    %c6_298 = arith.constant 6 : index
    %c2_299 = arith.constant 2 : index
    %c0_300 = arith.constant 0 : index
    %241 = vector.load %arg2[%c1_297, %c6_298, %c2_299, %c0_300] : memref<3x8x10x72xbf16, #tpu.memory_space<vmem>>, vector<1x1x8x72xbf16>
    %242 = vector.shape_cast %241 : vector<1x1x8x72xbf16> to vector<8x72xbf16>
    %c2_301 = arith.constant 2 : index
    %c6_302 = arith.constant 6 : index
    %c0_303 = arith.constant 0 : index
    %c0_304 = arith.constant 0 : index
    %243 = vector.load %arg2[%c2_301, %c6_302, %c0_303, %c0_304] : memref<3x8x10x72xbf16, #tpu.memory_space<vmem>>, vector<1x1x8x72xbf16>
    %244 = vector.shape_cast %243 : vector<1x1x8x72xbf16> to vector<8x72xbf16>
    %c2_305 = arith.constant 2 : index
    %c6_306 = arith.constant 6 : index
    %c1_307 = arith.constant 1 : index
    %c0_308 = arith.constant 0 : index
    %245 = vector.load %arg2[%c2_305, %c6_306, %c1_307, %c0_308] : memref<3x8x10x72xbf16, #tpu.memory_space<vmem>>, vector<1x1x8x72xbf16>
    %246 = vector.shape_cast %245 : vector<1x1x8x72xbf16> to vector<8x72xbf16>
    %c2_309 = arith.constant 2 : index
    %c6_310 = arith.constant 6 : index
    %c2_311 = arith.constant 2 : index
    %c0_312 = arith.constant 0 : index
    %247 = vector.load %arg2[%c2_309, %c6_310, %c2_311, %c0_312] : memref<3x8x10x72xbf16, #tpu.memory_space<vmem>>, vector<1x1x8x72xbf16>
    %248 = vector.shape_cast %247 : vector<1x1x8x72xbf16> to vector<8x72xbf16>
    %249 = tpu.concatenate %232, %234, %236, %238, %240, %242, %244, %246, %248 in 1 : vector<8x72xbf16>, vector<8x72xbf16>, vector<8x72xbf16>, vector<8x72xbf16>, vector<8x72xbf16>, vector<8x72xbf16>, vector<8x72xbf16>, vector<8x72xbf16>, vector<8x72xbf16> -> vector<8x648xbf16>
    %cst_313 = arith.constant dense<0.000000e+00> : vector<8x64xf32>
    %250 = tpu.matmul %249, %0, %cst_313 {dimension_numbers = #tpu.dot_dimension_numbers<[1], [0], [0], [1], [0, 0, 1, 1], [], []>} : vector<8x648xbf16>, vector<648x64xbf16>, vector<8x64xf32> -> vector<8x64xf32>
    %251 = arith.truncf %250 : vector<8x64xf32> to vector<8x64xbf16>
    %c0_314 = arith.constant 0 : index
    %c6_315 = arith.constant 6 : index
    %c0_316 = arith.constant 0 : index
    %c0_317 = arith.constant 0 : index
    %252 = vector.load %arg4[%c0_314, %c6_315, %c0_316, %c0_317] : memref<1x8x8x64xbf16, #tpu.memory_space<vmem>>, vector<1x1x8x64xbf16>
    %253 = vector.shape_cast %252 : vector<1x1x8x64xbf16> to vector<8x64xbf16>
    %254 = vector.shape_cast %251 : vector<8x64xbf16> to vector<1x1x8x64xbf16>
    tpu.vector_store %arg4[%c0_314, %c6_315, %c0_316, %c0_317], %254 {strides = array<i32>} : memref<1x8x8x64xbf16, #tpu.memory_space<vmem>>, vector<1x1x8x64xbf16>,
    %c8_i32_318 = arith.constant 8 : i32
    %255 = arith.muli %arg1, %c8_i32_318 : i32
    %c6_i32 = arith.constant 6 : i32
    %256 = arith.addi %255, %c6_i32 : i32
    %c8_i32_319 = arith.constant 8 : i32
    %257 = arith.cmpi slt, %256, %c8_i32_319 : i32
    %cst_320 = arith.constant dense<0.000000e+00> : vector<64xf32>
    %258 = vector.multi_reduction <add>, %250, %cst_320 [0] : vector<8x64xf32> to vector<64xf32>
    %259 = vector.shape_cast %258 : vector<64xf32> to vector<1x64xf32>
    %cst_321 = arith.constant 0.000000e+00 : f32
    %260 = vector.broadcast %cst_321 : f32 to vector<1x64xf32>
    %261 = arith.select %257, %259, %260 : vector<1x64xf32>
    %262 = arith.addf %224, %261 : vector<1x64xf32>
    %263 = arith.mulf %250, %250 : vector<8x64xf32>
    %cst_322 = arith.constant dense<0.000000e+00> : vector<64xf32>
    %264 = vector.multi_reduction <add>, %263, %cst_322 [0] : vector<8x64xf32> to vector<64xf32>
    %265 = vector.shape_cast %264 : vector<64xf32> to vector<1x64xf32>
    %cst_323 = arith.constant 0.000000e+00 : f32
    %266 = vector.broadcast %cst_323 : f32 to vector<1x64xf32>
    %267 = arith.select %257, %265, %266 : vector<1x64xf32>
    %268 = arith.addf %230, %267 : vector<1x64xf32>
    %c0_324 = arith.constant 0 : index
    %c7 = arith.constant 7 : index
    %c0_325 = arith.constant 0 : index
    %c0_326 = arith.constant 0 : index
    %269 = vector.load %arg2[%c0_324, %c7, %c0_325, %c0_326] : memref<3x8x10x72xbf16, #tpu.memory_space<vmem>>, vector<1x1x8x72xbf16>
    %270 = vector.shape_cast %269 : vector<1x1x8x72xbf16> to vector<8x72xbf16>
    %c0_327 = arith.constant 0 : index
    %c7_328 = arith.constant 7 : index
    %c1_329 = arith.constant 1 : index
    %c0_330 = arith.constant 0 : index
    %271 = vector.load %arg2[%c0_327, %c7_328, %c1_329, %c0_330] : memref<3x8x10x72xbf16, #tpu.memory_space<vmem>>, vector<1x1x8x72xbf16>
    %272 = vector.shape_cast %271 : vector<1x1x8x72xbf16> to vector<8x72xbf16>
    %c0_331 = arith.constant 0 : index
    %c7_332 = arith.constant 7 : index
    %c2_333 = arith.constant 2 : index
    %c0_334 = arith.constant 0 : index
    %273 = vector.load %arg2[%c0_331, %c7_332, %c2_333, %c0_334] : memref<3x8x10x72xbf16, #tpu.memory_space<vmem>>, vector<1x1x8x72xbf16>
    %274 = vector.shape_cast %273 : vector<1x1x8x72xbf16> to vector<8x72xbf16>
    %c1_335 = arith.constant 1 : index
    %c7_336 = arith.constant 7 : index
    %c0_337 = arith.constant 0 : index
    %c0_338 = arith.constant 0 : index
    %275 = vector.load %arg2[%c1_335, %c7_336, %c0_337, %c0_338] : memref<3x8x10x72xbf16, #tpu.memory_space<vmem>>, vector<1x1x8x72xbf16>
    %276 = vector.shape_cast %275 : vector<1x1x8x72xbf16> to vector<8x72xbf16>
    %c1_339 = arith.constant 1 : index
    %c7_340 = arith.constant 7 : index
    %c1_341 = arith.constant 1 : index
    %c0_342 = arith.constant 0 : index
    %277 = vector.load %arg2[%c1_339, %c7_340, %c1_341, %c0_342] : memref<3x8x10x72xbf16, #tpu.memory_space<vmem>>, vector<1x1x8x72xbf16>
    %278 = vector.shape_cast %277 : vector<1x1x8x72xbf16> to vector<8x72xbf16>
    %c1_343 = arith.constant 1 : index
    %c7_344 = arith.constant 7 : index
    %c2_345 = arith.constant 2 : index
    %c0_346 = arith.constant 0 : index
    %279 = vector.load %arg2[%c1_343, %c7_344, %c2_345, %c0_346] : memref<3x8x10x72xbf16, #tpu.memory_space<vmem>>, vector<1x1x8x72xbf16>
    %280 = vector.shape_cast %279 : vector<1x1x8x72xbf16> to vector<8x72xbf16>
    %c2_347 = arith.constant 2 : index
    %c7_348 = arith.constant 7 : index
    %c0_349 = arith.constant 0 : index
    %c0_350 = arith.constant 0 : index
    %281 = vector.load %arg2[%c2_347, %c7_348, %c0_349, %c0_350] : memref<3x8x10x72xbf16, #tpu.memory_space<vmem>>, vector<1x1x8x72xbf16>
    %282 = vector.shape_cast %281 : vector<1x1x8x72xbf16> to vector<8x72xbf16>
    %c2_351 = arith.constant 2 : index
    %c7_352 = arith.constant 7 : index
    %c1_353 = arith.constant 1 : index
    %c0_354 = arith.constant 0 : index
    %283 = vector.load %arg2[%c2_351, %c7_352, %c1_353, %c0_354] : memref<3x8x10x72xbf16, #tpu.memory_space<vmem>>, vector<1x1x8x72xbf16>
    %284 = vector.shape_cast %283 : vector<1x1x8x72xbf16> to vector<8x72xbf16>
    %c2_355 = arith.constant 2 : index
    %c7_356 = arith.constant 7 : index
    %c2_357 = arith.constant 2 : index
    %c0_358 = arith.constant 0 : index
    %285 = vector.load %arg2[%c2_355, %c7_356, %c2_357, %c0_358] : memref<3x8x10x72xbf16, #tpu.memory_space<vmem>>, vector<1x1x8x72xbf16>
    %286 = vector.shape_cast %285 : vector<1x1x8x72xbf16> to vector<8x72xbf16>
    %287 = tpu.concatenate %270, %272, %274, %276, %278, %280, %282, %284, %286 in 1 : vector<8x72xbf16>, vector<8x72xbf16>, vector<8x72xbf16>, vector<8x72xbf16>, vector<8x72xbf16>, vector<8x72xbf16>, vector<8x72xbf16>, vector<8x72xbf16>, vector<8x72xbf16> -> vector<8x648xbf16>
    %cst_359 = arith.constant dense<0.000000e+00> : vector<8x64xf32>
    %288 = tpu.matmul %287, %0, %cst_359 {dimension_numbers = #tpu.dot_dimension_numbers<[1], [0], [0], [1], [0, 0, 1, 1], [], []>} : vector<8x648xbf16>, vector<648x64xbf16>, vector<8x64xf32> -> vector<8x64xf32>
    %289 = arith.truncf %288 : vector<8x64xf32> to vector<8x64xbf16>
    %c0_360 = arith.constant 0 : index
    %c7_361 = arith.constant 7 : index
    %c0_362 = arith.constant 0 : index
    %c0_363 = arith.constant 0 : index
    %290 = vector.load %arg4[%c0_360, %c7_361, %c0_362, %c0_363] : memref<1x8x8x64xbf16, #tpu.memory_space<vmem>>, vector<1x1x8x64xbf16>
    %291 = vector.shape_cast %290 : vector<1x1x8x64xbf16> to vector<8x64xbf16>
    %292 = vector.shape_cast %289 : vector<8x64xbf16> to vector<1x1x8x64xbf16>
    tpu.vector_store %arg4[%c0_360, %c7_361, %c0_362, %c0_363], %292 {strides = array<i32>} : memref<1x8x8x64xbf16, #tpu.memory_space<vmem>>, vector<1x1x8x64xbf16>,
    %c8_i32_364 = arith.constant 8 : i32
    %293 = arith.muli %arg1, %c8_i32_364 : i32
    %c7_i32 = arith.constant 7 : i32
    %294 = arith.addi %293, %c7_i32 : i32
    %c8_i32_365 = arith.constant 8 : i32
    %295 = arith.cmpi slt, %294, %c8_i32_365 : i32
    %cst_366 = arith.constant dense<0.000000e+00> : vector<64xf32>
    %296 = vector.multi_reduction <add>, %288, %cst_366 [0] : vector<8x64xf32> to vector<64xf32>
    %297 = vector.shape_cast %296 : vector<64xf32> to vector<1x64xf32>
    %cst_367 = arith.constant 0.000000e+00 : f32
    %298 = vector.broadcast %cst_367 : f32 to vector<1x64xf32>
    %299 = arith.select %295, %297, %298 : vector<1x64xf32>
    %300 = arith.addf %262, %299 : vector<1x64xf32>
    %301 = arith.mulf %288, %288 : vector<8x64xf32>
    %cst_368 = arith.constant dense<0.000000e+00> : vector<64xf32>
    %302 = vector.multi_reduction <add>, %301, %cst_368 [0] : vector<8x64xf32> to vector<64xf32>
    %303 = vector.shape_cast %302 : vector<64xf32> to vector<1x64xf32>
    %cst_369 = arith.constant 0.000000e+00 : f32
    %304 = vector.broadcast %cst_369 : f32 to vector<1x64xf32>
    %305 = arith.select %295, %303, %304 : vector<1x64xf32>
    %306 = arith.addf %268, %305 : vector<1x64xf32>
    %c0_370 = arith.constant 0 : index
    %c0_371 = arith.constant 0 : index
    %c0_372 = arith.constant 0 : index
    %c0_373 = arith.constant 0 : index
    %307 = vector.load %arg5[%c0_370, %c0_371, %c0_372, %c0_373] : memref<1x1x1x64xf32, #tpu.memory_space<vmem>>, vector<1x1x1x64xf32>
    %308 = vector.shape_cast %307 : vector<1x1x1x64xf32> to vector<1x64xf32>
    %309 = vector.shape_cast %300 : vector<1x64xf32> to vector<1x1x1x64xf32>
    tpu.vector_store %arg5[%c0_370, %c0_371, %c0_372, %c0_373], %309 {strides = array<i32>} : memref<1x1x1x64xf32, #tpu.memory_space<vmem>>, vector<1x1x1x64xf32>,
    %c0_374 = arith.constant 0 : index
    %c0_375 = arith.constant 0 : index
    %c0_376 = arith.constant 0 : index
    %c0_377 = arith.constant 0 : index
    %310 = vector.load %arg6[%c0_374, %c0_375, %c0_376, %c0_377] : memref<1x1x1x64xf32, #tpu.memory_space<vmem>>, vector<1x1x1x64xf32>
    %311 = vector.shape_cast %310 : vector<1x1x1x64xf32> to vector<1x64xf32>
    %312 = vector.shape_cast %306 : vector<1x64xf32> to vector<1x1x1x64xf32>
    tpu.vector_store %arg6[%c0_374, %c0_375, %c0_376, %c0_377], %312 {strides = array<i32>} : memref<1x1x1x64xf32, #tpu.memory_space<vmem>>, vector<1x1x1x64xf32>,
    return
  }
  func.func @transform_0(%arg0: i32, %arg1: i32) -> (i32, i32, i32, i32) {
    %c0_i32 = arith.constant 0 : i32
    %c0_i32_0 = arith.constant 0 : i32
    %c0_i32_1 = arith.constant 0 : i32
    return %arg0, %arg1, %c0_i32, %c0_i32_0 : i32, i32, i32, i32
  }
  func.func @transform_1(%arg0: i32, %arg1: i32) -> (i32, i32) {
    %c0_i32 = arith.constant 0 : i32
    %c0_i32_0 = arith.constant 0 : i32
    %c0_i32_1 = arith.constant 0 : i32
    return %c0_i32, %c0_i32_0 : i32, i32
  }
  func.func @transform_2(%arg0: i32, %arg1: i32) -> (i32, i32, i32, i32) {
    %c0_i32 = arith.constant 0 : i32
    %c0_i32_0 = arith.constant 0 : i32
    %c0_i32_1 = arith.constant 0 : i32
    return %arg0, %arg1, %c0_i32, %c0_i32_0 : i32, i32, i32, i32
  }
  func.func @transform_3(%arg0: i32, %arg1: i32) -> (i32, i32, i32, i32) {
    %c0_i32 = arith.constant 0 : i32
    %c0_i32_0 = arith.constant 0 : i32
    %c0_i32_1 = arith.constant 0 : i32
    return %arg0, %arg1, %c0_i32, %c0_i32_0 : i32, i32, i32, i32
  }
  func.func @transform_4(%arg0: i32, %arg1: i32) -> (i32, i32, i32, i32) {
    %c0_i32 = arith.constant 0 : i32
    %c0_i32_0 = arith.constant 0 : i32
    %c0_i32_1 = arith.constant 0 : i32
    return %arg0, %arg1, %c0_i32, %c0_i32_0 : i32, i32, i32, i32
  }
}

module attributes {stable_mosaic.version = 11 : i64} {
  func.func @kernel(%arg0: i32, %arg1: i32, %arg2: memref<1x8x8x64xbf16, #tpu.memory_space<vmem>>, %arg3: memref<1x64xf32, #tpu.memory_space<vmem>>, %arg4: memref<1x64xf32, #tpu.memory_space<vmem>>, %arg5: memref<2x64xf32, #tpu.memory_space<vmem>>, %arg6: memref<32x8xf32, #tpu.memory_space<vmem>>, %arg7: memref<8x32xf32, #tpu.memory_space<vmem>>, %arg8: memref<1x2x32x32xf32, #tpu.memory_space<vmem>>) attributes {dimension_semantics = [#tpu.dimension_semantics<parallel>, #tpu.dimension_semantics<parallel>], iteration_bounds = array<i64: 2, 1>, scalar_prefetch = 0 : i64, scratch_operands = 0 : i64, tpu.core_type = #tpu.core_type<tc>, window_params = [{transform_indices = @transform_0, window_bounds = array<i64: 1, 8, 8, 64>}, {pipeline_mode = #tpu.pipeline_mode<synchronous>, transform_indices = @transform_1, window_bounds = array<i64: 1, 64>}, {pipeline_mode = #tpu.pipeline_mode<synchronous>, transform_indices = @transform_2, window_bounds = array<i64: 1, 64>}, {pipeline_mode = #tpu.pipeline_mode<synchronous>, transform_indices = @transform_3, window_bounds = array<i64: 2, 64>}, {transform_indices = @transform_4, window_bounds = array<i64: 32, 8>}, {pipeline_mode = #tpu.pipeline_mode<synchronous>, transform_indices = @transform_5, window_bounds = array<i64: 8, 32>}, {transform_indices = @transform_6, window_bounds = array<i64: 1, 2, 32, 32>}]} {
    %c0 = arith.constant 0 : index
    %c0_0 = arith.constant 0 : index
    %c0_1 = arith.constant 0 : index
    %c0_2 = arith.constant 0 : index
    %0 = vector.load %arg2[%c0, %c0_0, %c0_1, %c0_2] : memref<1x8x8x64xbf16, #tpu.memory_space<vmem>>, vector<1x8x8x64xbf16>
    %1 = vector.shape_cast %0 : vector<1x8x8x64xbf16> to vector<8x8x64xbf16>
    %2 = arith.extf %1 : vector<8x8x64xbf16> to vector<8x8x64xf32>
    %c0_3 = arith.constant 0 : index
    %c0_4 = arith.constant 0 : index
    %3 = vector.load %arg3[%c0_3, %c0_4] : memref<1x64xf32, #tpu.memory_space<vmem>>, vector<1x64xf32>
    %4 = vector.shape_cast %3 : vector<1x64xf32> to vector<1x1x64xf32>
    %c0_5 = arith.constant 0 : index
    %c0_6 = arith.constant 0 : index
    %5 = vector.load %arg4[%c0_5, %c0_6] : memref<1x64xf32, #tpu.memory_space<vmem>>, vector<1x64xf32>
    %6 = vector.shape_cast %5 : vector<1x64xf32> to vector<1x1x64xf32>
    %7 = vector.broadcast %4 : vector<1x1x64xf32> to vector<8x8x64xf32>
    %8 = arith.mulf %2, %7 : vector<8x8x64xf32>
    %9 = vector.broadcast %6 : vector<1x1x64xf32> to vector<8x8x64xf32>
    %10 = arith.addf %8, %9 : vector<8x8x64xf32>
    %cst = arith.constant 0.000000e+00 : f32
    %11 = vector.broadcast %cst : f32 to vector<8x8x64xf32>
    %12 = arith.maximumf %10, %11 : vector<8x8x64xf32>
    %c0_7 = arith.constant 0 : index
    %c0_8 = arith.constant 0 : index
    %13 = vector.load %arg6[%c0_7, %c0_8] : memref<32x8xf32, #tpu.memory_space<vmem>>, vector<32x8xf32>
    %c0_9 = arith.constant 0 : index
    %c0_10 = arith.constant 0 : index
    %14 = vector.load %arg7[%c0_9, %c0_10] : memref<8x32xf32, #tpu.memory_space<vmem>>, vector<8x32xf32>
    %c0_11 = arith.constant 0 : index
    %c0_12 = arith.constant 0 : index
    %15 = vector.load %arg5[%c0_11, %c0_12] : memref<2x64xf32, #tpu.memory_space<vmem>>, vector<2x64xf32>
    %16 = vector.extract_strided_slice %15 {offsets = [0, 0], sizes = [1, 64], strides = [1, 1]} : vector<2x64xf32> to vector<1x64xf32>
    %17 = vector.shape_cast %16 : vector<1x64xf32> to vector<1x1x64xf32>
    %18 = vector.broadcast %17 : vector<1x1x64xf32> to vector<8x8x64xf32>
    %19 = arith.mulf %12, %18 : vector<8x8x64xf32>
    %cst_13 = arith.constant dense<0.000000e+00> : vector<8x8xf32>
    %20 = vector.multi_reduction <add>, %19, %cst_13 [2] : vector<8x8x64xf32> to vector<8x8xf32>
    %cst_14 = arith.constant dense<0.000000e+00> : vector<32x8xf32>
    %21 = tpu.matmul %13, %20, %cst_14 {dimension_numbers = #tpu.dot_dimension_numbers<[1], [0], [0], [1], [0, 0, 1, 1], [], []>} : vector<32x8xf32>, vector<8x8xf32>, vector<32x8xf32> -> vector<32x8xf32>
    %cst_15 = arith.constant dense<0.000000e+00> : vector<32x32xf32>
    %22 = tpu.matmul %21, %14, %cst_15 {dimension_numbers = #tpu.dot_dimension_numbers<[1], [0], [0], [1], [0, 0, 1, 1], [], []>} : vector<32x8xf32>, vector<8x32xf32>, vector<32x32xf32> -> vector<32x32xf32>
    %23 = vector.extract_strided_slice %15 {offsets = [1, 0], sizes = [1, 64], strides = [1, 1]} : vector<2x64xf32> to vector<1x64xf32>
    %24 = vector.shape_cast %23 : vector<1x64xf32> to vector<1x1x64xf32>
    %25 = vector.broadcast %24 : vector<1x1x64xf32> to vector<8x8x64xf32>
    %26 = arith.mulf %12, %25 : vector<8x8x64xf32>
    %cst_16 = arith.constant dense<0.000000e+00> : vector<8x8xf32>
    %27 = vector.multi_reduction <add>, %26, %cst_16 [2] : vector<8x8x64xf32> to vector<8x8xf32>
    %cst_17 = arith.constant dense<0.000000e+00> : vector<32x8xf32>
    %28 = tpu.matmul %13, %27, %cst_17 {dimension_numbers = #tpu.dot_dimension_numbers<[1], [0], [0], [1], [0, 0, 1, 1], [], []>} : vector<32x8xf32>, vector<8x8xf32>, vector<32x8xf32> -> vector<32x8xf32>
    %cst_18 = arith.constant dense<0.000000e+00> : vector<32x32xf32>
    %29 = tpu.matmul %28, %14, %cst_18 {dimension_numbers = #tpu.dot_dimension_numbers<[1], [0], [0], [1], [0, 0, 1, 1], [], []>} : vector<32x8xf32>, vector<8x32xf32>, vector<32x32xf32> -> vector<32x32xf32>
    %30 = arith.maximumf %22, %29 : vector<32x32xf32>
    %31 = arith.subf %22, %30 : vector<32x32xf32>
    %32 = math.exp %31 : vector<32x32xf32>
    %33 = arith.subf %29, %30 : vector<32x32xf32>
    %34 = math.exp %33 : vector<32x32xf32>
    %35 = arith.addf %32, %34 : vector<32x32xf32>
    %cst_19 = arith.constant 1.000000e+00 : f32
    %36 = vector.broadcast %cst_19 : f32 to vector<32x32xf32>
    %37 = arith.divf %36, %35 : vector<32x32xf32>
    %38 = arith.mulf %32, %37 : vector<32x32xf32>
    %c0_20 = arith.constant 0 : index
    %c0_21 = arith.constant 0 : index
    %c0_22 = arith.constant 0 : index
    %c0_23 = arith.constant 0 : index
    %39 = vector.load %arg8[%c0_20, %c0_21, %c0_22, %c0_23] : memref<1x2x32x32xf32, #tpu.memory_space<vmem>>, vector<1x1x32x32xf32>
    %40 = vector.shape_cast %39 : vector<1x1x32x32xf32> to vector<32x32xf32>
    %41 = vector.shape_cast %38 : vector<32x32xf32> to vector<1x1x32x32xf32>
    tpu.vector_store %arg8[%c0_20, %c0_21, %c0_22, %c0_23], %41 {strides = array<i32>} : memref<1x2x32x32xf32, #tpu.memory_space<vmem>>, vector<1x1x32x32xf32>,
    %42 = arith.mulf %34, %37 : vector<32x32xf32>
    %c0_24 = arith.constant 0 : index
    %c1 = arith.constant 1 : index
    %c0_25 = arith.constant 0 : index
    %c0_26 = arith.constant 0 : index
    %43 = vector.load %arg8[%c0_24, %c1, %c0_25, %c0_26] : memref<1x2x32x32xf32, #tpu.memory_space<vmem>>, vector<1x1x32x32xf32>
    %44 = vector.shape_cast %43 : vector<1x1x32x32xf32> to vector<32x32xf32>
    %45 = vector.shape_cast %42 : vector<32x32xf32> to vector<1x1x32x32xf32>
    tpu.vector_store %arg8[%c0_24, %c1, %c0_25, %c0_26], %45 {strides = array<i32>} : memref<1x2x32x32xf32, #tpu.memory_space<vmem>>, vector<1x1x32x32xf32>,
    return
  }
  func.func @transform_0(%arg0: i32, %arg1: i32) -> (i32, i32, i32, i32) {
    %c0_i32 = arith.constant 0 : i32
    %c0_i32_0 = arith.constant 0 : i32
    %c0_i32_1 = arith.constant 0 : i32
    %c0_i32_2 = arith.constant 0 : i32
    return %arg0, %c0_i32, %c0_i32_0, %c0_i32_1 : i32, i32, i32, i32
  }
  func.func @transform_1(%arg0: i32, %arg1: i32) -> (i32, i32) {
    %c0_i32 = arith.constant 0 : i32
    %c0_i32_0 = arith.constant 0 : i32
    %c0_i32_1 = arith.constant 0 : i32
    return %c0_i32, %c0_i32_0 : i32, i32
  }
  func.func @transform_2(%arg0: i32, %arg1: i32) -> (i32, i32) {
    %c0_i32 = arith.constant 0 : i32
    %c0_i32_0 = arith.constant 0 : i32
    %c0_i32_1 = arith.constant 0 : i32
    return %c0_i32, %c0_i32_0 : i32, i32
  }
  func.func @transform_3(%arg0: i32, %arg1: i32) -> (i32, i32) {
    %c0_i32 = arith.constant 0 : i32
    %c0_i32_0 = arith.constant 0 : i32
    %c0_i32_1 = arith.constant 0 : i32
    return %c0_i32, %c0_i32_0 : i32, i32
  }
  func.func @transform_4(%arg0: i32, %arg1: i32) -> (i32, i32) {
    %c0_i32 = arith.constant 0 : i32
    %c0_i32_0 = arith.constant 0 : i32
    return %arg1, %c0_i32 : i32, i32
  }
  func.func @transform_5(%arg0: i32, %arg1: i32) -> (i32, i32) {
    %c0_i32 = arith.constant 0 : i32
    %c0_i32_0 = arith.constant 0 : i32
    %c0_i32_1 = arith.constant 0 : i32
    return %c0_i32, %c0_i32_0 : i32, i32
  }
  func.func @transform_6(%arg0: i32, %arg1: i32) -> (i32, i32, i32, i32) {
    %c0_i32 = arith.constant 0 : i32
    %c0_i32_0 = arith.constant 0 : i32
    %c0_i32_1 = arith.constant 0 : i32
    return %arg0, %c0_i32, %arg1, %c0_i32_0 : i32, i32, i32, i32
  }
}

</mosaic_0001>

<llo_original>
// kernel: regseg_forward.10
$region0: #{regseg_forward.10}
  #allocation0 [shape = 'u32[]', space=smem, size = 0x4, offset = 0x4, fixed_abs, tag = 'smem constant byte address 0x4 - core index']
  #allocation1 [shape = 'u32[72,128]{1,0:T(1,128)}', space=vmem, size = 0x9000, scoped, tag = 'internal scratch']
  %s0 = inlined_call_operand.vmem [shape: bf16[512,27], index: 0, kind: input, shape index: {}]
  %s1 = inlined_call_operand.vmem [shape: bf16[27,32], index: 1, kind: input, shape index: {}]
  %s2 = inlined_call_operand.vmem [shape: bf16[512,32], index: 2, kind: output, shape index: {0}]
  %s3 = inlined_call_operand.vmem [shape: f32[1,1,32], index: 3, kind: output, shape index: {1}]
  %s4 = inlined_call_operand.vmem [shape: f32[1,1,32], index: 4, kind: output, shape index: {2}]
  %5 = xla_tuple %s2, %s3, %s4
  %s6 = sld [smem:[#allocation0]]
  $region34: #{regseg_forward.10} parent=0
    _
  %s8 = ssub.s32 1, %s6
  %s9 = scalar_select 0, %s8, %s6
  // Predicated region
  $region2: #{regseg_forward.10} parent=0 // pred_check
    _
  $region3: #{regseg_forward.10} parent=0 // pred_check_branch
    %11 = sbr.rel (0) target = $region5
  $region4: #{regseg_forward.10} parent=0 // pred_region
    _
  $region5: #{regseg_forward.10} parent=0 // pred_fallthru
    _
  // Predicated region
  $region6: #{regseg_forward.10} parent=0 // pred_check
    _
  $region7: #{regseg_forward.10} parent=0 // pred_check_branch
    %13 = sbr.rel (0) target = $region9
  $region8: #{regseg_forward.10} parent=0 // pred_region
    _
  $region9: #{regseg_forward.10} parent=0 // pred_fallthru
    _
  %v15 = vld [vmem:[%s0] sm:$0xf]
  %v16 = vld [vmem:[%s0 + $0x4] sm:$0xf]
  %v17 = vld [vmem:[%s0 + $0x8] sm:$0xf]
  %v18 = vld [vmem:[%s0 + $0xc] sm:$0xf]
  %v19 = vld [vmem:[%s0 + $0x10] sm:$0xf]
  %v20 = vld [vmem:[%s0 + $0x14] sm:$0xf]
  %v21 = vld [vmem:[%s0 + $0x18] sm:$0xf]
  %v22 = vld [vmem:[%s0 + $0x1c] sm:$0xf]
  %v23 = vld [vmem:[%s0 + $0x20] sm:$0xf]
  %v24 = vld [vmem:[%s0 + $0x24] sm:$0xf]
  %v25 = vld [vmem:[%s0 + $0x28] sm:$0xf]
  %v26 = vld [vmem:[%s0 + $0x2c] sm:$0xf]
  %v27 = vld [vmem:[%s0 + $0x30] sm:$0xf]
  %v28 = vld [vmem:[%s0 + $0x34] sm:$0xf]
  %v29 = vld [vmem:[%s0 + $0x38] sm:$0xf]
  %v30 = vld [vmem:[%s0 + $0x3c] sm:$0xf]
  %v31 = vld [vmem:[%s0 + $0x40] sm:$0xf]
  %v32 = vld [vmem:[%s0 + $0x44] sm:$0xf]
  %v33 = vld [vmem:[%s0 + $0x48] sm:$0xf]
  %v34 = vld [vmem:[%s0 + $0x4c] sm:$0xf]
  %v35 = vld [vmem:[%s0 + $0x50] sm:$0xf]
  %v36 = vld [vmem:[%s0 + $0x54] sm:$0xf]
  %v37 = vld [vmem:[%s0 + $0x58] sm:$0xf]
  %v38 = vld [vmem:[%s0 + $0x5c] sm:$0xf]
  %v39 = vld [vmem:[%s0 + $0x60] sm:$0xf]
  %v40 = vld [vmem:[%s0 + $0x64] sm:$0xf]
  %v41 = vld [vmem:[%s0 + $0x68] sm:$0xf]
  %v42 = vld [vmem:[%s0 + $0x6c] sm:$0xf]
  %v43 = vld [vmem:[%s0 + $0x70] sm:$0xf]
  %v44 = vld [vmem:[%s0 + $0x74] sm:$0xf]
  %v45 = vld [vmem:[%s0 + $0x78] sm:$0xf]
  %v46 = vld [vmem:[%s0 + $0x7c] sm:$0xf]
  %v47 = vld [vmem:[%s0 + $0x80] sm:$0xf]
  %v48 = vld [vmem:[%s0 + $0x84] sm:$0xf]
  %v49 = vld [vmem:[%s0 + $0x88] sm:$0xf]
  %v50 = vld [vmem:[%s0 + $0x8c] sm:$0xf]
  %v51 = vld [vmem:[%s0 + $0x90] sm:$0xf]
  %v52 = vld [vmem:[%s0 + $0x94] sm:$0xf]
  %v53 = vld [vmem:[%s0 + $0x98] sm:$0xf]
  %v54 = vld [vmem:[%s0 + $0x9c] sm:$0xf]
  %v55 = vld [vmem:[%s0 + $0xa0] sm:$0xf]
  %v56 = vld [vmem:[%s0 + $0xa4] sm:$0xf]
  %v57 = vld [vmem:[%s0 + $0xa8] sm:$0xf]
  %v58 = vld [vmem:[%s0 + $0xac] sm:$0xf]
  %v59 = vld [vmem:[%s0 + $0xb0] sm:$0xf]
  %v60 = vld [vmem:[%s0 + $0xb4] sm:$0xf]
  %v61 = vld [vmem:[%s0 + $0xb8] sm:$0xf]
  %v62 = vld [vmem:[%s0 + $0xbc] sm:$0xf]
  %v63 = vld [vmem:[%s0 + $0xc0] sm:$0xf]
  %v64 = vld [vmem:[%s0 + $0xc4] sm:$0xf]
  %v65 = vld [vmem:[%s0 + $0xc8] sm:$0xf]
  %v66 = vld [vmem:[%s0 + $0xcc] sm:$0xf]
  %v67 = vld [vmem:[%s0 + $0xd0] sm:$0xf]
  %v68 = vld [vmem:[%s0 + $0xd4] sm:$0xf]
  %v69 = vld [vmem:[%s0 + $0xd8] sm:$0xf]
  %v70 = vld [vmem:[%s0 + $0xdc] sm:$0xf]
  %v71 = vld [vmem:[%s0 + $0xe0] sm:$0xf]
  %v72 = vld [vmem:[%s0 + $0xe4] sm:$0xf]
  %v73 = vld [vmem:[%s0 + $0xe8] sm:$0xf]
  %v74 = vld [vmem:[%s0 + $0xec] sm:$0xf]
  %v75 = vld [vmem:[%s0 + $0xf0] sm:$0xf]
  %v76 = vld [vmem:[%s0 + $0xf4] sm:$0xf]
  %v77 = vld [vmem:[%s0 + $0xf8] sm:$0xf]
  %v78 = vld [vmem:[%s0 + $0xfc] sm:$0xf]
  %v79 = vld [vmem:[%s1] sm:$0xf]
  %v80 = vld [vmem:[%s1 + $0x4] sm:$0xf]
  %v81 = vld [vmem:[%s1 + $0x8] sm:$0xf]
  %v82 = vld [vmem:[%s1 + $0xc] sm:$0x3]
  %v147 = vunpack.c.l.b16 %v15
  %v148 = vunpack.c.l.b16 %v16
  %v149 = vunpack.c.l.b16 %v17
  %v150 = vunpack.c.l.b16 %v18
  %v151 = vunpack.c.l.b16 %v19
  %v152 = vunpack.c.l.b16 %v20
  %v153 = vunpack.c.l.b16 %v21
  %v154 = vunpack.c.l.b16 %v22
  %v155 = vunpack.c.l.b16 %v23
  %v156 = vunpack.c.l.b16 %v24
  %v157 = vunpack.c.l.b16 %v25
  %v158 = vunpack.c.l.b16 %v26
  %v159 = vunpack.c.l.b16 %v27
  %v160 = vunpack.c.l.b16 %v28
  %v161 = vunpack.c.l.b16 %v29
  %v162 = vunpack.c.l.b16 %v30
  %v163 = vunpack.c.l.b16 %v31
  %v164 = vunpack.c.l.b16 %v32
  %v165 = vunpack.c.l.b16 %v33
  %v166 = vunpack.c.l.b16 %v34
  %v167 = vunpack.c.l.b16 %v35
  %v168 = vunpack.c.l.b16 %v36
  %v169 = vunpack.c.l.b16 %v37
  %v170 = vunpack.c.l.b16 %v38
  %v171 = vunpack.c.l.b16 %v39
  %v172 = vunpack.c.l.b16 %v40
  %v173 = vunpack.c.l.b16 %v41
  %v174 = vunpack.c.l.b16 %v42
  %v175 = vunpack.c.l.b16 %v43
  %v176 = vunpack.c.l.b16 %v44
  %v177 = vunpack.c.l.b16 %v45
  %v178 = vunpack.c.l.b16 %v46
  %v179 = vunpack.c.l.b16 %v47
  %v180 = vunpack.c.l.b16 %v48
  %v181 = vunpack.c.l.b16 %v49
  %v182 = vunpack.c.l.b16 %v50
  %v183 = vunpack.c.l.b16 %v51
  %v184 = vunpack.c.l.b16 %v52
  %v185 = vunpack.c.l.b16 %v53
  %v186 = vunpack.c.l.b16 %v54
  %v187 = vunpack.c.l.b16 %v55
  %v188 = vunpack.c.l.b16 %v56
  %v189 = vunpack.c.l.b16 %v57
  %v190 = vunpack.c.l.b16 %v58
  %v191 = vunpack.c.l.b16 %v59
  %v192 = vunpack.c.l.b16 %v60
  %v193 = vunpack.c.l.b16 %v61
  %v194 = vunpack.c.l.b16 %v62
  %v195 = vunpack.c.l.b16 %v63
  %v196 = vunpack.c.l.b16 %v64
  %v197 = vunpack.c.l.b16 %v65
  %v198 = vunpack.c.l.b16 %v66
  %v199 = vunpack.c.l.b16 %v67
  %v200 = vunpack.c.l.b16 %v68
  %v201 = vunpack.c.l.b16 %v69
  %v202 = vunpack.c.l.b16 %v70
  %v203 = vunpack.c.l.b16 %v71
  %v204 = vunpack.c.l.b16 %v72
  %v205 = vunpack.c.l.b16 %v73
  %v206 = vunpack.c.l.b16 %v74
  %v207 = vunpack.c.l.b16 %v75
  %v208 = vunpack.c.l.b16 %v76
  %v209 = vunpack.c.l.b16 %v77
  %v210 = vunpack.c.l.b16 %v78
  %v211 = vpack.c.b16 %v148, %v147
  %v212 = vpack.c.b16 %v150, %v149
  %v213 = vpack.c.b16 %v152, %v151
  %v214 = vpack.c.b16 %v154, %v153
  %v215 = vpack.c.b16 %v156, %v155
  %v216 = vpack.c.b16 %v158, %v157
  %v217 = vpack.c.b16 %v160, %v159
  %v218 = vpack.c.b16 %v162, %v161
  %v219 = vpack.c.b16 %v164, %v163
  %v220 = vpack.c.b16 %v166, %v165
  %v221 = vpack.c.b16 %v168, %v167
  %v222 = vpack.c.b16 %v170, %v169
  %v223 = vpack.c.b16 %v172, %v171
  %v224 = vpack.c.b16 %v174, %v173
  %v225 = vpack.c.b16 %v176, %v175
  %v226 = vpack.c.b16 %v178, %v177
  %v227 = vpack.c.b16 %v180, %v179
  %v228 = vpack.c.b16 %v182, %v181
  %v229 = vpack.c.b16 %v184, %v183
  %v230 = vpack.c.b16 %v186, %v185
  %v231 = vpack.c.b16 %v188, %v187
  %v232 = vpack.c.b16 %v190, %v189
  %v233 = vpack.c.b16 %v192, %v191
  %v234 = vpack.c.b16 %v194, %v193
  %v235 = vpack.c.b16 %v196, %v195
  %v236 = vpack.c.b16 %v198, %v197
  %v237 = vpack.c.b16 %v200, %v199
  %v238 = vpack.c.b16 %v202, %v201
  %v239 = vpack.c.b16 %v204, %v203
  %v240 = vpack.c.b16 %v206, %v205
  %v241 = vpack.c.b16 %v208, %v207
  %v242 = vpack.c.b16 %v210, %v209
  %v247 = vunpack.c.l.b16 %v79
  %v248 = vunpack.c.l.b16 %v80
  %v249 = vunpack.c.l.b16 %v81
  %v250 = vunpack.c.l.b16 %v82
  %v251 = vpack.c.b16 %v248, %v247
  %v252 = vpack.c.b16 %v250, %v249
  %vm254 = vcmask 220160
  %v256 = vsel %vm254, %v211, 0
  %v259 = vsel %vm254, %v212, 0
  %v262 = vsel %vm254, %v213, 0
  %v265 = vsel %vm254, %v214, 0
  %v268 = vsel %vm254, %v215, 0
  %v271 = vsel %vm254, %v216, 0
  %v274 = vsel %vm254, %v217, 0
  %v277 = vsel %vm254, %v218, 0
  %v280 = vsel %vm254, %v219, 0
  %v283 = vsel %vm254, %v220, 0
  %v286 = vsel %vm254, %v221, 0
  %v289 = vsel %vm254, %v222, 0
  %v292 = vsel %vm254, %v223, 0
  %v295 = vsel %vm254, %v224, 0
  %v298 = vsel %vm254, %v225, 0
  %v301 = vsel %vm254, %v226, 0
  %v304 = vsel %vm254, %v227, 0
  %v307 = vsel %vm254, %v228, 0
  %v310 = vsel %vm254, %v229, 0
  %v313 = vsel %vm254, %v230, 0
  %v316 = vsel %vm254, %v231, 0
  %v319 = vsel %vm254, %v232, 0
  %v322 = vsel %vm254, %v233, 0
  %v325 = vsel %vm254, %v234, 0
  %v328 = vsel %vm254, %v235, 0
  %v331 = vsel %vm254, %v236, 0
  %v334 = vsel %vm254, %v237, 0
  %v337 = vsel %vm254, %v238, 0
  %v340 = vsel %vm254, %v239, 0
  %v343 = vsel %vm254, %v240, 0
  %v346 = vsel %vm254, %v241, 0
  %v349 = vsel %vm254, %v242, 0
  %vm351 = vcmask 1044480
  %vm352 = vcmask 1045504
  %v353 = vsel %vm351, 4294967295, 65535
  %v354 = vsel %vm352, %v353, 0
  %v356 = vand.u32 %v252, %v354
  %358 = vmatpush.bf16.msra.mxu0 0
  %359 = vmatpush.bf16.msra.mxu0 0
  %360 = vmatpush.bf16.msra.mxu0 0
  %361 = vmatpush.bf16.msra.mxu0 0
  %362 = vmatpush.bf16.msra.mxu0 0
  %363 = vmatpush.bf16.msra.mxu0 0
  %364 = vmatpush.bf16.msra.mxu0 %v356
  %365 = vmatpush.bf16.msra.mxu0 %v251
  %366 = vmatmul.bf16.gmra.mxu0 %v256
  %v367 = vpop.f32.mrf.mxu0
  %v368 = vadd.f32 0.0, %v367
  %v369 = vpop.f32.mrf.mxu0
  %v370 = vadd.f32 0.0, %v369
  %371 = vmatmul.bf16.gmra.mxu0 %v259
  %v372 = vpop.f32.mrf.mxu0
  %v373 = vadd.f32 0.0, %v372
  %v374 = vpop.f32.mrf.mxu0
  %v375 = vadd.f32 0.0, %v374
  %376 = vmatmul.bf16.gmra.mxu0 %v262
  %v377 = vpop.f32.mrf.mxu0
  %v378 = vadd.f32 0.0, %v377
  %v379 = vpop.f32.mrf.mxu0
  %v380 = vadd.f32 0.0, %v379
  %381 = vmatmul.bf16.gmra.mxu0 %v265
  %v382 = vpop.f32.mrf.mxu0
  %v383 = vadd.f32 0.0, %v382
  %v384 = vpop.f32.mrf.mxu0
  %v385 = vadd.f32 0.0, %v384
  %386 = vmatmul.bf16.gmra.mxu0 %v268
  %v387 = vpop.f32.mrf.mxu0
  %v388 = vadd.f32 0.0, %v387
  %v389 = vpop.f32.mrf.mxu0
  %v390 = vadd.f32 0.0, %v389
  %391 = vmatmul.bf16.gmra.mxu0 %v271
  %v392 = vpop.f32.mrf.mxu0
  %v393 = vadd.f32 0.0, %v392
  %v394 = vpop.f32.mrf.mxu0
  %v395 = vadd.f32 0.0, %v394
  %396 = vmatmul.bf16.gmra.mxu0 %v274
  %v397 = vpop.f32.mrf.mxu0
  %v398 = vadd.f32 0.0, %v397
  %v399 = vpop.f32.mrf.mxu0
  %v400 = vadd.f32 0.0, %v399
  %401 = vmatmul.bf16.gmra.mxu0 %v277
  %v402 = vpop.f32.mrf.mxu0
  %v403 = vadd.f32 0.0, %v402
  %v404 = vpop.f32.mrf.mxu0
  %v405 = vadd.f32 0.0, %v404
  %406 = vmatmul.bf16.gmra.mxu0 %v280
  %v407 = vpop.f32.mrf.mxu0
  %v408 = vadd.f32 0.0, %v407
  %v409 = vpop.f32.mrf.mxu0
  %v410 = vadd.f32 0.0, %v409
  %411 = vmatmul.bf16.gmra.mxu0 %v283
  %v412 = vpop.f32.mrf.mxu0
  %v413 = vadd.f32 0.0, %v412
  %v414 = vpop.f32.mrf.mxu0
  %v415 = vadd.f32 0.0, %v414
  %416 = vmatmul.bf16.gmra.mxu0 %v286
  %v417 = vpop.f32.mrf.mxu0
  %v418 = vadd.f32 0.0, %v417
  %v419 = vpop.f32.mrf.mxu0
  %v420 = vadd.f32 0.0, %v419
  %421 = vmatmul.bf16.gmra.mxu0 %v289
  %v422 = vpop.f32.mrf.mxu0
  %v423 = vadd.f32 0.0, %v422
  %v424 = vpop.f32.mrf.mxu0
  %v425 = vadd.f32 0.0, %v424
  %426 = vmatmul.bf16.gmra.mxu0 %v292
  %v427 = vpop.f32.mrf.mxu0
  %v428 = vadd.f32 0.0, %v427
  %v429 = vpop.f32.mrf.mxu0
  %v430 = vadd.f32 0.0, %v429
  %431 = vmatmul.bf16.gmra.mxu0 %v295
  %v432 = vpop.f32.mrf.mxu0
  %v433 = vadd.f32 0.0, %v432
  %v434 = vpop.f32.mrf.mxu0
  %v435 = vadd.f32 0.0, %v434
  %436 = vmatmul.bf16.gmra.mxu0 %v298
  %v437 = vpop.f32.mrf.mxu0
  %v438 = vadd.f32 0.0, %v437
  %v439 = vpop.f32.mrf.mxu0
  %v440 = vadd.f32 0.0, %v439
  %441 = vmatmul.bf16.gmra.mxu0 %v301
  %v442 = vpop.f32.mrf.mxu0
  %v443 = vadd.f32 0.0, %v442
  %v444 = vpop.f32.mrf.mxu0
  %v445 = vadd.f32 0.0, %v444
  %446 = vmatmul.bf16.gmra.mxu0 %v304
  %v447 = vpop.f32.mrf.mxu0
  %v448 = vadd.f32 0.0, %v447
  %v449 = vpop.f32.mrf.mxu0
  %v450 = vadd.f32 0.0, %v449
  %451 = vmatmul.bf16.gmra.mxu0 %v307
  %v452 = vpop.f32.mrf.mxu0
  %v453 = vadd.f32 0.0, %v452
  %v454 = vpop.f32.mrf.mxu0
  %v455 = vadd.f32 0.0, %v454
  %456 = vmatmul.bf16.gmra.mxu0 %v310
  %v457 = vpop.f32.mrf.mxu0
  %v458 = vadd.f32 0.0, %v457
  %v459 = vpop.f32.mrf.mxu0
  %v460 = vadd.f32 0.0, %v459
  %461 = vmatmul.bf16.gmra.mxu0 %v313
  %v462 = vpop.f32.mrf.mxu0
  %v463 = vadd.f32 0.0, %v462
  %v464 = vpop.f32.mrf.mxu0
  %v465 = vadd.f32 0.0, %v464
  %466 = vmatmul.bf16.gmra.mxu0 %v316
  %v467 = vpop.f32.mrf.mxu0
  %v468 = vadd.f32 0.0, %v467
  %v469 = vpop.f32.mrf.mxu0
  %v470 = vadd.f32 0.0, %v469
  %471 = vmatmul.bf16.gmra.mxu0 %v319
  %v472 = vpop.f32.mrf.mxu0
  %v473 = vadd.f32 0.0, %v472
  %v474 = vpop.f32.mrf.mxu0
  %v475 = vadd.f32 0.0, %v474
  %476 = vmatmul.bf16.gmra.mxu0 %v322
  %v477 = vpop.f32.mrf.mxu0
  %v478 = vadd.f32 0.0, %v477
  %v479 = vpop.f32.mrf.mxu0
  %v480 = vadd.f32 0.0, %v479
  %481 = vmatmul.bf16.gmra.mxu0 %v325
  %v482 = vpop.f32.mrf.mxu0
  %v483 = vadd.f32 0.0, %v482
  %v484 = vpop.f32.mrf.mxu0
  %v485 = vadd.f32 0.0, %v484
  %486 = vmatmul.bf16.gmra.mxu0 %v328
  %v487 = vpop.f32.mrf.mxu0
  %v488 = vadd.f32 0.0, %v487
  %v489 = vpop.f32.mrf.mxu0
  %v490 = vadd.f32 0.0, %v489
  %491 = vmatmul.bf16.gmra.mxu0 %v331
  %v492 = vpop.f32.mrf.mxu0
  %v493 = vadd.f32 0.0, %v492
  %v494 = vpop.f32.mrf.mxu0
  %v495 = vadd.f32 0.0, %v494
  %496 = vmatmul.bf16.gmra.mxu0 %v334
  %v497 = vpop.f32.mrf.mxu0
  %v498 = vadd.f32 0.0, %v497
  %v499 = vpop.f32.mrf.mxu0
  %v500 = vadd.f32 0.0, %v499
  %501 = vmatmul.bf16.gmra.mxu0 %v337
  %v502 = vpop.f32.mrf.mxu0
  %v503 = vadd.f32 0.0, %v502
  %v504 = vpop.f32.mrf.mxu0
  %v505 = vadd.f32 0.0, %v504
  %506 = vmatmul.bf16.gmra.mxu0 %v340
  %v507 = vpop.f32.mrf.mxu0
  %v508 = vadd.f32 0.0, %v507
  %v509 = vpop.f32.mrf.mxu0
  %v510 = vadd.f32 0.0, %v509
  %511 = vmatmul.bf16.gmra.mxu0 %v343
  %v512 = vpop.f32.mrf.mxu0
  %v513 = vadd.f32 0.0, %v512
  %v514 = vpop.f32.mrf.mxu0
  %v515 = vadd.f32 0.0, %v514
  %516 = vmatmul.bf16.gmra.mxu0 %v346
  %v517 = vpop.f32.mrf.mxu0
  %v518 = vadd.f32 0.0, %v517
  %v519 = vpop.f32.mrf.mxu0
  %v520 = vadd.f32 0.0, %v519
  %521 = vmatmul.bf16.gmra.mxu0 %v349
  %v522 = vpop.f32.mrf.mxu0
  %v523 = vadd.f32 0.0, %v522
  %v524 = vpop.f32.mrf.mxu0
  %v525 = vadd.f32 0.0, %v524
  %526 = vdwg.mxu0
  %v527 = vpack.c.bf16 %v368, %v368
  %v528 = vpack.c.bf16 %v370, %v370
  %v529 = vpack.c.bf16 %v373, %v373
  %v530 = vpack.c.bf16 %v375, %v375
  %v531 = vpack.c.bf16 %v378, %v378
  %v532 = vpack.c.bf16 %v380, %v380
  %v533 = vpack.c.bf16 %v383, %v383
  %v534 = vpack.c.bf16 %v385, %v385
  %v535 = vpack.c.bf16 %v388, %v388
  %v536 = vpack.c.bf16 %v390, %v390
  %v537 = vpack.c.bf16 %v393, %v393
  %v538 = vpack.c.bf16 %v395, %v395
  %v539 = vpack.c.bf16 %v398, %v398
  %v540 = vpack.c.bf16 %v400, %v400
  %v541 = vpack.c.bf16 %v403, %v403
  %v542 = vpack.c.bf16 %v405, %v405
  %v543 = vpack.c.bf16 %v408, %v408
  %v544 = vpack.c.bf16 %v410, %v410
  %v545 = vpack.c.bf16 %v413, %v413
  %v546 = vpack.c.bf16 %v415, %v415
  %v547 = vpack.c.bf16 %v418, %v418
  %v548 = vpack.c.bf16 %v420, %v420
  %v549 = vpack.c.bf16 %v423, %v423
  %v550 = vpack.c.bf16 %v425, %v425
  %v551 = vpack.c.bf16 %v428, %v428
  %v552 = vpack.c.bf16 %v430, %v430
  %v553 = vpack.c.bf16 %v433, %v433
  %v554 = vpack.c.bf16 %v435, %v435
  %v555 = vpack.c.bf16 %v438, %v438
  %v556 = vpack.c.bf16 %v440, %v440
  %v557 = vpack.c.bf16 %v443, %v443
  %v558 = vpack.c.bf16 %v445, %v445
  %v559 = vpack.c.bf16 %v448, %v448
  %v560 = vpack.c.bf16 %v450, %v450
  %v561 = vpack.c.bf16 %v453, %v453
  %v562 = vpack.c.bf16 %v455, %v455
  %v563 = vpack.c.bf16 %v458, %v458
  %v564 = vpack.c.bf16 %v460, %v460
  %v565 = vpack.c.bf16 %v463, %v463
  %v566 = vpack.c.bf16 %v465, %v465
  %v567 = vpack.c.bf16 %v468, %v468
  %v568 = vpack.c.bf16 %v470, %v470
  %v569 = vpack.c.bf16 %v473, %v473
  %v570 = vpack.c.bf16 %v475, %v475
  %v571 = vpack.c.bf16 %v478, %v478
  %v572 = vpack.c.bf16 %v480, %v480
  %v573 = vpack.c.bf16 %v483, %v483
  %v574 = vpack.c.bf16 %v485, %v485
  %v575 = vpack.c.bf16 %v488, %v488
  %v576 = vpack.c.bf16 %v490, %v490
  %v577 = vpack.c.bf16 %v493, %v493
  %v578 = vpack.c.bf16 %v495, %v495
  %v579 = vpack.c.bf16 %v498, %v498
  %v580 = vpack.c.bf16 %v500, %v500
  %v581 = vpack.c.bf16 %v503, %v503
  %v582 = vpack.c.bf16 %v505, %v505
  %v583 = vpack.c.bf16 %v508, %v508
  %v584 = vpack.c.bf16 %v510, %v510
  %v585 = vpack.c.bf16 %v513, %v513
  %v586 = vpack.c.bf16 %v515, %v515
  %v587 = vpack.c.bf16 %v518, %v518
  %v588 = vpack.c.bf16 %v520, %v520
  %v589 = vpack.c.bf16 %v523, %v523
  %v590 = vpack.c.bf16 %v525, %v525
  %vm591 = vcmask 257024
  %592 = vst.msk [vmem:[%s2] sm:$0xf] %vm591, %v527
  %593 = vst.msk [vmem:[%s2 + $0x4] sm:$0xf] %vm591, %v528
  %594 = vst.msk [vmem:[%s2 + $0x8] sm:$0xf] %vm591, %v529
  %595 = vst.msk [vmem:[%s2 + $0xc] sm:$0xf] %vm591, %v530
  %596 = vst.msk [vmem:[%s2 + $0x10] sm:$0xf] %vm591, %v531
  %597 = vst.msk [vmem:[%s2 + $0x14] sm:$0xf] %vm591, %v532
  %598 = vst.msk [vmem:[%s2 + $0x18] sm:$0xf] %vm591, %v533
  %599 = vst.msk [vmem:[%s2 + $0x1c] sm:$0xf] %vm591, %v534
  %600 = vst.msk [vmem:[%s2 + $0x20] sm:$0xf] %vm591, %v535
  %601 = vst.msk [vmem:[%s2 + $0x24] sm:$0xf] %vm591, %v536
  %602 = vst.msk [vmem:[%s2 + $0x28] sm:$0xf] %vm591, %v537
  %603 = vst.msk [vmem:[%s2 + $0x2c] sm:$0xf] %vm591, %v538
  %604 = vst.msk [vmem:[%s2 + $0x30] sm:$0xf] %vm591, %v539
  %605 = vst.msk [vmem:[%s2 + $0x34] sm:$0xf] %vm591, %v540
  %606 = vst.msk [vmem:[%s2 + $0x38] sm:$0xf] %vm591, %v541
  %607 = vst.msk [vmem:[%s2 + $0x3c] sm:$0xf] %vm591, %v542
  %608 = vst.msk [vmem:[%s2 + $0x40] sm:$0xf] %vm591, %v543
  %609 = vst.msk [vmem:[%s2 + $0x44] sm:$0xf] %vm591, %v544
  %610 = vst.msk [vmem:[%s2 + $0x48] sm:$0xf] %vm591, %v545
  %611 = vst.msk [vmem:[%s2 + $0x4c] sm:$0xf] %vm591, %v546
  %612 = vst.msk [vmem:[%s2 + $0x50] sm:$0xf] %vm591, %v547
  %613 = vst.msk [vmem:[%s2 + $0x54] sm:$0xf] %vm591, %v548
  %614 = vst.msk [vmem:[%s2 + $0x58] sm:$0xf] %vm591, %v549
  %615 = vst.msk [vmem:[%s2 + $0x5c] sm:$0xf] %vm591, %v550
  %616 = vst.msk [vmem:[%s2 + $0x60] sm:$0xf] %vm591, %v551
  %617 = vst.msk [vmem:[%s2 + $0x64] sm:$0xf] %vm591, %v552
  %618 = vst.msk [vmem:[%s2 + $0x68] sm:$0xf] %vm591, %v553
  %619 = vst.msk [vmem:[%s2 + $0x6c] sm:$0xf] %vm591, %v554
  %620 = vst.msk [vmem:[%s2 + $0x70] sm:$0xf] %vm591, %v555
  %621 = vst.msk [vmem:[%s2 + $0x74] sm:$0xf] %vm591, %v556
  %622 = vst.msk [vmem:[%s2 + $0x78] sm:$0xf] %vm591, %v557
  %623 = vst.msk [vmem:[%s2 + $0x7c] sm:$0xf] %vm591, %v558
  %624 = vst.msk [vmem:[%s2 + $0x80] sm:$0xf] %vm591, %v559
  %625 = vst.msk [vmem:[%s2 + $0x84] sm:$0xf] %vm591, %v560
  %626 = vst.msk [vmem:[%s2 + $0x88] sm:$0xf] %vm591, %v561
  %627 = vst.msk [vmem:[%s2 + $0x8c] sm:$0xf] %vm591, %v562
  %628 = vst.msk [vmem:[%s2 + $0x90] sm:$0xf] %vm591, %v563
  %629 = vst.msk [vmem:[%s2 + $0x94] sm:$0xf] %vm591, %v564
  %630 = vst.msk [vmem:[%s2 + $0x98] sm:$0xf] %vm591, %v565
  %631 = vst.msk [vmem:[%s2 + $0x9c] sm:$0xf] %vm591, %v566
  %632 = vst.msk [vmem:[%s2 + $0xa0] sm:$0xf] %vm591, %v567
  %633 = vst.msk [vmem:[%s2 + $0xa4] sm:$0xf] %vm591, %v568
  %634 = vst.msk [vmem:[%s2 + $0xa8] sm:$0xf] %vm591, %v569
  %635 = vst.msk [vmem:[%s2 + $0xac] sm:$0xf] %vm591, %v570
  %636 = vst.msk [vmem:[%s2 + $0xb0] sm:$0xf] %vm591, %v571
  %637 = vst.msk [vmem:[%s2 + $0xb4] sm:$0xf] %vm591, %v572
  %638 = vst.msk [vmem:[%s2 + $0xb8] sm:$0xf] %vm591, %v573
  %639 = vst.msk [vmem:[%s2 + $0xbc] sm:$0xf] %vm591, %v574
  %640 = vst.msk [vmem:[%s2 + $0xc0] sm:$0xf] %vm591, %v575
  %641 = vst.msk [vmem:[%s2 + $0xc4] sm:$0xf] %vm591, %v576
  %642 = vst.msk [vmem:[%s2 + $0xc8] sm:$0xf] %vm591, %v577
  %643 = vst.msk [vmem:[%s2 + $0xcc] sm:$0xf] %vm591, %v578
  %644 = vst.msk [vmem:[%s2 + $0xd0] sm:$0xf] %vm591, %v579
  %645 = vst.msk [vmem:[%s2 + $0xd4] sm:$0xf] %vm591, %v580
  %646 = vst.msk [vmem:[%s2 + $0xd8] sm:$0xf] %vm591, %v581
  %647 = vst.msk [vmem:[%s2 + $0xdc] sm:$0xf] %vm591, %v582
  %648 = vst.msk [vmem:[%s2 + $0xe0] sm:$0xf] %vm591, %v583
  %649 = vst.msk [vmem:[%s2 + $0xe4] sm:$0xf] %vm591, %v584
  %650 = vst.msk [vmem:[%s2 + $0xe8] sm:$0xf] %vm591, %v585
  %651 = vst.msk [vmem:[%s2 + $0xec] sm:$0xf] %vm591, %v586
  %652 = vst.msk [vmem:[%s2 + $0xf0] sm:$0xf] %vm591, %v587
  %653 = vst.msk [vmem:[%s2 + $0xf4] sm:$0xf] %vm591, %v588
  %654 = vst.msk [vmem:[%s2 + $0xf8] sm:$0xf] %vm591, %v589
  %655 = vst.msk [vmem:[%s2 + $0xfc] sm:$0xf] %vm591, %v590
  %vm656 = vcmask 261120
  %v657 = vsel %vm656, %v368, 0.0
  %v658 = vsel %vm656, %v370, 0.0
  %v659 = vadd.f32 %v657, %v658
  %v660 = vsel %vm656, %v373, 0.0
  %v661 = vadd.f32 %v659, %v660
  %v662 = vsel %vm656, %v375, 0.0
  %v663 = vadd.f32 %v661, %v662
  %v664 = vsel %vm656, %v378, 0.0
  %v665 = vadd.f32 %v663, %v664
  %v666 = vsel %vm656, %v380, 0.0
  %v667 = vadd.f32 %v665, %v666
  %v668 = vsel %vm656, %v383, 0.0
  %v669 = vadd.f32 %v667, %v668
  %v670 = vsel %vm656, %v385, 0.0
  %v671 = vadd.f32 %v669, %v670
  %v672 = vsel %vm656, %v388, 0.0
  %v673 = vadd.f32 %v671, %v672
  %v674 = vsel %vm656, %v390, 0.0
  %v675 = vadd.f32 %v673, %v674
  %v676 = vsel %vm656, %v393, 0.0
  %v677 = vadd.f32 %v675, %v676
  %v678 = vsel %vm656, %v395, 0.0
  %v679 = vadd.f32 %v677, %v678
  %v680 = vsel %vm656, %v398, 0.0
  %v681 = vadd.f32 %v679, %v680
  %v682 = vsel %vm656, %v400, 0.0
  %v683 = vadd.f32 %v681, %v682
  %v684 = vsel %vm656, %v403, 0.0
  %v685 = vadd.f32 %v683, %v684
  %v686 = vsel %vm656, %v405, 0.0
  %v687 = vadd.f32 %v685, %v686
  %v688 = vsel %vm656, %v408, 0.0
  %v689 = vadd.f32 %v687, %v688
  %v690 = vsel %vm656, %v410, 0.0
  %v691 = vadd.f32 %v689, %v690
  %v692 = vsel %vm656, %v413, 0.0
  %v693 = vadd.f32 %v691, %v692
  %v694 = vsel %vm656, %v415, 0.0
  %v695 = vadd.f32 %v693, %v694
  %v696 = vsel %vm656, %v418, 0.0
  %v697 = vadd.f32 %v695, %v696
  %v698 = vsel %vm656, %v420, 0.0
  %v699 = vadd.f32 %v697, %v698
  %v700 = vsel %vm656, %v423, 0.0
  %v701 = vadd.f32 %v699, %v700
  %v702 = vsel %vm656, %v425, 0.0
  %v703 = vadd.f32 %v701, %v702
  %v704 = vsel %vm656, %v428, 0.0
  %v705 = vadd.f32 %v703, %v704
  %v706 = vsel %vm656, %v430, 0.0
  %v707 = vadd.f32 %v705, %v706
  %v708 = vsel %vm656, %v433, 0.0
  %v709 = vadd.f32 %v707, %v708
  %v710 = vsel %vm656, %v435, 0.0
  %v711 = vadd.f32 %v709, %v710
  %v712 = vsel %vm656, %v438, 0.0
  %v713 = vadd.f32 %v711, %v712
  %v714 = vsel %vm656, %v440, 0.0
  %v715 = vadd.f32 %v713, %v714
  %v716 = vsel %vm656, %v443, 0.0
  %v717 = vadd.f32 %v715, %v716
  %v718 = vsel %vm656, %v445, 0.0
  %v719 = vadd.f32 %v717, %v718
  %v720 = vsel %vm656, %v448, 0.0
  %v721 = vadd.f32 %v719, %v720
  %v722 = vsel %vm656, %v450, 0.0
  %v723 = vadd.f32 %v721, %v722
  %v724 = vsel %vm656, %v453, 0.0
  %v725 = vadd.f32 %v723, %v724
  %v726 = vsel %vm656, %v455, 0.0
  %v727 = vadd.f32 %v725, %v726
  %v728 = vsel %vm656, %v458, 0.0
  %v729 = vadd.f32 %v727, %v728
  %v730 = vsel %vm656, %v460, 0.0
  %v731 = vadd.f32 %v729, %v730
  %v732 = vsel %vm656, %v463, 0.0
  %v733 = vadd.f32 %v731, %v732
  %v734 = vsel %vm656, %v465, 0.0
  %v735 = vadd.f32 %v733, %v734
  %v736 = vsel %vm656, %v468, 0.0
  %v737 = vadd.f32 %v735, %v736
  %v738 = vsel %vm656, %v470, 0.0
  %v739 = vadd.f32 %v737, %v738
  %v740 = vsel %vm656, %v473, 0.0
  %v741 = vadd.f32 %v739, %v740
  %v742 = vsel %vm656, %v475, 0.0
  %v743 = vadd.f32 %v741, %v742
  %v744 = vsel %vm656, %v478, 0.0
  %v745 = vadd.f32 %v743, %v744
  %v746 = vsel %vm656, %v480, 0.0
  %v747 = vadd.f32 %v745, %v746
  %v748 = vsel %vm656, %v483, 0.0
  %v749 = vadd.f32 %v747, %v748
  %v750 = vsel %vm656, %v485, 0.0
  %v751 = vadd.f32 %v749, %v750
  %v752 = vsel %vm656, %v488, 0.0
  %v753 = vadd.f32 %v751, %v752
  %v754 = vsel %vm656, %v490, 0.0
  %v755 = vadd.f32 %v753, %v754
  %v756 = vsel %vm656, %v493, 0.0
  %v757 = vadd.f32 %v755, %v756
  %v758 = vsel %vm656, %v495, 0.0
  %v759 = vadd.f32 %v757, %v758
  %v760 = vsel %vm656, %v498, 0.0
  %v761 = vadd.f32 %v759, %v760
  %v762 = vsel %vm656, %v500, 0.0
  %v763 = vadd.f32 %v761, %v762
  %v764 = vsel %vm656, %v503, 0.0
  %v765 = vadd.f32 %v763, %v764
  %v766 = vsel %vm656, %v505, 0.0
  %v767 = vadd.f32 %v765, %v766
  %v768 = vsel %vm656, %v508, 0.0
  %v769 = vadd.f32 %v767, %v768
  %v770 = vsel %vm656, %v510, 0.0
  %v771 = vadd.f32 %v769, %v770
  %v772 = vsel %vm656, %v513, 0.0
  %v773 = vadd.f32 %v771, %v772
  %v774 = vsel %vm656, %v515, 0.0
  %v775 = vadd.f32 %v773, %v774
  %v776 = vsel %vm656, %v518, 0.0
  %v777 = vadd.f32 %v775, %v776
  %v778 = vsel %vm656, %v520, 0.0
  %v779 = vadd.f32 %v777, %v778
  %v780 = vsel %vm656, %v523, 0.0
  %v781 = vadd.f32 %v779, %v780
  %v782 = vsel %vm656, %v525, 0.0
  %v783 = vadd.f32 %v781, %v782
  %v784 = vrot.slane %v783, 4
  %v785 = vadd.f32 %v783, %v784
  %v786 = vrot.slane %v785, 2
  %v787 = vadd.f32 %v785, %v786
  %v788 = vrot.slane %v787, 1
  %v789 = vadd.f32 %v787, %v788
  %vm790 = vcmask 253952
  %791 = vst.msk [vmem:[%s3] sm:$0x1] %vm790, %v789
  %v792 = vmul.f32 %v368, %v368
  %v793 = vmul.f32 %v370, %v370
  %v794 = vmul.f32 %v373, %v373
  %v795 = vmul.f32 %v375, %v375
  %v796 = vmul.f32 %v378, %v378
  %v797 = vmul.f32 %v380, %v380
  %v798 = vmul.f32 %v383, %v383
  %v799 = vmul.f32 %v385, %v385
  %v800 = vmul.f32 %v388, %v388
  %v801 = vmul.f32 %v390, %v390
  %v802 = vmul.f32 %v393, %v393
  %v803 = vmul.f32 %v395, %v395
  %v804 = vmul.f32 %v398, %v398
  %v805 = vmul.f32 %v400, %v400
  %v806 = vmul.f32 %v403, %v403
  %v807 = vmul.f32 %v405, %v405
  %v808 = vmul.f32 %v408, %v408
  %v809 = vmul.f32 %v410, %v410
  %v810 = vmul.f32 %v413, %v413
  %v811 = vmul.f32 %v415, %v415
  %v812 = vmul.f32 %v418, %v418
  %v813 = vmul.f32 %v420, %v420
  %v814 = vmul.f32 %v423, %v423
  %v815 = vmul.f32 %v425, %v425
  %v816 = vmul.f32 %v428, %v428
  %v817 = vmul.f32 %v430, %v430
  %v818 = vmul.f32 %v433, %v433
  %v819 = vmul.f32 %v435, %v435
  %v820 = vmul.f32 %v438, %v438
  %v821 = vmul.f32 %v440, %v440
  %v822 = vmul.f32 %v443, %v443
  %v823 = vmul.f32 %v445, %v445
  %v824 = vmul.f32 %v448, %v448
  %v825 = vmul.f32 %v450, %v450
  %v826 = vmul.f32 %v453, %v453
  %v827 = vmul.f32 %v455, %v455
  %v828 = vmul.f32 %v458, %v458
  %v829 = vmul.f32 %v460, %v460
  %v830 = vmul.f32 %v463, %v463
  %v831 = vmul.f32 %v465, %v465
  %v832 = vmul.f32 %v468, %v468
  %v833 = vmul.f32 %v470, %v470
  %v834 = vmul.f32 %v473, %v473
  %v835 = vmul.f32 %v475, %v475
  %v836 = vmul.f32 %v478, %v478
  %v837 = vmul.f32 %v480, %v480
  %v838 = vmul.f32 %v483, %v483
  %v839 = vmul.f32 %v485, %v485
  %v840 = vmul.f32 %v488, %v488
  %v841 = vmul.f32 %v490, %v490
  %v842 = vmul.f32 %v493, %v493
  %v843 = vmul.f32 %v495, %v495
  %v844 = vmul.f32 %v498, %v498
  %v845 = vmul.f32 %v500, %v500
  %v846 = vmul.f32 %v503, %v503
  %v847 = vmul.f32 %v505, %v505
  %v848 = vmul.f32 %v508, %v508
  %v849 = vmul.f32 %v510, %v510
  %v850 = vmul.f32 %v513, %v513
  %v851 = vmul.f32 %v515, %v515
  %v852 = vmul.f32 %v518, %v518
  %v853 = vmul.f32 %v520, %v520
  %v854 = vmul.f32 %v523, %v523
  %v855 = vmul.f32 %v525, %v525
  %v856 = vsel %vm656, %v792, 0.0
  %v857 = vsel %vm656, %v793, 0.0
  %v858 = vadd.f32 %v856, %v857
  %v859 = vsel %vm656, %v794, 0.0
  %v860 = vadd.f32 %v858, %v859
  %v861 = vsel %vm656, %v795, 0.0
  %v862 = vadd.f32 %v860, %v861
  %v863 = vsel %vm656, %v796, 0.0
  %v864 = vadd.f32 %v862, %v863
  %v865 = vsel %vm656, %v797, 0.0
  %v866 = vadd.f32 %v864, %v865
  %v867 = vsel %vm656, %v798, 0.0
  %v868 = vadd.f32 %v866, %v867
  %v869 = vsel %vm656, %v799, 0.0
  %v870 = vadd.f32 %v868, %v869
  %v871 = vsel %vm656, %v800, 0.0
  %v872 = vadd.f32 %v870, %v871
  %v873 = vsel %vm656, %v801, 0.0
  %v874 = vadd.f32 %v872, %v873
  %v875 = vsel %vm656, %v802, 0.0
  %v876 = vadd.f32 %v874, %v875
  %v877 = vsel %vm656, %v803, 0.0
  %v878 = vadd.f32 %v876, %v877
  %v879 = vsel %vm656, %v804, 0.0
  %v880 = vadd.f32 %v878, %v879
  %v881 = vsel %vm656, %v805, 0.0
  %v882 = vadd.f32 %v880, %v881
  %v883 = vsel %vm656, %v806, 0.0
  %v884 = vadd.f32 %v882, %v883
  %v885 = vsel %vm656, %v807, 0.0
  %v886 = vadd.f32 %v884, %v885
  %v887 = vsel %vm656, %v808, 0.0
  %v888 = vadd.f32 %v886, %v887
  %v889 = vsel %vm656, %v809, 0.0
  %v890 = vadd.f32 %v888, %v889
  %v891 = vsel %vm656, %v810, 0.0
  %v892 = vadd.f32 %v890, %v891
  %v893 = vsel %vm656, %v811, 0.0
  %v894 = vadd.f32 %v892, %v893
  %v895 = vsel %vm656, %v812, 0.0
  %v896 = vadd.f32 %v894, %v895
  %v897 = vsel %vm656, %v813, 0.0
  %v898 = vadd.f32 %v896, %v897
  %v899 = vsel %vm656, %v814, 0.0
  %v900 = vadd.f32 %v898, %v899
  %v901 = vsel %vm656, %v815, 0.0
  %v902 = vadd.f32 %v900, %v901
  %v903 = vsel %vm656, %v816, 0.0
  %v904 = vadd.f32 %v902, %v903
  %v905 = vsel %vm656, %v817, 0.0
  %v906 = vadd.f32 %v904, %v905
  %v907 = vsel %vm656, %v818, 0.0
  %v908 = vadd.f32 %v906, %v907
  %v909 = vsel %vm656, %v819, 0.0
  %v910 = vadd.f32 %v908, %v909
  %v911 = vsel %vm656, %v820, 0.0
  %v912 = vadd.f32 %v910, %v911
  %v913 = vsel %vm656, %v821, 0.0
  %v914 = vadd.f32 %v912, %v913
  %v915 = vsel %vm656, %v822, 0.0
  %v916 = vadd.f32 %v914, %v915
  %v917 = vsel %vm656, %v823, 0.0
  %v918 = vadd.f32 %v916, %v917
  %v919 = vsel %vm656, %v824, 0.0
  %v920 = vadd.f32 %v918, %v919
  %v921 = vsel %vm656, %v825, 0.0
  %v922 = vadd.f32 %v920, %v921
  %v923 = vsel %vm656, %v826, 0.0
  %v924 = vadd.f32 %v922, %v923
  %v925 = vsel %vm656, %v827, 0.0
  %v926 = vadd.f32 %v924, %v925
  %v927 = vsel %vm656, %v828, 0.0
  %v928 = vadd.f32 %v926, %v927
  %v929 = vsel %vm656, %v829, 0.0
  %v930 = vadd.f32 %v928, %v929
  %v931 = vsel %vm656, %v830, 0.0
  %v932 = vadd.f32 %v930, %v931
  %v933 = vsel %vm656, %v831, 0.0
  %v934 = vadd.f32 %v932, %v933
  %v935 = vsel %vm656, %v832, 0.0
  %v936 = vadd.f32 %v934, %v935
  %v937 = vsel %vm656, %v833, 0.0
  %v938 = vadd.f32 %v936, %v937
  %v939 = vsel %vm656, %v834, 0.0
  %v940 = vadd.f32 %v938, %v939
  %v941 = vsel %vm656, %v835, 0.0
  %v942 = vadd.f32 %v940, %v941
  %v943 = vsel %vm656, %v836, 0.0
  %v944 = vadd.f32 %v942, %v943
  %v945 = vsel %vm656, %v837, 0.0
  %v946 = vadd.f32 %v944, %v945
  %v947 = vsel %vm656, %v838, 0.0
  %v948 = vadd.f32 %v946, %v947
  %v949 = vsel %vm656, %v839, 0.0
  %v950 = vadd.f32 %v948, %v949
  %v951 = vsel %vm656, %v840, 0.0
  %v952 = vadd.f32 %v950, %v951
  %v953 = vsel %vm656, %v841, 0.0
  %v954 = vadd.f32 %v952, %v953
  %v955 = vsel %vm656, %v842, 0.0
  %v956 = vadd.f32 %v954, %v955
  %v957 = vsel %vm656, %v843, 0.0
  %v958 = vadd.f32 %v956, %v957
  %v959 = vsel %vm656, %v844, 0.0
  %v960 = vadd.f32 %v958, %v959
  %v961 = vsel %vm656, %v845, 0.0
  %v962 = vadd.f32 %v960, %v961
  %v963 = vsel %vm656, %v846, 0.0
  %v964 = vadd.f32 %v962, %v963
  %v965 = vsel %vm656, %v847, 0.0
  %v966 = vadd.f32 %v964, %v965
  %v967 = vsel %vm656, %v848, 0.0
  %v968 = vadd.f32 %v966, %v967
  %v969 = vsel %vm656, %v849, 0.0
  %v970 = vadd.f32 %v968, %v969
  %v971 = vsel %vm656, %v850, 0.0
  %v972 = vadd.f32 %v970, %v971
  %v973 = vsel %vm656, %v851, 0.0
  %v974 = vadd.f32 %v972, %v973
  %v975 = vsel %vm656, %v852, 0.0
  %v976 = vadd.f32 %v974, %v975
  %v977 = vsel %vm656, %v853, 0.0
  %v978 = vadd.f32 %v976, %v977
  %v979 = vsel %vm656, %v854, 0.0
  %v980 = vadd.f32 %v978, %v979
  %v981 = vsel %vm656, %v855, 0.0
  %v982 = vadd.f32 %v980, %v981
  %v983 = vrot.slane %v982, 4
  %v984 = vadd.f32 %v982, %v983
  %v985 = vrot.slane %v984, 2
  %v986 = vadd.f32 %v984, %v985
  %v987 = vrot.slane %v986, 1
  %v988 = vadd.f32 %v986, %v987
  %989 = vst.msk [vmem:[%s4] sm:$0x1] %vm790, %v988
  // Predicated region
  $region10: #{regseg_forward.10} parent=0 // pred_check
    _
  $region11: #{regseg_forward.10} parent=0 // pred_check_branch
    %991 = sbr.rel (0) target = $region13
  $region12: #{regseg_forward.10} parent=0 // pred_region
    _
  $region13: #{regseg_forward.10} parent=0 // pred_fallthru
    _
  // Predicated region
  $region14: #{regseg_forward.10} parent=0 // pred_check
    _
  $region15: #{regseg_forward.10} parent=0 // pred_check_branch
    %993 = sbr.rel (0) target = $region17
  $region16: #{regseg_forward.10} parent=0 // pred_region
    _
  $region17: #{regseg_forward.10} parent=0 // pred_fallthru
    _
  // Predicated region
  $region18: #{regseg_forward.10} parent=0 // pred_check
    _
  $region19: #{regseg_forward.10} parent=0 // pred_check_branch
    %995 = sbr.rel (0) target = $region21
  $region20: #{regseg_forward.10} parent=0 // pred_region
    _
  $region21: #{regseg_forward.10} parent=0 // pred_fallthru
    _
  // Predicated region
  $region22: #{regseg_forward.10} parent=0 // pred_check
    _
  $region23: #{regseg_forward.10} parent=0 // pred_check_branch
    %997 = sbr.rel (0) target = $region25
  $region24: #{regseg_forward.10} parent=0 // pred_region
    _
  $region25: #{regseg_forward.10} parent=0 // pred_fallthru
    _
  // Predicated region
  $region26: #{regseg_forward.10} parent=0 // pred_check
    _
  $region27: #{regseg_forward.10} parent=0 // pred_check_branch
    %999 = sbr.rel (0) target = $region29
  $region28: #{regseg_forward.10} parent=0 // pred_region
    _
  $region29: #{regseg_forward.10} parent=0 // pred_fallthru
    _
  // Predicated region
  $region30: #{regseg_forward.10} parent=0 // pred_check
    _
  $region31: #{regseg_forward.10} parent=0 // pred_check_branch
    %1001 = sbr.rel (0) target = $region33
  $region32: #{regseg_forward.10} parent=0 // pred_region
    _
  $region33: #{regseg_forward.10} parent=0 // pred_fallthru
    _

// kernel: regseg_forward.11
$region0: #{regseg_forward.11}
  #allocation0 [shape = 'u32[]', space=smem, size = 0x4, offset = 0x4, fixed_abs, tag = 'smem constant byte address 0x4 - core index']
  #allocation1 [shape = 'u32[72,128]{1,0:T(1,128)}', space=vmem, size = 0x9000, scoped, tag = 'internal scratch']
  %s0 = inlined_call_operand.vmem [shape: bf16[128,288], index: 0, kind: input, shape index: {}]
  %s1 = inlined_call_operand.vmem [shape: bf16[288,48], index: 1, kind: input, shape index: {}]
  %s2 = inlined_call_operand.vmem [shape: bf16[128,48], index: 2, kind: output, shape index: {0}]
  %s3 = inlined_call_operand.vmem [shape: f32[1,1,48], index: 3, kind: output, shape index: {1}]
  %s4 = inlined_call_operand.vmem [shape: f32[1,1,48], index: 4, kind: output, shape index: {2}]
  %5 = xla_tuple %s2, %s3, %s4
  %s6 = sld [smem:[#allocation0]]
  $region34: #{regseg_forward.11} parent=0
    _
  %s8 = ssub.s32 1, %s6
  %s9 = scalar_select 0, %s8, %s6
  // Predicated region
  $region2: #{regseg_forward.11} parent=0 // pred_check
    _
  $region3: #{regseg_forward.11} parent=0 // pred_check_branch
    %11 = sbr.rel (0) target = $region5
  $region4: #{regseg_forward.11} parent=0 // pred_region
    _
  $region5: #{regseg_forward.11} parent=0 // pred_fallthru
    _
  // Predicated region
  $region6: #{regseg_forward.11} parent=0 // pred_check
    _
  $region7: #{regseg_forward.11} parent=0 // pred_check_branch
    %13 = sbr.rel (0) target = $region9
  $region8: #{regseg_forward.11} parent=0 // pred_region
    _
  $region9: #{regseg_forward.11} parent=0 // pred_fallthru
    _
  %v15 = vld [vmem:[%s0] sm:$0xff]
  %v16 = vld [vmem:[%s0 + $0x8] sm:$0xf]
  %v17 = vld [vmem:[%s0 + $0xc] sm:$0xff]
  %v18 = vld [vmem:[%s0 + $0x14] sm:$0xf]
  %v19 = vld [vmem:[%s0 + $0x18] sm:$0xff]
  %v20 = vld [vmem:[%s0 + $0x20] sm:$0xf]
  %v21 = vld [vmem:[%s0 + $0x24] sm:$0xff]
  %v22 = vld [vmem:[%s0 + $0x2c] sm:$0xf]
  %v23 = vld [vmem:[%s0 + $0x30] sm:$0xff]
  %v24 = vld [vmem:[%s0 + $0x38] sm:$0xf]
  %v25 = vld [vmem:[%s0 + $0x3c] sm:$0xff]
  %v26 = vld [vmem:[%s0 + $0x44] sm:$0xf]
  %v27 = vld [vmem:[%s0 + $0x48] sm:$0xff]
  %v28 = vld [vmem:[%s0 + $0x50] sm:$0xf]
  %v29 = vld [vmem:[%s0 + $0x54] sm:$0xff]
  %v30 = vld [vmem:[%s0 + $0x5c] sm:$0xf]
  %v31 = vld [vmem:[%s0 + $0x60] sm:$0xff]
  %v32 = vld [vmem:[%s0 + $0x68] sm:$0xf]
  %v33 = vld [vmem:[%s0 + $0x6c] sm:$0xff]
  %v34 = vld [vmem:[%s0 + $0x74] sm:$0xf]
  %v35 = vld [vmem:[%s0 + $0x78] sm:$0xff]
  %v36 = vld [vmem:[%s0 + $0x80] sm:$0xf]
  %v37 = vld [vmem:[%s0 + $0x84] sm:$0xff]
  %v38 = vld [vmem:[%s0 + $0x8c] sm:$0xf]
  %v39 = vld [vmem:[%s0 + $0x90] sm:$0xff]
  %v40 = vld [vmem:[%s0 + $0x98] sm:$0xf]
  %v41 = vld [vmem:[%s0 + $0x9c] sm:$0xff]
  %v42 = vld [vmem:[%s0 + $0xa4] sm:$0xf]
  %v43 = vld [vmem:[%s0 + $0xa8] sm:$0xff]
  %v44 = vld [vmem:[%s0 + $0xb0] sm:$0xf]
  %v45 = vld [vmem:[%s0 + $0xb4] sm:$0xff]
  %v46 = vld [vmem:[%s0 + $0xbc] sm:$0xf]
  %v47 = vld [vmem:[%s1] sm:$0xf]
  %v48 = vld [vmem:[%s1 + $0x4] sm:$0xf]
  %v49 = vld [vmem:[%s1 + $0x8] sm:$0xf]
  %v50 = vld [vmem:[%s1 + $0xc] sm:$0xf]
  %v51 = vld [vmem:[%s1 + $0x10] sm:$0xf]
  %v52 = vld [vmem:[%s1 + $0x14] sm:$0xf]
  %v53 = vld [vmem:[%s1 + $0x18] sm:$0xf]
  %v54 = vld [vmem:[%s1 + $0x1c] sm:$0xf]
  %v55 = vld [vmem:[%s1 + $0x20] sm:$0xf]
  %v56 = vld [vmem:[%s1 + $0x24] sm:$0xf]
  %v57 = vld [vmem:[%s1 + $0x28] sm:$0xf]
  %v58 = vld [vmem:[%s1 + $0x2c] sm:$0xf]
  %v59 = vld [vmem:[%s1 + $0x30] sm:$0xf]
  %v60 = vld [vmem:[%s1 + $0x34] sm:$0xf]
  %v61 = vld [vmem:[%s1 + $0x38] sm:$0xf]
  %v62 = vld [vmem:[%s1 + $0x3c] sm:$0xf]
  %v63 = vld [vmem:[%s1 + $0x40] sm:$0xf]
  %v64 = vld [vmem:[%s1 + $0x44] sm:$0xf]
  %v65 = vld [vmem:[%s1 + $0x48] sm:$0xf]
  %v66 = vld [vmem:[%s1 + $0x4c] sm:$0xf]
  %v67 = vld [vmem:[%s1 + $0x50] sm:$0xf]
  %v68 = vld [vmem:[%s1 + $0x54] sm:$0xf]
  %v69 = vld [vmem:[%s1 + $0x58] sm:$0xf]
  %v70 = vld [vmem:[%s1 + $0x5c] sm:$0xf]
  %v71 = vld [vmem:[%s1 + $0x60] sm:$0xf]
  %v72 = vld [vmem:[%s1 + $0x64] sm:$0xf]
  %v73 = vld [vmem:[%s1 + $0x68] sm:$0xf]
  %v74 = vld [vmem:[%s1 + $0x6c] sm:$0xf]
  %v75 = vld [vmem:[%s1 + $0x70] sm:$0xf]
  %v76 = vld [vmem:[%s1 + $0x74] sm:$0xf]
  %v77 = vld [vmem:[%s1 + $0x78] sm:$0xf]
  %v78 = vld [vmem:[%s1 + $0x7c] sm:$0xf]
  %v79 = vld [vmem:[%s1 + $0x80] sm:$0xf]
  %v80 = vld [vmem:[%s1 + $0x84] sm:$0xf]
  %v81 = vld [vmem:[%s1 + $0x88] sm:$0xf]
  %v82 = vld [vmem:[%s1 + $0x8c] sm:$0xf]
  %v115 = vunpack.c.l.b16 %v15
  %v116 = vunpack.c.h.b16 %v15
  %v117 = vunpack.c.l.b16 %v16
  %v118 = vunpack.c.l.b16 %v17
  %v119 = vunpack.c.h.b16 %v17
  %v120 = vunpack.c.l.b16 %v18
  %v121 = vunpack.c.l.b16 %v19
  %v122 = vunpack.c.h.b16 %v19
  %v123 = vunpack.c.l.b16 %v20
  %v124 = vunpack.c.l.b16 %v21
  %v125 = vunpack.c.h.b16 %v21
  %v126 = vunpack.c.l.b16 %v22
  %v127 = vunpack.c.l.b16 %v23
  %v128 = vunpack.c.h.b16 %v23
  %v129 = vunpack.c.l.b16 %v24
  %v130 = vunpack.c.l.b16 %v25
  %v131 = vunpack.c.h.b16 %v25
  %v132 = vunpack.c.l.b16 %v26
  %v133 = vunpack.c.l.b16 %v27
  %v134 = vunpack.c.h.b16 %v27
  %v135 = vunpack.c.l.b16 %v28
  %v136 = vunpack.c.l.b16 %v29
  %v137 = vunpack.c.h.b16 %v29
  %v138 = vunpack.c.l.b16 %v30
  %v139 = vunpack.c.l.b16 %v31
  %v140 = vunpack.c.h.b16 %v31
  %v141 = vunpack.c.l.b16 %v32
  %v142 = vunpack.c.l.b16 %v33
  %v143 = vunpack.c.h.b16 %v33
  %v144 = vunpack.c.l.b16 %v34
  %v145 = vunpack.c.l.b16 %v35
  %v146 = vunpack.c.h.b16 %v35
  %v147 = vunpack.c.l.b16 %v36
  %v148 = vunpack.c.l.b16 %v37
  %v149 = vunpack.c.h.b16 %v37
  %v150 = vunpack.c.l.b16 %v38
  %v151 = vunpack.c.l.b16 %v39
  %v152 = vunpack.c.h.b16 %v39
  %v153 = vunpack.c.l.b16 %v40
  %v154 = vunpack.c.l.b16 %v41
  %v155 = vunpack.c.h.b16 %v41
  %v156 = vunpack.c.l.b16 %v42
  %v157 = vunpack.c.l.b16 %v43
  %v158 = vunpack.c.h.b16 %v43
  %v159 = vunpack.c.l.b16 %v44
  %v160 = vunpack.c.l.b16 %v45
  %v161 = vunpack.c.h.b16 %v45
  %v162 = vunpack.c.l.b16 %v46
  %v163 = vpack.c.b16 %v118, %v115
  %v164 = vpack.c.b16 %v119, %v116
  %v165 = vpack.c.b16 %v120, %v117
  %v166 = vpack.c.b16 %v124, %v121
  %v167 = vpack.c.b16 %v125, %v122
  %v168 = vpack.c.b16 %v126, %v123
  %v169 = vpack.c.b16 %v130, %v127
  %v170 = vpack.c.b16 %v131, %v128
  %v171 = vpack.c.b16 %v132, %v129
  %v172 = vpack.c.b16 %v136, %v133
  %v173 = vpack.c.b16 %v137, %v134
  %v174 = vpack.c.b16 %v138, %v135
  %v175 = vpack.c.b16 %v142, %v139
  %v176 = vpack.c.b16 %v143, %v140
  %v177 = vpack.c.b16 %v144, %v141
  %v178 = vpack.c.b16 %v148, %v145
  %v179 = vpack.c.b16 %v149, %v146
  %v180 = vpack.c.b16 %v150, %v147
  %v181 = vpack.c.b16 %v154, %v151
  %v182 = vpack.c.b16 %v155, %v152
  %v183 = vpack.c.b16 %v156, %v153
  %v184 = vpack.c.b16 %v160, %v157
  %v185 = vpack.c.b16 %v161, %v158
  %v186 = vpack.c.b16 %v162, %v159
  %v239 = vunpack.c.l.b16 %v47
  %v240 = vunpack.c.l.b16 %v48
  %v241 = vunpack.c.l.b16 %v49
  %v242 = vunpack.c.l.b16 %v50
  %v243 = vunpack.c.l.b16 %v51
  %v244 = vunpack.c.l.b16 %v52
  %v245 = vunpack.c.l.b16 %v53
  %v246 = vunpack.c.l.b16 %v54
  %v247 = vunpack.c.l.b16 %v55
  %v248 = vunpack.c.l.b16 %v56
  %v249 = vunpack.c.l.b16 %v57
  %v250 = vunpack.c.l.b16 %v58
  %v251 = vunpack.c.l.b16 %v59
  %v252 = vunpack.c.l.b16 %v60
  %v253 = vunpack.c.l.b16 %v61
  %v254 = vunpack.c.l.b16 %v62
  %v255 = vunpack.c.l.b16 %v63
  %v256 = vunpack.c.l.b16 %v64
  %v257 = vunpack.c.l.b16 %v65
  %v258 = vunpack.c.l.b16 %v66
  %v259 = vunpack.c.l.b16 %v67
  %v260 = vunpack.c.l.b16 %v68
  %v261 = vunpack.c.l.b16 %v69
  %v262 = vunpack.c.l.b16 %v70
  %v263 = vunpack.c.l.b16 %v71
  %v264 = vunpack.c.l.b16 %v72
  %v265 = vunpack.c.l.b16 %v73
  %v266 = vunpack.c.l.b16 %v74
  %v267 = vunpack.c.l.b16 %v75
  %v268 = vunpack.c.l.b16 %v76
  %v269 = vunpack.c.l.b16 %v77
  %v270 = vunpack.c.l.b16 %v78
  %v271 = vunpack.c.l.b16 %v79
  %v272 = vunpack.c.l.b16 %v80
  %v273 = vunpack.c.l.b16 %v81
  %v274 = vunpack.c.l.b16 %v82
  %v275 = vpack.c.b16 %v240, %v239
  %v276 = vpack.c.b16 %v242, %v241
  %v277 = vpack.c.b16 %v244, %v243
  %v278 = vpack.c.b16 %v246, %v245
  %v279 = vpack.c.b16 %v248, %v247
  %v280 = vpack.c.b16 %v250, %v249
  %v281 = vpack.c.b16 %v252, %v251
  %v282 = vpack.c.b16 %v254, %v253
  %v283 = vpack.c.b16 %v256, %v255
  %v284 = vpack.c.b16 %v258, %v257
  %v285 = vpack.c.b16 %v260, %v259
  %v286 = vpack.c.b16 %v262, %v261
  %v287 = vpack.c.b16 %v264, %v263
  %v288 = vpack.c.b16 %v266, %v265
  %v289 = vpack.c.b16 %v268, %v267
  %v290 = vpack.c.b16 %v270, %v269
  %v291 = vpack.c.b16 %v272, %v271
  %v292 = vpack.c.b16 %v274, %v273
  %vm311 = vcmask 261120
  %v313 = vsel %vm311, %v165, 0
  %v316 = vsel %vm311, %v168, 0
  %v319 = vsel %vm311, %v171, 0
  %v322 = vsel %vm311, %v174, 0
  %v325 = vsel %vm311, %v177, 0
  %v328 = vsel %vm311, %v180, 0
  %v331 = vsel %vm311, %v183, 0
  %v334 = vsel %vm311, %v186, 0
  %336 = vmatpush.bf16.msra.mxu0 %v282
  %337 = vmatpush.bf16.msra.mxu0 %v281
  %338 = vmatpush.bf16.msra.mxu0 %v280
  %339 = vmatpush.bf16.msra.mxu0 %v279
  %340 = vmatpush.bf16.msra.mxu0 %v278
  %341 = vmatpush.bf16.msra.mxu0 %v277
  %342 = vmatpush.bf16.msra.mxu0 %v276
  %343 = vmatpush.bf16.msra.mxu0 %v275
  %344 = vmatmul.bf16.gmra.mxu0 %v163
  %v345 = vpop.f32.mrf.mxu0
  %v346 = vadd.f32 0.0, %v345
  %v347 = vpop.f32.mrf.mxu0
  %v348 = vadd.f32 0.0, %v347
  %349 = vmatmul.bf16.gmra.mxu0 %v166
  %v350 = vpop.f32.mrf.mxu0
  %v351 = vadd.f32 0.0, %v350
  %v352 = vpop.f32.mrf.mxu0
  %v353 = vadd.f32 0.0, %v352
  %354 = vmatmul.bf16.gmra.mxu0 %v169
  %v355 = vpop.f32.mrf.mxu0
  %v356 = vadd.f32 0.0, %v355
  %v357 = vpop.f32.mrf.mxu0
  %v358 = vadd.f32 0.0, %v357
  %359 = vmatmul.bf16.gmra.mxu0 %v172
  %v360 = vpop.f32.mrf.mxu0
  %v361 = vadd.f32 0.0, %v360
  %v362 = vpop.f32.mrf.mxu0
  %v363 = vadd.f32 0.0, %v362
  %364 = vmatmul.bf16.gmra.mxu0 %v175
  %v365 = vpop.f32.mrf.mxu0
  %v366 = vadd.f32 0.0, %v365
  %v367 = vpop.f32.mrf.mxu0
  %v368 = vadd.f32 0.0, %v367
  %369 = vmatmul.bf16.gmra.mxu0 %v178
  %v370 = vpop.f32.mrf.mxu0
  %v371 = vadd.f32 0.0, %v370
  %v372 = vpop.f32.mrf.mxu0
  %v373 = vadd.f32 0.0, %v372
  %374 = vmatmul.bf16.gmra.mxu0 %v181
  %v375 = vpop.f32.mrf.mxu0
  %v376 = vadd.f32 0.0, %v375
  %v377 = vpop.f32.mrf.mxu0
  %v378 = vadd.f32 0.0, %v377
  %379 = vmatmul.bf16.gmra.mxu0 %v184
  %v380 = vpop.f32.mrf.mxu0
  %v381 = vadd.f32 0.0, %v380
  %v382 = vpop.f32.mrf.mxu0
  %v383 = vadd.f32 0.0, %v382
  %384 = vdwg.mxu0
  %385 = vmatpush.bf16.msra.mxu0 %v290
  %386 = vmatpush.bf16.msra.mxu0 %v289
  %387 = vmatpush.bf16.msra.mxu0 %v288
  %388 = vmatpush.bf16.msra.mxu0 %v287
  %389 = vmatpush.bf16.msra.mxu0 %v286
  %390 = vmatpush.bf16.msra.mxu0 %v285
  %391 = vmatpush.bf16.msra.mxu0 %v284
  %392 = vmatpush.bf16.msra.mxu0 %v283
  %393 = vmatmul.bf16.gmra.mxu0 %v164
  %v394 = vpop.f32.mrf.mxu0
  %v395 = vadd.f32 %v346, %v394
  %v396 = vpop.f32.mrf.mxu0
  %v397 = vadd.f32 %v348, %v396
  %398 = vmatmul.bf16.gmra.mxu0 %v167
  %v399 = vpop.f32.mrf.mxu0
  %v400 = vadd.f32 %v351, %v399
  %v401 = vpop.f32.mrf.mxu0
  %v402 = vadd.f32 %v353, %v401
  %403 = vmatmul.bf16.gmra.mxu0 %v170
  %v404 = vpop.f32.mrf.mxu0
  %v405 = vadd.f32 %v356, %v404
  %v406 = vpop.f32.mrf.mxu0
  %v407 = vadd.f32 %v358, %v406
  %408 = vmatmul.bf16.gmra.mxu0 %v173
  %v409 = vpop.f32.mrf.mxu0
  %v410 = vadd.f32 %v361, %v409
  %v411 = vpop.f32.mrf.mxu0
  %v412 = vadd.f32 %v363, %v411
  %413 = vmatmul.bf16.gmra.mxu0 %v176
  %v414 = vpop.f32.mrf.mxu0
  %v415 = vadd.f32 %v366, %v414
  %v416 = vpop.f32.mrf.mxu0
  %v417 = vadd.f32 %v368, %v416
  %418 = vmatmul.bf16.gmra.mxu0 %v179
  %v419 = vpop.f32.mrf.mxu0
  %v420 = vadd.f32 %v371, %v419
  %v421 = vpop.f32.mrf.mxu0
  %v422 = vadd.f32 %v373, %v421
  %423 = vmatmul.bf16.gmra.mxu0 %v182
  %v424 = vpop.f32.mrf.mxu0
  %v425 = vadd.f32 %v376, %v424
  %v426 = vpop.f32.mrf.mxu0
  %v427 = vadd.f32 %v378, %v426
  %428 = vmatmul.bf16.gmra.mxu0 %v185
  %v429 = vpop.f32.mrf.mxu0
  %v430 = vadd.f32 %v381, %v429
  %v431 = vpop.f32.mrf.mxu0
  %v432 = vadd.f32 %v383, %v431
  %433 = vdwg.mxu0
  %434 = vmatpush.bf16.msra.mxu0 0
  %435 = vmatpush.bf16.msra.mxu0 0
  %436 = vmatpush.bf16.msra.mxu0 0
  %437 = vmatpush.bf16.msra.mxu0 0
  %438 = vmatpush.bf16.msra.mxu0 0
  %439 = vmatpush.bf16.msra.mxu0 0
  %440 = vmatpush.bf16.msra.mxu0 %v292
  %441 = vmatpush.bf16.msra.mxu0 %v291
  %442 = vmatmul.bf16.gmra.mxu0 %v313
  %v443 = vpop.f32.mrf.mxu0
  %v444 = vadd.f32 %v395, %v443
  %v445 = vpop.f32.mrf.mxu0
  %v446 = vadd.f32 %v397, %v445
  %447 = vmatmul.bf16.gmra.mxu0 %v316
  %v448 = vpop.f32.mrf.mxu0
  %v449 = vadd.f32 %v400, %v448
  %v450 = vpop.f32.mrf.mxu0
  %v451 = vadd.f32 %v402, %v450
  %452 = vmatmul.bf16.gmra.mxu0 %v319
  %v453 = vpop.f32.mrf.mxu0
  %v454 = vadd.f32 %v405, %v453
  %v455 = vpop.f32.mrf.mxu0
  %v456 = vadd.f32 %v407, %v455
  %457 = vmatmul.bf16.gmra.mxu0 %v322
  %v458 = vpop.f32.mrf.mxu0
  %v459 = vadd.f32 %v410, %v458
  %v460 = vpop.f32.mrf.mxu0
  %v461 = vadd.f32 %v412, %v460
  %462 = vmatmul.bf16.gmra.mxu0 %v325
  %v463 = vpop.f32.mrf.mxu0
  %v464 = vadd.f32 %v415, %v463
  %v465 = vpop.f32.mrf.mxu0
  %v466 = vadd.f32 %v417, %v465
  %467 = vmatmul.bf16.gmra.mxu0 %v328
  %v468 = vpop.f32.mrf.mxu0
  %v469 = vadd.f32 %v420, %v468
  %v470 = vpop.f32.mrf.mxu0
  %v471 = vadd.f32 %v422, %v470
  %472 = vmatmul.bf16.gmra.mxu0 %v331
  %v473 = vpop.f32.mrf.mxu0
  %v474 = vadd.f32 %v425, %v473
  %v475 = vpop.f32.mrf.mxu0
  %v476 = vadd.f32 %v427, %v475
  %477 = vmatmul.bf16.gmra.mxu0 %v334
  %v478 = vpop.f32.mrf.mxu0
  %v479 = vadd.f32 %v430, %v478
  %v480 = vpop.f32.mrf.mxu0
  %v481 = vadd.f32 %v432, %v480
  %482 = vdwg.mxu0
  %v483 = vpack.c.bf16 %v444, %v444
  %v484 = vpack.c.bf16 %v446, %v446
  %v485 = vpack.c.bf16 %v449, %v449
  %v486 = vpack.c.bf16 %v451, %v451
  %v487 = vpack.c.bf16 %v454, %v454
  %v488 = vpack.c.bf16 %v456, %v456
  %v489 = vpack.c.bf16 %v459, %v459
  %v490 = vpack.c.bf16 %v461, %v461
  %v491 = vpack.c.bf16 %v464, %v464
  %v492 = vpack.c.bf16 %v466, %v466
  %v493 = vpack.c.bf16 %v469, %v469
  %v494 = vpack.c.bf16 %v471, %v471
  %v495 = vpack.c.bf16 %v474, %v474
  %v496 = vpack.c.bf16 %v476, %v476
  %v497 = vpack.c.bf16 %v479, %v479
  %v498 = vpack.c.bf16 %v481, %v481
  %vm499 = vcmask 388096
  %500 = vst.msk [vmem:[%s2] sm:$0xf] %vm499, %v483
  %501 = vst.msk [vmem:[%s2 + $0x4] sm:$0xf] %vm499, %v484
  %502 = vst.msk [vmem:[%s2 + $0x8] sm:$0xf] %vm499, %v485
  %503 = vst.msk [vmem:[%s2 + $0xc] sm:$0xf] %vm499, %v486
  %504 = vst.msk [vmem:[%s2 + $0x10] sm:$0xf] %vm499, %v487
  %505 = vst.msk [vmem:[%s2 + $0x14] sm:$0xf] %vm499, %v488
  %506 = vst.msk [vmem:[%s2 + $0x18] sm:$0xf] %vm499, %v489
  %507 = vst.msk [vmem:[%s2 + $0x1c] sm:$0xf] %vm499, %v490
  %508 = vst.msk [vmem:[%s2 + $0x20] sm:$0xf] %vm499, %v491
  %509 = vst.msk [vmem:[%s2 + $0x24] sm:$0xf] %vm499, %v492
  %510 = vst.msk [vmem:[%s2 + $0x28] sm:$0xf] %vm499, %v493
  %511 = vst.msk [vmem:[%s2 + $0x2c] sm:$0xf] %vm499, %v494
  %512 = vst.msk [vmem:[%s2 + $0x30] sm:$0xf] %vm499, %v495
  %513 = vst.msk [vmem:[%s2 + $0x34] sm:$0xf] %vm499, %v496
  %514 = vst.msk [vmem:[%s2 + $0x38] sm:$0xf] %vm499, %v497
  %515 = vst.msk [vmem:[%s2 + $0x3c] sm:$0xf] %vm499, %v498
  %vm516 = vcmask 392192
  %v517 = vsel %vm516, %v444, 0.0
  %v518 = vsel %vm516, %v446, 0.0
  %v519 = vadd.f32 %v517, %v518
  %v520 = vsel %vm516, %v449, 0.0
  %v521 = vadd.f32 %v519, %v520
  %v522 = vsel %vm516, %v451, 0.0
  %v523 = vadd.f32 %v521, %v522
  %v524 = vsel %vm516, %v454, 0.0
  %v525 = vadd.f32 %v523, %v524
  %v526 = vsel %vm516, %v456, 0.0
  %v527 = vadd.f32 %v525, %v526
  %v528 = vsel %vm516, %v459, 0.0
  %v529 = vadd.f32 %v527, %v528
  %v530 = vsel %vm516, %v461, 0.0
  %v531 = vadd.f32 %v529, %v530
  %v532 = vsel %vm516, %v464, 0.0
  %v533 = vadd.f32 %v531, %v532
  %v534 = vsel %vm516, %v466, 0.0
  %v535 = vadd.f32 %v533, %v534
  %v536 = vsel %vm516, %v469, 0.0
  %v537 = vadd.f32 %v535, %v536
  %v538 = vsel %vm516, %v471, 0.0
  %v539 = vadd.f32 %v537, %v538
  %v540 = vsel %vm516, %v474, 0.0
  %v541 = vadd.f32 %v539, %v540
  %v542 = vsel %vm516, %v476, 0.0
  %v543 = vadd.f32 %v541, %v542
  %v544 = vsel %vm516, %v479, 0.0
  %v545 = vadd.f32 %v543, %v544
  %v546 = vsel %vm516, %v481, 0.0
  %v547 = vadd.f32 %v545, %v546
  %v548 = vrot.slane %v547, 4
  %v549 = vadd.f32 %v547, %v548
  %v550 = vrot.slane %v549, 2
  %v551 = vadd.f32 %v549, %v550
  %v552 = vrot.slane %v551, 1
  %v553 = vadd.f32 %v551, %v552
  %vm554 = vcmask 385024
  %555 = vst.msk [vmem:[%s3] sm:$0x1] %vm554, %v553
  %v556 = vmul.f32 %v444, %v444
  %v557 = vmul.f32 %v446, %v446
  %v558 = vmul.f32 %v449, %v449
  %v559 = vmul.f32 %v451, %v451
  %v560 = vmul.f32 %v454, %v454
  %v561 = vmul.f32 %v456, %v456
  %v562 = vmul.f32 %v459, %v459
  %v563 = vmul.f32 %v461, %v461
  %v564 = vmul.f32 %v464, %v464
  %v565 = vmul.f32 %v466, %v466
  %v566 = vmul.f32 %v469, %v469
  %v567 = vmul.f32 %v471, %v471
  %v568 = vmul.f32 %v474, %v474
  %v569 = vmul.f32 %v476, %v476
  %v570 = vmul.f32 %v479, %v479
  %v571 = vmul.f32 %v481, %v481
  %v572 = vsel %vm516, %v556, 0.0
  %v573 = vsel %vm516, %v557, 0.0
  %v574 = vadd.f32 %v572, %v573
  %v575 = vsel %vm516, %v558, 0.0
  %v576 = vadd.f32 %v574, %v575
  %v577 = vsel %vm516, %v559, 0.0
  %v578 = vadd.f32 %v576, %v577
  %v579 = vsel %vm516, %v560, 0.0
  %v580 = vadd.f32 %v578, %v579
  %v581 = vsel %vm516, %v561, 0.0
  %v582 = vadd.f32 %v580, %v581
  %v583 = vsel %vm516, %v562, 0.0
  %v584 = vadd.f32 %v582, %v583
  %v585 = vsel %vm516, %v563, 0.0
  %v586 = vadd.f32 %v584, %v585
  %v587 = vsel %vm516, %v564, 0.0
  %v588 = vadd.f32 %v586, %v587
  %v589 = vsel %vm516, %v565, 0.0
  %v590 = vadd.f32 %v588, %v589
  %v591 = vsel %vm516, %v566, 0.0
  %v592 = vadd.f32 %v590, %v591
  %v593 = vsel %vm516, %v567, 0.0
  %v594 = vadd.f32 %v592, %v593
  %v595 = vsel %vm516, %v568, 0.0
  %v596 = vadd.f32 %v594, %v595
  %v597 = vsel %vm516, %v569, 0.0
  %v598 = vadd.f32 %v596, %v597
  %v599 = vsel %vm516, %v570, 0.0
  %v600 = vadd.f32 %v598, %v599
  %v601 = vsel %vm516, %v571, 0.0
  %v602 = vadd.f32 %v600, %v601
  %v603 = vrot.slane %v602, 4
  %v604 = vadd.f32 %v602, %v603
  %v605 = vrot.slane %v604, 2
  %v606 = vadd.f32 %v604, %v605
  %v607 = vrot.slane %v606, 1
  %v608 = vadd.f32 %v606, %v607
  %609 = vst.msk [vmem:[%s4] sm:$0x1] %vm554, %v608
  // Predicated region
  $region10: #{regseg_forward.11} parent=0 // pred_check
    _
  $region11: #{regseg_forward.11} parent=0 // pred_check_branch
    %611 = sbr.rel (0) target = $region13
  $region12: #{regseg_forward.11} parent=0 // pred_region
    _
  $region13: #{regseg_forward.11} parent=0 // pred_fallthru
    _
  // Predicated region
  $region14: #{regseg_forward.11} parent=0 // pred_check
    _
  $region15: #{regseg_forward.11} parent=0 // pred_check_branch
    %613 = sbr.rel (0) target = $region17
  $region16: #{regseg_forward.11} parent=0 // pred_region
    _
  $region17: #{regseg_forward.11} parent=0 // pred_fallthru
    _
  // Predicated region
  $region18: #{regseg_forward.11} parent=0 // pred_check
    _
  $region19: #{regseg_forward.11} parent=0 // pred_check_branch
    %615 = sbr.rel (0) target = $region21
  $region20: #{regseg_forward.11} parent=0 // pred_region
    _
  $region21: #{regseg_forward.11} parent=0 // pred_fallthru
    _
  // Predicated region
  $region22: #{regseg_forward.11} parent=0 // pred_check
    _
  $region23: #{regseg_forward.11} parent=0 // pred_check_branch
    %617 = sbr.rel (0) target = $region25
  $region24: #{regseg_forward.11} parent=0 // pred_region
    _
  $region25: #{regseg_forward.11} parent=0 // pred_fallthru
    _
  // Predicated region
  $region26: #{regseg_forward.11} parent=0 // pred_check
    _
  $region27: #{regseg_forward.11} parent=0 // pred_check_branch
    %619 = sbr.rel (0) target = $region29
  $region28: #{regseg_forward.11} parent=0 // pred_region
    _
  $region29: #{regseg_forward.11} parent=0 // pred_fallthru
    _
  // Predicated region
  $region30: #{regseg_forward.11} parent=0 // pred_check
    _
  $region31: #{regseg_forward.11} parent=0 // pred_check_branch
    %621 = sbr.rel (0) target = $region33
  $region32: #{regseg_forward.11} parent=0 // pred_region
    _
  $region33: #{regseg_forward.11} parent=0 // pred_fallthru
    _

// kernel: regseg_forward.12
$region0: #{regseg_forward.12}
  #allocation0 [shape = 'u32[]', space=smem, size = 0x4, offset = 0x4, fixed_abs, tag = 'smem constant byte address 0x4 - core index']
  #allocation1 [shape = 'u32[72,128]{1,0:T(1,128)}', space=vmem, size = 0x9000, scoped, tag = 'internal scratch']
  %s0 = inlined_call_operand.vmem [shape: bf16[32,432], index: 0, kind: input, shape index: {}]
  %s1 = inlined_call_operand.vmem [shape: bf16[432,128], index: 1, kind: input, shape index: {}]
  %s2 = inlined_call_operand.vmem [shape: bf16[32,128], index: 2, kind: output, shape index: {0}]
  %s3 = inlined_call_operand.vmem [shape: f32[1,1,128], index: 3, kind: output, shape index: {1}]
  %s4 = inlined_call_operand.vmem [shape: f32[1,1,128], index: 4, kind: output, shape index: {2}]
  %5 = xla_tuple %s2, %s3, %s4
  %s6 = sld [smem:[#allocation0]]
  $region34: #{regseg_forward.12} parent=0
    _
  %s8 = ssub.s32 1, %s6
  %s9 = scalar_select 0, %s8, %s6
  // Predicated region
  $region2: #{regseg_forward.12} parent=0 // pred_check
    _
  $region3: #{regseg_forward.12} parent=0 // pred_check_branch
    %11 = sbr.rel (0) target = $region5
  $region4: #{regseg_forward.12} parent=0 // pred_region
    _
  $region5: #{regseg_forward.12} parent=0 // pred_fallthru
    _
  // Predicated region
  $region6: #{regseg_forward.12} parent=0 // pred_check
    _
  $region7: #{regseg_forward.12} parent=0 // pred_check_branch
    %13 = sbr.rel (0) target = $region9
  $region8: #{regseg_forward.12} parent=0 // pred_region
    _
  $region9: #{regseg_forward.12} parent=0 // pred_fallthru
    _
  %v15 = vld [vmem:[%s0] sm:$0xff]
  %v16 = vld [vmem:[%s0 + $0x8] sm:$0xff]
  %v17 = vld [vmem:[%s0 + $0x10] sm:$0xff]
  %v18 = vld [vmem:[%s0 + $0x18] sm:$0xff]
  %v19 = vld [vmem:[%s0 + $0x20] sm:$0xff]
  %v20 = vld [vmem:[%s0 + $0x28] sm:$0xff]
  %v21 = vld [vmem:[%s0 + $0x30] sm:$0xff]
  %v22 = vld [vmem:[%s0 + $0x38] sm:$0xff]
  %v23 = vld [vmem:[%s1] sm:$0xf]
  %v24 = vld [vmem:[%s1 + $0x4] sm:$0xf]
  %v25 = vld [vmem:[%s1 + $0x8] sm:$0xf]
  %v26 = vld [vmem:[%s1 + $0xc] sm:$0xf]
  %v27 = vld [vmem:[%s1 + $0x10] sm:$0xf]
  %v28 = vld [vmem:[%s1 + $0x14] sm:$0xf]
  %v29 = vld [vmem:[%s1 + $0x18] sm:$0xf]
  %v30 = vld [vmem:[%s1 + $0x1c] sm:$0xf]
  %v31 = vld [vmem:[%s1 + $0x20] sm:$0xf]
  %v32 = vld [vmem:[%s1 + $0x24] sm:$0xf]
  %v33 = vld [vmem:[%s1 + $0x28] sm:$0xf]
  %v34 = vld [vmem:[%s1 + $0x2c] sm:$0xf]
  %v35 = vld [vmem:[%s1 + $0x30] sm:$0xf]
  %v36 = vld [vmem:[%s1 + $0x34] sm:$0xf]
  %v37 = vld [vmem:[%s1 + $0x38] sm:$0xf]
  %v38 = vld [vmem:[%s1 + $0x3c] sm:$0xf]
  %v39 = vld [vmem:[%s1 + $0x40] sm:$0xf]
  %v40 = vld [vmem:[%s1 + $0x44] sm:$0xf]
  %v41 = vld [vmem:[%s1 + $0x48] sm:$0xf]
  %v42 = vld [vmem:[%s1 + $0x4c] sm:$0xf]
  %v43 = vld [vmem:[%s1 + $0x50] sm:$0xf]
  %v44 = vld [vmem:[%s1 + $0x54] sm:$0xf]
  %v45 = vld [vmem:[%s1 + $0x58] sm:$0xf]
  %v46 = vld [vmem:[%s1 + $0x5c] sm:$0xf]
  %v47 = vld [vmem:[%s1 + $0x60] sm:$0xf]
  %v48 = vld [vmem:[%s1 + $0x64] sm:$0xf]
  %v49 = vld [vmem:[%s1 + $0x68] sm:$0xf]
  %v50 = vld [vmem:[%s1 + $0x6c] sm:$0xf]
  %v51 = vld [vmem:[%s1 + $0x70] sm:$0xf]
  %v52 = vld [vmem:[%s1 + $0x74] sm:$0xf]
  %v53 = vld [vmem:[%s1 + $0x78] sm:$0xf]
  %v54 = vld [vmem:[%s1 + $0x7c] sm:$0xf]
  %v55 = vld [vmem:[%s1 + $0x80] sm:$0xf]
  %v56 = vld [vmem:[%s1 + $0x84] sm:$0xf]
  %v57 = vld [vmem:[%s1 + $0x88] sm:$0xf]
  %v58 = vld [vmem:[%s1 + $0x8c] sm:$0xf]
  %v59 = vld [vmem:[%s1 + $0x90] sm:$0xf]
  %v60 = vld [vmem:[%s1 + $0x94] sm:$0xf]
  %v61 = vld [vmem:[%s1 + $0x98] sm:$0xf]
  %v62 = vld [vmem:[%s1 + $0x9c] sm:$0xf]
  %v63 = vld [vmem:[%s1 + $0xa0] sm:$0xf]
  %v64 = vld [vmem:[%s1 + $0xa4] sm:$0xf]
  %v65 = vld [vmem:[%s1 + $0xa8] sm:$0xf]
  %v66 = vld [vmem:[%s1 + $0xac] sm:$0xf]
  %v67 = vld [vmem:[%s1 + $0xb0] sm:$0xf]
  %v68 = vld [vmem:[%s1 + $0xb4] sm:$0xf]
  %v69 = vld [vmem:[%s1 + $0xb8] sm:$0xf]
  %v70 = vld [vmem:[%s1 + $0xbc] sm:$0xf]
  %v71 = vld [vmem:[%s1 + $0xc0] sm:$0xf]
  %v72 = vld [vmem:[%s1 + $0xc4] sm:$0xf]
  %v73 = vld [vmem:[%s1 + $0xc8] sm:$0xf]
  %v74 = vld [vmem:[%s1 + $0xcc] sm:$0xf]
  %v75 = vld [vmem:[%s1 + $0xd0] sm:$0xf]
  %v76 = vld [vmem:[%s1 + $0xd4] sm:$0xf]
  %v85 = vunpack.c.l.b16 %v15
  %v86 = vunpack.c.h.b16 %v15
  %v87 = vunpack.c.l.b16 %v16
  %v88 = vunpack.c.h.b16 %v16
  %v89 = vunpack.c.l.b16 %v17
  %v90 = vunpack.c.h.b16 %v17
  %v91 = vunpack.c.l.b16 %v18
  %v92 = vunpack.c.h.b16 %v18
  %v93 = vunpack.c.l.b16 %v19
  %v94 = vunpack.c.h.b16 %v19
  %v95 = vunpack.c.l.b16 %v20
  %v96 = vunpack.c.h.b16 %v20
  %v97 = vunpack.c.l.b16 %v21
  %v98 = vunpack.c.h.b16 %v21
  %v99 = vunpack.c.l.b16 %v22
  %v100 = vunpack.c.h.b16 %v22
  %v101 = vpack.c.b16 %v89, %v85
  %v102 = vpack.c.b16 %v90, %v86
  %v103 = vpack.c.b16 %v91, %v87
  %v104 = vpack.c.b16 %v92, %v88
  %v105 = vpack.c.b16 %v97, %v93
  %v106 = vpack.c.b16 %v98, %v94
  %v107 = vpack.c.b16 %v99, %v95
  %v108 = vpack.c.b16 %v100, %v96
  %v169 = vunpack.c.l.b16 %v23
  %v170 = vunpack.c.l.b16 %v24
  %v171 = vunpack.c.l.b16 %v25
  %v172 = vunpack.c.l.b16 %v26
  %v173 = vunpack.c.l.b16 %v27
  %v174 = vunpack.c.l.b16 %v28
  %v175 = vunpack.c.l.b16 %v29
  %v176 = vunpack.c.l.b16 %v30
  %v177 = vunpack.c.l.b16 %v31
  %v178 = vunpack.c.l.b16 %v32
  %v179 = vunpack.c.l.b16 %v33
  %v180 = vunpack.c.l.b16 %v34
  %v181 = vunpack.c.l.b16 %v35
  %v182 = vunpack.c.l.b16 %v36
  %v183 = vunpack.c.l.b16 %v37
  %v184 = vunpack.c.l.b16 %v38
  %v185 = vunpack.c.l.b16 %v39
  %v186 = vunpack.c.l.b16 %v40
  %v187 = vunpack.c.l.b16 %v41
  %v188 = vunpack.c.l.b16 %v42
  %v189 = vunpack.c.l.b16 %v43
  %v190 = vunpack.c.l.b16 %v44
  %v191 = vunpack.c.l.b16 %v45
  %v192 = vunpack.c.l.b16 %v46
  %v193 = vunpack.c.l.b16 %v47
  %v194 = vunpack.c.l.b16 %v48
  %v195 = vunpack.c.l.b16 %v49
  %v196 = vunpack.c.l.b16 %v50
  %v197 = vunpack.c.l.b16 %v51
  %v198 = vunpack.c.l.b16 %v52
  %v199 = vunpack.c.l.b16 %v53
  %v200 = vunpack.c.l.b16 %v54
  %v201 = vunpack.c.l.b16 %v55
  %v202 = vunpack.c.l.b16 %v56
  %v203 = vunpack.c.l.b16 %v57
  %v204 = vunpack.c.l.b16 %v58
  %v205 = vunpack.c.l.b16 %v59
  %v206 = vunpack.c.l.b16 %v60
  %v207 = vunpack.c.l.b16 %v61
  %v208 = vunpack.c.l.b16 %v62
  %v209 = vunpack.c.l.b16 %v63
  %v210 = vunpack.c.l.b16 %v64
  %v211 = vunpack.c.l.b16 %v65
  %v212 = vunpack.c.l.b16 %v66
  %v213 = vunpack.c.l.b16 %v67
  %v214 = vunpack.c.l.b16 %v68
  %v215 = vunpack.c.l.b16 %v69
  %v216 = vunpack.c.l.b16 %v70
  %v217 = vunpack.c.l.b16 %v71
  %v218 = vunpack.c.l.b16 %v72
  %v219 = vunpack.c.l.b16 %v73
  %v220 = vunpack.c.l.b16 %v74
  %v221 = vunpack.c.l.b16 %v75
  %v222 = vunpack.c.l.b16 %v76
  %v223 = vpack.c.b16 %v170, %v169
  %v224 = vpack.c.b16 %v172, %v171
  %v225 = vpack.c.b16 %v174, %v173
  %v226 = vpack.c.b16 %v176, %v175
  %v227 = vpack.c.b16 %v178, %v177
  %v228 = vpack.c.b16 %v180, %v179
  %v229 = vpack.c.b16 %v182, %v181
  %v230 = vpack.c.b16 %v184, %v183
  %v231 = vpack.c.b16 %v186, %v185
  %v232 = vpack.c.b16 %v188, %v187
  %v233 = vpack.c.b16 %v190, %v189
  %v234 = vpack.c.b16 %v192, %v191
  %v235 = vpack.c.b16 %v194, %v193
  %v236 = vpack.c.b16 %v196, %v195
  %v237 = vpack.c.b16 %v198, %v197
  %v238 = vpack.c.b16 %v200, %v199
  %v239 = vpack.c.b16 %v202, %v201
  %v240 = vpack.c.b16 %v204, %v203
  %v241 = vpack.c.b16 %v206, %v205
  %v242 = vpack.c.b16 %v208, %v207
  %v243 = vpack.c.b16 %v210, %v209
  %v244 = vpack.c.b16 %v212, %v211
  %v245 = vpack.c.b16 %v214, %v213
  %v246 = vpack.c.b16 %v216, %v215
  %v247 = vpack.c.b16 %v218, %v217
  %v248 = vpack.c.b16 %v220, %v219
  %v249 = vpack.c.b16 %v222, %v221
  %vm277 = vcmask 392192
  %v279 = vsel %vm277, %v104, 0
  %v282 = vsel %vm277, %v108, 0
  %284 = vmatpush.bf16.msra.mxu0 %v230
  %285 = vmatpush.bf16.msra.mxu0 %v229
  %286 = vmatpush.bf16.msra.mxu0 %v228
  %287 = vmatpush.bf16.msra.mxu0 %v227
  %288 = vmatpush.bf16.msra.mxu0 %v226
  %289 = vmatpush.bf16.msra.mxu0 %v225
  %290 = vmatpush.bf16.msra.mxu0 %v224
  %291 = vmatpush.bf16.msra.mxu0 %v223
  %292 = vmatmul.bf16.gmra.mxu0 %v101
  %v293 = vpop.f32.mrf.mxu0
  %v294 = vadd.f32 0.0, %v293
  %v295 = vpop.f32.mrf.mxu0
  %v296 = vadd.f32 0.0, %v295
  %297 = vmatmul.bf16.gmra.mxu0 %v105
  %v298 = vpop.f32.mrf.mxu0
  %v299 = vadd.f32 0.0, %v298
  %v300 = vpop.f32.mrf.mxu0
  %v301 = vadd.f32 0.0, %v300
  %302 = vdwg.mxu0
  %303 = vmatpush.bf16.msra.mxu0 %v238
  %304 = vmatpush.bf16.msra.mxu0 %v237
  %305 = vmatpush.bf16.msra.mxu0 %v236
  %306 = vmatpush.bf16.msra.mxu0 %v235
  %307 = vmatpush.bf16.msra.mxu0 %v234
  %308 = vmatpush.bf16.msra.mxu0 %v233
  %309 = vmatpush.bf16.msra.mxu0 %v232
  %310 = vmatpush.bf16.msra.mxu0 %v231
  %311 = vmatmul.bf16.gmra.mxu0 %v102
  %v312 = vpop.f32.mrf.mxu0
  %v313 = vadd.f32 %v294, %v312
  %v314 = vpop.f32.mrf.mxu0
  %v315 = vadd.f32 %v296, %v314
  %316 = vmatmul.bf16.gmra.mxu0 %v106
  %v317 = vpop.f32.mrf.mxu0
  %v318 = vadd.f32 %v299, %v317
  %v319 = vpop.f32.mrf.mxu0
  %v320 = vadd.f32 %v301, %v319
  %321 = vdwg.mxu0
  %322 = vmatpush.bf16.msra.mxu0 %v246
  %323 = vmatpush.bf16.msra.mxu0 %v245
  %324 = vmatpush.bf16.msra.mxu0 %v244
  %325 = vmatpush.bf16.msra.mxu0 %v243
  %326 = vmatpush.bf16.msra.mxu0 %v242
  %327 = vmatpush.bf16.msra.mxu0 %v241
  %328 = vmatpush.bf16.msra.mxu0 %v240
  %329 = vmatpush.bf16.msra.mxu0 %v239
  %330 = vmatmul.bf16.gmra.mxu0 %v103
  %v331 = vpop.f32.mrf.mxu0
  %v332 = vadd.f32 %v313, %v331
  %v333 = vpop.f32.mrf.mxu0
  %v334 = vadd.f32 %v315, %v333
  %335 = vmatmul.bf16.gmra.mxu0 %v107
  %v336 = vpop.f32.mrf.mxu0
  %v337 = vadd.f32 %v318, %v336
  %v338 = vpop.f32.mrf.mxu0
  %v339 = vadd.f32 %v320, %v338
  %340 = vdwg.mxu0
  %341 = vmatpush.bf16.msra.mxu0 0
  %342 = vmatpush.bf16.msra.mxu0 0
  %343 = vmatpush.bf16.msra.mxu0 0
  %344 = vmatpush.bf16.msra.mxu0 0
  %345 = vmatpush.bf16.msra.mxu0 0
  %346 = vmatpush.bf16.msra.mxu0 %v249
  %347 = vmatpush.bf16.msra.mxu0 %v248
  %348 = vmatpush.bf16.msra.mxu0 %v247
  %349 = vmatmul.bf16.gmra.mxu0 %v279
  %v350 = vpop.f32.mrf.mxu0
  %v351 = vadd.f32 %v332, %v350
  %v352 = vpop.f32.mrf.mxu0
  %v353 = vadd.f32 %v334, %v352
  %354 = vmatmul.bf16.gmra.mxu0 %v282
  %v355 = vpop.f32.mrf.mxu0
  %v356 = vadd.f32 %v337, %v355
  %v357 = vpop.f32.mrf.mxu0
  %v358 = vadd.f32 %v339, %v357
  %359 = vdwg.mxu0
  %v360 = vpack.c.bf16 %v351, %v351
  %v361 = vpack.c.bf16 %v353, %v353
  %v362 = vpack.c.bf16 %v356, %v356
  %v363 = vpack.c.bf16 %v358, %v358
  %364 = vst [vmem:[%s2] sm:$0xf] %v360
  %365 = vst [vmem:[%s2 + $0x4] sm:$0xf] %v361
  %366 = vst [vmem:[%s2 + $0x8] sm:$0xf] %v362
  %367 = vst [vmem:[%s2 + $0xc] sm:$0xf] %v363
  %v368 = vadd.f32 %v351, %v353
  %v369 = vadd.f32 %v368, %v356
  %v370 = vadd.f32 %v369, %v358
  %v371 = vrot.slane %v370, 4
  %v372 = vadd.f32 %v370, %v371
  %v373 = vrot.slane %v372, 2
  %v374 = vadd.f32 %v372, %v373
  %v375 = vrot.slane %v374, 1
  %v376 = vadd.f32 %v374, %v375
  %377 = vst [vmem:[%s3] sm:$0x1] %v376
  %v378 = vmul.f32 %v351, %v351
  %v379 = vmul.f32 %v353, %v353
  %v380 = vmul.f32 %v356, %v356
  %v381 = vmul.f32 %v358, %v358
  %v382 = vadd.f32 %v378, %v379
  %v383 = vadd.f32 %v382, %v380
  %v384 = vadd.f32 %v383, %v381
  %v385 = vrot.slane %v384, 4
  %v386 = vadd.f32 %v384, %v385
  %v387 = vrot.slane %v386, 2
  %v388 = vadd.f32 %v386, %v387
  %v389 = vrot.slane %v388, 1
  %v390 = vadd.f32 %v388, %v389
  %391 = vst [vmem:[%s4] sm:$0x1] %v390
  // Predicated region
  $region10: #{regseg_forward.12} parent=0 // pred_check
    _
  $region11: #{regseg_forward.12} parent=0 // pred_check_branch
    %393 = sbr.rel (0) target = $region13
  $region12: #{regseg_forward.12} parent=0 // pred_region
    _
  $region13: #{regseg_forward.12} parent=0 // pred_fallthru
    _
  // Predicated region
  $region14: #{regseg_forward.12} parent=0 // pred_check
    _
  $region15: #{regseg_forward.12} parent=0 // pred_check_branch
    %395 = sbr.rel (0) target = $region17
  $region16: #{regseg_forward.12} parent=0 // pred_region
    _
  $region17: #{regseg_forward.12} parent=0 // pred_fallthru
    _
  // Predicated region
  $region18: #{regseg_forward.12} parent=0 // pred_check
    _
  $region19: #{regseg_forward.12} parent=0 // pred_check_branch
    %397 = sbr.rel (0) target = $region21
  $region20: #{regseg_forward.12} parent=0 // pred_region
    _
  $region21: #{regseg_forward.12} parent=0 // pred_fallthru
    _
  // Predicated region
  $region22: #{regseg_forward.12} parent=0 // pred_check
    _
  $region23: #{regseg_forward.12} parent=0 // pred_check_branch
    %399 = sbr.rel (0) target = $region25
  $region24: #{regseg_forward.12} parent=0 // pred_region
    _
  $region25: #{regseg_forward.12} parent=0 // pred_fallthru
    _
  // Predicated region
  $region26: #{regseg_forward.12} parent=0 // pred_check
    _
  $region27: #{regseg_forward.12} parent=0 // pred_check_branch
    %401 = sbr.rel (0) target = $region29
  $region28: #{regseg_forward.12} parent=0 // pred_region
    _
  $region29: #{regseg_forward.12} parent=0 // pred_fallthru
    _
  // Predicated region
  $region30: #{regseg_forward.12} parent=0 // pred_check
    _
  $region31: #{regseg_forward.12} parent=0 // pred_check_branch
    %403 = sbr.rel (0) target = $region33
  $region32: #{regseg_forward.12} parent=0 // pred_region
    _
  $region33: #{regseg_forward.12} parent=0 // pred_fallthru
    _

// kernel: regseg_forward.15
$region0: #{regseg_forward.15}
  #allocation0 [shape = 'u32[]', space=smem, size = 0x4, offset = 0x4, fixed_abs, tag = 'smem constant byte address 0x4 - core index']
  #allocation1 [shape = 'u32[72,128]{1,0:T(1,128)}', space=vmem, size = 0x9000, scoped, tag = 'internal scratch']
  %s0 = inlined_call_operand.vmem [shape: bf16[32,128], index: 0, kind: input, shape index: {}]
  %s1 = inlined_call_operand.vmem [shape: f32[1,128], index: 1, kind: input, shape index: {}]
  %s2 = inlined_call_operand.vmem [shape: f32[1,128], index: 2, kind: input, shape index: {}]
  %s3 = inlined_call_operand.vmem [shape: bf16[128,128], index: 3, kind: input, shape index: {}]
  %s4 = inlined_call_operand.vmem [shape: bf16[32,128], index: 4, kind: output, shape index: {0}]
  %s5 = inlined_call_operand.vmem [shape: f32[1,1,128], index: 5, kind: output, shape index: {1}]
  %s6 = inlined_call_operand.vmem [shape: f32[1,1,128], index: 6, kind: output, shape index: {2}]
  %7 = xla_tuple %s4, %s5, %s6
  %s8 = sld [smem:[#allocation0]]
  $region42: #{regseg_forward.15} parent=0
    _
  %s10 = ssub.s32 1, %s8
  %s11 = scalar_select 0, %s10, %s8
  // Predicated region
  $region2: #{regseg_forward.15} parent=0 // pred_check
    _
  $region3: #{regseg_forward.15} parent=0 // pred_check_branch
    %13 = sbr.rel (0) target = $region5
  $region4: #{regseg_forward.15} parent=0 // pred_region
    _
  $region5: #{regseg_forward.15} parent=0 // pred_fallthru
    _
  // Predicated region
  $region6: #{regseg_forward.15} parent=0 // pred_check
    _
  $region7: #{regseg_forward.15} parent=0 // pred_check_branch
    %15 = sbr.rel (0) target = $region9
  $region8: #{regseg_forward.15} parent=0 // pred_region
    _
  $region9: #{regseg_forward.15} parent=0 // pred_fallthru
    _
  // Predicated region
  $region10: #{regseg_forward.15} parent=0 // pred_check
    _
  $region11: #{regseg_forward.15} parent=0 // pred_check_branch
    %17 = sbr.rel (0) target = $region13
  $region12: #{regseg_forward.15} parent=0 // pred_region
    _
  $region13: #{regseg_forward.15} parent=0 // pred_fallthru
    _
  // Predicated region
  $region14: #{regseg_forward.15} parent=0 // pred_check
    _
  $region15: #{regseg_forward.15} parent=0 // pred_check_branch
    %19 = sbr.rel (0) target = $region17
  $region16: #{regseg_forward.15} parent=0 // pred_region
    _
  $region17: #{regseg_forward.15} parent=0 // pred_fallthru
    _
  %v20 = vld [vmem:[%s0] sm:$0xf]
  %v21 = vld [vmem:[%s0 + $0x4] sm:$0xf]
  %v22 = vld [vmem:[%s0 + $0x8] sm:$0xf]
  %v23 = vld [vmem:[%s0 + $0xc] sm:$0xf]
  %v24 = vunpack.c.l.bf16 %v20
  %v25 = vunpack.c.l.bf16 %v21
  %v26 = vunpack.c.l.bf16 %v22
  %v27 = vunpack.c.l.bf16 %v23
  %v28 = vld [vmem:[%s1] sm:$0x1]
  %v30 = vperm.slane %v28, 0
  %v32 = vmul.f32 %v24, %v30
  %v33 = vmul.f32 %v25, %v30
  %v34 = vmul.f32 %v26, %v30
  %v35 = vmul.f32 %v27, %v30
  %v36 = vld [vmem:[%s2] sm:$0x1]
  %v38 = vperm.slane %v36, 0
  %v40 = vadd.f32 %v32, %v38
  %v41 = vadd.f32 %v33, %v38
  %v42 = vadd.f32 %v34, %v38
  %v43 = vadd.f32 %v35, %v38
  %v44 = vmax.f32 %v40, 0.0
  %v45 = vmax.f32 %v41, 0.0
  %v46 = vmax.f32 %v42, 0.0
  %v47 = vmax.f32 %v43, 0.0
  %v48 = vpack.c.bf16 %v45, %v44
  %v49 = vpack.c.bf16 %v47, %v46
  %v50 = vld [vmem:[%s3] sm:$0xf]
  %v51 = vld [vmem:[%s3 + $0x4] sm:$0xf]
  %v52 = vld [vmem:[%s3 + $0x8] sm:$0xf]
  %v53 = vld [vmem:[%s3 + $0xc] sm:$0xf]
  %v54 = vld [vmem:[%s3 + $0x10] sm:$0xf]
  %v55 = vld [vmem:[%s3 + $0x14] sm:$0xf]
  %v56 = vld [vmem:[%s3 + $0x18] sm:$0xf]
  %v57 = vld [vmem:[%s3 + $0x1c] sm:$0xf]
  %v58 = vld [vmem:[%s3 + $0x20] sm:$0xf]
  %v59 = vld [vmem:[%s3 + $0x24] sm:$0xf]
  %v60 = vld [vmem:[%s3 + $0x28] sm:$0xf]
  %v61 = vld [vmem:[%s3 + $0x2c] sm:$0xf]
  %v62 = vld [vmem:[%s3 + $0x30] sm:$0xf]
  %v63 = vld [vmem:[%s3 + $0x34] sm:$0xf]
  %v64 = vld [vmem:[%s3 + $0x38] sm:$0xf]
  %v65 = vld [vmem:[%s3 + $0x3c] sm:$0xf]
  %v82 = vunpack.c.l.b16 %v50
  %v83 = vunpack.c.l.b16 %v51
  %v84 = vunpack.c.l.b16 %v52
  %v85 = vunpack.c.l.b16 %v53
  %v86 = vunpack.c.l.b16 %v54
  %v87 = vunpack.c.l.b16 %v55
  %v88 = vunpack.c.l.b16 %v56
  %v89 = vunpack.c.l.b16 %v57
  %v90 = vunpack.c.l.b16 %v58
  %v91 = vunpack.c.l.b16 %v59
  %v92 = vunpack.c.l.b16 %v60
  %v93 = vunpack.c.l.b16 %v61
  %v94 = vunpack.c.l.b16 %v62
  %v95 = vunpack.c.l.b16 %v63
  %v96 = vunpack.c.l.b16 %v64
  %v97 = vunpack.c.l.b16 %v65
  %v98 = vpack.c.b16 %v83, %v82
  %v99 = vpack.c.b16 %v85, %v84
  %v100 = vpack.c.b16 %v87, %v86
  %v101 = vpack.c.b16 %v89, %v88
  %v102 = vpack.c.b16 %v91, %v90
  %v103 = vpack.c.b16 %v93, %v92
  %v104 = vpack.c.b16 %v95, %v94
  %v105 = vpack.c.b16 %v97, %v96
  %114 = vmatpush.bf16.msra.mxu0 %v105
  %115 = vmatpush.bf16.msra.mxu0 %v104
  %116 = vmatpush.bf16.msra.mxu0 %v103
  %117 = vmatpush.bf16.msra.mxu0 %v102
  %118 = vmatpush.bf16.msra.mxu0 %v101
  %119 = vmatpush.bf16.msra.mxu0 %v100
  %120 = vmatpush.bf16.msra.mxu0 %v99
  %121 = vmatpush.bf16.msra.mxu0 %v98
  %122 = vmatmul.bf16.gmra.mxu0 %v48
  %v123 = vpop.f32.mrf.mxu0
  %v124 = vadd.f32 0.0, %v123
  %v125 = vpop.f32.mrf.mxu0
  %v126 = vadd.f32 0.0, %v125
  %127 = vmatmul.bf16.gmra.mxu0 %v49
  %v128 = vpop.f32.mrf.mxu0
  %v129 = vadd.f32 0.0, %v128
  %v130 = vpop.f32.mrf.mxu0
  %v131 = vadd.f32 0.0, %v130
  %132 = vdwg.mxu0
  %v133 = vpack.c.bf16 %v124, %v124
  %v134 = vpack.c.bf16 %v126, %v126
  %v135 = vpack.c.bf16 %v129, %v129
  %v136 = vpack.c.bf16 %v131, %v131
  %137 = vst [vmem:[%s4] sm:$0xf] %v133
  %138 = vst [vmem:[%s4 + $0x4] sm:$0xf] %v134
  %139 = vst [vmem:[%s4 + $0x8] sm:$0xf] %v135
  %140 = vst [vmem:[%s4 + $0xc] sm:$0xf] %v136
  %v141 = vadd.f32 %v124, %v126
  %v142 = vadd.f32 %v141, %v129
  %v143 = vadd.f32 %v142, %v131
  %v144 = vrot.slane %v143, 4
  %v145 = vadd.f32 %v143, %v144
  %v146 = vrot.slane %v145, 2
  %v147 = vadd.f32 %v145, %v146
  %v148 = vrot.slane %v147, 1
  %v149 = vadd.f32 %v147, %v148
  %150 = vst [vmem:[%s5] sm:$0x1] %v149
  %v151 = vmul.f32 %v124, %v124
  %v152 = vmul.f32 %v126, %v126
  %v153 = vmul.f32 %v129, %v129
  %v154 = vmul.f32 %v131, %v131
  %v155 = vadd.f32 %v151, %v152
  %v156 = vadd.f32 %v155, %v153
  %v157 = vadd.f32 %v156, %v154
  %v158 = vrot.slane %v157, 4
  %v159 = vadd.f32 %v157, %v158
  %v160 = vrot.slane %v159, 2
  %v161 = vadd.f32 %v159, %v160
  %v162 = vrot.slane %v161, 1
  %v163 = vadd.f32 %v161, %v162
  %164 = vst [vmem:[%s6] sm:$0x1] %v163
  // Predicated region
  $region18: #{regseg_forward.15} parent=0 // pred_check
    _
  $region19: #{regseg_forward.15} parent=0 // pred_check_branch
    %166 = sbr.rel (0) target = $region21
  $region20: #{regseg_forward.15} parent=0 // pred_region
    _
  $region21: #{regseg_forward.15} parent=0 // pred_fallthru
    _
  // Predicated region
  $region22: #{regseg_forward.15} parent=0 // pred_check
    _
  $region23: #{regseg_forward.15} parent=0 // pred_check_branch
    %168 = sbr.rel (0) target = $region25
  $region24: #{regseg_forward.15} parent=0 // pred_region
    _
  $region25: #{regseg_forward.15} parent=0 // pred_fallthru
    _
  // Predicated region
  $region26: #{regseg_forward.15} parent=0 // pred_check
    _
  $region27: #{regseg_forward.15} parent=0 // pred_check_branch
    %170 = sbr.rel (0) target = $region29
  $region28: #{regseg_forward.15} parent=0 // pred_region
    _
  $region29: #{regseg_forward.15} parent=0 // pred_fallthru
    _
  // Predicated region
  $region30: #{regseg_forward.15} parent=0 // pred_check
    _
  $region31: #{regseg_forward.15} parent=0 // pred_check_branch
    %172 = sbr.rel (0) target = $region33
  $region32: #{regseg_forward.15} parent=0 // pred_region
    _
  $region33: #{regseg_forward.15} parent=0 // pred_fallthru
    _
  // Predicated region
  $region34: #{regseg_forward.15} parent=0 // pred_check
    _
  $region35: #{regseg_forward.15} parent=0 // pred_check_branch
    %174 = sbr.rel (0) target = $region37
  $region36: #{regseg_forward.15} parent=0 // pred_region
    _
  $region37: #{regseg_forward.15} parent=0 // pred_fallthru
    _
  // Predicated region
  $region38: #{regseg_forward.15} parent=0 // pred_check
    _
  $region39: #{regseg_forward.15} parent=0 // pred_check_branch
    %176 = sbr.rel (0) target = $region41
  $region40: #{regseg_forward.15} parent=0 // pred_region
    _
  $region41: #{regseg_forward.15} parent=0 // pred_fallthru
    _

// kernel: regseg_forward.14
$region0: #{regseg_forward.14}
  #allocation0 [shape = 'u32[]', space=smem, size = 0x4, offset = 0x4, fixed_abs, tag = 'smem constant byte address 0x4 - core index']
  #allocation1 [shape = 'u32[72,128]{1,0:T(1,128)}', space=vmem, size = 0x9000, scoped, tag = 'internal scratch']
  %s0 = inlined_call_operand.vmem [shape: bf16[16,320], index: 0, kind: input, shape index: {}]
  %s1 = inlined_call_operand.vmem [shape: f32[1,320], index: 1, kind: input, shape index: {}]
  %s2 = inlined_call_operand.vmem [shape: f32[1,320], index: 2, kind: input, shape index: {}]
  %s3 = inlined_call_operand.vmem [shape: bf16[320,128], index: 3, kind: input, shape index: {}]
  %s4 = inlined_call_operand.vmem [shape: bf16[16,128], index: 4, kind: output, shape index: {0}]
  %s5 = inlined_call_operand.vmem [shape: f32[1,1,128], index: 5, kind: output, shape index: {1}]
  %s6 = inlined_call_operand.vmem [shape: f32[1,1,128], index: 6, kind: output, shape index: {2}]
  %7 = xla_tuple %s4, %s5, %s6
  %s8 = sld [smem:[#allocation0]]
  $region42: #{regseg_forward.14} parent=0
    _
  %s10 = ssub.s32 1, %s8
  %s11 = scalar_select 0, %s10, %s8
  // Predicated region
  $region2: #{regseg_forward.14} parent=0 // pred_check
    _
  $region3: #{regseg_forward.14} parent=0 // pred_check_branch
    %13 = sbr.rel (0) target = $region5
  $region4: #{regseg_forward.14} parent=0 // pred_region
    _
  $region5: #{regseg_forward.14} parent=0 // pred_fallthru
    _
  // Predicated region
  $region6: #{regseg_forward.14} parent=0 // pred_check
    _
  $region7: #{regseg_forward.14} parent=0 // pred_check_branch
    %15 = sbr.rel (0) target = $region9
  $region8: #{regseg_forward.14} parent=0 // pred_region
    _
  $region9: #{regseg_forward.14} parent=0 // pred_fallthru
    _
  // Predicated region
  $region10: #{regseg_forward.14} parent=0 // pred_check
    _
  $region11: #{regseg_forward.14} parent=0 // pred_check_branch
    %17 = sbr.rel (0) target = $region13
  $region12: #{regseg_forward.14} parent=0 // pred_region
    _
  $region13: #{regseg_forward.14} parent=0 // pred_fallthru
    _
  // Predicated region
  $region14: #{regseg_forward.14} parent=0 // pred_check
    _
  $region15: #{regseg_forward.14} parent=0 // pred_check_branch
    %19 = sbr.rel (0) target = $region17
  $region16: #{regseg_forward.14} parent=0 // pred_region
    _
  $region17: #{regseg_forward.14} parent=0 // pred_fallthru
    _
  %v21 = vld [vmem:[%s0] sm:$0xff]
  %v22 = vld [vmem:[%s0 + $0x8] sm:$0xf]
  %v23 = vld [vmem:[%s0 + $0xc] sm:$0xff]
  %v24 = vld [vmem:[%s0 + $0x14] sm:$0xf]
  %v25 = vunpack.c.l.bf16 %v21
  %v26 = vunpack.c.h.bf16 %v21
  %v27 = vunpack.c.l.bf16 %v22
  %v28 = vunpack.c.l.bf16 %v23
  %v29 = vunpack.c.h.bf16 %v23
  %v30 = vunpack.c.l.bf16 %v24
  %v31 = vld [vmem:[%s1] sm:$0x7]
  %v33 = vperm.slane %v31, 0
  %v34 = vperm.slane %v31, 1
  %v35 = vperm.slane %v31, 2
  %v39 = vmul.f32 %v25, %v33
  %v40 = vmul.f32 %v26, %v34
  %v41 = vmul.f32 %v27, %v35
  %v42 = vmul.f32 %v28, %v33
  %v43 = vmul.f32 %v29, %v34
  %v44 = vmul.f32 %v30, %v35
  %v45 = vld [vmem:[%s2] sm:$0x7]
  %v47 = vperm.slane %v45, 0
  %v48 = vperm.slane %v45, 1
  %v49 = vperm.slane %v45, 2
  %v53 = vadd.f32 %v39, %v47
  %v54 = vadd.f32 %v40, %v48
  %v55 = vadd.f32 %v41, %v49
  %v56 = vadd.f32 %v42, %v47
  %v57 = vadd.f32 %v43, %v48
  %v58 = vadd.f32 %v44, %v49
  %v59 = vmax.f32 %v53, 0.0
  %v60 = vmax.f32 %v54, 0.0
  %v61 = vmax.f32 %v55, 0.0
  %v62 = vmax.f32 %v56, 0.0
  %v63 = vmax.f32 %v57, 0.0
  %v64 = vmax.f32 %v58, 0.0
  %v65 = vpack.c.bf16 %v62, %v59
  %v66 = vpack.c.bf16 %v63, %v60
  %v67 = vpack.c.bf16 %v64, %v61
  %v68 = vld [vmem:[%s3] sm:$0xf]
  %v69 = vld [vmem:[%s3 + $0x4] sm:$0xf]
  %v70 = vld [vmem:[%s3 + $0x8] sm:$0xf]
  %v71 = vld [vmem:[%s3 + $0xc] sm:$0xf]
  %v72 = vld [vmem:[%s3 + $0x10] sm:$0xf]
  %v73 = vld [vmem:[%s3 + $0x14] sm:$0xf]
  %v74 = vld [vmem:[%s3 + $0x18] sm:$0xf]
  %v75 = vld [vmem:[%s3 + $0x1c] sm:$0xf]
  %v76 = vld [vmem:[%s3 + $0x20] sm:$0xf]
  %v77 = vld [vmem:[%s3 + $0x24] sm:$0xf]
  %v78 = vld [vmem:[%s3 + $0x28] sm:$0xf]
  %v79 = vld [vmem:[%s3 + $0x2c] sm:$0xf]
  %v80 = vld [vmem:[%s3 + $0x30] sm:$0xf]
  %v81 = vld [vmem:[%s3 + $0x34] sm:$0xf]
  %v82 = vld [vmem:[%s3 + $0x38] sm:$0xf]
  %v83 = vld [vmem:[%s3 + $0x3c] sm:$0xf]
  %v84 = vld [vmem:[%s3 + $0x40] sm:$0xf]
  %v85 = vld [vmem:[%s3 + $0x44] sm:$0xf]
  %v86 = vld [vmem:[%s3 + $0x48] sm:$0xf]
  %v87 = vld [vmem:[%s3 + $0x4c] sm:$0xf]
  %v88 = vld [vmem:[%s3 + $0x50] sm:$0xf]
  %v89 = vld [vmem:[%s3 + $0x54] sm:$0xf]
  %v90 = vld [vmem:[%s3 + $0x58] sm:$0xf]
  %v91 = vld [vmem:[%s3 + $0x5c] sm:$0xf]
  %v92 = vld [vmem:[%s3 + $0x60] sm:$0xf]
  %v93 = vld [vmem:[%s3 + $0x64] sm:$0xf]
  %v94 = vld [vmem:[%s3 + $0x68] sm:$0xf]
  %v95 = vld [vmem:[%s3 + $0x6c] sm:$0xf]
  %v96 = vld [vmem:[%s3 + $0x70] sm:$0xf]
  %v97 = vld [vmem:[%s3 + $0x74] sm:$0xf]
  %v98 = vld [vmem:[%s3 + $0x78] sm:$0xf]
  %v99 = vld [vmem:[%s3 + $0x7c] sm:$0xf]
  %v100 = vld [vmem:[%s3 + $0x80] sm:$0xf]
  %v101 = vld [vmem:[%s3 + $0x84] sm:$0xf]
  %v102 = vld [vmem:[%s3 + $0x88] sm:$0xf]
  %v103 = vld [vmem:[%s3 + $0x8c] sm:$0xf]
  %v104 = vld [vmem:[%s3 + $0x90] sm:$0xf]
  %v105 = vld [vmem:[%s3 + $0x94] sm:$0xf]
  %v106 = vld [vmem:[%s3 + $0x98] sm:$0xf]
  %v107 = vld [vmem:[%s3 + $0x9c] sm:$0xf]
  %v148 = vunpack.c.l.b16 %v68
  %v149 = vunpack.c.l.b16 %v69
  %v150 = vunpack.c.l.b16 %v70
  %v151 = vunpack.c.l.b16 %v71
  %v152 = vunpack.c.l.b16 %v72
  %v153 = vunpack.c.l.b16 %v73
  %v154 = vunpack.c.l.b16 %v74
  %v155 = vunpack.c.l.b16 %v75
  %v156 = vunpack.c.l.b16 %v76
  %v157 = vunpack.c.l.b16 %v77
  %v158 = vunpack.c.l.b16 %v78
  %v159 = vunpack.c.l.b16 %v79
  %v160 = vunpack.c.l.b16 %v80
  %v161 = vunpack.c.l.b16 %v81
  %v162 = vunpack.c.l.b16 %v82
  %v163 = vunpack.c.l.b16 %v83
  %v164 = vunpack.c.l.b16 %v84
  %v165 = vunpack.c.l.b16 %v85
  %v166 = vunpack.c.l.b16 %v86
  %v167 = vunpack.c.l.b16 %v87
  %v168 = vunpack.c.l.b16 %v88
  %v169 = vunpack.c.l.b16 %v89
  %v170 = vunpack.c.l.b16 %v90
  %v171 = vunpack.c.l.b16 %v91
  %v172 = vunpack.c.l.b16 %v92
  %v173 = vunpack.c.l.b16 %v93
  %v174 = vunpack.c.l.b16 %v94
  %v175 = vunpack.c.l.b16 %v95
  %v176 = vunpack.c.l.b16 %v96
  %v177 = vunpack.c.l.b16 %v97
  %v178 = vunpack.c.l.b16 %v98
  %v179 = vunpack.c.l.b16 %v99
  %v180 = vunpack.c.l.b16 %v100
  %v181 = vunpack.c.l.b16 %v101
  %v182 = vunpack.c.l.b16 %v102
  %v183 = vunpack.c.l.b16 %v103
  %v184 = vunpack.c.l.b16 %v104
  %v185 = vunpack.c.l.b16 %v105
  %v186 = vunpack.c.l.b16 %v106
  %v187 = vunpack.c.l.b16 %v107
  %v188 = vpack.c.b16 %v149, %v148
  %v189 = vpack.c.b16 %v151, %v150
  %v190 = vpack.c.b16 %v153, %v152
  %v191 = vpack.c.b16 %v155, %v154
  %v192 = vpack.c.b16 %v157, %v156
  %v193 = vpack.c.b16 %v159, %v158
  %v194 = vpack.c.b16 %v161, %v160
  %v195 = vpack.c.b16 %v163, %v162
  %v196 = vpack.c.b16 %v165, %v164
  %v197 = vpack.c.b16 %v167, %v166
  %v198 = vpack.c.b16 %v169, %v168
  %v199 = vpack.c.b16 %v171, %v170
  %v200 = vpack.c.b16 %v173, %v172
  %v201 = vpack.c.b16 %v175, %v174
  %v202 = vpack.c.b16 %v177, %v176
  %v203 = vpack.c.b16 %v179, %v178
  %v204 = vpack.c.b16 %v181, %v180
  %v205 = vpack.c.b16 %v183, %v182
  %v206 = vpack.c.b16 %v185, %v184
  %v207 = vpack.c.b16 %v187, %v186
  %vm228 = vcmask 523264
  %v230 = vsel %vm228, %v67, 0
  %232 = vmatpush.bf16.msra.mxu0 %v195
  %233 = vmatpush.bf16.msra.mxu0 %v194
  %234 = vmatpush.bf16.msra.mxu0 %v193
  %235 = vmatpush.bf16.msra.mxu0 %v192
  %236 = vmatpush.bf16.msra.mxu0 %v191
  %237 = vmatpush.bf16.msra.mxu0 %v190
  %238 = vmatpush.bf16.msra.mxu0 %v189
  %239 = vmatpush.bf16.msra.mxu0 %v188
  %240 = vmatmul.bf16.gmra.mxu0 %v65
  %v241 = vpop.f32.mrf.mxu0
  %v242 = vadd.f32 0.0, %v241
  %v243 = vpop.f32.mrf.mxu0
  %v244 = vadd.f32 0.0, %v243
  %245 = vdwg.mxu0
  %246 = vmatpush.bf16.msra.mxu0 %v203
  %247 = vmatpush.bf16.msra.mxu0 %v202
  %248 = vmatpush.bf16.msra.mxu0 %v201
  %249 = vmatpush.bf16.msra.mxu0 %v200
  %250 = vmatpush.bf16.msra.mxu0 %v199
  %251 = vmatpush.bf16.msra.mxu0 %v198
  %252 = vmatpush.bf16.msra.mxu0 %v197
  %253 = vmatpush.bf16.msra.mxu0 %v196
  %254 = vmatmul.bf16.gmra.mxu0 %v66
  %v255 = vpop.f32.mrf.mxu0
  %v256 = vadd.f32 %v242, %v255
  %v257 = vpop.f32.mrf.mxu0
  %v258 = vadd.f32 %v244, %v257
  %259 = vdwg.mxu0
  %260 = vmatpush.bf16.msra.mxu0 0
  %261 = vmatpush.bf16.msra.mxu0 0
  %262 = vmatpush.bf16.msra.mxu0 0
  %263 = vmatpush.bf16.msra.mxu0 0
  %264 = vmatpush.bf16.msra.mxu0 %v207
  %265 = vmatpush.bf16.msra.mxu0 %v206
  %266 = vmatpush.bf16.msra.mxu0 %v205
  %267 = vmatpush.bf16.msra.mxu0 %v204
  %268 = vmatmul.bf16.gmra.mxu0 %v230
  %v269 = vpop.f32.mrf.mxu0
  %v270 = vadd.f32 %v256, %v269
  %v271 = vpop.f32.mrf.mxu0
  %v272 = vadd.f32 %v258, %v271
  %273 = vdwg.mxu0
  %v274 = vpack.c.bf16 %v270, %v270
  %v275 = vpack.c.bf16 %v272, %v272
  %276 = vst [vmem:[%s4] sm:$0xf] %v274
  %277 = vst [vmem:[%s4 + $0x4] sm:$0xf] %v275
  %v278 = vlaneseq
  %v279 = vshrl.u32 %v278, 7
  %v280 = vadd.s32 %v279, 8
  %s281 = smul.u32 0, 16
  %v282 = vstv %s281
  %v283 = vadd.s32 %v279, %v282
  %v284 = vadd.s32 %v280, %v282
  %vm285 = vcmp.lt.s32.totalorder %v283, 8
  %vm286 = vcmp.lt.s32.totalorder %v284, 8
  %v287 = vsel %vm285, %v270, 0.0
  %v288 = vsel %vm286, %v272, 0.0
  %v289 = vadd.f32 %v287, %v288
  %v290 = vrot.slane %v289, 4
  %v291 = vadd.f32 %v289, %v290
  %v292 = vrot.slane %v291, 2
  %v293 = vadd.f32 %v291, %v292
  %v294 = vrot.slane %v293, 1
  %v295 = vadd.f32 %v293, %v294
  %296 = vst [vmem:[%s5] sm:$0x1] %v295
  %v297 = vmul.f32 %v287, %v287
  %v298 = vmul.f32 %v288, %v288
  %v299 = vadd.f32 %v297, %v298
  %v300 = vrot.slane %v299, 4
  %v301 = vadd.f32 %v299, %v300
  %v302 = vrot.slane %v301, 2
  %v303 = vadd.f32 %v301, %v302
  %v304 = vrot.slane %v303, 1
  %v305 = vadd.f32 %v303, %v304
  %306 = vst [vmem:[%s6] sm:$0x1] %v305
  // Predicated region
  $region18: #{regseg_forward.14} parent=0 // pred_check
    _
  $region19: #{regseg_forward.14} parent=0 // pred_check_branch
    %308 = sbr.rel (0) target = $region21
  $region20: #{regseg_forward.14} parent=0 // pred_region
    _
  $region21: #{regseg_forward.14} parent=0 // pred_fallthru
    _
  // Predicated region
  $region22: #{regseg_forward.14} parent=0 // pred_check
    _
  $region23: #{regseg_forward.14} parent=0 // pred_check_branch
    %310 = sbr.rel (0) target = $region25
  $region24: #{regseg_forward.14} parent=0 // pred_region
    _
  $region25: #{regseg_forward.14} parent=0 // pred_fallthru
    _
  // Predicated region
  $region26: #{regseg_forward.14} parent=0 // pred_check
    _
  $region27: #{regseg_forward.14} parent=0 // pred_check_branch
    %312 = sbr.rel (0) target = $region29
  $region28: #{regseg_forward.14} parent=0 // pred_region
    _
  $region29: #{regseg_forward.14} parent=0 // pred_fallthru
    _
  // Predicated region
  $region30: #{regseg_forward.14} parent=0 // pred_check
    _
  $region31: #{regseg_forward.14} parent=0 // pred_check_branch
    %314 = sbr.rel (0) target = $region33
  $region32: #{regseg_forward.14} parent=0 // pred_region
    _
  $region33: #{regseg_forward.14} parent=0 // pred_fallthru
    _
  // Predicated region
  $region34: #{regseg_forward.14} parent=0 // pred_check
    _
  $region35: #{regseg_forward.14} parent=0 // pred_check_branch
    %316 = sbr.rel (0) target = $region37
  $region36: #{regseg_forward.14} parent=0 // pred_region
    _
  $region37: #{regseg_forward.14} parent=0 // pred_fallthru
    _
  // Predicated region
  $region38: #{regseg_forward.14} parent=0 // pred_check
    _
  $region39: #{regseg_forward.14} parent=0 // pred_check_branch
    %318 = sbr.rel (0) target = $region41
  $region40: #{regseg_forward.14} parent=0 // pred_region
    _
  $region41: #{regseg_forward.14} parent=0 // pred_fallthru
    _

// kernel: regseg_forward.13
$region0: #{regseg_forward.13}
  #allocation0 [shape = 'u32[]', space=smem, size = 0x4, offset = 0x4, fixed_abs, tag = 'smem constant byte address 0x4 - core index']
  #allocation1 [shape = 'u32[72,128]{1,0:T(1,128)}', space=vmem, size = 0x9000, scoped, tag = 'internal scratch']
  %s0 = inlined_call_operand.vmem [shape: bf16[16,1152], index: 0, kind: input, shape index: {}]
  %s1 = inlined_call_operand.vmem [shape: bf16[1152,320], index: 1, kind: input, shape index: {}]
  %s2 = inlined_call_operand.vmem [shape: bf16[16,320], index: 2, kind: output, shape index: {0}]
  %s3 = inlined_call_operand.vmem [shape: f32[1,1,320], index: 3, kind: output, shape index: {1}]
  %s4 = inlined_call_operand.vmem [shape: f32[1,1,320], index: 4, kind: output, shape index: {2}]
  %5 = xla_tuple %s2, %s3, %s4
  %s6 = sld [smem:[#allocation0]]
  $region34: #{regseg_forward.13} parent=0
    _
  %s8 = ssub.s32 1, %s6
  %s9 = scalar_select 0, %s8, %s6
  // Predicated region
  $region2: #{regseg_forward.13} parent=0 // pred_check
    _
  $region3: #{regseg_forward.13} parent=0 // pred_check_branch
    %11 = sbr.rel (0) target = $region5
  $region4: #{regseg_forward.13} parent=0 // pred_region
    _
  $region5: #{regseg_forward.13} parent=0 // pred_fallthru
    _
  // Predicated region
  $region6: #{regseg_forward.13} parent=0 // pred_check
    _
  $region7: #{regseg_forward.13} parent=0 // pred_check_branch
    %13 = sbr.rel (0) target = $region9
  $region8: #{regseg_forward.13} parent=0 // pred_region
    _
  $region9: #{regseg_forward.13} parent=0 // pred_fallthru
    _
  %v14 = vld [vmem:[%s0] sm:$0xff]
  %v15 = vld [vmem:[%s0 + $0x8] sm:$0xff]
  %v16 = vld [vmem:[%s0 + $0x10] sm:$0xff]
  %v17 = vld [vmem:[%s0 + $0x18] sm:$0xff]
  %v18 = vld [vmem:[%s0 + $0x20] sm:$0xf]
  %v19 = vld [vmem:[%s0 + $0x24] sm:$0xff]
  %v20 = vld [vmem:[%s0 + $0x2c] sm:$0xff]
  %v21 = vld [vmem:[%s0 + $0x34] sm:$0xff]
  %v22 = vld [vmem:[%s0 + $0x3c] sm:$0xff]
  %v23 = vld [vmem:[%s0 + $0x44] sm:$0xf]
  %v24 = vld [vmem:[%s1] sm:$0xff]
  %v25 = vld [vmem:[%s1 + $0x8] sm:$0xf]
  %v26 = vld [vmem:[%s1 + $0xc] sm:$0xff]
  %v27 = vld [vmem:[%s1 + $0x14] sm:$0xf]
  %v28 = vld [vmem:[%s1 + $0x18] sm:$0xff]
  %v29 = vld [vmem:[%s1 + $0x20] sm:$0xf]
  %v30 = vld [vmem:[%s1 + $0x24] sm:$0xff]
  %v31 = vld [vmem:[%s1 + $0x2c] sm:$0xf]
  %v32 = vld [vmem:[%s1 + $0x30] sm:$0xff]
  %v33 = vld [vmem:[%s1 + $0x38] sm:$0xf]
  %v34 = vld [vmem:[%s1 + $0x3c] sm:$0xff]
  %v35 = vld [vmem:[%s1 + $0x44] sm:$0xf]
  %v36 = vld [vmem:[%s1 + $0x48] sm:$0xff]
  %v37 = vld [vmem:[%s1 + $0x50] sm:$0xf]
  %v38 = vld [vmem:[%s1 + $0x54] sm:$0xff]
  %v39 = vld [vmem:[%s1 + $0x5c] sm:$0xf]
  %v40 = vld [vmem:[%s1 + $0x60] sm:$0xff]
  %v41 = vld [vmem:[%s1 + $0x68] sm:$0xf]
  %v42 = vld [vmem:[%s1 + $0x6c] sm:$0xff]
  %v43 = vld [vmem:[%s1 + $0x74] sm:$0xf]
  %v44 = vld [vmem:[%s1 + $0x78] sm:$0xff]
  %v45 = vld [vmem:[%s1 + $0x80] sm:$0xf]
  %v46 = vld [vmem:[%s1 + $0x84] sm:$0xff]
  %v47 = vld [vmem:[%s1 + $0x8c] sm:$0xf]
  %v48 = vld [vmem:[%s1 + $0x90] sm:$0xff]
  %v49 = vld [vmem:[%s1 + $0x98] sm:$0xf]
  %v50 = vld [vmem:[%s1 + $0x9c] sm:$0xff]
  %v51 = vld [vmem:[%s1 + $0xa4] sm:$0xf]
  %v52 = vld [vmem:[%s1 + $0xa8] sm:$0xff]
  %v53 = vld [vmem:[%s1 + $0xb0] sm:$0xf]
  %v54 = vld [vmem:[%s1 + $0xb4] sm:$0xff]
  %v55 = vld [vmem:[%s1 + $0xbc] sm:$0xf]
  %v56 = vld [vmem:[%s1 + $0xc0] sm:$0xff]
  %v57 = vld [vmem:[%s1 + $0xc8] sm:$0xf]
  %v58 = vld [vmem:[%s1 + $0xcc] sm:$0xff]
  %v59 = vld [vmem:[%s1 + $0xd4] sm:$0xf]
  %v60 = vld [vmem:[%s1 + $0xd8] sm:$0xff]
  %v61 = vld [vmem:[%s1 + $0xe0] sm:$0xf]
  %v62 = vld [vmem:[%s1 + $0xe4] sm:$0xff]
  %v63 = vld [vmem:[%s1 + $0xec] sm:$0xf]
  %v64 = vld [vmem:[%s1 + $0xf0] sm:$0xff]
  %v65 = vld [vmem:[%s1 + $0xf8] sm:$0xf]
  %v66 = vld [vmem:[%s1 + $0xfc] sm:$0xff]
  %v67 = vld [vmem:[%s1 + $0x104] sm:$0xf]
  %v68 = vld [vmem:[%s1 + $0x108] sm:$0xff]
  %v69 = vld [vmem:[%s1 + $0x110] sm:$0xf]
  %v70 = vld [vmem:[%s1 + $0x114] sm:$0xff]
  %v71 = vld [vmem:[%s1 + $0x11c] sm:$0xf]
  %v72 = vld [vmem:[%s1 + $0x120] sm:$0xff]
  %v73 = vld [vmem:[%s1 + $0x128] sm:$0xf]
  %v74 = vld [vmem:[%s1 + $0x12c] sm:$0xff]
  %v75 = vld [vmem:[%s1 + $0x134] sm:$0xf]
  %v76 = vld [vmem:[%s1 + $0x138] sm:$0xff]
  %v77 = vld [vmem:[%s1 + $0x140] sm:$0xf]
  %v78 = vld [vmem:[%s1 + $0x144] sm:$0xff]
  %v79 = vld [vmem:[%s1 + $0x14c] sm:$0xf]
  %v80 = vld [vmem:[%s1 + $0x150] sm:$0xff]
  %v81 = vld [vmem:[%s1 + $0x158] sm:$0xf]
  %v82 = vld [vmem:[%s1 + $0x15c] sm:$0xff]
  %v83 = vld [vmem:[%s1 + $0x164] sm:$0xf]
  %v84 = vld [vmem:[%s1 + $0x168] sm:$0xff]
  %v85 = vld [vmem:[%s1 + $0x170] sm:$0xf]
  %v86 = vld [vmem:[%s1 + $0x174] sm:$0xff]
  %v87 = vld [vmem:[%s1 + $0x17c] sm:$0xf]
  %v88 = vld [vmem:[%s1 + $0x180] sm:$0xff]
  %v89 = vld [vmem:[%s1 + $0x188] sm:$0xf]
  %v90 = vld [vmem:[%s1 + $0x18c] sm:$0xff]
  %v91 = vld [vmem:[%s1 + $0x194] sm:$0xf]
  %v92 = vld [vmem:[%s1 + $0x198] sm:$0xff]
  %v93 = vld [vmem:[%s1 + $0x1a0] sm:$0xf]
  %v94 = vld [vmem:[%s1 + $0x1a4] sm:$0xff]
  %v95 = vld [vmem:[%s1 + $0x1ac] sm:$0xf]
  %v96 = vld [vmem:[%s1 + $0x1b0] sm:$0xff]
  %v97 = vld [vmem:[%s1 + $0x1b8] sm:$0xf]
  %v98 = vld [vmem:[%s1 + $0x1bc] sm:$0xff]
  %v99 = vld [vmem:[%s1 + $0x1c4] sm:$0xf]
  %v100 = vld [vmem:[%s1 + $0x1c8] sm:$0xff]
  %v101 = vld [vmem:[%s1 + $0x1d0] sm:$0xf]
  %v102 = vld [vmem:[%s1 + $0x1d4] sm:$0xff]
  %v103 = vld [vmem:[%s1 + $0x1dc] sm:$0xf]
  %v104 = vld [vmem:[%s1 + $0x1e0] sm:$0xff]
  %v105 = vld [vmem:[%s1 + $0x1e8] sm:$0xf]
  %v106 = vld [vmem:[%s1 + $0x1ec] sm:$0xff]
  %v107 = vld [vmem:[%s1 + $0x1f4] sm:$0xf]
  %v108 = vld [vmem:[%s1 + $0x1f8] sm:$0xff]
  %v109 = vld [vmem:[%s1 + $0x200] sm:$0xf]
  %v110 = vld [vmem:[%s1 + $0x204] sm:$0xff]
  %v111 = vld [vmem:[%s1 + $0x20c] sm:$0xf]
  %v112 = vld [vmem:[%s1 + $0x210] sm:$0xff]
  %v113 = vld [vmem:[%s1 + $0x218] sm:$0xf]
  %v114 = vld [vmem:[%s1 + $0x21c] sm:$0xff]
  %v115 = vld [vmem:[%s1 + $0x224] sm:$0xf]
  %v116 = vld [vmem:[%s1 + $0x228] sm:$0xff]
  %v117 = vld [vmem:[%s1 + $0x230] sm:$0xf]
  %v118 = vld [vmem:[%s1 + $0x234] sm:$0xff]
  %v119 = vld [vmem:[%s1 + $0x23c] sm:$0xf]
  %v120 = vld [vmem:[%s1 + $0x240] sm:$0xff]
  %v121 = vld [vmem:[%s1 + $0x248] sm:$0xf]
  %v122 = vld [vmem:[%s1 + $0x24c] sm:$0xff]
  %v123 = vld [vmem:[%s1 + $0x254] sm:$0xf]
  %v124 = vld [vmem:[%s1 + $0x258] sm:$0xff]
  %v125 = vld [vmem:[%s1 + $0x260] sm:$0xf]
  %v126 = vld [vmem:[%s1 + $0x264] sm:$0xff]
  %v127 = vld [vmem:[%s1 + $0x26c] sm:$0xf]
  %v128 = vld [vmem:[%s1 + $0x270] sm:$0xff]
  %v129 = vld [vmem:[%s1 + $0x278] sm:$0xf]
  %v130 = vld [vmem:[%s1 + $0x27c] sm:$0xff]
  %v131 = vld [vmem:[%s1 + $0x284] sm:$0xf]
  %v132 = vld [vmem:[%s1 + $0x288] sm:$0xff]
  %v133 = vld [vmem:[%s1 + $0x290] sm:$0xf]
  %v134 = vld [vmem:[%s1 + $0x294] sm:$0xff]
  %v135 = vld [vmem:[%s1 + $0x29c] sm:$0xf]
  %v136 = vld [vmem:[%s1 + $0x2a0] sm:$0xff]
  %v137 = vld [vmem:[%s1 + $0x2a8] sm:$0xf]
  %v138 = vld [vmem:[%s1 + $0x2ac] sm:$0xff]
  %v139 = vld [vmem:[%s1 + $0x2b4] sm:$0xf]
  %v140 = vld [vmem:[%s1 + $0x2b8] sm:$0xff]
  %v141 = vld [vmem:[%s1 + $0x2c0] sm:$0xf]
  %v142 = vld [vmem:[%s1 + $0x2c4] sm:$0xff]
  %v143 = vld [vmem:[%s1 + $0x2cc] sm:$0xf]
  %v144 = vld [vmem:[%s1 + $0x2d0] sm:$0xff]
  %v145 = vld [vmem:[%s1 + $0x2d8] sm:$0xf]
  %v146 = vld [vmem:[%s1 + $0x2dc] sm:$0xff]
  %v147 = vld [vmem:[%s1 + $0x2e4] sm:$0xf]
  %v148 = vld [vmem:[%s1 + $0x2e8] sm:$0xff]
  %v149 = vld [vmem:[%s1 + $0x2f0] sm:$0xf]
  %v150 = vld [vmem:[%s1 + $0x2f4] sm:$0xff]
  %v151 = vld [vmem:[%s1 + $0x2fc] sm:$0xf]
  %v152 = vld [vmem:[%s1 + $0x300] sm:$0xff]
  %v153 = vld [vmem:[%s1 + $0x308] sm:$0xf]
  %v154 = vld [vmem:[%s1 + $0x30c] sm:$0xff]
  %v155 = vld [vmem:[%s1 + $0x314] sm:$0xf]
  %v156 = vld [vmem:[%s1 + $0x318] sm:$0xff]
  %v157 = vld [vmem:[%s1 + $0x320] sm:$0xf]
  %v158 = vld [vmem:[%s1 + $0x324] sm:$0xff]
  %v159 = vld [vmem:[%s1 + $0x32c] sm:$0xf]
  %v160 = vld [vmem:[%s1 + $0x330] sm:$0xff]
  %v161 = vld [vmem:[%s1 + $0x338] sm:$0xf]
  %v162 = vld [vmem:[%s1 + $0x33c] sm:$0xff]
  %v163 = vld [vmem:[%s1 + $0x344] sm:$0xf]
  %v164 = vld [vmem:[%s1 + $0x348] sm:$0xff]
  %v165 = vld [vmem:[%s1 + $0x350] sm:$0xf]
  %v166 = vld [vmem:[%s1 + $0x354] sm:$0xff]
  %v167 = vld [vmem:[%s1 + $0x35c] sm:$0xf]
  %v168 = vld [vmem:[%s1 + $0x360] sm:$0xff]
  %v169 = vld [vmem:[%s1 + $0x368] sm:$0xf]
  %v170 = vld [vmem:[%s1 + $0x36c] sm:$0xff]
  %v171 = vld [vmem:[%s1 + $0x374] sm:$0xf]
  %v172 = vld [vmem:[%s1 + $0x378] sm:$0xff]
  %v173 = vld [vmem:[%s1 + $0x380] sm:$0xf]
  %v174 = vld [vmem:[%s1 + $0x384] sm:$0xff]
  %v175 = vld [vmem:[%s1 + $0x38c] sm:$0xf]
  %v176 = vld [vmem:[%s1 + $0x390] sm:$0xff]
  %v177 = vld [vmem:[%s1 + $0x398] sm:$0xf]
  %v178 = vld [vmem:[%s1 + $0x39c] sm:$0xff]
  %v179 = vld [vmem:[%s1 + $0x3a4] sm:$0xf]
  %v180 = vld [vmem:[%s1 + $0x3a8] sm:$0xff]
  %v181 = vld [vmem:[%s1 + $0x3b0] sm:$0xf]
  %v182 = vld [vmem:[%s1 + $0x3b4] sm:$0xff]
  %v183 = vld [vmem:[%s1 + $0x3bc] sm:$0xf]
  %v184 = vld [vmem:[%s1 + $0x3c0] sm:$0xff]
  %v185 = vld [vmem:[%s1 + $0x3c8] sm:$0xf]
  %v186 = vld [vmem:[%s1 + $0x3cc] sm:$0xff]
  %v187 = vld [vmem:[%s1 + $0x3d4] sm:$0xf]
  %v188 = vld [vmem:[%s1 + $0x3d8] sm:$0xff]
  %v189 = vld [vmem:[%s1 + $0x3e0] sm:$0xf]
  %v190 = vld [vmem:[%s1 + $0x3e4] sm:$0xff]
  %v191 = vld [vmem:[%s1 + $0x3ec] sm:$0xf]
  %v192 = vld [vmem:[%s1 + $0x3f0] sm:$0xff]
  %v193 = vld [vmem:[%s1 + $0x3f8] sm:$0xf]
  %v194 = vld [vmem:[%s1 + $0x3fc] sm:$0xff]
  %v195 = vld [vmem:[%s1 + $0x404] sm:$0xf]
  %v196 = vld [vmem:[%s1 + $0x408] sm:$0xff]
  %v197 = vld [vmem:[%s1 + $0x410] sm:$0xf]
  %v198 = vld [vmem:[%s1 + $0x414] sm:$0xff]
  %v199 = vld [vmem:[%s1 + $0x41c] sm:$0xf]
  %v200 = vld [vmem:[%s1 + $0x420] sm:$0xff]
  %v201 = vld [vmem:[%s1 + $0x428] sm:$0xf]
  %v202 = vld [vmem:[%s1 + $0x42c] sm:$0xff]
  %v203 = vld [vmem:[%s1 + $0x434] sm:$0xf]
  %v204 = vld [vmem:[%s1 + $0x438] sm:$0xff]
  %v205 = vld [vmem:[%s1 + $0x440] sm:$0xf]
  %v206 = vld [vmem:[%s1 + $0x444] sm:$0xff]
  %v207 = vld [vmem:[%s1 + $0x44c] sm:$0xf]
  %v208 = vld [vmem:[%s1 + $0x450] sm:$0xff]
  %v209 = vld [vmem:[%s1 + $0x458] sm:$0xf]
  %v210 = vld [vmem:[%s1 + $0x45c] sm:$0xff]
  %v211 = vld [vmem:[%s1 + $0x464] sm:$0xf]
  %v212 = vld [vmem:[%s1 + $0x468] sm:$0xff]
  %v213 = vld [vmem:[%s1 + $0x470] sm:$0xf]
  %v214 = vld [vmem:[%s1 + $0x474] sm:$0xff]
  %v215 = vld [vmem:[%s1 + $0x47c] sm:$0xf]
  %v216 = vld [vmem:[%s1 + $0x480] sm:$0xff]
  %v217 = vld [vmem:[%s1 + $0x488] sm:$0xf]
  %v218 = vld [vmem:[%s1 + $0x48c] sm:$0xff]
  %v219 = vld [vmem:[%s1 + $0x494] sm:$0xf]
  %v220 = vld [vmem:[%s1 + $0x498] sm:$0xff]
  %v221 = vld [vmem:[%s1 + $0x4a0] sm:$0xf]
  %v222 = vld [vmem:[%s1 + $0x4a4] sm:$0xff]
  %v223 = vld [vmem:[%s1 + $0x4ac] sm:$0xf]
  %v224 = vld [vmem:[%s1 + $0x4b0] sm:$0xff]
  %v225 = vld [vmem:[%s1 + $0x4b8] sm:$0xf]
  %v226 = vld [vmem:[%s1 + $0x4bc] sm:$0xff]
  %v227 = vld [vmem:[%s1 + $0x4c4] sm:$0xf]
  %v228 = vld [vmem:[%s1 + $0x4c8] sm:$0xff]
  %v229 = vld [vmem:[%s1 + $0x4d0] sm:$0xf]
  %v230 = vld [vmem:[%s1 + $0x4d4] sm:$0xff]
  %v231 = vld [vmem:[%s1 + $0x4dc] sm:$0xf]
  %v232 = vld [vmem:[%s1 + $0x4e0] sm:$0xff]
  %v233 = vld [vmem:[%s1 + $0x4e8] sm:$0xf]
  %v234 = vld [vmem:[%s1 + $0x4ec] sm:$0xff]
  %v235 = vld [vmem:[%s1 + $0x4f4] sm:$0xf]
  %v236 = vld [vmem:[%s1 + $0x4f8] sm:$0xff]
  %v237 = vld [vmem:[%s1 + $0x500] sm:$0xf]
  %v238 = vld [vmem:[%s1 + $0x504] sm:$0xff]
  %v239 = vld [vmem:[%s1 + $0x50c] sm:$0xf]
  %v240 = vld [vmem:[%s1 + $0x510] sm:$0xff]
  %v241 = vld [vmem:[%s1 + $0x518] sm:$0xf]
  %v242 = vld [vmem:[%s1 + $0x51c] sm:$0xff]
  %v243 = vld [vmem:[%s1 + $0x524] sm:$0xf]
  %v244 = vld [vmem:[%s1 + $0x528] sm:$0xff]
  %v245 = vld [vmem:[%s1 + $0x530] sm:$0xf]
  %v246 = vld [vmem:[%s1 + $0x534] sm:$0xff]
  %v247 = vld [vmem:[%s1 + $0x53c] sm:$0xf]
  %v248 = vld [vmem:[%s1 + $0x540] sm:$0xff]
  %v249 = vld [vmem:[%s1 + $0x548] sm:$0xf]
  %v250 = vld [vmem:[%s1 + $0x54c] sm:$0xff]
  %v251 = vld [vmem:[%s1 + $0x554] sm:$0xf]
  %v252 = vld [vmem:[%s1 + $0x558] sm:$0xff]
  %v253 = vld [vmem:[%s1 + $0x560] sm:$0xf]
  %v254 = vld [vmem:[%s1 + $0x564] sm:$0xff]
  %v255 = vld [vmem:[%s1 + $0x56c] sm:$0xf]
  %v256 = vld [vmem:[%s1 + $0x570] sm:$0xff]
  %v257 = vld [vmem:[%s1 + $0x578] sm:$0xf]
  %v258 = vld [vmem:[%s1 + $0x57c] sm:$0xff]
  %v259 = vld [vmem:[%s1 + $0x584] sm:$0xf]
  %v260 = vld [vmem:[%s1 + $0x588] sm:$0xff]
  %v261 = vld [vmem:[%s1 + $0x590] sm:$0xf]
  %v262 = vld [vmem:[%s1 + $0x594] sm:$0xff]
  %v263 = vld [vmem:[%s1 + $0x59c] sm:$0xf]
  %v264 = vld [vmem:[%s1 + $0x5a0] sm:$0xff]
  %v265 = vld [vmem:[%s1 + $0x5a8] sm:$0xf]
  %v266 = vld [vmem:[%s1 + $0x5ac] sm:$0xff]
  %v267 = vld [vmem:[%s1 + $0x5b4] sm:$0xf]
  %v268 = vld [vmem:[%s1 + $0x5b8] sm:$0xff]
  %v269 = vld [vmem:[%s1 + $0x5c0] sm:$0xf]
  %v270 = vld [vmem:[%s1 + $0x5c4] sm:$0xff]
  %v271 = vld [vmem:[%s1 + $0x5cc] sm:$0xf]
  %v272 = vld [vmem:[%s1 + $0x5d0] sm:$0xff]
  %v273 = vld [vmem:[%s1 + $0x5d8] sm:$0xf]
  %v274 = vld [vmem:[%s1 + $0x5dc] sm:$0xff]
  %v275 = vld [vmem:[%s1 + $0x5e4] sm:$0xf]
  %v276 = vld [vmem:[%s1 + $0x5e8] sm:$0xff]
  %v277 = vld [vmem:[%s1 + $0x5f0] sm:$0xf]
  %v278 = vld [vmem:[%s1 + $0x5f4] sm:$0xff]
  %v279 = vld [vmem:[%s1 + $0x5fc] sm:$0xf]
  %v280 = vld [vmem:[%s1 + $0x600] sm:$0xff]
  %v281 = vld [vmem:[%s1 + $0x608] sm:$0xf]
  %v282 = vld [vmem:[%s1 + $0x60c] sm:$0xff]
  %v283 = vld [vmem:[%s1 + $0x614] sm:$0xf]
  %v284 = vld [vmem:[%s1 + $0x618] sm:$0xff]
  %v285 = vld [vmem:[%s1 + $0x620] sm:$0xf]
  %v286 = vld [vmem:[%s1 + $0x624] sm:$0xff]
  %v287 = vld [vmem:[%s1 + $0x62c] sm:$0xf]
  %v288 = vld [vmem:[%s1 + $0x630] sm:$0xff]
  %v289 = vld [vmem:[%s1 + $0x638] sm:$0xf]
  %v290 = vld [vmem:[%s1 + $0x63c] sm:$0xff]
  %v291 = vld [vmem:[%s1 + $0x644] sm:$0xf]
  %v292 = vld [vmem:[%s1 + $0x648] sm:$0xff]
  %v293 = vld [vmem:[%s1 + $0x650] sm:$0xf]
  %v294 = vld [vmem:[%s1 + $0x654] sm:$0xff]
  %v295 = vld [vmem:[%s1 + $0x65c] sm:$0xf]
  %v296 = vld [vmem:[%s1 + $0x660] sm:$0xff]
  %v297 = vld [vmem:[%s1 + $0x668] sm:$0xf]
  %v298 = vld [vmem:[%s1 + $0x66c] sm:$0xff]
  %v299 = vld [vmem:[%s1 + $0x674] sm:$0xf]
  %v300 = vld [vmem:[%s1 + $0x678] sm:$0xff]
  %v301 = vld [vmem:[%s1 + $0x680] sm:$0xf]
  %v302 = vld [vmem:[%s1 + $0x684] sm:$0xff]
  %v303 = vld [vmem:[%s1 + $0x68c] sm:$0xf]
  %v304 = vld [vmem:[%s1 + $0x690] sm:$0xff]
  %v305 = vld [vmem:[%s1 + $0x698] sm:$0xf]
  %v306 = vld [vmem:[%s1 + $0x69c] sm:$0xff]
  %v307 = vld [vmem:[%s1 + $0x6a4] sm:$0xf]
  %v308 = vld [vmem:[%s1 + $0x6a8] sm:$0xff]
  %v309 = vld [vmem:[%s1 + $0x6b0] sm:$0xf]
  %v310 = vld [vmem:[%s1 + $0x6b4] sm:$0xff]
  %v311 = vld [vmem:[%s1 + $0x6bc] sm:$0xf]
  %v322 = vunpack.c.l.b16 %v14
  %v323 = vunpack.c.h.b16 %v14
  %v324 = vunpack.c.l.b16 %v15
  %v325 = vunpack.c.h.b16 %v15
  %v326 = vunpack.c.l.b16 %v16
  %v327 = vunpack.c.h.b16 %v16
  %v328 = vunpack.c.l.b16 %v17
  %v329 = vunpack.c.h.b16 %v17
  %v330 = vunpack.c.l.b16 %v18
  %v331 = vunpack.c.l.b16 %v19
  %v332 = vunpack.c.h.b16 %v19
  %v333 = vunpack.c.l.b16 %v20
  %v334 = vunpack.c.h.b16 %v20
  %v335 = vunpack.c.l.b16 %v21
  %v336 = vunpack.c.h.b16 %v21
  %v337 = vunpack.c.l.b16 %v22
  %v338 = vunpack.c.h.b16 %v22
  %v339 = vunpack.c.l.b16 %v23
  %v340 = vpack.c.b16 %v331, %v322
  %v341 = vpack.c.b16 %v332, %v323
  %v342 = vpack.c.b16 %v333, %v324
  %v343 = vpack.c.b16 %v334, %v325
  %v344 = vpack.c.b16 %v335, %v326
  %v345 = vpack.c.b16 %v336, %v327
  %v346 = vpack.c.b16 %v337, %v328
  %v347 = vpack.c.b16 %v338, %v329
  %v348 = vpack.c.b16 %v339, %v330
  %v646 = vunpack.c.l.b16 %v24
  %v647 = vunpack.c.h.b16 %v24
  %v648 = vunpack.c.l.b16 %v25
  %v649 = vunpack.c.l.b16 %v26
  %v650 = vunpack.c.h.b16 %v26
  %v651 = vunpack.c.l.b16 %v27
  %v652 = vunpack.c.l.b16 %v28
  %v653 = vunpack.c.h.b16 %v28
  %v654 = vunpack.c.l.b16 %v29
  %v655 = vunpack.c.l.b16 %v30
  %v656 = vunpack.c.h.b16 %v30
  %v657 = vunpack.c.l.b16 %v31
  %v658 = vunpack.c.l.b16 %v32
  %v659 = vunpack.c.h.b16 %v32
  %v660 = vunpack.c.l.b16 %v33
  %v661 = vunpack.c.l.b16 %v34
  %v662 = vunpack.c.h.b16 %v34
  %v663 = vunpack.c.l.b16 %v35
  %v664 = vunpack.c.l.b16 %v36
  %v665 = vunpack.c.h.b16 %v36
  %v666 = vunpack.c.l.b16 %v37
  %v667 = vunpack.c.l.b16 %v38
  %v668 = vunpack.c.h.b16 %v38
  %v669 = vunpack.c.l.b16 %v39
  %v670 = vunpack.c.l.b16 %v40
  %v671 = vunpack.c.h.b16 %v40
  %v672 = vunpack.c.l.b16 %v41
  %v673 = vunpack.c.l.b16 %v42
  %v674 = vunpack.c.h.b16 %v42
  %v675 = vunpack.c.l.b16 %v43
  %v676 = vunpack.c.l.b16 %v44
  %v677 = vunpack.c.h.b16 %v44
  %v678 = vunpack.c.l.b16 %v45
  %v679 = vunpack.c.l.b16 %v46
  %v680 = vunpack.c.h.b16 %v46
  %v681 = vunpack.c.l.b16 %v47
  %v682 = vunpack.c.l.b16 %v48
  %v683 = vunpack.c.h.b16 %v48
  %v684 = vunpack.c.l.b16 %v49
  %v685 = vunpack.c.l.b16 %v50
  %v686 = vunpack.c.h.b16 %v50
  %v687 = vunpack.c.l.b16 %v51
  %v688 = vunpack.c.l.b16 %v52
  %v689 = vunpack.c.h.b16 %v52
  %v690 = vunpack.c.l.b16 %v53
  %v691 = vunpack.c.l.b16 %v54
  %v692 = vunpack.c.h.b16 %v54
  %v693 = vunpack.c.l.b16 %v55
  %v694 = vunpack.c.l.b16 %v56
  %v695 = vunpack.c.h.b16 %v56
  %v696 = vunpack.c.l.b16 %v57
  %v697 = vunpack.c.l.b16 %v58
  %v698 = vunpack.c.h.b16 %v58
  %v699 = vunpack.c.l.b16 %v59
  %v700 = vunpack.c.l.b16 %v60
  %v701 = vunpack.c.h.b16 %v60
  %v702 = vunpack.c.l.b16 %v61
  %v703 = vunpack.c.l.b16 %v62
  %v704 = vunpack.c.h.b16 %v62
  %v705 = vunpack.c.l.b16 %v63
  %v706 = vunpack.c.l.b16 %v64
  %v707 = vunpack.c.h.b16 %v64
  %v708 = vunpack.c.l.b16 %v65
  %v709 = vunpack.c.l.b16 %v66
  %v710 = vunpack.c.h.b16 %v66
  %v711 = vunpack.c.l.b16 %v67
  %v712 = vunpack.c.l.b16 %v68
  %v713 = vunpack.c.h.b16 %v68
  %v714 = vunpack.c.l.b16 %v69
  %v715 = vunpack.c.l.b16 %v70
  %v716 = vunpack.c.h.b16 %v70
  %v717 = vunpack.c.l.b16 %v71
  %v718 = vunpack.c.l.b16 %v72
  %v719 = vunpack.c.h.b16 %v72
  %v720 = vunpack.c.l.b16 %v73
  %v721 = vunpack.c.l.b16 %v74
  %v722 = vunpack.c.h.b16 %v74
  %v723 = vunpack.c.l.b16 %v75
  %v724 = vunpack.c.l.b16 %v76
  %v725 = vunpack.c.h.b16 %v76
  %v726 = vunpack.c.l.b16 %v77
  %v727 = vunpack.c.l.b16 %v78
  %v728 = vunpack.c.h.b16 %v78
  %v729 = vunpack.c.l.b16 %v79
  %v730 = vunpack.c.l.b16 %v80
  %v731 = vunpack.c.h.b16 %v80
  %v732 = vunpack.c.l.b16 %v81
  %v733 = vunpack.c.l.b16 %v82
  %v734 = vunpack.c.h.b16 %v82
  %v735 = vunpack.c.l.b16 %v83
  %v736 = vunpack.c.l.b16 %v84
  %v737 = vunpack.c.h.b16 %v84
  %v738 = vunpack.c.l.b16 %v85
  %v739 = vunpack.c.l.b16 %v86
  %v740 = vunpack.c.h.b16 %v86
  %v741 = vunpack.c.l.b16 %v87
  %v742 = vunpack.c.l.b16 %v88
  %v743 = vunpack.c.h.b16 %v88
  %v744 = vunpack.c.l.b16 %v89
  %v745 = vunpack.c.l.b16 %v90
  %v746 = vunpack.c.h.b16 %v90
  %v747 = vunpack.c.l.b16 %v91
  %v748 = vunpack.c.l.b16 %v92
  %v749 = vunpack.c.h.b16 %v92
  %v750 = vunpack.c.l.b16 %v93
  %v751 = vunpack.c.l.b16 %v94
  %v752 = vunpack.c.h.b16 %v94
  %v753 = vunpack.c.l.b16 %v95
  %v754 = vunpack.c.l.b16 %v96
  %v755 = vunpack.c.h.b16 %v96
  %v756 = vunpack.c.l.b16 %v97
  %v757 = vunpack.c.l.b16 %v98
  %v758 = vunpack.c.h.b16 %v98
  %v759 = vunpack.c.l.b16 %v99
  %v760 = vunpack.c.l.b16 %v100
  %v761 = vunpack.c.h.b16 %v100
  %v762 = vunpack.c.l.b16 %v101
  %v763 = vunpack.c.l.b16 %v102
  %v764 = vunpack.c.h.b16 %v102
  %v765 = vunpack.c.l.b16 %v103
  %v766 = vunpack.c.l.b16 %v104
  %v767 = vunpack.c.h.b16 %v104
  %v768 = vunpack.c.l.b16 %v105
  %v769 = vunpack.c.l.b16 %v106
  %v770 = vunpack.c.h.b16 %v106
  %v771 = vunpack.c.l.b16 %v107
  %v772 = vunpack.c.l.b16 %v108
  %v773 = vunpack.c.h.b16 %v108
  %v774 = vunpack.c.l.b16 %v109
  %v775 = vunpack.c.l.b16 %v110
  %v776 = vunpack.c.h.b16 %v110
  %v777 = vunpack.c.l.b16 %v111
  %v778 = vunpack.c.l.b16 %v112
  %v779 = vunpack.c.h.b16 %v112
  %v780 = vunpack.c.l.b16 %v113
  %v781 = vunpack.c.l.b16 %v114
  %v782 = vunpack.c.h.b16 %v114
  %v783 = vunpack.c.l.b16 %v115
  %v784 = vunpack.c.l.b16 %v116
  %v785 = vunpack.c.h.b16 %v116
  %v786 = vunpack.c.l.b16 %v117
  %v787 = vunpack.c.l.b16 %v118
  %v788 = vunpack.c.h.b16 %v118
  %v789 = vunpack.c.l.b16 %v119
  %v790 = vunpack.c.l.b16 %v120
  %v791 = vunpack.c.h.b16 %v120
  %v792 = vunpack.c.l.b16 %v121
  %v793 = vunpack.c.l.b16 %v122
  %v794 = vunpack.c.h.b16 %v122
  %v795 = vunpack.c.l.b16 %v123
  %v796 = vunpack.c.l.b16 %v124
  %v797 = vunpack.c.h.b16 %v124
  %v798 = vunpack.c.l.b16 %v125
  %v799 = vunpack.c.l.b16 %v126
  %v800 = vunpack.c.h.b16 %v126
  %v801 = vunpack.c.l.b16 %v127
  %v802 = vunpack.c.l.b16 %v128
  %v803 = vunpack.c.h.b16 %v128
  %v804 = vunpack.c.l.b16 %v129
  %v805 = vunpack.c.l.b16 %v130
  %v806 = vunpack.c.h.b16 %v130
  %v807 = vunpack.c.l.b16 %v131
  %v808 = vunpack.c.l.b16 %v132
  %v809 = vunpack.c.h.b16 %v132
  %v810 = vunpack.c.l.b16 %v133
  %v811 = vunpack.c.l.b16 %v134
  %v812 = vunpack.c.h.b16 %v134
  %v813 = vunpack.c.l.b16 %v135
  %v814 = vunpack.c.l.b16 %v136
  %v815 = vunpack.c.h.b16 %v136
  %v816 = vunpack.c.l.b16 %v137
  %v817 = vunpack.c.l.b16 %v138
  %v818 = vunpack.c.h.b16 %v138
  %v819 = vunpack.c.l.b16 %v139
  %v820 = vunpack.c.l.b16 %v140
  %v821 = vunpack.c.h.b16 %v140
  %v822 = vunpack.c.l.b16 %v141
  %v823 = vunpack.c.l.b16 %v142
  %v824 = vunpack.c.h.b16 %v142
  %v825 = vunpack.c.l.b16 %v143
  %v826 = vunpack.c.l.b16 %v144
  %v827 = vunpack.c.h.b16 %v144
  %v828 = vunpack.c.l.b16 %v145
  %v829 = vunpack.c.l.b16 %v146
  %v830 = vunpack.c.h.b16 %v146
  %v831 = vunpack.c.l.b16 %v147
  %v832 = vunpack.c.l.b16 %v148
  %v833 = vunpack.c.h.b16 %v148
  %v834 = vunpack.c.l.b16 %v149
  %v835 = vunpack.c.l.b16 %v150
  %v836 = vunpack.c.h.b16 %v150
  %v837 = vunpack.c.l.b16 %v151
  %v838 = vunpack.c.l.b16 %v152
  %v839 = vunpack.c.h.b16 %v152
  %v840 = vunpack.c.l.b16 %v153
  %v841 = vunpack.c.l.b16 %v154
  %v842 = vunpack.c.h.b16 %v154
  %v843 = vunpack.c.l.b16 %v155
  %v844 = vunpack.c.l.b16 %v156
  %v845 = vunpack.c.h.b16 %v156
  %v846 = vunpack.c.l.b16 %v157
  %v847 = vunpack.c.l.b16 %v158
  %v848 = vunpack.c.h.b16 %v158
  %v849 = vunpack.c.l.b16 %v159
  %v850 = vunpack.c.l.b16 %v160
  %v851 = vunpack.c.h.b16 %v160
  %v852 = vunpack.c.l.b16 %v161
  %v853 = vunpack.c.l.b16 %v162
  %v854 = vunpack.c.h.b16 %v162
  %v855 = vunpack.c.l.b16 %v163
  %v856 = vunpack.c.l.b16 %v164
  %v857 = vunpack.c.h.b16 %v164
  %v858 = vunpack.c.l.b16 %v165
  %v859 = vunpack.c.l.b16 %v166
  %v860 = vunpack.c.h.b16 %v166
  %v861 = vunpack.c.l.b16 %v167
  %v862 = vunpack.c.l.b16 %v168
  %v863 = vunpack.c.h.b16 %v168
  %v864 = vunpack.c.l.b16 %v169
  %v865 = vunpack.c.l.b16 %v170
  %v866 = vunpack.c.h.b16 %v170
  %v867 = vunpack.c.l.b16 %v171
  %v868 = vunpack.c.l.b16 %v172
  %v869 = vunpack.c.h.b16 %v172
  %v870 = vunpack.c.l.b16 %v173
  %v871 = vunpack.c.l.b16 %v174
  %v872 = vunpack.c.h.b16 %v174
  %v873 = vunpack.c.l.b16 %v175
  %v874 = vunpack.c.l.b16 %v176
  %v875 = vunpack.c.h.b16 %v176
  %v876 = vunpack.c.l.b16 %v177
  %v877 = vunpack.c.l.b16 %v178
  %v878 = vunpack.c.h.b16 %v178
  %v879 = vunpack.c.l.b16 %v179
  %v880 = vunpack.c.l.b16 %v180
  %v881 = vunpack.c.h.b16 %v180
  %v882 = vunpack.c.l.b16 %v181
  %v883 = vunpack.c.l.b16 %v182
  %v884 = vunpack.c.h.b16 %v182
  %v885 = vunpack.c.l.b16 %v183
  %v886 = vunpack.c.l.b16 %v184
  %v887 = vunpack.c.h.b16 %v184
  %v888 = vunpack.c.l.b16 %v185
  %v889 = vunpack.c.l.b16 %v186
  %v890 = vunpack.c.h.b16 %v186
  %v891 = vunpack.c.l.b16 %v187
  %v892 = vunpack.c.l.b16 %v188
  %v893 = vunpack.c.h.b16 %v188
  %v894 = vunpack.c.l.b16 %v189
  %v895 = vunpack.c.l.b16 %v190
  %v896 = vunpack.c.h.b16 %v190
  %v897 = vunpack.c.l.b16 %v191
  %v898 = vunpack.c.l.b16 %v192
  %v899 = vunpack.c.h.b16 %v192
  %v900 = vunpack.c.l.b16 %v193
  %v901 = vunpack.c.l.b16 %v194
  %v902 = vunpack.c.h.b16 %v194
  %v903 = vunpack.c.l.b16 %v195
  %v904 = vunpack.c.l.b16 %v196
  %v905 = vunpack.c.h.b16 %v196
  %v906 = vunpack.c.l.b16 %v197
  %v907 = vunpack.c.l.b16 %v198
  %v908 = vunpack.c.h.b16 %v198
  %v909 = vunpack.c.l.b16 %v199
  %v910 = vunpack.c.l.b16 %v200
  %v911 = vunpack.c.h.b16 %v200
  %v912 = vunpack.c.l.b16 %v201
  %v913 = vunpack.c.l.b16 %v202
  %v914 = vunpack.c.h.b16 %v202
  %v915 = vunpack.c.l.b16 %v203
  %v916 = vunpack.c.l.b16 %v204
  %v917 = vunpack.c.h.b16 %v204
  %v918 = vunpack.c.l.b16 %v205
  %v919 = vunpack.c.l.b16 %v206
  %v920 = vunpack.c.h.b16 %v206
  %v921 = vunpack.c.l.b16 %v207
  %v922 = vunpack.c.l.b16 %v208
  %v923 = vunpack.c.h.b16 %v208
  %v924 = vunpack.c.l.b16 %v209
  %v925 = vunpack.c.l.b16 %v210
  %v926 = vunpack.c.h.b16 %v210
  %v927 = vunpack.c.l.b16 %v211
  %v928 = vunpack.c.l.b16 %v212
  %v929 = vunpack.c.h.b16 %v212
  %v930 = vunpack.c.l.b16 %v213
  %v931 = vunpack.c.l.b16 %v214
  %v932 = vunpack.c.h.b16 %v214
  %v933 = vunpack.c.l.b16 %v215
  %v934 = vunpack.c.l.b16 %v216
  %v935 = vunpack.c.h.b16 %v216
  %v936 = vunpack.c.l.b16 %v217
  %v937 = vunpack.c.l.b16 %v218
  %v938 = vunpack.c.h.b16 %v218
  %v939 = vunpack.c.l.b16 %v219
  %v940 = vunpack.c.l.b16 %v220
  %v941 = vunpack.c.h.b16 %v220
  %v942 = vunpack.c.l.b16 %v221
  %v943 = vunpack.c.l.b16 %v222
  %v944 = vunpack.c.h.b16 %v222
  %v945 = vunpack.c.l.b16 %v223
  %v946 = vunpack.c.l.b16 %v224
  %v947 = vunpack.c.h.b16 %v224
  %v948 = vunpack.c.l.b16 %v225
  %v949 = vunpack.c.l.b16 %v226
  %v950 = vunpack.c.h.b16 %v226
  %v951 = vunpack.c.l.b16 %v227
  %v952 = vunpack.c.l.b16 %v228
  %v953 = vunpack.c.h.b16 %v228
  %v954 = vunpack.c.l.b16 %v229
  %v955 = vunpack.c.l.b16 %v230
  %v956 = vunpack.c.h.b16 %v230
  %v957 = vunpack.c.l.b16 %v231
  %v958 = vunpack.c.l.b16 %v232
  %v959 = vunpack.c.h.b16 %v232
  %v960 = vunpack.c.l.b16 %v233
  %v961 = vunpack.c.l.b16 %v234
  %v962 = vunpack.c.h.b16 %v234
  %v963 = vunpack.c.l.b16 %v235
  %v964 = vunpack.c.l.b16 %v236
  %v965 = vunpack.c.h.b16 %v236
  %v966 = vunpack.c.l.b16 %v237
  %v967 = vunpack.c.l.b16 %v238
  %v968 = vunpack.c.h.b16 %v238
  %v969 = vunpack.c.l.b16 %v239
  %v970 = vunpack.c.l.b16 %v240
  %v971 = vunpack.c.h.b16 %v240
  %v972 = vunpack.c.l.b16 %v241
  %v973 = vunpack.c.l.b16 %v242
  %v974 = vunpack.c.h.b16 %v242
  %v975 = vunpack.c.l.b16 %v243
  %v976 = vunpack.c.l.b16 %v244
  %v977 = vunpack.c.h.b16 %v244
  %v978 = vunpack.c.l.b16 %v245
  %v979 = vunpack.c.l.b16 %v246
  %v980 = vunpack.c.h.b16 %v246
  %v981 = vunpack.c.l.b16 %v247
  %v982 = vunpack.c.l.b16 %v248
  %v983 = vunpack.c.h.b16 %v248
  %v984 = vunpack.c.l.b16 %v249
  %v985 = vunpack.c.l.b16 %v250
  %v986 = vunpack.c.h.b16 %v250
  %v987 = vunpack.c.l.b16 %v251
  %v988 = vunpack.c.l.b16 %v252
  %v989 = vunpack.c.h.b16 %v252
  %v990 = vunpack.c.l.b16 %v253
  %v991 = vunpack.c.l.b16 %v254
  %v992 = vunpack.c.h.b16 %v254
  %v993 = vunpack.c.l.b16 %v255
  %v994 = vunpack.c.l.b16 %v256
  %v995 = vunpack.c.h.b16 %v256
  %v996 = vunpack.c.l.b16 %v257
  %v997 = vunpack.c.l.b16 %v258
  %v998 = vunpack.c.h.b16 %v258
  %v999 = vunpack.c.l.b16 %v259
  %v1000 = vunpack.c.l.b16 %v260
  %v1001 = vunpack.c.h.b16 %v260
  %v1002 = vunpack.c.l.b16 %v261
  %v1003 = vunpack.c.l.b16 %v262
  %v1004 = vunpack.c.h.b16 %v262
  %v1005 = vunpack.c.l.b16 %v263
  %v1006 = vunpack.c.l.b16 %v264
  %v1007 = vunpack.c.h.b16 %v264
  %v1008 = vunpack.c.l.b16 %v265
  %v1009 = vunpack.c.l.b16 %v266
  %v1010 = vunpack.c.h.b16 %v266
  %v1011 = vunpack.c.l.b16 %v267
  %v1012 = vunpack.c.l.b16 %v268
  %v1013 = vunpack.c.h.b16 %v268
  %v1014 = vunpack.c.l.b16 %v269
  %v1015 = vunpack.c.l.b16 %v270
  %v1016 = vunpack.c.h.b16 %v270
  %v1017 = vunpack.c.l.b16 %v271
  %v1018 = vunpack.c.l.b16 %v272
  %v1019 = vunpack.c.h.b16 %v272
  %v1020 = vunpack.c.l.b16 %v273
  %v1021 = vunpack.c.l.b16 %v274
  %v1022 = vunpack.c.h.b16 %v274
  %v1023 = vunpack.c.l.b16 %v275
  %v1024 = vunpack.c.l.b16 %v276
  %v1025 = vunpack.c.h.b16 %v276
  %v1026 = vunpack.c.l.b16 %v277
  %v1027 = vunpack.c.l.b16 %v278
  %v1028 = vunpack.c.h.b16 %v278
  %v1029 = vunpack.c.l.b16 %v279
  %v1030 = vunpack.c.l.b16 %v280
  %v1031 = vunpack.c.h.b16 %v280
  %v1032 = vunpack.c.l.b16 %v281
  %v1033 = vunpack.c.l.b16 %v282
  %v1034 = vunpack.c.h.b16 %v282
  %v1035 = vunpack.c.l.b16 %v283
  %v1036 = vunpack.c.l.b16 %v284
  %v1037 = vunpack.c.h.b16 %v284
  %v1038 = vunpack.c.l.b16 %v285
  %v1039 = vunpack.c.l.b16 %v286
  %v1040 = vunpack.c.h.b16 %v286
  %v1041 = vunpack.c.l.b16 %v287
  %v1042 = vunpack.c.l.b16 %v288
  %v1043 = vunpack.c.h.b16 %v288
  %v1044 = vunpack.c.l.b16 %v289
  %v1045 = vunpack.c.l.b16 %v290
  %v1046 = vunpack.c.h.b16 %v290
  %v1047 = vunpack.c.l.b16 %v291
  %v1048 = vunpack.c.l.b16 %v292
  %v1049 = vunpack.c.h.b16 %v292
  %v1050 = vunpack.c.l.b16 %v293
  %v1051 = vunpack.c.l.b16 %v294
  %v1052 = vunpack.c.h.b16 %v294
  %v1053 = vunpack.c.l.b16 %v295
  %v1054 = vunpack.c.l.b16 %v296
  %v1055 = vunpack.c.h.b16 %v296
  %v1056 = vunpack.c.l.b16 %v297
  %v1057 = vunpack.c.l.b16 %v298
  %v1058 = vunpack.c.h.b16 %v298
  %v1059 = vunpack.c.l.b16 %v299
  %v1060 = vunpack.c.l.b16 %v300
  %v1061 = vunpack.c.h.b16 %v300
  %v1062 = vunpack.c.l.b16 %v301
  %v1063 = vunpack.c.l.b16 %v302
  %v1064 = vunpack.c.h.b16 %v302
  %v1065 = vunpack.c.l.b16 %v303
  %v1066 = vunpack.c.l.b16 %v304
  %v1067 = vunpack.c.h.b16 %v304
  %v1068 = vunpack.c.l.b16 %v305
  %v1069 = vunpack.c.l.b16 %v306
  %v1070 = vunpack.c.h.b16 %v306
  %v1071 = vunpack.c.l.b16 %v307
  %v1072 = vunpack.c.l.b16 %v308
  %v1073 = vunpack.c.h.b16 %v308
  %v1074 = vunpack.c.l.b16 %v309
  %v1075 = vunpack.c.l.b16 %v310
  %v1076 = vunpack.c.h.b16 %v310
  %v1077 = vunpack.c.l.b16 %v311
  %v1078 = vpack.c.b16 %v649, %v646
  %v1079 = vpack.c.b16 %v650, %v647
  %v1080 = vpack.c.b16 %v651, %v648
  %v1081 = vpack.c.b16 %v655, %v652
  %v1082 = vpack.c.b16 %v656, %v653
  %v1083 = vpack.c.b16 %v657, %v654
  %v1084 = vpack.c.b16 %v661, %v658
  %v1085 = vpack.c.b16 %v662, %v659
  %v1086 = vpack.c.b16 %v663, %v660
  %v1087 = vpack.c.b16 %v667, %v664
  %v1088 = vpack.c.b16 %v668, %v665
  %v1089 = vpack.c.b16 %v669, %v666
  %v1090 = vpack.c.b16 %v673, %v670
  %v1091 = vpack.c.b16 %v674, %v671
  %v1092 = vpack.c.b16 %v675, %v672
  %v1093 = vpack.c.b16 %v679, %v676
  %v1094 = vpack.c.b16 %v680, %v677
  %v1095 = vpack.c.b16 %v681, %v678
  %v1096 = vpack.c.b16 %v685, %v682
  %v1097 = vpack.c.b16 %v686, %v683
  %v1098 = vpack.c.b16 %v687, %v684
  %v1099 = vpack.c.b16 %v691, %v688
  %v1100 = vpack.c.b16 %v692, %v689
  %v1101 = vpack.c.b16 %v693, %v690
  %v1102 = vpack.c.b16 %v697, %v694
  %v1103 = vpack.c.b16 %v698, %v695
  %v1104 = vpack.c.b16 %v699, %v696
  %v1105 = vpack.c.b16 %v703, %v700
  %v1106 = vpack.c.b16 %v704, %v701
  %v1107 = vpack.c.b16 %v705, %v702
  %v1108 = vpack.c.b16 %v709, %v706
  %v1109 = vpack.c.b16 %v710, %v707
  %v1110 = vpack.c.b16 %v711, %v708
  %v1111 = vpack.c.b16 %v715, %v712
  %v1112 = vpack.c.b16 %v716, %v713
  %v1113 = vpack.c.b16 %v717, %v714
  %v1114 = vpack.c.b16 %v721, %v718
  %v1115 = vpack.c.b16 %v722, %v719
  %v1116 = vpack.c.b16 %v723, %v720
  %v1117 = vpack.c.b16 %v727, %v724
  %v1118 = vpack.c.b16 %v728, %v725
  %v1119 = vpack.c.b16 %v729, %v726
  %v1120 = vpack.c.b16 %v733, %v730
  %v1121 = vpack.c.b16 %v734, %v731
  %v1122 = vpack.c.b16 %v735, %v732
  %v1123 = vpack.c.b16 %v739, %v736
  %v1124 = vpack.c.b16 %v740, %v737
  %v1125 = vpack.c.b16 %v741, %v738
  %v1126 = vpack.c.b16 %v745, %v742
  %v1127 = vpack.c.b16 %v746, %v743
  %v1128 = vpack.c.b16 %v747, %v744
  %v1129 = vpack.c.b16 %v751, %v748
  %v1130 = vpack.c.b16 %v752, %v749
  %v1131 = vpack.c.b16 %v753, %v750
  %v1132 = vpack.c.b16 %v757, %v754
  %v1133 = vpack.c.b16 %v758, %v755
  %v1134 = vpack.c.b16 %v759, %v756
  %v1135 = vpack.c.b16 %v763, %v760
  %v1136 = vpack.c.b16 %v764, %v761
  %v1137 = vpack.c.b16 %v765, %v762
  %v1138 = vpack.c.b16 %v769, %v766
  %v1139 = vpack.c.b16 %v770, %v767
  %v1140 = vpack.c.b16 %v771, %v768
  %v1141 = vpack.c.b16 %v775, %v772
  %v1142 = vpack.c.b16 %v776, %v773
  %v1143 = vpack.c.b16 %v777, %v774
  %v1144 = vpack.c.b16 %v781, %v778
  %v1145 = vpack.c.b16 %v782, %v779
  %v1146 = vpack.c.b16 %v783, %v780
  %v1147 = vpack.c.b16 %v787, %v784
  %v1148 = vpack.c.b16 %v788, %v785
  %v1149 = vpack.c.b16 %v789, %v786
  %v1150 = vpack.c.b16 %v793, %v790
  %v1151 = vpack.c.b16 %v794, %v791
  %v1152 = vpack.c.b16 %v795, %v792
  %v1153 = vpack.c.b16 %v799, %v796
  %v1154 = vpack.c.b16 %v800, %v797
  %v1155 = vpack.c.b16 %v801, %v798
  %v1156 = vpack.c.b16 %v805, %v802
  %v1157 = vpack.c.b16 %v806, %v803
  %v1158 = vpack.c.b16 %v807, %v804
  %v1159 = vpack.c.b16 %v811, %v808
  %v1160 = vpack.c.b16 %v812, %v809
  %v1161 = vpack.c.b16 %v813, %v810
  %v1162 = vpack.c.b16 %v817, %v814
  %v1163 = vpack.c.b16 %v818, %v815
  %v1164 = vpack.c.b16 %v819, %v816
  %v1165 = vpack.c.b16 %v823, %v820
  %v1166 = vpack.c.b16 %v824, %v821
  %v1167 = vpack.c.b16 %v825, %v822
  %v1168 = vpack.c.b16 %v829, %v826
  %v1169 = vpack.c.b16 %v830, %v827
  %v1170 = vpack.c.b16 %v831, %v828
  %v1171 = vpack.c.b16 %v835, %v832
  %v1172 = vpack.c.b16 %v836, %v833
  %v1173 = vpack.c.b16 %v837, %v834
  %v1174 = vpack.c.b16 %v841, %v838
  %v1175 = vpack.c.b16 %v842, %v839
  %v1176 = vpack.c.b16 %v843, %v840
  %v1177 = vpack.c.b16 %v847, %v844
  %v1178 = vpack.c.b16 %v848, %v845
  %v1179 = vpack.c.b16 %v849, %v846
  %v1180 = vpack.c.b16 %v853, %v850
  %v1181 = vpack.c.b16 %v854, %v851
  %v1182 = vpack.c.b16 %v855, %v852
  %v1183 = vpack.c.b16 %v859, %v856
  %v1184 = vpack.c.b16 %v860, %v857
  %v1185 = vpack.c.b16 %v861, %v858
  %v1186 = vpack.c.b16 %v865, %v862
  %v1187 = vpack.c.b16 %v866, %v863
  %v1188 = vpack.c.b16 %v867, %v864
  %v1189 = vpack.c.b16 %v871, %v868
  %v1190 = vpack.c.b16 %v872, %v869
  %v1191 = vpack.c.b16 %v873, %v870
  %v1192 = vpack.c.b16 %v877, %v874
  %v1193 = vpack.c.b16 %v878, %v875
  %v1194 = vpack.c.b16 %v879, %v876
  %v1195 = vpack.c.b16 %v883, %v880
  %v1196 = vpack.c.b16 %v884, %v881
  %v1197 = vpack.c.b16 %v885, %v882
  %v1198 = vpack.c.b16 %v889, %v886
  %v1199 = vpack.c.b16 %v890, %v887
  %v1200 = vpack.c.b16 %v891, %v888
  %v1201 = vpack.c.b16 %v895, %v892
  %v1202 = vpack.c.b16 %v896, %v893
  %v1203 = vpack.c.b16 %v897, %v894
  %v1204 = vpack.c.b16 %v901, %v898
  %v1205 = vpack.c.b16 %v902, %v899
  %v1206 = vpack.c.b16 %v903, %v900
  %v1207 = vpack.c.b16 %v907, %v904
  %v1208 = vpack.c.b16 %v908, %v905
  %v1209 = vpack.c.b16 %v909, %v906
  %v1210 = vpack.c.b16 %v913, %v910
  %v1211 = vpack.c.b16 %v914, %v911
  %v1212 = vpack.c.b16 %v915, %v912
  %v1213 = vpack.c.b16 %v919, %v916
  %v1214 = vpack.c.b16 %v920, %v917
  %v1215 = vpack.c.b16 %v921, %v918
  %v1216 = vpack.c.b16 %v925, %v922
  %v1217 = vpack.c.b16 %v926, %v923
  %v1218 = vpack.c.b16 %v927, %v924
  %v1219 = vpack.c.b16 %v931, %v928
  %v1220 = vpack.c.b16 %v932, %v929
  %v1221 = vpack.c.b16 %v933, %v930
  %v1222 = vpack.c.b16 %v937, %v934
  %v1223 = vpack.c.b16 %v938, %v935
  %v1224 = vpack.c.b16 %v939, %v936
  %v1225 = vpack.c.b16 %v943, %v940
  %v1226 = vpack.c.b16 %v944, %v941
  %v1227 = vpack.c.b16 %v945, %v942
  %v1228 = vpack.c.b16 %v949, %v946
  %v1229 = vpack.c.b16 %v950, %v947
  %v1230 = vpack.c.b16 %v951, %v948
  %v1231 = vpack.c.b16 %v955, %v952
  %v1232 = vpack.c.b16 %v956, %v953
  %v1233 = vpack.c.b16 %v957, %v954
  %v1234 = vpack.c.b16 %v961, %v958
  %v1235 = vpack.c.b16 %v962, %v959
  %v1236 = vpack.c.b16 %v963, %v960
  %v1237 = vpack.c.b16 %v967, %v964
  %v1238 = vpack.c.b16 %v968, %v965
  %v1239 = vpack.c.b16 %v969, %v966
  %v1240 = vpack.c.b16 %v973, %v970
  %v1241 = vpack.c.b16 %v974, %v971
  %v1242 = vpack.c.b16 %v975, %v972
  %v1243 = vpack.c.b16 %v979, %v976
  %v1244 = vpack.c.b16 %v980, %v977
  %v1245 = vpack.c.b16 %v981, %v978
  %v1246 = vpack.c.b16 %v985, %v982
  %v1247 = vpack.c.b16 %v986, %v983
  %v1248 = vpack.c.b16 %v987, %v984
  %v1249 = vpack.c.b16 %v991, %v988
  %v1250 = vpack.c.b16 %v992, %v989
  %v1251 = vpack.c.b16 %v993, %v990
  %v1252 = vpack.c.b16 %v997, %v994
  %v1253 = vpack.c.b16 %v998, %v995
  %v1254 = vpack.c.b16 %v999, %v996
  %v1255 = vpack.c.b16 %v1003, %v1000
  %v1256 = vpack.c.b16 %v1004, %v1001
  %v1257 = vpack.c.b16 %v1005, %v1002
  %v1258 = vpack.c.b16 %v1009, %v1006
  %v1259 = vpack.c.b16 %v1010, %v1007
  %v1260 = vpack.c.b16 %v1011, %v1008
  %v1261 = vpack.c.b16 %v1015, %v1012
  %v1262 = vpack.c.b16 %v1016, %v1013
  %v1263 = vpack.c.b16 %v1017, %v1014
  %v1264 = vpack.c.b16 %v1021, %v1018
  %v1265 = vpack.c.b16 %v1022, %v1019
  %v1266 = vpack.c.b16 %v1023, %v1020
  %v1267 = vpack.c.b16 %v1027, %v1024
  %v1268 = vpack.c.b16 %v1028, %v1025
  %v1269 = vpack.c.b16 %v1029, %v1026
  %v1270 = vpack.c.b16 %v1033, %v1030
  %v1271 = vpack.c.b16 %v1034, %v1031
  %v1272 = vpack.c.b16 %v1035, %v1032
  %v1273 = vpack.c.b16 %v1039, %v1036
  %v1274 = vpack.c.b16 %v1040, %v1037
  %v1275 = vpack.c.b16 %v1041, %v1038
  %v1276 = vpack.c.b16 %v1045, %v1042
  %v1277 = vpack.c.b16 %v1046, %v1043
  %v1278 = vpack.c.b16 %v1047, %v1044
  %v1279 = vpack.c.b16 %v1051, %v1048
  %v1280 = vpack.c.b16 %v1052, %v1049
  %v1281 = vpack.c.b16 %v1053, %v1050
  %v1282 = vpack.c.b16 %v1057, %v1054
  %v1283 = vpack.c.b16 %v1058, %v1055
  %v1284 = vpack.c.b16 %v1059, %v1056
  %v1285 = vpack.c.b16 %v1063, %v1060
  %v1286 = vpack.c.b16 %v1064, %v1061
  %v1287 = vpack.c.b16 %v1065, %v1062
  %v1288 = vpack.c.b16 %v1069, %v1066
  %v1289 = vpack.c.b16 %v1070, %v1067
  %v1290 = vpack.c.b16 %v1071, %v1068
  %v1291 = vpack.c.b16 %v1075, %v1072
  %v1292 = vpack.c.b16 %v1076, %v1073
  %v1293 = vpack.c.b16 %v1077, %v1074
  %1510 = vmatpush.bf16.msra.mxu0 %v1099
  %1511 = vmatpush.bf16.msra.mxu0 %v1096
  %1512 = vmatpush.bf16.msra.mxu0 %v1093
  %1513 = vmatpush.bf16.msra.mxu0 %v1090
  %1514 = vmatpush.bf16.msra.mxu0 %v1087
  %1515 = vmatpush.bf16.msra.mxu0 %v1084
  %1516 = vmatpush.bf16.msra.mxu0 %v1081
  %1517 = vmatpush.bf16.msra.mxu0 %v1078
  %1518 = vmatmul.bf16.gmra.mxu0 %v340
  %v1519 = vpop.f32.mrf.mxu0
  %v1520 = vadd.f32 0.0, %v1519
  %v1521 = vpop.f32.mrf.mxu0
  %v1522 = vadd.f32 0.0, %v1521
  %1523 = vdwg.mxu0
  %1524 = vmatpush.bf16.msra.mxu0 %v1123
  %1525 = vmatpush.bf16.msra.mxu0 %v1120
  %1526 = vmatpush.bf16.msra.mxu0 %v1117
  %1527 = vmatpush.bf16.msra.mxu0 %v1114
  %1528 = vmatpush.bf16.msra.mxu0 %v1111
  %1529 = vmatpush.bf16.msra.mxu0 %v1108
  %1530 = vmatpush.bf16.msra.mxu0 %v1105
  %1531 = vmatpush.bf16.msra.mxu0 %v1102
  %1532 = vmatmul.bf16.gmra.mxu0 %v341
  %v1533 = vpop.f32.mrf.mxu0
  %v1534 = vadd.f32 %v1520, %v1533
  %v1535 = vpop.f32.mrf.mxu0
  %v1536 = vadd.f32 %v1522, %v1535
  %1537 = vdwg.mxu0
  %1538 = vmatpush.bf16.msra.mxu0 %v1147
  %1539 = vmatpush.bf16.msra.mxu0 %v1144
  %1540 = vmatpush.bf16.msra.mxu0 %v1141
  %1541 = vmatpush.bf16.msra.mxu0 %v1138
  %1542 = vmatpush.bf16.msra.mxu0 %v1135
  %1543 = vmatpush.bf16.msra.mxu0 %v1132
  %1544 = vmatpush.bf16.msra.mxu0 %v1129
  %1545 = vmatpush.bf16.msra.mxu0 %v1126
  %1546 = vmatmul.bf16.gmra.mxu0 %v342
  %v1547 = vpop.f32.mrf.mxu0
  %v1548 = vadd.f32 %v1534, %v1547
  %v1549 = vpop.f32.mrf.mxu0
  %v1550 = vadd.f32 %v1536, %v1549
  %1551 = vdwg.mxu0
  %1552 = vmatpush.bf16.msra.mxu0 %v1171
  %1553 = vmatpush.bf16.msra.mxu0 %v1168
  %1554 = vmatpush.bf16.msra.mxu0 %v1165
  %1555 = vmatpush.bf16.msra.mxu0 %v1162
  %1556 = vmatpush.bf16.msra.mxu0 %v1159
  %1557 = vmatpush.bf16.msra.mxu0 %v1156
  %1558 = vmatpush.bf16.msra.mxu0 %v1153
  %1559 = vmatpush.bf16.msra.mxu0 %v1150
  %1560 = vmatmul.bf16.gmra.mxu0 %v343
  %v1561 = vpop.f32.mrf.mxu0
  %v1562 = vadd.f32 %v1548, %v1561
  %v1563 = vpop.f32.mrf.mxu0
  %v1564 = vadd.f32 %v1550, %v1563
  %1565 = vdwg.mxu0
  %1566 = vmatpush.bf16.msra.mxu0 %v1195
  %1567 = vmatpush.bf16.msra.mxu0 %v1192
  %1568 = vmatpush.bf16.msra.mxu0 %v1189
  %1569 = vmatpush.bf16.msra.mxu0 %v1186
  %1570 = vmatpush.bf16.msra.mxu0 %v1183
  %1571 = vmatpush.bf16.msra.mxu0 %v1180
  %1572 = vmatpush.bf16.msra.mxu0 %v1177
  %1573 = vmatpush.bf16.msra.mxu0 %v1174
  %1574 = vmatmul.bf16.gmra.mxu0 %v344
  %v1575 = vpop.f32.mrf.mxu0
  %v1576 = vadd.f32 %v1562, %v1575
  %v1577 = vpop.f32.mrf.mxu0
  %v1578 = vadd.f32 %v1564, %v1577
  %1579 = vdwg.mxu0
  %1580 = vmatpush.bf16.msra.mxu0 %v1219
  %1581 = vmatpush.bf16.msra.mxu0 %v1216
  %1582 = vmatpush.bf16.msra.mxu0 %v1213
  %1583 = vmatpush.bf16.msra.mxu0 %v1210
  %1584 = vmatpush.bf16.msra.mxu0 %v1207
  %1585 = vmatpush.bf16.msra.mxu0 %v1204
  %1586 = vmatpush.bf16.msra.mxu0 %v1201
  %1587 = vmatpush.bf16.msra.mxu0 %v1198
  %1588 = vmatmul.bf16.gmra.mxu0 %v345
  %v1589 = vpop.f32.mrf.mxu0
  %v1590 = vadd.f32 %v1576, %v1589
  %v1591 = vpop.f32.mrf.mxu0
  %v1592 = vadd.f32 %v1578, %v1591
  %1593 = vdwg.mxu0
  %1594 = vmatpush.bf16.msra.mxu0 %v1243
  %1595 = vmatpush.bf16.msra.mxu0 %v1240
  %1596 = vmatpush.bf16.msra.mxu0 %v1237
  %1597 = vmatpush.bf16.msra.mxu0 %v1234
  %1598 = vmatpush.bf16.msra.mxu0 %v1231
  %1599 = vmatpush.bf16.msra.mxu0 %v1228
  %1600 = vmatpush.bf16.msra.mxu0 %v1225
  %1601 = vmatpush.bf16.msra.mxu0 %v1222
  %1602 = vmatmul.bf16.gmra.mxu0 %v346
  %v1603 = vpop.f32.mrf.mxu0
  %v1604 = vadd.f32 %v1590, %v1603
  %v1605 = vpop.f32.mrf.mxu0
  %v1606 = vadd.f32 %v1592, %v1605
  %1607 = vdwg.mxu0
  %1608 = vmatpush.bf16.msra.mxu0 %v1267
  %1609 = vmatpush.bf16.msra.mxu0 %v1264
  %1610 = vmatpush.bf16.msra.mxu0 %v1261
  %1611 = vmatpush.bf16.msra.mxu0 %v1258
  %1612 = vmatpush.bf16.msra.mxu0 %v1255
  %1613 = vmatpush.bf16.msra.mxu0 %v1252
  %1614 = vmatpush.bf16.msra.mxu0 %v1249
  %1615 = vmatpush.bf16.msra.mxu0 %v1246
  %1616 = vmatmul.bf16.gmra.mxu0 %v347
  %v1617 = vpop.f32.mrf.mxu0
  %v1618 = vadd.f32 %v1604, %v1617
  %v1619 = vpop.f32.mrf.mxu0
  %v1620 = vadd.f32 %v1606, %v1619
  %1621 = vdwg.mxu0
  %1622 = vmatpush.bf16.msra.mxu0 %v1291
  %1623 = vmatpush.bf16.msra.mxu0 %v1288
  %1624 = vmatpush.bf16.msra.mxu0 %v1285
  %1625 = vmatpush.bf16.msra.mxu0 %v1282
  %1626 = vmatpush.bf16.msra.mxu0 %v1279
  %1627 = vmatpush.bf16.msra.mxu0 %v1276
  %1628 = vmatpush.bf16.msra.mxu0 %v1273
  %1629 = vmatpush.bf16.msra.mxu0 %v1270
  %1630 = vmatmul.bf16.gmra.mxu0 %v348
  %v1631 = vpop.f32.mrf.mxu0
  %v1632 = vadd.f32 %v1618, %v1631
  %v1633 = vpop.f32.mrf.mxu0
  %v1634 = vadd.f32 %v1620, %v1633
  %1635 = vdwg.mxu0
  %1636 = vmatpush.bf16.msra.mxu0 %v1100
  %1637 = vmatpush.bf16.msra.mxu0 %v1097
  %1638 = vmatpush.bf16.msra.mxu0 %v1094
  %1639 = vmatpush.bf16.msra.mxu0 %v1091
  %1640 = vmatpush.bf16.msra.mxu0 %v1088
  %1641 = vmatpush.bf16.msra.mxu0 %v1085
  %1642 = vmatpush.bf16.msra.mxu0 %v1082
  %1643 = vmatpush.bf16.msra.mxu0 %v1079
  %1644 = vmatmul.bf16.gmra.mxu0 %v340
  %v1645 = vpop.f32.mrf.mxu0
  %v1646 = vadd.f32 0.0, %v1645
  %v1647 = vpop.f32.mrf.mxu0
  %v1648 = vadd.f32 0.0, %v1647
  %1649 = vdwg.mxu0
  %1650 = vmatpush.bf16.msra.mxu0 %v1124
  %1651 = vmatpush.bf16.msra.mxu0 %v1121
  %1652 = vmatpush.bf16.msra.mxu0 %v1118
  %1653 = vmatpush.bf16.msra.mxu0 %v1115
  %1654 = vmatpush.bf16.msra.mxu0 %v1112
  %1655 = vmatpush.bf16.msra.mxu0 %v1109
  %1656 = vmatpush.bf16.msra.mxu0 %v1106
  %1657 = vmatpush.bf16.msra.mxu0 %v1103
  %1658 = vmatmul.bf16.gmra.mxu0 %v341
  %v1659 = vpop.f32.mrf.mxu0
  %v1660 = vadd.f32 %v1646, %v1659
  %v1661 = vpop.f32.mrf.mxu0
  %v1662 = vadd.f32 %v1648, %v1661
  %1663 = vdwg.mxu0
  %1664 = vmatpush.bf16.msra.mxu0 %v1148
  %1665 = vmatpush.bf16.msra.mxu0 %v1145
  %1666 = vmatpush.bf16.msra.mxu0 %v1142
  %1667 = vmatpush.bf16.msra.mxu0 %v1139
  %1668 = vmatpush.bf16.msra.mxu0 %v1136
  %1669 = vmatpush.bf16.msra.mxu0 %v1133
  %1670 = vmatpush.bf16.msra.mxu0 %v1130
  %1671 = vmatpush.bf16.msra.mxu0 %v1127
  %1672 = vmatmul.bf16.gmra.mxu0 %v342
  %v1673 = vpop.f32.mrf.mxu0
  %v1674 = vadd.f32 %v1660, %v1673
  %v1675 = vpop.f32.mrf.mxu0
  %v1676 = vadd.f32 %v1662, %v1675
  %1677 = vdwg.mxu0
  %1678 = vmatpush.bf16.msra.mxu0 %v1172
  %1679 = vmatpush.bf16.msra.mxu0 %v1169
  %1680 = vmatpush.bf16.msra.mxu0 %v1166
  %1681 = vmatpush.bf16.msra.mxu0 %v1163
  %1682 = vmatpush.bf16.msra.mxu0 %v1160
  %1683 = vmatpush.bf16.msra.mxu0 %v1157
  %1684 = vmatpush.bf16.msra.mxu0 %v1154
  %1685 = vmatpush.bf16.msra.mxu0 %v1151
  %1686 = vmatmul.bf16.gmra.mxu0 %v343
  %v1687 = vpop.f32.mrf.mxu0
  %v1688 = vadd.f32 %v1674, %v1687
  %v1689 = vpop.f32.mrf.mxu0
  %v1690 = vadd.f32 %v1676, %v1689
  %1691 = vdwg.mxu0
  %1692 = vmatpush.bf16.msra.mxu0 %v1196
  %1693 = vmatpush.bf16.msra.mxu0 %v1193
  %1694 = vmatpush.bf16.msra.mxu0 %v1190
  %1695 = vmatpush.bf16.msra.mxu0 %v1187
  %1696 = vmatpush.bf16.msra.mxu0 %v1184
  %1697 = vmatpush.bf16.msra.mxu0 %v1181
  %1698 = vmatpush.bf16.msra.mxu0 %v1178
  %1699 = vmatpush.bf16.msra.mxu0 %v1175
  %1700 = vmatmul.bf16.gmra.mxu0 %v344
  %v1701 = vpop.f32.mrf.mxu0
  %v1702 = vadd.f32 %v1688, %v1701
  %v1703 = vpop.f32.mrf.mxu0
  %v1704 = vadd.f32 %v1690, %v1703
  %1705 = vdwg.mxu0
  %1706 = vmatpush.bf16.msra.mxu0 %v1220
  %1707 = vmatpush.bf16.msra.mxu0 %v1217
  %1708 = vmatpush.bf16.msra.mxu0 %v1214
  %1709 = vmatpush.bf16.msra.mxu0 %v1211
  %1710 = vmatpush.bf16.msra.mxu0 %v1208
  %1711 = vmatpush.bf16.msra.mxu0 %v1205
  %1712 = vmatpush.bf16.msra.mxu0 %v1202
  %1713 = vmatpush.bf16.msra.mxu0 %v1199
  %1714 = vmatmul.bf16.gmra.mxu0 %v345
  %v1715 = vpop.f32.mrf.mxu0
  %v1716 = vadd.f32 %v1702, %v1715
  %v1717 = vpop.f32.mrf.mxu0
  %v1718 = vadd.f32 %v1704, %v1717
  %1719 = vdwg.mxu0
  %1720 = vmatpush.bf16.msra.mxu0 %v1244
  %1721 = vmatpush.bf16.msra.mxu0 %v1241
  %1722 = vmatpush.bf16.msra.mxu0 %v1238
  %1723 = vmatpush.bf16.msra.mxu0 %v1235
  %1724 = vmatpush.bf16.msra.mxu0 %v1232
  %1725 = vmatpush.bf16.msra.mxu0 %v1229
  %1726 = vmatpush.bf16.msra.mxu0 %v1226
  %1727 = vmatpush.bf16.msra.mxu0 %v1223
  %1728 = vmatmul.bf16.gmra.mxu0 %v346
  %v1729 = vpop.f32.mrf.mxu0
  %v1730 = vadd.f32 %v1716, %v1729
  %v1731 = vpop.f32.mrf.mxu0
  %v1732 = vadd.f32 %v1718, %v1731
  %1733 = vdwg.mxu0
  %1734 = vmatpush.bf16.msra.mxu0 %v1268
  %1735 = vmatpush.bf16.msra.mxu0 %v1265
  %1736 = vmatpush.bf16.msra.mxu0 %v1262
  %1737 = vmatpush.bf16.msra.mxu0 %v1259
  %1738 = vmatpush.bf16.msra.mxu0 %v1256
  %1739 = vmatpush.bf16.msra.mxu0 %v1253
  %1740 = vmatpush.bf16.msra.mxu0 %v1250
  %1741 = vmatpush.bf16.msra.mxu0 %v1247
  %1742 = vmatmul.bf16.gmra.mxu0 %v347
  %v1743 = vpop.f32.mrf.mxu0
  %v1744 = vadd.f32 %v1730, %v1743
  %v1745 = vpop.f32.mrf.mxu0
  %v1746 = vadd.f32 %v1732, %v1745
  %1747 = vdwg.mxu0
  %1748 = vmatpush.bf16.msra.mxu0 %v1292
  %1749 = vmatpush.bf16.msra.mxu0 %v1289
  %1750 = vmatpush.bf16.msra.mxu0 %v1286
  %1751 = vmatpush.bf16.msra.mxu0 %v1283
  %1752 = vmatpush.bf16.msra.mxu0 %v1280
  %1753 = vmatpush.bf16.msra.mxu0 %v1277
  %1754 = vmatpush.bf16.msra.mxu0 %v1274
  %1755 = vmatpush.bf16.msra.mxu0 %v1271
  %1756 = vmatmul.bf16.gmra.mxu0 %v348
  %v1757 = vpop.f32.mrf.mxu0
  %v1758 = vadd.f32 %v1744, %v1757
  %v1759 = vpop.f32.mrf.mxu0
  %v1760 = vadd.f32 %v1746, %v1759
  %1761 = vdwg.mxu0
  %1762 = vmatpush.bf16.msra.mxu0 %v1101
  %1763 = vmatpush.bf16.msra.mxu0 %v1098
  %1764 = vmatpush.bf16.msra.mxu0 %v1095
  %1765 = vmatpush.bf16.msra.mxu0 %v1092
  %1766 = vmatpush.bf16.msra.mxu0 %v1089
  %1767 = vmatpush.bf16.msra.mxu0 %v1086
  %1768 = vmatpush.bf16.msra.mxu0 %v1083
  %1769 = vmatpush.bf16.msra.mxu0 %v1080
  %1770 = vmatmul.bf16.gmra.mxu0 %v340
  %v1771 = vpop.f32.mrf.mxu0
  %v1772 = vadd.f32 0.0, %v1771
  %v1773 = vpop.f32.mrf.mxu0
  %v1774 = vadd.f32 0.0, %v1773
  %1775 = vdwg.mxu0
  %1776 = vmatpush.bf16.msra.mxu0 %v1125
  %1777 = vmatpush.bf16.msra.mxu0 %v1122
  %1778 = vmatpush.bf16.msra.mxu0 %v1119
  %1779 = vmatpush.bf16.msra.mxu0 %v1116
  %1780 = vmatpush.bf16.msra.mxu0 %v1113
  %1781 = vmatpush.bf16.msra.mxu0 %v1110
  %1782 = vmatpush.bf16.msra.mxu0 %v1107
  %1783 = vmatpush.bf16.msra.mxu0 %v1104
  %1784 = vmatmul.bf16.gmra.mxu0 %v341
  %v1785 = vpop.f32.mrf.mxu0
  %v1786 = vadd.f32 %v1772, %v1785
  %v1787 = vpop.f32.mrf.mxu0
  %v1788 = vadd.f32 %v1774, %v1787
  %1789 = vdwg.mxu0
  %1790 = vmatpush.bf16.msra.mxu0 %v1149
  %1791 = vmatpush.bf16.msra.mxu0 %v1146
  %1792 = vmatpush.bf16.msra.mxu0 %v1143
  %1793 = vmatpush.bf16.msra.mxu0 %v1140
  %1794 = vmatpush.bf16.msra.mxu0 %v1137
  %1795 = vmatpush.bf16.msra.mxu0 %v1134
  %1796 = vmatpush.bf16.msra.mxu0 %v1131
  %1797 = vmatpush.bf16.msra.mxu0 %v1128
  %1798 = vmatmul.bf16.gmra.mxu0 %v342
  %v1799 = vpop.f32.mrf.mxu0
  %v1800 = vadd.f32 %v1786, %v1799
  %v1801 = vpop.f32.mrf.mxu0
  %v1802 = vadd.f32 %v1788, %v1801
  %1803 = vdwg.mxu0
  %1804 = vmatpush.bf16.msra.mxu0 %v1173
  %1805 = vmatpush.bf16.msra.mxu0 %v1170
  %1806 = vmatpush.bf16.msra.mxu0 %v1167
  %1807 = vmatpush.bf16.msra.mxu0 %v1164
  %1808 = vmatpush.bf16.msra.mxu0 %v1161
  %1809 = vmatpush.bf16.msra.mxu0 %v1158
  %1810 = vmatpush.bf16.msra.mxu0 %v1155
  %1811 = vmatpush.bf16.msra.mxu0 %v1152
  %1812 = vmatmul.bf16.gmra.mxu0 %v343
  %v1813 = vpop.f32.mrf.mxu0
  %v1814 = vadd.f32 %v1800, %v1813
  %v1815 = vpop.f32.mrf.mxu0
  %v1816 = vadd.f32 %v1802, %v1815
  %1817 = vdwg.mxu0
  %1818 = vmatpush.bf16.msra.mxu0 %v1197
  %1819 = vmatpush.bf16.msra.mxu0 %v1194
  %1820 = vmatpush.bf16.msra.mxu0 %v1191
  %1821 = vmatpush.bf16.msra.mxu0 %v1188
  %1822 = vmatpush.bf16.msra.mxu0 %v1185
  %1823 = vmatpush.bf16.msra.mxu0 %v1182
  %1824 = vmatpush.bf16.msra.mxu0 %v1179
  %1825 = vmatpush.bf16.msra.mxu0 %v1176
  %1826 = vmatmul.bf16.gmra.mxu0 %v344
  %v1827 = vpop.f32.mrf.mxu0
  %v1828 = vadd.f32 %v1814, %v1827
  %v1829 = vpop.f32.mrf.mxu0
  %v1830 = vadd.f32 %v1816, %v1829
  %1831 = vdwg.mxu0
  %1832 = vmatpush.bf16.msra.mxu0 %v1221
  %1833 = vmatpush.bf16.msra.mxu0 %v1218
  %1834 = vmatpush.bf16.msra.mxu0 %v1215
  %1835 = vmatpush.bf16.msra.mxu0 %v1212
  %1836 = vmatpush.bf16.msra.mxu0 %v1209
  %1837 = vmatpush.bf16.msra.mxu0 %v1206
  %1838 = vmatpush.bf16.msra.mxu0 %v1203
  %1839 = vmatpush.bf16.msra.mxu0 %v1200
  %1840 = vmatmul.bf16.gmra.mxu0 %v345
  %v1841 = vpop.f32.mrf.mxu0
  %v1842 = vadd.f32 %v1828, %v1841
  %v1843 = vpop.f32.mrf.mxu0
  %v1844 = vadd.f32 %v1830, %v1843
  %1845 = vdwg.mxu0
  %1846 = vmatpush.bf16.msra.mxu0 %v1245
  %1847 = vmatpush.bf16.msra.mxu0 %v1242
  %1848 = vmatpush.bf16.msra.mxu0 %v1239
  %1849 = vmatpush.bf16.msra.mxu0 %v1236
  %1850 = vmatpush.bf16.msra.mxu0 %v1233
  %1851 = vmatpush.bf16.msra.mxu0 %v1230
  %1852 = vmatpush.bf16.msra.mxu0 %v1227
  %1853 = vmatpush.bf16.msra.mxu0 %v1224
  %1854 = vmatmul.bf16.gmra.mxu0 %v346
  %v1855 = vpop.f32.mrf.mxu0
  %v1856 = vadd.f32 %v1842, %v1855
  %v1857 = vpop.f32.mrf.mxu0
  %v1858 = vadd.f32 %v1844, %v1857
  %1859 = vdwg.mxu0
  %1860 = vmatpush.bf16.msra.mxu0 %v1269
  %1861 = vmatpush.bf16.msra.mxu0 %v1266
  %1862 = vmatpush.bf16.msra.mxu0 %v1263
  %1863 = vmatpush.bf16.msra.mxu0 %v1260
  %1864 = vmatpush.bf16.msra.mxu0 %v1257
  %1865 = vmatpush.bf16.msra.mxu0 %v1254
  %1866 = vmatpush.bf16.msra.mxu0 %v1251
  %1867 = vmatpush.bf16.msra.mxu0 %v1248
  %1868 = vmatmul.bf16.gmra.mxu0 %v347
  %v1869 = vpop.f32.mrf.mxu0
  %v1870 = vadd.f32 %v1856, %v1869
  %v1871 = vpop.f32.mrf.mxu0
  %v1872 = vadd.f32 %v1858, %v1871
  %1873 = vdwg.mxu0
  %1874 = vmatpush.bf16.msra.mxu0 %v1293
  %1875 = vmatpush.bf16.msra.mxu0 %v1290
  %1876 = vmatpush.bf16.msra.mxu0 %v1287
  %1877 = vmatpush.bf16.msra.mxu0 %v1284
  %1878 = vmatpush.bf16.msra.mxu0 %v1281
  %1879 = vmatpush.bf16.msra.mxu0 %v1278
  %1880 = vmatpush.bf16.msra.mxu0 %v1275
  %1881 = vmatpush.bf16.msra.mxu0 %v1272
  %1882 = vmatmul.bf16.gmra.mxu0 %v348
  %v1883 = vpop.f32.mrf.mxu0
  %v1884 = vadd.f32 %v1870, %v1883
  %v1885 = vpop.f32.mrf.mxu0
  %v1886 = vadd.f32 %v1872, %v1885
  %1887 = vdwg.mxu0
  %v1888 = vpack.c.bf16 %v1758, %v1632
  %v1889 = vpack.c.bf16 %v1884, %v1884
  %v1890 = vpack.c.bf16 %v1760, %v1634
  %v1891 = vpack.c.bf16 %v1886, %v1886
  %1892 = vst [vmem:[%s2] sm:$0xff] %v1888
  %vm1893 = vcmask 519168
  %1894 = vst.msk [vmem:[%s2 + $0x8] sm:$0xf] %vm1893, %v1889
  %1895 = vst [vmem:[%s2 + $0xc] sm:$0xff] %v1890
  %1896 = vst.msk [vmem:[%s2 + $0x14] sm:$0xf] %vm1893, %v1891
  %v1897 = vlaneseq
  %v1898 = vshrl.u32 %v1897, 7
  %v1899 = vadd.s32 %v1898, 8
  %s1900 = smul.u32 0, 16
  %v1901 = vstv %s1900
  %v1902 = vadd.s32 %v1898, %v1901
  %v1903 = vadd.s32 %v1899, %v1901
  %vm1904 = vcmp.lt.s32.totalorder %v1902, 8
  %vm1905 = vcmp.lt.s32.totalorder %v1903, 8
  %v1906 = vsel %vm1904, %v1632, 0.0
  %v1907 = vsel %vm1904, %v1758, 0.0
  %v1908 = vsel %vm1904, %v1884, 0.0
  %v1909 = vsel %vm1905, %v1634, 0.0
  %v1910 = vsel %vm1905, %v1760, 0.0
  %v1911 = vsel %vm1905, %v1886, 0.0
  %v1912 = vadd.f32 %v1906, %v1909
  %v1913 = vrot.slane %v1912, 4
  %v1914 = vadd.f32 %v1912, %v1913
  %v1915 = vrot.slane %v1914, 2
  %v1916 = vadd.f32 %v1914, %v1915
  %v1917 = vrot.slane %v1916, 1
  %v1918 = vadd.f32 %v1916, %v1917
  %v1919 = vadd.f32 %v1907, %v1910
  %v1920 = vrot.slane %v1919, 4
  %v1921 = vadd.f32 %v1919, %v1920
  %v1922 = vrot.slane %v1921, 2
  %v1923 = vadd.f32 %v1921, %v1922
  %v1924 = vrot.slane %v1923, 1
  %v1925 = vadd.f32 %v1923, %v1924
  %vm1926 = vcmask 523264
  %v1927 = vsel %vm1926, %v1908, 0.0
  %v1928 = vsel %vm1926, %v1911, 0.0
  %v1929 = vadd.f32 %v1927, %v1928
  %v1930 = vrot.slane %v1929, 4
  %v1931 = vadd.f32 %v1929, %v1930
  %v1932 = vrot.slane %v1931, 2
  %v1933 = vadd.f32 %v1931, %v1932
  %v1934 = vrot.slane %v1933, 1
  %v1935 = vadd.f32 %v1933, %v1934
  %v1939 = vrot.slane %v1925, 7
  %v1940 = vrot.slane %v1935, 6
  %vm1941 = vcmask 1040384
  %v1942 = vsel %vm1941, %v1918, %v1939
  %vm1943 = vcmask 1041408
  %v1944 = vsel %vm1943, %v1942, %v1940
  %v1946 = vlaneseq
  %vm1947 = vcmp.ge.s32.totalorder %v1946, 0
  %vm1948 = vcmp.lt.s32.totalorder %v1946, 320
  %vm1949 = vmand %vm1947, %vm1948
  %1950 = vst.msk [vmem:[%s3] sm:$0x7] %vm1949, %v1944
  %v1951 = vmul.f32 %v1906, %v1906
  %v1952 = vmul.f32 %v1907, %v1907
  %v1953 = vmul.f32 %v1908, %v1908
  %v1954 = vmul.f32 %v1909, %v1909
  %v1955 = vmul.f32 %v1910, %v1910
  %v1956 = vmul.f32 %v1911, %v1911
  %v1957 = vadd.f32 %v1951, %v1954
  %v1958 = vrot.slane %v1957, 4
  %v1959 = vadd.f32 %v1957, %v1958
  %v1960 = vrot.slane %v1959, 2
  %v1961 = vadd.f32 %v1959, %v1960
  %v1962 = vrot.slane %v1961, 1
  %v1963 = vadd.f32 %v1961, %v1962
  %v1964 = vadd.f32 %v1952, %v1955
  %v1965 = vrot.slane %v1964, 4
  %v1966 = vadd.f32 %v1964, %v1965
  %v1967 = vrot.slane %v1966, 2
  %v1968 = vadd.f32 %v1966, %v1967
  %v1969 = vrot.slane %v1968, 1
  %v1970 = vadd.f32 %v1968, %v1969
  %v1971 = vsel %vm1926, %v1953, 0.0
  %v1972 = vsel %vm1926, %v1956, 0.0
  %v1973 = vadd.f32 %v1971, %v1972
  %v1974 = vrot.slane %v1973, 4
  %v1975 = vadd.f32 %v1973, %v1974
  %v1976 = vrot.slane %v1975, 2
  %v1977 = vadd.f32 %v1975, %v1976
  %v1978 = vrot.slane %v1977, 1
  %v1979 = vadd.f32 %v1977, %v1978
  %v1983 = vrot.slane %v1970, 7
  %v1984 = vrot.slane %v1979, 6
  %v1985 = vsel %vm1941, %v1963, %v1983
  %v1986 = vsel %vm1943, %v1985, %v1984
  %1988 = vst.msk [vmem:[%s4] sm:$0x7] %vm1949, %v1986
  // Predicated region
  $region10: #{regseg_forward.13} parent=0 // pred_check
    _
  $region11: #{regseg_forward.13} parent=0 // pred_check_branch
    %1990 = sbr.rel (0) target = $region13
  $region12: #{regseg_forward.13} parent=0 // pred_region
    _
  $region13: #{regseg_forward.13} parent=0 // pred_fallthru
    _
  // Predicated region
  $region14: #{regseg_forward.13} parent=0 // pred_check
    _
  $region15: #{regseg_forward.13} parent=0 // pred_check_branch
    %1992 = sbr.rel (0) target = $region17
  $region16: #{regseg_forward.13} parent=0 // pred_region
    _
  $region17: #{regseg_forward.13} parent=0 // pred_fallthru
    _
  // Predicated region
  $region18: #{regseg_forward.13} parent=0 // pred_check
    _
  $region19: #{regseg_forward.13} parent=0 // pred_check_branch
    %1994 = sbr.rel (0) target = $region21
  $region20: #{regseg_forward.13} parent=0 // pred_region
    _
  $region21: #{regseg_forward.13} parent=0 // pred_fallthru
    _
  // Predicated region
  $region22: #{regseg_forward.13} parent=0 // pred_check
    _
  $region23: #{regseg_forward.13} parent=0 // pred_check_branch
    %1996 = sbr.rel (0) target = $region25
  $region24: #{regseg_forward.13} parent=0 // pred_region
    _
  $region25: #{regseg_forward.13} parent=0 // pred_fallthru
    _
  // Predicated region
  $region26: #{regseg_forward.13} parent=0 // pred_check
    _
  $region27: #{regseg_forward.13} parent=0 // pred_check_branch
    %1998 = sbr.rel (0) target = $region29
  $region28: #{regseg_forward.13} parent=0 // pred_region
    _
  $region29: #{regseg_forward.13} parent=0 // pred_fallthru
    _
  // Predicated region
  $region30: #{regseg_forward.13} parent=0 // pred_check
    _
  $region31: #{regseg_forward.13} parent=0 // pred_check_branch
    %2000 = sbr.rel (0) target = $region33
  $region32: #{regseg_forward.13} parent=0 // pred_region
    _
  $region33: #{regseg_forward.13} parent=0 // pred_fallthru
    _

// kernel: regseg_forward.17
$region0: #{regseg_forward.17}
  #allocation0 [shape = 'u32[]', space=smem, size = 0x4, offset = 0x4, fixed_abs, tag = 'smem constant byte address 0x4 - core index']
  #allocation1 [shape = 'u32[72,128]{1,0:T(1,128)}', space=vmem, size = 0x9000, scoped, tag = 'internal scratch']
  %s0 = inlined_call_operand.vmem [shape: bf16[128,48], index: 0, kind: input, shape index: {}]
  %s1 = inlined_call_operand.vmem [shape: f32[1,48], index: 1, kind: input, shape index: {}]
  %s2 = inlined_call_operand.vmem [shape: f32[1,48], index: 2, kind: input, shape index: {}]
  %s3 = inlined_call_operand.vmem [shape: bf16[48,8], index: 3, kind: input, shape index: {}]
  %s4 = inlined_call_operand.vmem [shape: bf16[128,8], index: 4, kind: output, shape index: {0}]
  %s5 = inlined_call_operand.vmem [shape: f32[1,1,8], index: 5, kind: output, shape index: {1}]
  %s6 = inlined_call_operand.vmem [shape: f32[1,1,8], index: 6, kind: output, shape index: {2}]
  %7 = xla_tuple %s4, %s5, %s6
  %s8 = sld [smem:[#allocation0]]
  $region42: #{regseg_forward.17} parent=0
    _
  %s10 = ssub.s32 1, %s8
  %s11 = scalar_select 0, %s10, %s8
  // Predicated region
  $region2: #{regseg_forward.17} parent=0 // pred_check
    _
  $region3: #{regseg_forward.17} parent=0 // pred_check_branch
    %13 = sbr.rel (0) target = $region5
  $region4: #{regseg_forward.17} parent=0 // pred_region
    _
  $region5: #{regseg_forward.17} parent=0 // pred_fallthru
    _
  // Predicated region
  $region6: #{regseg_forward.17} parent=0 // pred_check
    _
  $region7: #{regseg_forward.17} parent=0 // pred_check_branch
    %15 = sbr.rel (0) target = $region9
  $region8: #{regseg_forward.17} parent=0 // pred_region
    _
  $region9: #{regseg_forward.17} parent=0 // pred_fallthru
    _
  // Predicated region
  $region10: #{regseg_forward.17} parent=0 // pred_check
    _
  $region11: #{regseg_forward.17} parent=0 // pred_check_branch
    %17 = sbr.rel (0) target = $region13
  $region12: #{regseg_forward.17} parent=0 // pred_region
    _
  $region13: #{regseg_forward.17} parent=0 // pred_fallthru
    _
  // Predicated region
  $region14: #{regseg_forward.17} parent=0 // pred_check
    _
  $region15: #{regseg_forward.17} parent=0 // pred_check_branch
    %19 = sbr.rel (0) target = $region17
  $region16: #{regseg_forward.17} parent=0 // pred_region
    _
  $region17: #{regseg_forward.17} parent=0 // pred_fallthru
    _
  %v21 = vld [vmem:[%s0] sm:$0xf]
  %v22 = vld [vmem:[%s0 + $0x4] sm:$0xf]
  %v23 = vld [vmem:[%s0 + $0x8] sm:$0xf]
  %v24 = vld [vmem:[%s0 + $0xc] sm:$0xf]
  %v25 = vld [vmem:[%s0 + $0x10] sm:$0xf]
  %v26 = vld [vmem:[%s0 + $0x14] sm:$0xf]
  %v27 = vld [vmem:[%s0 + $0x18] sm:$0xf]
  %v28 = vld [vmem:[%s0 + $0x1c] sm:$0xf]
  %v29 = vld [vmem:[%s0 + $0x20] sm:$0xf]
  %v30 = vld [vmem:[%s0 + $0x24] sm:$0xf]
  %v31 = vld [vmem:[%s0 + $0x28] sm:$0xf]
  %v32 = vld [vmem:[%s0 + $0x2c] sm:$0xf]
  %v33 = vld [vmem:[%s0 + $0x30] sm:$0xf]
  %v34 = vld [vmem:[%s0 + $0x34] sm:$0xf]
  %v35 = vld [vmem:[%s0 + $0x38] sm:$0xf]
  %v36 = vld [vmem:[%s0 + $0x3c] sm:$0xf]
  %v37 = vunpack.c.l.bf16 %v21
  %v38 = vunpack.c.l.bf16 %v22
  %v39 = vunpack.c.l.bf16 %v23
  %v40 = vunpack.c.l.bf16 %v24
  %v41 = vunpack.c.l.bf16 %v25
  %v42 = vunpack.c.l.bf16 %v26
  %v43 = vunpack.c.l.bf16 %v27
  %v44 = vunpack.c.l.bf16 %v28
  %v45 = vunpack.c.l.bf16 %v29
  %v46 = vunpack.c.l.bf16 %v30
  %v47 = vunpack.c.l.bf16 %v31
  %v48 = vunpack.c.l.bf16 %v32
  %v49 = vunpack.c.l.bf16 %v33
  %v50 = vunpack.c.l.bf16 %v34
  %v51 = vunpack.c.l.bf16 %v35
  %v52 = vunpack.c.l.bf16 %v36
  %v53 = vld [vmem:[%s1] sm:$0x1]
  %v55 = vperm.slane %v53, 0
  %v57 = vmul.f32 %v37, %v55
  %v58 = vmul.f32 %v38, %v55
  %v59 = vmul.f32 %v39, %v55
  %v60 = vmul.f32 %v40, %v55
  %v61 = vmul.f32 %v41, %v55
  %v62 = vmul.f32 %v42, %v55
  %v63 = vmul.f32 %v43, %v55
  %v64 = vmul.f32 %v44, %v55
  %v65 = vmul.f32 %v45, %v55
  %v66 = vmul.f32 %v46, %v55
  %v67 = vmul.f32 %v47, %v55
  %v68 = vmul.f32 %v48, %v55
  %v69 = vmul.f32 %v49, %v55
  %v70 = vmul.f32 %v50, %v55
  %v71 = vmul.f32 %v51, %v55
  %v72 = vmul.f32 %v52, %v55
  %v73 = vld [vmem:[%s2] sm:$0x1]
  %v75 = vperm.slane %v73, 0
  %v77 = vadd.f32 %v57, %v75
  %v78 = vadd.f32 %v58, %v75
  %v79 = vadd.f32 %v59, %v75
  %v80 = vadd.f32 %v60, %v75
  %v81 = vadd.f32 %v61, %v75
  %v82 = vadd.f32 %v62, %v75
  %v83 = vadd.f32 %v63, %v75
  %v84 = vadd.f32 %v64, %v75
  %v85 = vadd.f32 %v65, %v75
  %v86 = vadd.f32 %v66, %v75
  %v87 = vadd.f32 %v67, %v75
  %v88 = vadd.f32 %v68, %v75
  %v89 = vadd.f32 %v69, %v75
  %v90 = vadd.f32 %v70, %v75
  %v91 = vadd.f32 %v71, %v75
  %v92 = vadd.f32 %v72, %v75
  %v93 = vmax.f32 %v77, 0.0
  %v94 = vmax.f32 %v78, 0.0
  %v95 = vmax.f32 %v79, 0.0
  %v96 = vmax.f32 %v80, 0.0
  %v97 = vmax.f32 %v81, 0.0
  %v98 = vmax.f32 %v82, 0.0
  %v99 = vmax.f32 %v83, 0.0
  %v100 = vmax.f32 %v84, 0.0
  %v101 = vmax.f32 %v85, 0.0
  %v102 = vmax.f32 %v86, 0.0
  %v103 = vmax.f32 %v87, 0.0
  %v104 = vmax.f32 %v88, 0.0
  %v105 = vmax.f32 %v89, 0.0
  %v106 = vmax.f32 %v90, 0.0
  %v107 = vmax.f32 %v91, 0.0
  %v108 = vmax.f32 %v92, 0.0
  %v109 = vpack.c.bf16 %v94, %v93
  %v110 = vpack.c.bf16 %v96, %v95
  %v111 = vpack.c.bf16 %v98, %v97
  %v112 = vpack.c.bf16 %v100, %v99
  %v113 = vpack.c.bf16 %v102, %v101
  %v114 = vpack.c.bf16 %v104, %v103
  %v115 = vpack.c.bf16 %v106, %v105
  %v116 = vpack.c.bf16 %v108, %v107
  %v117 = vld [vmem:[%s3] sm:$0xf]
  %v118 = vld [vmem:[%s3 + $0x4] sm:$0xf]
  %v119 = vld [vmem:[%s3 + $0x8] sm:$0xf]
  %v120 = vld [vmem:[%s3 + $0xc] sm:$0xf]
  %v121 = vld [vmem:[%s3 + $0x10] sm:$0xf]
  %v122 = vld [vmem:[%s3 + $0x14] sm:$0xf]
  %v129 = vunpack.c.l.b16 %v117
  %v130 = vunpack.c.l.b16 %v118
  %v131 = vunpack.c.l.b16 %v119
  %v132 = vunpack.c.l.b16 %v120
  %v133 = vunpack.c.l.b16 %v121
  %v134 = vunpack.c.l.b16 %v122
  %v135 = vpack.c.b16 %v130, %v129
  %v136 = vpack.c.b16 %v132, %v131
  %v137 = vpack.c.b16 %v134, %v133
  %vm141 = vcmask 392192
  %v143 = vsel %vm141, %v109, 0
  %v146 = vsel %vm141, %v110, 0
  %v149 = vsel %vm141, %v111, 0
  %v152 = vsel %vm141, %v112, 0
  %v155 = vsel %vm141, %v113, 0
  %v158 = vsel %vm141, %v114, 0
  %v161 = vsel %vm141, %v115, 0
  %v164 = vsel %vm141, %v116, 0
  %166 = vmatpush.bf16.msra.mxu0 0
  %167 = vmatpush.bf16.msra.mxu0 0
  %168 = vmatpush.bf16.msra.mxu0 0
  %169 = vmatpush.bf16.msra.mxu0 0
  %170 = vmatpush.bf16.msra.mxu0 0
  %171 = vmatpush.bf16.msra.mxu0 %v137
  %172 = vmatpush.bf16.msra.mxu0 %v136
  %173 = vmatpush.bf16.msra.mxu0 %v135
  %174 = vmatmul.bf16.gmra.mxu0 %v143
  %v175 = vpop.f32.mrf.mxu0
  %v176 = vadd.f32 0.0, %v175
  %v177 = vpop.f32.mrf.mxu0
  %v178 = vadd.f32 0.0, %v177
  %179 = vmatmul.bf16.gmra.mxu0 %v146
  %v180 = vpop.f32.mrf.mxu0
  %v181 = vadd.f32 0.0, %v180
  %v182 = vpop.f32.mrf.mxu0
  %v183 = vadd.f32 0.0, %v182
  %184 = vmatmul.bf16.gmra.mxu0 %v149
  %v185 = vpop.f32.mrf.mxu0
  %v186 = vadd.f32 0.0, %v185
  %v187 = vpop.f32.mrf.mxu0
  %v188 = vadd.f32 0.0, %v187
  %189 = vmatmul.bf16.gmra.mxu0 %v152
  %v190 = vpop.f32.mrf.mxu0
  %v191 = vadd.f32 0.0, %v190
  %v192 = vpop.f32.mrf.mxu0
  %v193 = vadd.f32 0.0, %v192
  %194 = vmatmul.bf16.gmra.mxu0 %v155
  %v195 = vpop.f32.mrf.mxu0
  %v196 = vadd.f32 0.0, %v195
  %v197 = vpop.f32.mrf.mxu0
  %v198 = vadd.f32 0.0, %v197
  %199 = vmatmul.bf16.gmra.mxu0 %v158
  %v200 = vpop.f32.mrf.mxu0
  %v201 = vadd.f32 0.0, %v200
  %v202 = vpop.f32.mrf.mxu0
  %v203 = vadd.f32 0.0, %v202
  %204 = vmatmul.bf16.gmra.mxu0 %v161
  %v205 = vpop.f32.mrf.mxu0
  %v206 = vadd.f32 0.0, %v205
  %v207 = vpop.f32.mrf.mxu0
  %v208 = vadd.f32 0.0, %v207
  %209 = vmatmul.bf16.gmra.mxu0 %v164
  %v210 = vpop.f32.mrf.mxu0
  %v211 = vadd.f32 0.0, %v210
  %v212 = vpop.f32.mrf.mxu0
  %v213 = vadd.f32 0.0, %v212
  %214 = vdwg.mxu0
  %v215 = vpack.c.bf16 %v176, %v176
  %v216 = vpack.c.bf16 %v178, %v178
  %v217 = vpack.c.bf16 %v181, %v181
  %v218 = vpack.c.bf16 %v183, %v183
  %v219 = vpack.c.bf16 %v186, %v186
  %v220 = vpack.c.bf16 %v188, %v188
  %v221 = vpack.c.bf16 %v191, %v191
  %v222 = vpack.c.bf16 %v193, %v193
  %v223 = vpack.c.bf16 %v196, %v196
  %v224 = vpack.c.bf16 %v198, %v198
  %v225 = vpack.c.bf16 %v201, %v201
  %v226 = vpack.c.bf16 %v203, %v203
  %v227 = vpack.c.bf16 %v206, %v206
  %v228 = vpack.c.bf16 %v208, %v208
  %v229 = vpack.c.bf16 %v211, %v211
  %v230 = vpack.c.bf16 %v213, %v213
  %vm231 = vcmask 60416
  %232 = vst.msk [vmem:[%s4] sm:$0xf] %vm231, %v215
  %233 = vst.msk [vmem:[%s4 + $0x4] sm:$0xf] %vm231, %v216
  %234 = vst.msk [vmem:[%s4 + $0x8] sm:$0xf] %vm231, %v217
  %235 = vst.msk [vmem:[%s4 + $0xc] sm:$0xf] %vm231, %v218
  %236 = vst.msk [vmem:[%s4 + $0x10] sm:$0xf] %vm231, %v219
  %237 = vst.msk [vmem:[%s4 + $0x14] sm:$0xf] %vm231, %v220
  %238 = vst.msk [vmem:[%s4 + $0x18] sm:$0xf] %vm231, %v221
  %239 = vst.msk [vmem:[%s4 + $0x1c] sm:$0xf] %vm231, %v222
  %240 = vst.msk [vmem:[%s4 + $0x20] sm:$0xf] %vm231, %v223
  %241 = vst.msk [vmem:[%s4 + $0x24] sm:$0xf] %vm231, %v224
  %242 = vst.msk [vmem:[%s4 + $0x28] sm:$0xf] %vm231, %v225
  %243 = vst.msk [vmem:[%s4 + $0x2c] sm:$0xf] %vm231, %v226
  %244 = vst.msk [vmem:[%s4 + $0x30] sm:$0xf] %vm231, %v227
  %245 = vst.msk [vmem:[%s4 + $0x34] sm:$0xf] %vm231, %v228
  %246 = vst.msk [vmem:[%s4 + $0x38] sm:$0xf] %vm231, %v229
  %247 = vst.msk [vmem:[%s4 + $0x3c] sm:$0xf] %vm231, %v230
  %vm248 = vcmask 64512
  %v249 = vsel %vm248, %v176, 0.0
  %v250 = vsel %vm248, %v178, 0.0
  %v251 = vadd.f32 %v249, %v250
  %v252 = vsel %vm248, %v181, 0.0
  %v253 = vadd.f32 %v251, %v252
  %v254 = vsel %vm248, %v183, 0.0
  %v255 = vadd.f32 %v253, %v254
  %v256 = vsel %vm248, %v186, 0.0
  %v257 = vadd.f32 %v255, %v256
  %v258 = vsel %vm248, %v188, 0.0
  %v259 = vadd.f32 %v257, %v258
  %v260 = vsel %vm248, %v191, 0.0
  %v261 = vadd.f32 %v259, %v260
  %v262 = vsel %vm248, %v193, 0.0
  %v263 = vadd.f32 %v261, %v262
  %v264 = vsel %vm248, %v196, 0.0
  %v265 = vadd.f32 %v263, %v264
  %v266 = vsel %vm248, %v198, 0.0
  %v267 = vadd.f32 %v265, %v266
  %v268 = vsel %vm248, %v201, 0.0
  %v269 = vadd.f32 %v267, %v268
  %v270 = vsel %vm248, %v203, 0.0
  %v271 = vadd.f32 %v269, %v270
  %v272 = vsel %vm248, %v206, 0.0
  %v273 = vadd.f32 %v271, %v272
  %v274 = vsel %vm248, %v208, 0.0
  %v275 = vadd.f32 %v273, %v274
  %v276 = vsel %vm248, %v211, 0.0
  %v277 = vadd.f32 %v275, %v276
  %v278 = vsel %vm248, %v213, 0.0
  %v279 = vadd.f32 %v277, %v278
  %v280 = vrot.slane %v279, 4
  %v281 = vadd.f32 %v279, %v280
  %v282 = vrot.slane %v281, 2
  %v283 = vadd.f32 %v281, %v282
  %v284 = vrot.slane %v283, 1
  %v285 = vadd.f32 %v283, %v284
  %vm286 = vcmask 57344
  %287 = vst.msk [vmem:[%s5] sm:$0x1] %vm286, %v285
  %v288 = vmul.f32 %v176, %v176
  %v289 = vmul.f32 %v178, %v178
  %v290 = vmul.f32 %v181, %v181
  %v291 = vmul.f32 %v183, %v183
  %v292 = vmul.f32 %v186, %v186
  %v293 = vmul.f32 %v188, %v188
  %v294 = vmul.f32 %v191, %v191
  %v295 = vmul.f32 %v193, %v193
  %v296 = vmul.f32 %v196, %v196
  %v297 = vmul.f32 %v198, %v198
  %v298 = vmul.f32 %v201, %v201
  %v299 = vmul.f32 %v203, %v203
  %v300 = vmul.f32 %v206, %v206
  %v301 = vmul.f32 %v208, %v208
  %v302 = vmul.f32 %v211, %v211
  %v303 = vmul.f32 %v213, %v213
  %v304 = vsel %vm248, %v288, 0.0
  %v305 = vsel %vm248, %v289, 0.0
  %v306 = vadd.f32 %v304, %v305
  %v307 = vsel %vm248, %v290, 0.0
  %v308 = vadd.f32 %v306, %v307
  %v309 = vsel %vm248, %v291, 0.0
  %v310 = vadd.f32 %v308, %v309
  %v311 = vsel %vm248, %v292, 0.0
  %v312 = vadd.f32 %v310, %v311
  %v313 = vsel %vm248, %v293, 0.0
  %v314 = vadd.f32 %v312, %v313
  %v315 = vsel %vm248, %v294, 0.0
  %v316 = vadd.f32 %v314, %v315
  %v317 = vsel %vm248, %v295, 0.0
  %v318 = vadd.f32 %v316, %v317
  %v319 = vsel %vm248, %v296, 0.0
  %v320 = vadd.f32 %v318, %v319
  %v321 = vsel %vm248, %v297, 0.0
  %v322 = vadd.f32 %v320, %v321
  %v323 = vsel %vm248, %v298, 0.0
  %v324 = vadd.f32 %v322, %v323
  %v325 = vsel %vm248, %v299, 0.0
  %v326 = vadd.f32 %v324, %v325
  %v327 = vsel %vm248, %v300, 0.0
  %v328 = vadd.f32 %v326, %v327
  %v329 = vsel %vm248, %v301, 0.0
  %v330 = vadd.f32 %v328, %v329
  %v331 = vsel %vm248, %v302, 0.0
  %v332 = vadd.f32 %v330, %v331
  %v333 = vsel %vm248, %v303, 0.0
  %v334 = vadd.f32 %v332, %v333
  %v335 = vrot.slane %v334, 4
  %v336 = vadd.f32 %v334, %v335
  %v337 = vrot.slane %v336, 2
  %v338 = vadd.f32 %v336, %v337
  %v339 = vrot.slane %v338, 1
  %v340 = vadd.f32 %v338, %v339
  %341 = vst.msk [vmem:[%s6] sm:$0x1] %vm286, %v340
  // Predicated region
  $region18: #{regseg_forward.17} parent=0 // pred_check
    _
  $region19: #{regseg_forward.17} parent=0 // pred_check_branch
    %343 = sbr.rel (0) target = $region21
  $region20: #{regseg_forward.17} parent=0 // pred_region
    _
  $region21: #{regseg_forward.17} parent=0 // pred_fallthru
    _
  // Predicated region
  $region22: #{regseg_forward.17} parent=0 // pred_check
    _
  $region23: #{regseg_forward.17} parent=0 // pred_check_branch
    %345 = sbr.rel (0) target = $region25
  $region24: #{regseg_forward.17} parent=0 // pred_region
    _
  $region25: #{regseg_forward.17} parent=0 // pred_fallthru
    _
  // Predicated region
  $region26: #{regseg_forward.17} parent=0 // pred_check
    _
  $region27: #{regseg_forward.17} parent=0 // pred_check_branch
    %347 = sbr.rel (0) target = $region29
  $region28: #{regseg_forward.17} parent=0 // pred_region
    _
  $region29: #{regseg_forward.17} parent=0 // pred_fallthru
    _
  // Predicated region
  $region30: #{regseg_forward.17} parent=0 // pred_check
    _
  $region31: #{regseg_forward.17} parent=0 // pred_check_branch
    %349 = sbr.rel (0) target = $region33
  $region32: #{regseg_forward.17} parent=0 // pred_region
    _
  $region33: #{regseg_forward.17} parent=0 // pred_fallthru
    _
  // Predicated region
  $region34: #{regseg_forward.17} parent=0 // pred_check
    _
  $region35: #{regseg_forward.17} parent=0 // pred_check_branch
    %351 = sbr.rel (0) target = $region37
  $region36: #{regseg_forward.17} parent=0 // pred_region
    _
  $region37: #{regseg_forward.17} parent=0 // pred_fallthru
    _
  // Predicated region
  $region38: #{regseg_forward.17} parent=0 // pred_check
    _
  $region39: #{regseg_forward.17} parent=0 // pred_check_branch
    %353 = sbr.rel (0) target = $region41
  $region40: #{regseg_forward.17} parent=0 // pred_region
    _
  $region41: #{regseg_forward.17} parent=0 // pred_fallthru
    _

// kernel: regseg_forward.16
$region0: #{regseg_forward.16}
  #allocation0 [shape = 'u32[]', space=smem, size = 0x4, offset = 0x4, fixed_abs, tag = 'smem constant byte address 0x4 - core index']
  #allocation1 [shape = 'u32[72,128]{1,0:T(1,128)}', space=vmem, size = 0x9000, scoped, tag = 'internal scratch']
  %s0 = inlined_call_operand.vmem [shape: bf16[6,4,6,128], index: 0, kind: input, shape index: {}]
  %s1 = inlined_call_operand.vmem [shape: bf16[1152,64], index: 1, kind: input, shape index: {}]
  %s2 = inlined_call_operand.vmem [shape: bf16[2,4,4,64], index: 2, kind: output, shape index: {0}]
  %s3 = inlined_call_operand.vmem [shape: f32[2,1,1,64], index: 3, kind: output, shape index: {1}]
  %s4 = inlined_call_operand.vmem [shape: f32[2,1,1,64], index: 4, kind: output, shape index: {2}]
  %5 = xla_tuple %s2, %s3, %s4
  %s6 = sld [smem:[#allocation0]]
  $region57: #{regseg_forward.16} parent=0
    _
  %s8 = ssub.s32 1, %s6
  %s9 = scalar_select 0, %s8, %s6
  loop: start=0, step=1, limit=4
  $region2: #{regseg_forward.16} parent=0 // loop_pre_header
    _
  $region3: #{regseg_forward.16} parent=0 // loop_header
    %s11 = sphi 0, %s15
    %p12 = scmp.ge.s32.totalorder %s11, 4
    %s18 = sphi 0, %s30
    %s19 = sphi 0, %s26
    %s20 = sphi 0, %s18
    %s21 = sphi 0, %s19
    %s22 = sphi 0, %s20
    %s23 = sphi 0, %s21
    %s35 = sphi 0, %s37
    %s38 = sphi 0, %s35
    %s39 = sphi 0, %s38
    %s55 = sphi 0, %s39
    %s59 = sphi 0, %s59
    %s61 = sphi 0, %s59
    %s62 = sphi 0, %s61
    %s76 = sphi 0, %s62
    %s84 = sphi 0, %s86
    %s87 = sphi 0, %s84
    %s88 = sphi 0, %s87
    %s104 = sphi 0, %s88
    %s112 = sphi 0, %s114
    %s115 = sphi 0, %s112
    %s116 = sphi 0, %s115
    %s132 = sphi 0, %s116
    %s140 = sphi 0, %s142
    %s143 = sphi 0, %s140
    %s144 = sphi 0, %s143
    %s160 = sphi 0, %s144
  $region4: #{regseg_forward.16} parent=0 // loop_header_branch
    %14 = sbr.rel (%p12) target = $region8
  $region5: #{regseg_forward.16} parent=0 // loop_body
    %s16 = ssub.s32 %s11, 1
    %s17 = ssub.s32 %s11, 2
    %s24 = sadd.s32 1, %s19
    %p25 = scmp.ge.s32.totalorder %s24, 1
    %s26 = scalar_select %p25, 0, %s24
    %s27 = sadd.s32 1, %s18
    %s28 = scalar_select %p25, %s27, %s18
    %p29 = scmp.ge.s32.totalorder %s28, 2
    %s30 = scalar_select %p29, 0, %s28
    %s31 = ssub.s32 %s18, %s30
    %s32 = ssub.s32 %s19, %s26
    %s33 = sor.u32 %s31, %s32
    %p34 = scmp.eq.s32.totalorder %s33, 0
    %s36 = sadd.s32 %s35, 1
    %s37 = scalar_select %p34, %s35, %s36
    %p40 = pneg %p34
    %p41 = scmp.eq.s32.totalorder %s11, 1
    %p42 = por %p40, %p41
    %p43 = scmp.ne.s32.totalorder %s35, %s38
    %p44 = scmp.eq.s32.totalorder %s11, 0
    %p45 = por %p43, %p44
    %p46 = scmp.ne.s32.totalorder %s35, %s38
    %p47 = scmp.eq.s32.totalorder %s16, 1
    %p48 = por %p46, %p47
    %p49 = scmp.ne.s32.totalorder %s38, %s39
    %p50 = scmp.eq.s32.totalorder %s16, 0
    %p51 = por %p49, %p50
    %p52 = scmp.ne.s32.totalorder %s38, %s39
    %p53 = scmp.eq.s32.totalorder %s17, 1
    %p54 = por %p52, %p53
    %p56 = scmp.ne.s32.totalorder %s39, %s55
    %p57 = scmp.eq.s32.totalorder %s17, 0
    %p58 = por %p56, %p57
    %s60 = sadd.s32 %s59, 1
    %p63 = scmp.eq.s32.totalorder %s11, 1
    %p64 = scmp.ne.s32.totalorder %s59, %s61
    %p65 = scmp.eq.s32.totalorder %s11, 0
    %p66 = por %p64, %p65
    %p67 = scmp.ne.s32.totalorder %s59, %s61
    %p68 = scmp.eq.s32.totalorder %s16, 1
    %p69 = por %p67, %p68
    %p70 = scmp.ne.s32.totalorder %s61, %s62
    %p71 = scmp.eq.s32.totalorder %s16, 0
    %p72 = por %p70, %p71
    %p73 = scmp.ne.s32.totalorder %s61, %s62
    %p74 = scmp.eq.s32.totalorder %s17, 1
    %p75 = por %p73, %p74
    %p77 = scmp.ne.s32.totalorder %s62, %s76
    %p78 = scmp.eq.s32.totalorder %s17, 0
    %p79 = por %p77, %p78
    %s80 = ssub.s32 %s18, %s30
    %s81 = ssub.s32 %s19, %s26
    %s82 = sor.u32 %s80, %s81
    %p83 = scmp.eq.s32.totalorder %s82, 0
    %s85 = sadd.s32 %s84, 1
    %s86 = scalar_select %p83, %s84, %s85
    %p89 = pneg %p83
    %p90 = scmp.eq.s32.totalorder %s11, 1
    %p91 = por %p89, %p90
    %p92 = scmp.ne.s32.totalorder %s84, %s87
    %p93 = scmp.eq.s32.totalorder %s11, 0
    %p94 = por %p92, %p93
    %p95 = scmp.ne.s32.totalorder %s84, %s87
    %p96 = scmp.eq.s32.totalorder %s16, 1
    %p97 = por %p95, %p96
    %p98 = scmp.ne.s32.totalorder %s87, %s88
    %p99 = scmp.eq.s32.totalorder %s16, 0
    %p100 = por %p98, %p99
    %p101 = scmp.ne.s32.totalorder %s87, %s88
    %p102 = scmp.eq.s32.totalorder %s17, 1
    %p103 = por %p101, %p102
    %p105 = scmp.ne.s32.totalorder %s88, %s104
    %p106 = scmp.eq.s32.totalorder %s17, 0
    %p107 = por %p105, %p106
    %s108 = ssub.s32 %s18, %s30
    %s109 = ssub.s32 %s19, %s26
    %s110 = sor.u32 %s108, %s109
    %p111 = scmp.eq.s32.totalorder %s110, 0
    %s113 = sadd.s32 %s112, 1
    %s114 = scalar_select %p111, %s112, %s113
    %p117 = pneg %p111
    %p118 = scmp.eq.s32.totalorder %s11, 1
    %p119 = por %p117, %p118
    %p120 = scmp.ne.s32.totalorder %s112, %s115
    %p121 = scmp.eq.s32.totalorder %s11, 0
    %p122 = por %p120, %p121
    %p123 = scmp.ne.s32.totalorder %s112, %s115
    %p124 = scmp.eq.s32.totalorder %s16, 1
    %p125 = por %p123, %p124
    %p126 = scmp.ne.s32.totalorder %s115, %s116
    %p127 = scmp.eq.s32.totalorder %s16, 0
    %p128 = por %p126, %p127
    %p129 = scmp.ne.s32.totalorder %s115, %s116
    %p130 = scmp.eq.s32.totalorder %s17, 1
    %p131 = por %p129, %p130
    %p133 = scmp.ne.s32.totalorder %s116, %s132
    %p134 = scmp.eq.s32.totalorder %s17, 0
    %p135 = por %p133, %p134
    %s136 = ssub.s32 %s18, %s30
    %s137 = ssub.s32 %s19, %s26
    %s138 = sor.u32 %s136, %s137
    %p139 = scmp.eq.s32.totalorder %s138, 0
    %s141 = sadd.s32 %s140, 1
    %s142 = scalar_select %p139, %s140, %s141
    %p145 = pneg %p139
    %p146 = scmp.eq.s32.totalorder %s11, 1
    %p147 = por %p145, %p146
    %p148 = scmp.ne.s32.totalorder %s140, %s143
    %p149 = scmp.eq.s32.totalorder %s11, 0
    %p150 = por %p148, %p149
    %p151 = scmp.ne.s32.totalorder %s140, %s143
    %p152 = scmp.eq.s32.totalorder %s16, 1
    %p153 = por %p151, %p152
    %p154 = scmp.ne.s32.totalorder %s143, %s144
    %p155 = scmp.eq.s32.totalorder %s16, 0
    %p156 = por %p154, %p155
    %p157 = scmp.ne.s32.totalorder %s143, %s144
    %p158 = scmp.eq.s32.totalorder %s17, 1
    %p159 = por %p157, %p158
    %p161 = scmp.ne.s32.totalorder %s144, %s160
    %p162 = scmp.eq.s32.totalorder %s17, 0
    %p163 = por %p161, %p162
    %p164 = scmp.le.s32.totalorder 1, %s11
    %p165 = scmp.lt.s32.totalorder %s11, 3
    %p166 = pnand %p164, %p165
    %p167 = pneg %p166
    // Predicated region
    $region9: #{regseg_forward.16} parent=5 // pred_check
      _
    $region10: #{regseg_forward.16} parent=5 // pred_check_branch
      %169 = sbr.rel (%p166) target = $region12
    $region11: #{regseg_forward.16} parent=5 // pred_region
      %s170 = ssub.s32 %s11, 1
      // Predicated region
      $region13: #{regseg_forward.16} parent=11 // pred_check
        %p171 = pneg %p72
      $region14: #{regseg_forward.16} parent=11 // pred_check_branch
        %173 = sbr.rel (%p171) target = $region16
      $region15: #{regseg_forward.16} parent=11 // pred_region
        _
      $region16: #{regseg_forward.16} parent=11 // pred_fallthru
        _
    $region12: #{regseg_forward.16} parent=5 // pred_fallthru
      _
    %p174 = scmp.lt.s32.totalorder %s11, 2
    // Predicated region
    $region17: #{regseg_forward.16} parent=5 // pred_check
      %p175 = pneg %p174
    $region18: #{regseg_forward.16} parent=5 // pred_check_branch
      %177 = sbr.rel (%p175) target = $region20
    $region19: #{regseg_forward.16} parent=5 // pred_region
      // Predicated region
      $region21: #{regseg_forward.16} parent=19 // pred_check
        %p178 = pneg %p45
      $region22: #{regseg_forward.16} parent=19 // pred_check_branch
        %180 = sbr.rel (%p178) target = $region24
      $region23: #{regseg_forward.16} parent=19 // pred_region
        %s181 = smul.u32 3, %s18
        %s182 = smul.u32 4, %s19
        %p183 = scmp.lt.s32.totalorder %s181, 5
        %s184 = scalar_select %p183, %s181, 5
        %p185 = scmp.lt.s32.totalorder %s182, 3
        %s186 = scalar_select %p185, %s182, 3
        %s187 = smul.addr %s184, 4
        %s188 = sadd.s32 %s186, %s187
        %s189 = smul.addr %s188, 4
        %s190 = scalar_lea.vmem %s0, %s189
        %s191 = smul.u32 3, %s18
        %s192 = smul.u32 4, %s19
      $region24: #{regseg_forward.16} parent=19 // pred_fallthru
        _
    $region20: #{regseg_forward.16} parent=5 // pred_fallthru
      _
    %p193 = scmp.le.s32.totalorder 1, %s11
    %p194 = scmp.lt.s32.totalorder %s11, 3
    %p195 = pnand %p193, %p194
    %p196 = pneg %p195
    // Predicated region
    $region25: #{regseg_forward.16} parent=5 // pred_check
      _
    $region26: #{regseg_forward.16} parent=5 // pred_check_branch
      %198 = sbr.rel (%p195) target = $region28
    $region27: #{regseg_forward.16} parent=5 // pred_region
      %s199 = ssub.s32 %s11, 1
      %s200 = smul.u32 3, %s20
      %s201 = smul.u32 4, %s21
      %p202 = scmp.lt.s32.totalorder %s200, 5
      %s203 = scalar_select %p202, %s200, 5
      %p204 = scmp.lt.s32.totalorder %s201, 3
      %s205 = scalar_select %p204, %s201, 3
      %s206 = smul.addr %s203, 4
      %s207 = sadd.s32 %s205, %s206
      %s208 = smul.addr %s207, 4
      %s209 = scalar_lea.vmem %s0, %s208
      %p210 = pneg %p51
      %p211 = pneg %p48
      %p212 = pneg %p72
      %p213 = pneg %p69
      %p214 = pneg %p100
      %p215 = pneg %p97
      %s216 = smul.u32 4, %s21
      %p217 = scmp.lt.s32.totalorder %s20, 1
      %s218 = scalar_select %p217, %s20, 1
      %p219 = scmp.lt.s32.totalorder %s216, 3
      %s220 = scalar_select %p219, %s216, 3
      %s221 = smul.addr %s218, 4
      %s222 = sadd.s32 %s220, %s221
      %s223 = smul.addr %s222, 2
      %s224 = scalar_lea.vmem %s2, %s223
      %p225 = pneg %p128
      %p226 = pneg %p125
      %p227 = scmp.lt.s32.totalorder %s20, 1
      %s228 = scalar_select %p227, %s20, 1
      %p229 = scmp.lt.s32.totalorder %s21, 0
      %s230 = scalar_select %p229, %s21, 0
      %s231 = sadd.s32 %s230, %s228
      %s232 = scalar_lea.vmem %s3, %s231
      %p233 = pneg %p156
      %p234 = pneg %p153
      %p235 = scmp.lt.s32.totalorder %s20, 1
      %s236 = scalar_select %p235, %s20, 1
      %p237 = scmp.lt.s32.totalorder %s21, 0
      %s238 = scalar_select %p237, %s21, 0
      %s239 = sadd.s32 %s238, %s236
      %s240 = scalar_lea.vmem %s4, %s239
      %s241 = smul.u32 3, %s20
      %s242 = smul.u32 4, %s21
      %p243 = scmp.lt.s32.totalorder %s241, 5
      %s244 = scalar_select %p243, %s241, 5
      %p245 = scmp.lt.s32.totalorder %s242, 3
      %s246 = scalar_select %p245, %s242, 3
      %s247 = smul.addr %s244, 4
      %s248 = sadd.s32 %s246, %s247
      %s249 = smul.addr %s248, 4
      %s250 = scalar_lea.vmem %s0, %s249
      %s251 = smul.u32 3, %s20
      %s252 = smul.u32 4, %s21
      %s253 = smul.u32 4, %s21
      %p254 = scmp.lt.s32.totalorder %s20, 1
      %s255 = scalar_select %p254, %s20, 1
      %p256 = scmp.lt.s32.totalorder %s253, 3
      %s257 = scalar_select %p256, %s253, 3
      %s258 = smul.addr %s255, 4
      %s259 = sadd.s32 %s257, %s258
      %s260 = smul.addr %s259, 2
      %s261 = scalar_lea.vmem %s2, %s260
      %s262 = smul.u32 4, %s21
      %p263 = scmp.lt.s32.totalorder %s20, 1
      %s264 = scalar_select %p263, %s20, 1
      %p265 = scmp.lt.s32.totalorder %s21, 0
      %s266 = scalar_select %p265, %s21, 0
      %s267 = sadd.s32 %s266, %s264
      %s268 = scalar_lea.vmem %s3, %s267
      %p269 = scmp.lt.s32.totalorder %s20, 1
      %s270 = scalar_select %p269, %s20, 1
      %p271 = scmp.lt.s32.totalorder %s21, 0
      %s272 = scalar_select %p271, %s21, 0
      %s273 = sadd.s32 %s272, %s270
      %s274 = scalar_lea.vmem %s4, %s273
      %v275 = vld [vmem:[%s1] sm:$0xf]
      %v276 = vld [vmem:[%s1 + $0x4] sm:$0xf]
      %v277 = vld [vmem:[%s1 + $0x8] sm:$0xf]
      %v278 = vld [vmem:[%s1 + $0xc] sm:$0xf]
      %v279 = vld [vmem:[%s1 + $0x10] sm:$0xf]
      %v280 = vld [vmem:[%s1 + $0x14] sm:$0xf]
      %v281 = vld [vmem:[%s1 + $0x18] sm:$0xf]
      %v282 = vld [vmem:[%s1 + $0x1c] sm:$0xf]
      %v283 = vld [vmem:[%s1 + $0x20] sm:$0xf]
      %v284 = vld [vmem:[%s1 + $0x24] sm:$0xf]
      %v285 = vld [vmem:[%s1 + $0x28] sm:$0xf]
      %v286 = vld [vmem:[%s1 + $0x2c] sm:$0xf]
      %v287 = vld [vmem:[%s1 + $0x30] sm:$0xf]
      %v288 = vld [vmem:[%s1 + $0x34] sm:$0xf]
      %v289 = vld [vmem:[%s1 + $0x38] sm:$0xf]
      %v290 = vld [vmem:[%s1 + $0x3c] sm:$0xf]
      %v291 = vld [vmem:[%s1 + $0x40] sm:$0xf]
      %v292 = vld [vmem:[%s1 + $0x44] sm:$0xf]
      %v293 = vld [vmem:[%s1 + $0x48] sm:$0xf]
      %v294 = vld [vmem:[%s1 + $0x4c] sm:$0xf]
      %v295 = vld [vmem:[%s1 + $0x50] sm:$0xf]
      %v296 = vld [vmem:[%s1 + $0x54] sm:$0xf]
      %v297 = vld [vmem:[%s1 + $0x58] sm:$0xf]
      %v298 = vld [vmem:[%s1 + $0x5c] sm:$0xf]
      %v299 = vld [vmem:[%s1 + $0x60] sm:$0xf]
      %v300 = vld [vmem:[%s1 + $0x64] sm:$0xf]
      %v301 = vld [vmem:[%s1 + $0x68] sm:$0xf]
      %v302 = vld [vmem:[%s1 + $0x6c] sm:$0xf]
      %v303 = vld [vmem:[%s1 + $0x70] sm:$0xf]
      %v304 = vld [vmem:[%s1 + $0x74] sm:$0xf]
      %v305 = vld [vmem:[%s1 + $0x78] sm:$0xf]
      %v306 = vld [vmem:[%s1 + $0x7c] sm:$0xf]
      %v307 = vld [vmem:[%s1 + $0x80] sm:$0xf]
      %v308 = vld [vmem:[%s1 + $0x84] sm:$0xf]
      %v309 = vld [vmem:[%s1 + $0x88] sm:$0xf]
      %v310 = vld [vmem:[%s1 + $0x8c] sm:$0xf]
      %v311 = vld [vmem:[%s1 + $0x90] sm:$0xf]
      %v312 = vld [vmem:[%s1 + $0x94] sm:$0xf]
      %v313 = vld [vmem:[%s1 + $0x98] sm:$0xf]
      %v314 = vld [vmem:[%s1 + $0x9c] sm:$0xf]
      %v315 = vld [vmem:[%s1 + $0xa0] sm:$0xf]
      %v316 = vld [vmem:[%s1 + $0xa4] sm:$0xf]
      %v317 = vld [vmem:[%s1 + $0xa8] sm:$0xf]
      %v318 = vld [vmem:[%s1 + $0xac] sm:$0xf]
      %v319 = vld [vmem:[%s1 + $0xb0] sm:$0xf]
      %v320 = vld [vmem:[%s1 + $0xb4] sm:$0xf]
      %v321 = vld [vmem:[%s1 + $0xb8] sm:$0xf]
      %v322 = vld [vmem:[%s1 + $0xbc] sm:$0xf]
      %v323 = vld [vmem:[%s1 + $0xc0] sm:$0xf]
      %v324 = vld [vmem:[%s1 + $0xc4] sm:$0xf]
      %v325 = vld [vmem:[%s1 + $0xc8] sm:$0xf]
      %v326 = vld [vmem:[%s1 + $0xcc] sm:$0xf]
      %v327 = vld [vmem:[%s1 + $0xd0] sm:$0xf]
      %v328 = vld [vmem:[%s1 + $0xd4] sm:$0xf]
      %v329 = vld [vmem:[%s1 + $0xd8] sm:$0xf]
      %v330 = vld [vmem:[%s1 + $0xdc] sm:$0xf]
      %v331 = vld [vmem:[%s1 + $0xe0] sm:$0xf]
      %v332 = vld [vmem:[%s1 + $0xe4] sm:$0xf]
      %v333 = vld [vmem:[%s1 + $0xe8] sm:$0xf]
      %v334 = vld [vmem:[%s1 + $0xec] sm:$0xf]
      %v335 = vld [vmem:[%s1 + $0xf0] sm:$0xf]
      %v336 = vld [vmem:[%s1 + $0xf4] sm:$0xf]
      %v337 = vld [vmem:[%s1 + $0xf8] sm:$0xf]
      %v338 = vld [vmem:[%s1 + $0xfc] sm:$0xf]
      %v339 = vld [vmem:[%s1 + $0x100] sm:$0xf]
      %v340 = vld [vmem:[%s1 + $0x104] sm:$0xf]
      %v341 = vld [vmem:[%s1 + $0x108] sm:$0xf]
      %v342 = vld [vmem:[%s1 + $0x10c] sm:$0xf]
      %v343 = vld [vmem:[%s1 + $0x110] sm:$0xf]
      %v344 = vld [vmem:[%s1 + $0x114] sm:$0xf]
      %v345 = vld [vmem:[%s1 + $0x118] sm:$0xf]
      %v346 = vld [vmem:[%s1 + $0x11c] sm:$0xf]
      %v347 = vld [vmem:[%s1 + $0x120] sm:$0xf]
      %v348 = vld [vmem:[%s1 + $0x124] sm:$0xf]
      %v349 = vld [vmem:[%s1 + $0x128] sm:$0xf]
      %v350 = vld [vmem:[%s1 + $0x12c] sm:$0xf]
      %v351 = vld [vmem:[%s1 + $0x130] sm:$0xf]
      %v352 = vld [vmem:[%s1 + $0x134] sm:$0xf]
      %v353 = vld [vmem:[%s1 + $0x138] sm:$0xf]
      %v354 = vld [vmem:[%s1 + $0x13c] sm:$0xf]
      %v355 = vld [vmem:[%s1 + $0x140] sm:$0xf]
      %v356 = vld [vmem:[%s1 + $0x144] sm:$0xf]
      %v357 = vld [vmem:[%s1 + $0x148] sm:$0xf]
      %v358 = vld [vmem:[%s1 + $0x14c] sm:$0xf]
      %v359 = vld [vmem:[%s1 + $0x150] sm:$0xf]
      %v360 = vld [vmem:[%s1 + $0x154] sm:$0xf]
      %v361 = vld [vmem:[%s1 + $0x158] sm:$0xf]
      %v362 = vld [vmem:[%s1 + $0x15c] sm:$0xf]
      %v363 = vld [vmem:[%s1 + $0x160] sm:$0xf]
      %v364 = vld [vmem:[%s1 + $0x164] sm:$0xf]
      %v365 = vld [vmem:[%s1 + $0x168] sm:$0xf]
      %v366 = vld [vmem:[%s1 + $0x16c] sm:$0xf]
      %v367 = vld [vmem:[%s1 + $0x170] sm:$0xf]
      %v368 = vld [vmem:[%s1 + $0x174] sm:$0xf]
      %v369 = vld [vmem:[%s1 + $0x178] sm:$0xf]
      %v370 = vld [vmem:[%s1 + $0x17c] sm:$0xf]
      %v371 = vld [vmem:[%s1 + $0x180] sm:$0xf]
      %v372 = vld [vmem:[%s1 + $0x184] sm:$0xf]
      %v373 = vld [vmem:[%s1 + $0x188] sm:$0xf]
      %v374 = vld [vmem:[%s1 + $0x18c] sm:$0xf]
      %v375 = vld [vmem:[%s1 + $0x190] sm:$0xf]
      %v376 = vld [vmem:[%s1 + $0x194] sm:$0xf]
      %v377 = vld [vmem:[%s1 + $0x198] sm:$0xf]
      %v378 = vld [vmem:[%s1 + $0x19c] sm:$0xf]
      %v379 = vld [vmem:[%s1 + $0x1a0] sm:$0xf]
      %v380 = vld [vmem:[%s1 + $0x1a4] sm:$0xf]
      %v381 = vld [vmem:[%s1 + $0x1a8] sm:$0xf]
      %v382 = vld [vmem:[%s1 + $0x1ac] sm:$0xf]
      %v383 = vld [vmem:[%s1 + $0x1b0] sm:$0xf]
      %v384 = vld [vmem:[%s1 + $0x1b4] sm:$0xf]
      %v385 = vld [vmem:[%s1 + $0x1b8] sm:$0xf]
      %v386 = vld [vmem:[%s1 + $0x1bc] sm:$0xf]
      %v387 = vld [vmem:[%s1 + $0x1c0] sm:$0xf]
      %v388 = vld [vmem:[%s1 + $0x1c4] sm:$0xf]
      %v389 = vld [vmem:[%s1 + $0x1c8] sm:$0xf]
      %v390 = vld [vmem:[%s1 + $0x1cc] sm:$0xf]
      %v391 = vld [vmem:[%s1 + $0x1d0] sm:$0xf]
      %v392 = vld [vmem:[%s1 + $0x1d4] sm:$0xf]
      %v393 = vld [vmem:[%s1 + $0x1d8] sm:$0xf]
      %v394 = vld [vmem:[%s1 + $0x1dc] sm:$0xf]
      %v395 = vld [vmem:[%s1 + $0x1e0] sm:$0xf]
      %v396 = vld [vmem:[%s1 + $0x1e4] sm:$0xf]
      %v397 = vld [vmem:[%s1 + $0x1e8] sm:$0xf]
      %v398 = vld [vmem:[%s1 + $0x1ec] sm:$0xf]
      %v399 = vld [vmem:[%s1 + $0x1f0] sm:$0xf]
      %v400 = vld [vmem:[%s1 + $0x1f4] sm:$0xf]
      %v401 = vld [vmem:[%s1 + $0x1f8] sm:$0xf]
      %v402 = vld [vmem:[%s1 + $0x1fc] sm:$0xf]
      %v403 = vld [vmem:[%s1 + $0x200] sm:$0xf]
      %v404 = vld [vmem:[%s1 + $0x204] sm:$0xf]
      %v405 = vld [vmem:[%s1 + $0x208] sm:$0xf]
      %v406 = vld [vmem:[%s1 + $0x20c] sm:$0xf]
      %v407 = vld [vmem:[%s1 + $0x210] sm:$0xf]
      %v408 = vld [vmem:[%s1 + $0x214] sm:$0xf]
      %v409 = vld [vmem:[%s1 + $0x218] sm:$0xf]
      %v410 = vld [vmem:[%s1 + $0x21c] sm:$0xf]
      %v411 = vld [vmem:[%s1 + $0x220] sm:$0xf]
      %v412 = vld [vmem:[%s1 + $0x224] sm:$0xf]
      %v413 = vld [vmem:[%s1 + $0x228] sm:$0xf]
      %v414 = vld [vmem:[%s1 + $0x22c] sm:$0xf]
      %v415 = vld [vmem:[%s1 + $0x230] sm:$0xf]
      %v416 = vld [vmem:[%s1 + $0x234] sm:$0xf]
      %v417 = vld [vmem:[%s1 + $0x238] sm:$0xf]
      %v418 = vld [vmem:[%s1 + $0x23c] sm:$0xf]
      %v419 = vld [vmem:[%s250] sm:$0x3]
      %v420 = vld [vmem:[%s250] sm:$0x7]
      %v421 = vld [vmem:[%s250] sm:$0x6]
      %s422 = scalar_lea.vmem %s250, 16
      %v423 = vld [vmem:[%s422] sm:$0x3]
      %v424 = vld [vmem:[%s422] sm:$0x7]
      %v425 = vld [vmem:[%s422] sm:$0x6]
      %s426 = scalar_lea.vmem %s250, 32
      %v427 = vld [vmem:[%s426] sm:$0x3]
      %v428 = vld [vmem:[%s426] sm:$0x7]
      %v429 = vld [vmem:[%s426] sm:$0x6]
      %v431 = vunpack.c.l.b16 %v420
      %v432 = vpack.c.b16 %v431, %v431
      %v434 = vshrl.u32 %v432, 16
      %v436 = vshll.u32 %v432, 16
      %v438 = vrot.slane %v436, 1
      %v439 = vor.u32 %v434, %v438
      %v442 = vunpack.c.l.b16 %v421
      %v443 = vpack.c.b16 %v442, %v442
      %v444 = vrot.slane %v443, 1
      %v447 = vunpack.c.l.b16 %v424
      %v448 = vpack.c.b16 %v447, %v447
      %v450 = vshrl.u32 %v448, 16
      %v452 = vshll.u32 %v448, 16
      %v454 = vrot.slane %v452, 1
      %v455 = vor.u32 %v450, %v454
      %v458 = vunpack.c.l.b16 %v425
      %v459 = vpack.c.b16 %v458, %v458
      %v460 = vrot.slane %v459, 1
      %v463 = vunpack.c.l.b16 %v428
      %v464 = vpack.c.b16 %v463, %v463
      %v466 = vshrl.u32 %v464, 16
      %v468 = vshll.u32 %v464, 16
      %v470 = vrot.slane %v468, 1
      %v471 = vor.u32 %v466, %v470
      %v474 = vunpack.c.l.b16 %v429
      %v475 = vpack.c.b16 %v474, %v474
      %v476 = vrot.slane %v475, 1
      %v622 = vunpack.c.l.b16 %v275
      %v623 = vunpack.c.l.b16 %v276
      %v624 = vunpack.c.l.b16 %v277
      %v625 = vunpack.c.l.b16 %v278
      %v626 = vunpack.c.l.b16 %v279
      %v627 = vunpack.c.l.b16 %v280
      %v628 = vunpack.c.l.b16 %v281
      %v629 = vunpack.c.l.b16 %v282
      %v630 = vunpack.c.l.b16 %v283
      %v631 = vunpack.c.l.b16 %v284
      %v632 = vunpack.c.l.b16 %v285
      %v633 = vunpack.c.l.b16 %v286
      %v634 = vunpack.c.l.b16 %v287
      %v635 = vunpack.c.l.b16 %v288
      %v636 = vunpack.c.l.b16 %v289
      %v637 = vunpack.c.l.b16 %v290
      %v638 = vunpack.c.l.b16 %v291
      %v639 = vunpack.c.l.b16 %v292
      %v640 = vunpack.c.l.b16 %v293
      %v641 = vunpack.c.l.b16 %v294
      %v642 = vunpack.c.l.b16 %v295
      %v643 = vunpack.c.l.b16 %v296
      %v644 = vunpack.c.l.b16 %v297
      %v645 = vunpack.c.l.b16 %v298
      %v646 = vunpack.c.l.b16 %v299
      %v647 = vunpack.c.l.b16 %v300
      %v648 = vunpack.c.l.b16 %v301
      %v649 = vunpack.c.l.b16 %v302
      %v650 = vunpack.c.l.b16 %v303
      %v651 = vunpack.c.l.b16 %v304
      %v652 = vunpack.c.l.b16 %v305
      %v653 = vunpack.c.l.b16 %v306
      %v654 = vunpack.c.l.b16 %v307
      %v655 = vunpack.c.l.b16 %v308
      %v656 = vunpack.c.l.b16 %v309
      %v657 = vunpack.c.l.b16 %v310
      %v658 = vunpack.c.l.b16 %v311
      %v659 = vunpack.c.l.b16 %v312
      %v660 = vunpack.c.l.b16 %v313
      %v661 = vunpack.c.l.b16 %v314
      %v662 = vunpack.c.l.b16 %v315
      %v663 = vunpack.c.l.b16 %v316
      %v664 = vunpack.c.l.b16 %v317
      %v665 = vunpack.c.l.b16 %v318
      %v666 = vunpack.c.l.b16 %v319
      %v667 = vunpack.c.l.b16 %v320
      %v668 = vunpack.c.l.b16 %v321
      %v669 = vunpack.c.l.b16 %v322
      %v670 = vunpack.c.l.b16 %v323
      %v671 = vunpack.c.l.b16 %v324
      %v672 = vunpack.c.l.b16 %v325
      %v673 = vunpack.c.l.b16 %v326
      %v674 = vunpack.c.l.b16 %v327
      %v675 = vunpack.c.l.b16 %v328
      %v676 = vunpack.c.l.b16 %v329
      %v677 = vunpack.c.l.b16 %v330
      %v678 = vunpack.c.l.b16 %v331
      %v679 = vunpack.c.l.b16 %v332
      %v680 = vunpack.c.l.b16 %v333
      %v681 = vunpack.c.l.b16 %v334
      %v682 = vunpack.c.l.b16 %v335
      %v683 = vunpack.c.l.b16 %v336
      %v684 = vunpack.c.l.b16 %v337
      %v685 = vunpack.c.l.b16 %v338
      %v686 = vunpack.c.l.b16 %v339
      %v687 = vunpack.c.l.b16 %v340
      %v688 = vunpack.c.l.b16 %v341
      %v689 = vunpack.c.l.b16 %v342
      %v690 = vunpack.c.l.b16 %v343
      %v691 = vunpack.c.l.b16 %v344
      %v692 = vunpack.c.l.b16 %v345
      %v693 = vunpack.c.l.b16 %v346
      %v694 = vunpack.c.l.b16 %v347
      %v695 = vunpack.c.l.b16 %v348
      %v696 = vunpack.c.l.b16 %v349
      %v697 = vunpack.c.l.b16 %v350
      %v698 = vunpack.c.l.b16 %v351
      %v699 = vunpack.c.l.b16 %v352
      %v700 = vunpack.c.l.b16 %v353
      %v701 = vunpack.c.l.b16 %v354
      %v702 = vunpack.c.l.b16 %v355
      %v703 = vunpack.c.l.b16 %v356
      %v704 = vunpack.c.l.b16 %v357
      %v705 = vunpack.c.l.b16 %v358
      %v706 = vunpack.c.l.b16 %v359
      %v707 = vunpack.c.l.b16 %v360
      %v708 = vunpack.c.l.b16 %v361
      %v709 = vunpack.c.l.b16 %v362
      %v710 = vunpack.c.l.b16 %v363
      %v711 = vunpack.c.l.b16 %v364
      %v712 = vunpack.c.l.b16 %v365
      %v713 = vunpack.c.l.b16 %v366
      %v714 = vunpack.c.l.b16 %v367
      %v715 = vunpack.c.l.b16 %v368
      %v716 = vunpack.c.l.b16 %v369
      %v717 = vunpack.c.l.b16 %v370
      %v718 = vunpack.c.l.b16 %v371
      %v719 = vunpack.c.l.b16 %v372
      %v720 = vunpack.c.l.b16 %v373
      %v721 = vunpack.c.l.b16 %v374
      %v722 = vunpack.c.l.b16 %v375
      %v723 = vunpack.c.l.b16 %v376
      %v724 = vunpack.c.l.b16 %v377
      %v725 = vunpack.c.l.b16 %v378
      %v726 = vunpack.c.l.b16 %v379
      %v727 = vunpack.c.l.b16 %v380
      %v728 = vunpack.c.l.b16 %v381
      %v729 = vunpack.c.l.b16 %v382
      %v730 = vunpack.c.l.b16 %v383
      %v731 = vunpack.c.l.b16 %v384
      %v732 = vunpack.c.l.b16 %v385
      %v733 = vunpack.c.l.b16 %v386
      %v734 = vunpack.c.l.b16 %v387
      %v735 = vunpack.c.l.b16 %v388
      %v736 = vunpack.c.l.b16 %v389
      %v737 = vunpack.c.l.b16 %v390
      %v738 = vunpack.c.l.b16 %v391
      %v739 = vunpack.c.l.b16 %v392
      %v740 = vunpack.c.l.b16 %v393
      %v741 = vunpack.c.l.b16 %v394
      %v742 = vunpack.c.l.b16 %v395
      %v743 = vunpack.c.l.b16 %v396
      %v744 = vunpack.c.l.b16 %v397
      %v745 = vunpack.c.l.b16 %v398
      %v746 = vunpack.c.l.b16 %v399
      %v747 = vunpack.c.l.b16 %v400
      %v748 = vunpack.c.l.b16 %v401
      %v749 = vunpack.c.l.b16 %v402
      %v750 = vunpack.c.l.b16 %v403
      %v751 = vunpack.c.l.b16 %v404
      %v752 = vunpack.c.l.b16 %v405
      %v753 = vunpack.c.l.b16 %v406
      %v754 = vunpack.c.l.b16 %v407
      %v755 = vunpack.c.l.b16 %v408
      %v756 = vunpack.c.l.b16 %v409
      %v757 = vunpack.c.l.b16 %v410
      %v758 = vunpack.c.l.b16 %v411
      %v759 = vunpack.c.l.b16 %v412
      %v760 = vunpack.c.l.b16 %v413
      %v761 = vunpack.c.l.b16 %v414
      %v762 = vunpack.c.l.b16 %v415
      %v763 = vunpack.c.l.b16 %v416
      %v764 = vunpack.c.l.b16 %v417
      %v765 = vunpack.c.l.b16 %v418
      %v766 = vpack.c.b16 %v623, %v622
      %v767 = vpack.c.b16 %v625, %v624
      %v768 = vpack.c.b16 %v627, %v626
      %v769 = vpack.c.b16 %v629, %v628
      %v770 = vpack.c.b16 %v631, %v630
      %v771 = vpack.c.b16 %v633, %v632
      %v772 = vpack.c.b16 %v635, %v634
      %v773 = vpack.c.b16 %v637, %v636
      %v774 = vpack.c.b16 %v639, %v638
      %v775 = vpack.c.b16 %v641, %v640
      %v776 = vpack.c.b16 %v643, %v642
      %v777 = vpack.c.b16 %v645, %v644
      %v778 = vpack.c.b16 %v647, %v646
      %v779 = vpack.c.b16 %v649, %v648
      %v780 = vpack.c.b16 %v651, %v650
      %v781 = vpack.c.b16 %v653, %v652
      %v782 = vpack.c.b16 %v655, %v654
      %v783 = vpack.c.b16 %v657, %v656
      %v784 = vpack.c.b16 %v659, %v658
      %v785 = vpack.c.b16 %v661, %v660
      %v786 = vpack.c.b16 %v663, %v662
      %v787 = vpack.c.b16 %v665, %v664
      %v788 = vpack.c.b16 %v667, %v666
      %v789 = vpack.c.b16 %v669, %v668
      %v790 = vpack.c.b16 %v671, %v670
      %v791 = vpack.c.b16 %v673, %v672
      %v792 = vpack.c.b16 %v675, %v674
      %v793 = vpack.c.b16 %v677, %v676
      %v794 = vpack.c.b16 %v679, %v678
      %v795 = vpack.c.b16 %v681, %v680
      %v796 = vpack.c.b16 %v683, %v682
      %v797 = vpack.c.b16 %v685, %v684
      %v798 = vpack.c.b16 %v687, %v686
      %v799 = vpack.c.b16 %v689, %v688
      %v800 = vpack.c.b16 %v691, %v690
      %v801 = vpack.c.b16 %v693, %v692
      %v802 = vpack.c.b16 %v695, %v694
      %v803 = vpack.c.b16 %v697, %v696
      %v804 = vpack.c.b16 %v699, %v698
      %v805 = vpack.c.b16 %v701, %v700
      %v806 = vpack.c.b16 %v703, %v702
      %v807 = vpack.c.b16 %v705, %v704
      %v808 = vpack.c.b16 %v707, %v706
      %v809 = vpack.c.b16 %v709, %v708
      %v810 = vpack.c.b16 %v711, %v710
      %v811 = vpack.c.b16 %v713, %v712
      %v812 = vpack.c.b16 %v715, %v714
      %v813 = vpack.c.b16 %v717, %v716
      %v814 = vpack.c.b16 %v719, %v718
      %v815 = vpack.c.b16 %v721, %v720
      %v816 = vpack.c.b16 %v723, %v722
      %v817 = vpack.c.b16 %v725, %v724
      %v818 = vpack.c.b16 %v727, %v726
      %v819 = vpack.c.b16 %v729, %v728
      %v820 = vpack.c.b16 %v731, %v730
      %v821 = vpack.c.b16 %v733, %v732
      %v822 = vpack.c.b16 %v735, %v734
      %v823 = vpack.c.b16 %v737, %v736
      %v824 = vpack.c.b16 %v739, %v738
      %v825 = vpack.c.b16 %v741, %v740
      %v826 = vpack.c.b16 %v743, %v742
      %v827 = vpack.c.b16 %v745, %v744
      %v828 = vpack.c.b16 %v747, %v746
      %v829 = vpack.c.b16 %v749, %v748
      %v830 = vpack.c.b16 %v751, %v750
      %v831 = vpack.c.b16 %v753, %v752
      %v832 = vpack.c.b16 %v755, %v754
      %v833 = vpack.c.b16 %v757, %v756
      %v834 = vpack.c.b16 %v759, %v758
      %v835 = vpack.c.b16 %v761, %v760
      %v836 = vpack.c.b16 %v763, %v762
      %v837 = vpack.c.b16 %v765, %v764
      %910 = vmatpush.bf16.msra.mxu0 %v773
      %911 = vmatpush.bf16.msra.mxu0 %v772
      %912 = vmatpush.bf16.msra.mxu0 %v771
      %913 = vmatpush.bf16.msra.mxu0 %v770
      %914 = vmatpush.bf16.msra.mxu0 %v769
      %915 = vmatpush.bf16.msra.mxu0 %v768
      %916 = vmatpush.bf16.msra.mxu0 %v767
      %917 = vmatpush.bf16.msra.mxu0 %v766
      %918 = vmatmul.bf16.gmra.mxu0 %v419
      %v919 = vpop.f32.mrf.mxu0
      %v920 = vadd.f32 0.0, %v919
      %v921 = vpop.f32.mrf.mxu0
      %922 = vdwg.mxu0
      %923 = vmatpush.bf16.msra.mxu0 %v781
      %924 = vmatpush.bf16.msra.mxu0 %v780
      %925 = vmatpush.bf16.msra.mxu0 %v779
      %926 = vmatpush.bf16.msra.mxu0 %v778
      %927 = vmatpush.bf16.msra.mxu0 %v777
      %928 = vmatpush.bf16.msra.mxu0 %v776
      %929 = vmatpush.bf16.msra.mxu0 %v775
      %930 = vmatpush.bf16.msra.mxu0 %v774
      %931 = vmatmul.bf16.gmra.mxu0 %v439
      %v932 = vpop.f32.mrf.mxu0
      %v933 = vadd.f32 %v920, %v932
      %v934 = vpop.f32.mrf.mxu0
      %935 = vdwg.mxu0
      %936 = vmatpush.bf16.msra.mxu0 %v789
      %937 = vmatpush.bf16.msra.mxu0 %v788
      %938 = vmatpush.bf16.msra.mxu0 %v787
      %939 = vmatpush.bf16.msra.mxu0 %v786
      %940 = vmatpush.bf16.msra.mxu0 %v785
      %941 = vmatpush.bf16.msra.mxu0 %v784
      %942 = vmatpush.bf16.msra.mxu0 %v783
      %943 = vmatpush.bf16.msra.mxu0 %v782
      %944 = vmatmul.bf16.gmra.mxu0 %v444
      %v945 = vpop.f32.mrf.mxu0
      %v946 = vadd.f32 %v933, %v945
      %v947 = vpop.f32.mrf.mxu0
      %948 = vdwg.mxu0
      %949 = vmatpush.bf16.msra.mxu0 %v797
      %950 = vmatpush.bf16.msra.mxu0 %v796
      %951 = vmatpush.bf16.msra.mxu0 %v795
      %952 = vmatpush.bf16.msra.mxu0 %v794
      %953 = vmatpush.bf16.msra.mxu0 %v793
      %954 = vmatpush.bf16.msra.mxu0 %v792
      %955 = vmatpush.bf16.msra.mxu0 %v791
      %956 = vmatpush.bf16.msra.mxu0 %v790
      %957 = vmatmul.bf16.gmra.mxu0 %v423
      %v958 = vpop.f32.mrf.mxu0
      %v959 = vadd.f32 %v946, %v958
      %v960 = vpop.f32.mrf.mxu0
      %961 = vdwg.mxu0
      %962 = vmatpush.bf16.msra.mxu0 %v805
      %963 = vmatpush.bf16.msra.mxu0 %v804
      %964 = vmatpush.bf16.msra.mxu0 %v803
      %965 = vmatpush.bf16.msra.mxu0 %v802
      %966 = vmatpush.bf16.msra.mxu0 %v801
      %967 = vmatpush.bf16.msra.mxu0 %v800
      %968 = vmatpush.bf16.msra.mxu0 %v799
      %969 = vmatpush.bf16.msra.mxu0 %v798
      %970 = vmatmul.bf16.gmra.mxu0 %v455
      %v971 = vpop.f32.mrf.mxu0
      %v972 = vadd.f32 %v959, %v971
      %v973 = vpop.f32.mrf.mxu0
      %974 = vdwg.mxu0
      %975 = vmatpush.bf16.msra.mxu0 %v813
      %976 = vmatpush.bf16.msra.mxu0 %v812
      %977 = vmatpush.bf16.msra.mxu0 %v811
      %978 = vmatpush.bf16.msra.mxu0 %v810
      %979 = vmatpush.bf16.msra.mxu0 %v809
      %980 = vmatpush.bf16.msra.mxu0 %v808
      %981 = vmatpush.bf16.msra.mxu0 %v807
      %982 = vmatpush.bf16.msra.mxu0 %v806
      %983 = vmatmul.bf16.gmra.mxu0 %v460
      %v984 = vpop.f32.mrf.mxu0
      %v985 = vadd.f32 %v972, %v984
      %v986 = vpop.f32.mrf.mxu0
      %987 = vdwg.mxu0
      %988 = vmatpush.bf16.msra.mxu0 %v821
      %989 = vmatpush.bf16.msra.mxu0 %v820
      %990 = vmatpush.bf16.msra.mxu0 %v819
      %991 = vmatpush.bf16.msra.mxu0 %v818
      %992 = vmatpush.bf16.msra.mxu0 %v817
      %993 = vmatpush.bf16.msra.mxu0 %v816
      %994 = vmatpush.bf16.msra.mxu0 %v815
      %995 = vmatpush.bf16.msra.mxu0 %v814
      %996 = vmatmul.bf16.gmra.mxu0 %v427
      %v997 = vpop.f32.mrf.mxu0
      %v998 = vadd.f32 %v985, %v997
      %v999 = vpop.f32.mrf.mxu0
      %1000 = vdwg.mxu0
      %1001 = vmatpush.bf16.msra.mxu0 %v829
      %1002 = vmatpush.bf16.msra.mxu0 %v828
      %1003 = vmatpush.bf16.msra.mxu0 %v827
      %1004 = vmatpush.bf16.msra.mxu0 %v826
      %1005 = vmatpush.bf16.msra.mxu0 %v825
      %1006 = vmatpush.bf16.msra.mxu0 %v824
      %1007 = vmatpush.bf16.msra.mxu0 %v823
      %1008 = vmatpush.bf16.msra.mxu0 %v822
      %1009 = vmatmul.bf16.gmra.mxu0 %v471
      %v1010 = vpop.f32.mrf.mxu0
      %v1011 = vadd.f32 %v998, %v1010
      %v1012 = vpop.f32.mrf.mxu0
      %1013 = vdwg.mxu0
      %1014 = vmatpush.bf16.msra.mxu0 %v837
      %1015 = vmatpush.bf16.msra.mxu0 %v836
      %1016 = vmatpush.bf16.msra.mxu0 %v835
      %1017 = vmatpush.bf16.msra.mxu0 %v834
      %1018 = vmatpush.bf16.msra.mxu0 %v833
      %1019 = vmatpush.bf16.msra.mxu0 %v832
      %1020 = vmatpush.bf16.msra.mxu0 %v831
      %1021 = vmatpush.bf16.msra.mxu0 %v830
      %1022 = vmatmul.bf16.gmra.mxu0 %v476
      %v1023 = vpop.f32.mrf.mxu0
      %v1024 = vadd.f32 %v1011, %v1023
      %v1025 = vpop.f32.mrf.mxu0
      %1026 = vdwg.mxu0
      %v1027 = vpack.c.bf16 %v1024, %v1024
      %vm1028 = vcmask 517120
      %1029 = vst.msk [vmem:[%s261] sm:$0x3] %vm1028, %v1027
      %s1030 = smul.u32 %s21, 4
      %p1031 = scmp.lt.s32.totalorder %s1030, 4
      %vm1032 = vcmask 519168
      %v1033 = vsel %vm1032, %v1024, 0.0
      %v1034 = vrot.slane %v1033, 4
      %v1035 = vadd.f32 %v1033, %v1034
      %v1036 = vrot.slane %v1035, 2
      %v1037 = vadd.f32 %v1035, %v1036
      %v1038 = vrot.slane %v1037, 1
      %v1039 = vadd.f32 %v1037, %v1038
      %s1040 = scalar_select %p1031, 1, 0
      %v1041 = vstv %s1040
      %vm1042 = vcmp.eq.s32.totalorder %v1041, 1
      %v1043 = vsel %vm1042, %v1039, 0.0
      %v1044 = vadd.f32 %v1043, 0.0
      %v1045 = vmul.f32 %v1024, %v1024
      %v1046 = vsel %vm1032, %v1045, 0.0
      %v1047 = vrot.slane %v1046, 4
      %v1048 = vadd.f32 %v1046, %v1047
      %v1049 = vrot.slane %v1048, 2
      %v1050 = vadd.f32 %v1048, %v1049
      %v1051 = vrot.slane %v1050, 1
      %v1052 = vadd.f32 %v1050, %v1051
      %v1053 = vsel %vm1042, %v1052, 0.0
      %v1054 = vadd.f32 %v1053, 0.0
      %s1055 = scalar_lea.vmem %s250, 4
      %v1056 = vld [vmem:[%s1055] sm:$0x3]
      %v1057 = vld [vmem:[%s1055] sm:$0x7]
      %v1058 = vld [vmem:[%s1055] sm:$0x6]
      %s1059 = scalar_lea.vmem %s250, 20
      %v1060 = vld [vmem:[%s1059] sm:$0x3]
      %v1061 = vld [vmem:[%s1059] sm:$0x7]
      %v1062 = vld [vmem:[%s1059] sm:$0x6]
      %s1063 = scalar_lea.vmem %s250, 36
      %v1064 = vld [vmem:[%s1063] sm:$0x3]
      %v1065 = vld [vmem:[%s1063] sm:$0x7]
      %v1066 = vld [vmem:[%s1063] sm:$0x6]
      %v1068 = vunpack.c.l.b16 %v1057
      %v1069 = vpack.c.b16 %v1068, %v1068
      %v1071 = vshrl.u32 %v1069, 16
      %v1073 = vshll.u32 %v1069, 16
      %v1075 = vrot.slane %v1073, 1
      %v1076 = vor.u32 %v1071, %v1075
      %v1079 = vunpack.c.l.b16 %v1058
      %v1080 = vpack.c.b16 %v1079, %v1079
      %v1081 = vrot.slane %v1080, 1
      %v1084 = vunpack.c.l.b16 %v1061
      %v1085 = vpack.c.b16 %v1084, %v1084
      %v1087 = vshrl.u32 %v1085, 16
      %v1089 = vshll.u32 %v1085, 16
      %v1091 = vrot.slane %v1089, 1
      %v1092 = vor.u32 %v1087, %v1091
      %v1095 = vunpack.c.l.b16 %v1062
      %v1096 = vpack.c.b16 %v1095, %v1095
      %v1097 = vrot.slane %v1096, 1
      %v1100 = vunpack.c.l.b16 %v1065
      %v1101 = vpack.c.b16 %v1100, %v1100
      %v1103 = vshrl.u32 %v1101, 16
      %v1105 = vshll.u32 %v1101, 16
      %v1107 = vrot.slane %v1105, 1
      %v1108 = vor.u32 %v1103, %v1107
      %v1111 = vunpack.c.l.b16 %v1066
      %v1112 = vpack.c.b16 %v1111, %v1111
      %v1113 = vrot.slane %v1112, 1
      %1115 = vmatpush.bf16.msra.mxu0 %v773
      %1116 = vmatpush.bf16.msra.mxu0 %v772
      %1117 = vmatpush.bf16.msra.mxu0 %v771
      %1118 = vmatpush.bf16.msra.mxu0 %v770
      %1119 = vmatpush.bf16.msra.mxu0 %v769
      %1120 = vmatpush.bf16.msra.mxu0 %v768
      %1121 = vmatpush.bf16.msra.mxu0 %v767
      %1122 = vmatpush.bf16.msra.mxu0 %v766
      %1123 = vmatmul.bf16.gmra.mxu0 %v1056
      %v1124 = vpop.f32.mrf.mxu0
      %v1125 = vadd.f32 0.0, %v1124
      %v1126 = vpop.f32.mrf.mxu0
      %1127 = vdwg.mxu0
      %1128 = vmatpush.bf16.msra.mxu0 %v781
      %1129 = vmatpush.bf16.msra.mxu0 %v780
      %1130 = vmatpush.bf16.msra.mxu0 %v779
      %1131 = vmatpush.bf16.msra.mxu0 %v778
      %1132 = vmatpush.bf16.msra.mxu0 %v777
      %1133 = vmatpush.bf16.msra.mxu0 %v776
      %1134 = vmatpush.bf16.msra.mxu0 %v775
      %1135 = vmatpush.bf16.msra.mxu0 %v774
      %1136 = vmatmul.bf16.gmra.mxu0 %v1076
      %v1137 = vpop.f32.mrf.mxu0
      %v1138 = vadd.f32 %v1125, %v1137
      %v1139 = vpop.f32.mrf.mxu0
      %1140 = vdwg.mxu0
      %1141 = vmatpush.bf16.msra.mxu0 %v789
      %1142 = vmatpush.bf16.msra.mxu0 %v788
      %1143 = vmatpush.bf16.msra.mxu0 %v787
      %1144 = vmatpush.bf16.msra.mxu0 %v786
      %1145 = vmatpush.bf16.msra.mxu0 %v785
      %1146 = vmatpush.bf16.msra.mxu0 %v784
      %1147 = vmatpush.bf16.msra.mxu0 %v783
      %1148 = vmatpush.bf16.msra.mxu0 %v782
      %1149 = vmatmul.bf16.gmra.mxu0 %v1081
      %v1150 = vpop.f32.mrf.mxu0
      %v1151 = vadd.f32 %v1138, %v1150
      %v1152 = vpop.f32.mrf.mxu0
      %1153 = vdwg.mxu0
      %1154 = vmatpush.bf16.msra.mxu0 %v797
      %1155 = vmatpush.bf16.msra.mxu0 %v796
      %1156 = vmatpush.bf16.msra.mxu0 %v795
      %1157 = vmatpush.bf16.msra.mxu0 %v794
      %1158 = vmatpush.bf16.msra.mxu0 %v793
      %1159 = vmatpush.bf16.msra.mxu0 %v792
      %1160 = vmatpush.bf16.msra.mxu0 %v791
      %1161 = vmatpush.bf16.msra.mxu0 %v790
      %1162 = vmatmul.bf16.gmra.mxu0 %v1060
      %v1163 = vpop.f32.mrf.mxu0
      %v1164 = vadd.f32 %v1151, %v1163
      %v1165 = vpop.f32.mrf.mxu0
      %1166 = vdwg.mxu0
      %1167 = vmatpush.bf16.msra.mxu0 %v805
      %1168 = vmatpush.bf16.msra.mxu0 %v804
      %1169 = vmatpush.bf16.msra.mxu0 %v803
      %1170 = vmatpush.bf16.msra.mxu0 %v802
      %1171 = vmatpush.bf16.msra.mxu0 %v801
      %1172 = vmatpush.bf16.msra.mxu0 %v800
      %1173 = vmatpush.bf16.msra.mxu0 %v799
      %1174 = vmatpush.bf16.msra.mxu0 %v798
      %1175 = vmatmul.bf16.gmra.mxu0 %v1092
      %v1176 = vpop.f32.mrf.mxu0
      %v1177 = vadd.f32 %v1164, %v1176
      %v1178 = vpop.f32.mrf.mxu0
      %1179 = vdwg.mxu0
      %1180 = vmatpush.bf16.msra.mxu0 %v813
      %1181 = vmatpush.bf16.msra.mxu0 %v812
      %1182 = vmatpush.bf16.msra.mxu0 %v811
      %1183 = vmatpush.bf16.msra.mxu0 %v810
      %1184 = vmatpush.bf16.msra.mxu0 %v809
      %1185 = vmatpush.bf16.msra.mxu0 %v808
      %1186 = vmatpush.bf16.msra.mxu0 %v807
      %1187 = vmatpush.bf16.msra.mxu0 %v806
      %1188 = vmatmul.bf16.gmra.mxu0 %v1097
      %v1189 = vpop.f32.mrf.mxu0
      %v1190 = vadd.f32 %v1177, %v1189
      %v1191 = vpop.f32.mrf.mxu0
      %1192 = vdwg.mxu0
      %1193 = vmatpush.bf16.msra.mxu0 %v821
      %1194 = vmatpush.bf16.msra.mxu0 %v820
      %1195 = vmatpush.bf16.msra.mxu0 %v819
      %1196 = vmatpush.bf16.msra.mxu0 %v818
      %1197 = vmatpush.bf16.msra.mxu0 %v817
      %1198 = vmatpush.bf16.msra.mxu0 %v816
      %1199 = vmatpush.bf16.msra.mxu0 %v815
      %1200 = vmatpush.bf16.msra.mxu0 %v814
      %1201 = vmatmul.bf16.gmra.mxu0 %v1064
      %v1202 = vpop.f32.mrf.mxu0
      %v1203 = vadd.f32 %v1190, %v1202
      %v1204 = vpop.f32.mrf.mxu0
      %1205 = vdwg.mxu0
      %1206 = vmatpush.bf16.msra.mxu0 %v829
      %1207 = vmatpush.bf16.msra.mxu0 %v828
      %1208 = vmatpush.bf16.msra.mxu0 %v827
      %1209 = vmatpush.bf16.msra.mxu0 %v826
      %1210 = vmatpush.bf16.msra.mxu0 %v825
      %1211 = vmatpush.bf16.msra.mxu0 %v824
      %1212 = vmatpush.bf16.msra.mxu0 %v823
      %1213 = vmatpush.bf16.msra.mxu0 %v822
      %1214 = vmatmul.bf16.gmra.mxu0 %v1108
      %v1215 = vpop.f32.mrf.mxu0
      %v1216 = vadd.f32 %v1203, %v1215
      %v1217 = vpop.f32.mrf.mxu0
      %1218 = vdwg.mxu0
      %1219 = vmatpush.bf16.msra.mxu0 %v837
      %1220 = vmatpush.bf16.msra.mxu0 %v836
      %1221 = vmatpush.bf16.msra.mxu0 %v835
      %1222 = vmatpush.bf16.msra.mxu0 %v834
      %1223 = vmatpush.bf16.msra.mxu0 %v833
      %1224 = vmatpush.bf16.msra.mxu0 %v832
      %1225 = vmatpush.bf16.msra.mxu0 %v831
      %1226 = vmatpush.bf16.msra.mxu0 %v830
      %1227 = vmatmul.bf16.gmra.mxu0 %v1113
      %v1228 = vpop.f32.mrf.mxu0
      %v1229 = vadd.f32 %v1216, %v1228
      %v1230 = vpop.f32.mrf.mxu0
      %1231 = vdwg.mxu0
      %v1232 = vpack.c.bf16 %v1229, %v1229
      %s1233 = scalar_lea.vmem %s261, 2
      %1234 = vst.msk [vmem:[%s1233] sm:$0x3] %vm1028, %v1232
      %s1235 = sadd.s32 %s1030, 1
      %p1236 = scmp.lt.s32.totalorder %s1235, 4
      %v1237 = vsel %vm1032, %v1229, 0.0
      %v1238 = vrot.slane %v1237, 4
      %v1239 = vadd.f32 %v1237, %v1238
      %v1240 = vrot.slane %v1239, 2
      %v1241 = vadd.f32 %v1239, %v1240
      %v1242 = vrot.slane %v1241, 1
      %v1243 = vadd.f32 %v1241, %v1242
      %s1244 = scalar_select %p1236, 1, 0
      %v1245 = vstv %s1244
      %vm1246 = vcmp.eq.s32.totalorder %v1245, 1
      %v1247 = vsel %vm1246, %v1243, 0.0
      %v1248 = vadd.f32 %v1044, %v1247
      %v1249 = vmul.f32 %v1229, %v1229
      %v1250 = vsel %vm1032, %v1249, 0.0
      %v1251 = vrot.slane %v1250, 4
      %v1252 = vadd.f32 %v1250, %v1251
      %v1253 = vrot.slane %v1252, 2
      %v1254 = vadd.f32 %v1252, %v1253
      %v1255 = vrot.slane %v1254, 1
      %v1256 = vadd.f32 %v1254, %v1255
      %v1257 = vsel %vm1246, %v1256, 0.0
      %v1258 = vadd.f32 %v1054, %v1257
      %s1259 = scalar_lea.vmem %s250, 8
      %v1260 = vld [vmem:[%s1259] sm:$0x3]
      %v1261 = vld [vmem:[%s1259] sm:$0x7]
      %v1262 = vld [vmem:[%s1259] sm:$0x6]
      %s1263 = scalar_lea.vmem %s250, 24
      %v1264 = vld [vmem:[%s1263] sm:$0x3]
      %v1265 = vld [vmem:[%s1263] sm:$0x7]
      %v1266 = vld [vmem:[%s1263] sm:$0x6]
      %s1267 = scalar_lea.vmem %s250, 40
      %v1268 = vld [vmem:[%s1267] sm:$0x3]
      %v1269 = vld [vmem:[%s1267] sm:$0x7]
      %v1270 = vld [vmem:[%s1267] sm:$0x6]
      %v1272 = vunpack.c.l.b16 %v1261
      %v1273 = vpack.c.b16 %v1272, %v1272
      %v1275 = vshrl.u32 %v1273, 16
      %v1277 = vshll.u32 %v1273, 16
      %v1279 = vrot.slane %v1277, 1
      %v1280 = vor.u32 %v1275, %v1279
      %v1283 = vunpack.c.l.b16 %v1262
      %v1284 = vpack.c.b16 %v1283, %v1283
      %v1285 = vrot.slane %v1284, 1
      %v1288 = vunpack.c.l.b16 %v1265
      %v1289 = vpack.c.b16 %v1288, %v1288
      %v1291 = vshrl.u32 %v1289, 16
      %v1293 = vshll.u32 %v1289, 16
      %v1295 = vrot.slane %v1293, 1
      %v1296 = vor.u32 %v1291, %v1295
      %v1299 = vunpack.c.l.b16 %v1266
      %v1300 = vpack.c.b16 %v1299, %v1299
      %v1301 = vrot.slane %v1300, 1
      %v1304 = vunpack.c.l.b16 %v1269
      %v1305 = vpack.c.b16 %v1304, %v1304
      %v1307 = vshrl.u32 %v1305, 16
      %v1309 = vshll.u32 %v1305, 16
      %v1311 = vrot.slane %v1309, 1
      %v1312 = vor.u32 %v1307, %v1311
      %v1315 = vunpack.c.l.b16 %v1270
      %v1316 = vpack.c.b16 %v1315, %v1315
      %v1317 = vrot.slane %v1316, 1
      %1319 = vmatpush.bf16.msra.mxu0 %v773
      %1320 = vmatpush.bf16.msra.mxu0 %v772
      %1321 = vmatpush.bf16.msra.mxu0 %v771
      %1322 = vmatpush.bf16.msra.mxu0 %v770
      %1323 = vmatpush.bf16.msra.mxu0 %v769
      %1324 = vmatpush.bf16.msra.mxu0 %v768
      %1325 = vmatpush.bf16.msra.mxu0 %v767
      %1326 = vmatpush.bf16.msra.mxu0 %v766
      %1327 = vmatmul.bf16.gmra.mxu0 %v1260
      %v1328 = vpop.f32.mrf.mxu0
      %v1329 = vadd.f32 0.0, %v1328
      %v1330 = vpop.f32.mrf.mxu0
      %1331 = vdwg.mxu0
      %1332 = vmatpush.bf16.msra.mxu0 %v781
      %1333 = vmatpush.bf16.msra.mxu0 %v780
      %1334 = vmatpush.bf16.msra.mxu0 %v779
      %1335 = vmatpush.bf16.msra.mxu0 %v778
      %1336 = vmatpush.bf16.msra.mxu0 %v777
      %1337 = vmatpush.bf16.msra.mxu0 %v776
      %1338 = vmatpush.bf16.msra.mxu0 %v775
      %1339 = vmatpush.bf16.msra.mxu0 %v774
      %1340 = vmatmul.bf16.gmra.mxu0 %v1280
      %v1341 = vpop.f32.mrf.mxu0
      %v1342 = vadd.f32 %v1329, %v1341
      %v1343 = vpop.f32.mrf.mxu0
      %1344 = vdwg.mxu0
      %1345 = vmatpush.bf16.msra.mxu0 %v789
      %1346 = vmatpush.bf16.msra.mxu0 %v788
      %1347 = vmatpush.bf16.msra.mxu0 %v787
      %1348 = vmatpush.bf16.msra.mxu0 %v786
      %1349 = vmatpush.bf16.msra.mxu0 %v785
      %1350 = vmatpush.bf16.msra.mxu0 %v784
      %1351 = vmatpush.bf16.msra.mxu0 %v783
      %1352 = vmatpush.bf16.msra.mxu0 %v782
      %1353 = vmatmul.bf16.gmra.mxu0 %v1285
      %v1354 = vpop.f32.mrf.mxu0
      %v1355 = vadd.f32 %v1342, %v1354
      %v1356 = vpop.f32.mrf.mxu0
      %1357 = vdwg.mxu0
      %1358 = vmatpush.bf16.msra.mxu0 %v797
      %1359 = vmatpush.bf16.msra.mxu0 %v796
      %1360 = vmatpush.bf16.msra.mxu0 %v795
      %1361 = vmatpush.bf16.msra.mxu0 %v794
      %1362 = vmatpush.bf16.msra.mxu0 %v793
      %1363 = vmatpush.bf16.msra.mxu0 %v792
      %1364 = vmatpush.bf16.msra.mxu0 %v791
      %1365 = vmatpush.bf16.msra.mxu0 %v790
      %1366 = vmatmul.bf16.gmra.mxu0 %v1264
      %v1367 = vpop.f32.mrf.mxu0
      %v1368 = vadd.f32 %v1355, %v1367
      %v1369 = vpop.f32.mrf.mxu0
      %1370 = vdwg.mxu0
      %1371 = vmatpush.bf16.msra.mxu0 %v805
      %1372 = vmatpush.bf16.msra.mxu0 %v804
      %1373 = vmatpush.bf16.msra.mxu0 %v803
      %1374 = vmatpush.bf16.msra.mxu0 %v802
      %1375 = vmatpush.bf16.msra.mxu0 %v801
      %1376 = vmatpush.bf16.msra.mxu0 %v800
      %1377 = vmatpush.bf16.msra.mxu0 %v799
      %1378 = vmatpush.bf16.msra.mxu0 %v798
      %1379 = vmatmul.bf16.gmra.mxu0 %v1296
      %v1380 = vpop.f32.mrf.mxu0
      %v1381 = vadd.f32 %v1368, %v1380
      %v1382 = vpop.f32.mrf.mxu0
      %1383 = vdwg.mxu0
      %1384 = vmatpush.bf16.msra.mxu0 %v813
      %1385 = vmatpush.bf16.msra.mxu0 %v812
      %1386 = vmatpush.bf16.msra.mxu0 %v811
      %1387 = vmatpush.bf16.msra.mxu0 %v810
      %1388 = vmatpush.bf16.msra.mxu0 %v809
      %1389 = vmatpush.bf16.msra.mxu0 %v808
      %1390 = vmatpush.bf16.msra.mxu0 %v807
      %1391 = vmatpush.bf16.msra.mxu0 %v806
      %1392 = vmatmul.bf16.gmra.mxu0 %v1301
      %v1393 = vpop.f32.mrf.mxu0
      %v1394 = vadd.f32 %v1381, %v1393
      %v1395 = vpop.f32.mrf.mxu0
      %1396 = vdwg.mxu0
      %1397 = vmatpush.bf16.msra.mxu0 %v821
      %1398 = vmatpush.bf16.msra.mxu0 %v820
      %1399 = vmatpush.bf16.msra.mxu0 %v819
      %1400 = vmatpush.bf16.msra.mxu0 %v818
      %1401 = vmatpush.bf16.msra.mxu0 %v817
      %1402 = vmatpush.bf16.msra.mxu0 %v816
      %1403 = vmatpush.bf16.msra.mxu0 %v815
      %1404 = vmatpush.bf16.msra.mxu0 %v814
      %1405 = vmatmul.bf16.gmra.mxu0 %v1268
      %v1406 = vpop.f32.mrf.mxu0
      %v1407 = vadd.f32 %v1394, %v1406
      %v1408 = vpop.f32.mrf.mxu0
      %1409 = vdwg.mxu0
      %1410 = vmatpush.bf16.msra.mxu0 %v829
      %1411 = vmatpush.bf16.msra.mxu0 %v828
      %1412 = vmatpush.bf16.msra.mxu0 %v827
      %1413 = vmatpush.bf16.msra.mxu0 %v826
      %1414 = vmatpush.bf16.msra.mxu0 %v825
      %1415 = vmatpush.bf16.msra.mxu0 %v824
      %1416 = vmatpush.bf16.msra.mxu0 %v823
      %1417 = vmatpush.bf16.msra.mxu0 %v822
      %1418 = vmatmul.bf16.gmra.mxu0 %v1312
      %v1419 = vpop.f32.mrf.mxu0
      %v1420 = vadd.f32 %v1407, %v1419
      %v1421 = vpop.f32.mrf.mxu0
      %1422 = vdwg.mxu0
      %1423 = vmatpush.bf16.msra.mxu0 %v837
      %1424 = vmatpush.bf16.msra.mxu0 %v836
      %1425 = vmatpush.bf16.msra.mxu0 %v835
      %1426 = vmatpush.bf16.msra.mxu0 %v834
      %1427 = vmatpush.bf16.msra.mxu0 %v833
      %1428 = vmatpush.bf16.msra.mxu0 %v832
      %1429 = vmatpush.bf16.msra.mxu0 %v831
      %1430 = vmatpush.bf16.msra.mxu0 %v830
      %1431 = vmatmul.bf16.gmra.mxu0 %v1317
      %v1432 = vpop.f32.mrf.mxu0
      %v1433 = vadd.f32 %v1420, %v1432
      %v1434 = vpop.f32.mrf.mxu0
      %1435 = vdwg.mxu0
      %v1436 = vpack.c.bf16 %v1433, %v1433
      %s1437 = scalar_lea.vmem %s261, 4
      %1438 = vst.msk [vmem:[%s1437] sm:$0x3] %vm1028, %v1436
      %s1439 = sadd.s32 %s1030, 2
      %p1440 = scmp.lt.s32.totalorder %s1439, 4
      %v1441 = vsel %vm1032, %v1433, 0.0
      %v1442 = vrot.slane %v1441, 4
      %v1443 = vadd.f32 %v1441, %v1442
      %v1444 = vrot.slane %v1443, 2
      %v1445 = vadd.f32 %v1443, %v1444
      %v1446 = vrot.slane %v1445, 1
      %v1447 = vadd.f32 %v1445, %v1446
      %s1448 = scalar_select %p1440, 1, 0
      %v1449 = vstv %s1448
      %vm1450 = vcmp.eq.s32.totalorder %v1449, 1
      %v1451 = vsel %vm1450, %v1447, 0.0
      %v1452 = vadd.f32 %v1248, %v1451
      %v1453 = vmul.f32 %v1433, %v1433
      %v1454 = vsel %vm1032, %v1453, 0.0
      %v1455 = vrot.slane %v1454, 4
      %v1456 = vadd.f32 %v1454, %v1455
      %v1457 = vrot.slane %v1456, 2
      %v1458 = vadd.f32 %v1456, %v1457
      %v1459 = vrot.slane %v1458, 1
      %v1460 = vadd.f32 %v1458, %v1459
      %v1461 = vsel %vm1450, %v1460, 0.0
      %v1462 = vadd.f32 %v1258, %v1461
      %s1463 = scalar_lea.vmem %s250, 12
      %v1464 = vld [vmem:[%s1463] sm:$0x3]
      %v1465 = vld [vmem:[%s1463] sm:$0x7]
      %v1466 = vld [vmem:[%s1463] sm:$0x6]
      %s1467 = scalar_lea.vmem %s250, 28
      %v1468 = vld [vmem:[%s1467] sm:$0x3]
      %v1469 = vld [vmem:[%s1467] sm:$0x7]
      %v1470 = vld [vmem:[%s1467] sm:$0x6]
      %s1471 = scalar_lea.vmem %s250, 44
      %v1472 = vld [vmem:[%s1471] sm:$0x3]
      %v1473 = vld [vmem:[%s1471] sm:$0x7]
      %v1474 = vld [vmem:[%s1471] sm:$0x6]
      %v1476 = vunpack.c.l.b16 %v1465
      %v1477 = vpack.c.b16 %v1476, %v1476
      %v1479 = vshrl.u32 %v1477, 16
      %v1481 = vshll.u32 %v1477, 16
      %v1483 = vrot.slane %v1481, 1
      %v1484 = vor.u32 %v1479, %v1483
      %v1487 = vunpack.c.l.b16 %v1466
      %v1488 = vpack.c.b16 %v1487, %v1487
      %v1489 = vrot.slane %v1488, 1
      %v1492 = vunpack.c.l.b16 %v1469
      %v1493 = vpack.c.b16 %v1492, %v1492
      %v1495 = vshrl.u32 %v1493, 16
      %v1497 = vshll.u32 %v1493, 16
      %v1499 = vrot.slane %v1497, 1
      %v1500 = vor.u32 %v1495, %v1499
      %v1503 = vunpack.c.l.b16 %v1470
      %v1504 = vpack.c.b16 %v1503, %v1503
      %v1505 = vrot.slane %v1504, 1
      %v1508 = vunpack.c.l.b16 %v1473
      %v1509 = vpack.c.b16 %v1508, %v1508
      %v1511 = vshrl.u32 %v1509, 16
      %v1513 = vshll.u32 %v1509, 16
      %v1515 = vrot.slane %v1513, 1
      %v1516 = vor.u32 %v1511, %v1515
      %v1519 = vunpack.c.l.b16 %v1474
      %v1520 = vpack.c.b16 %v1519, %v1519
      %v1521 = vrot.slane %v1520, 1
      %1523 = vmatpush.bf16.msra.mxu0 %v773
      %1524 = vmatpush.bf16.msra.mxu0 %v772
      %1525 = vmatpush.bf16.msra.mxu0 %v771
      %1526 = vmatpush.bf16.msra.mxu0 %v770
      %1527 = vmatpush.bf16.msra.mxu0 %v769
      %1528 = vmatpush.bf16.msra.mxu0 %v768
      %1529 = vmatpush.bf16.msra.mxu0 %v767
      %1530 = vmatpush.bf16.msra.mxu0 %v766
      %1531 = vmatmul.bf16.gmra.mxu0 %v1464
      %v1532 = vpop.f32.mrf.mxu0
      %v1533 = vadd.f32 0.0, %v1532
      %v1534 = vpop.f32.mrf.mxu0
      %1535 = vdwg.mxu0
      %1536 = vmatpush.bf16.msra.mxu0 %v781
      %1537 = vmatpush.bf16.msra.mxu0 %v780
      %1538 = vmatpush.bf16.msra.mxu0 %v779
      %1539 = vmatpush.bf16.msra.mxu0 %v778
      %1540 = vmatpush.bf16.msra.mxu0 %v777
      %1541 = vmatpush.bf16.msra.mxu0 %v776
      %1542 = vmatpush.bf16.msra.mxu0 %v775
      %1543 = vmatpush.bf16.msra.mxu0 %v774
      %1544 = vmatmul.bf16.gmra.mxu0 %v1484
      %v1545 = vpop.f32.mrf.mxu0
      %v1546 = vadd.f32 %v1533, %v1545
      %v1547 = vpop.f32.mrf.mxu0
      %1548 = vdwg.mxu0
      %1549 = vmatpush.bf16.msra.mxu0 %v789
      %1550 = vmatpush.bf16.msra.mxu0 %v788
      %1551 = vmatpush.bf16.msra.mxu0 %v787
      %1552 = vmatpush.bf16.msra.mxu0 %v786
      %1553 = vmatpush.bf16.msra.mxu0 %v785
      %1554 = vmatpush.bf16.msra.mxu0 %v784
      %1555 = vmatpush.bf16.msra.mxu0 %v783
      %1556 = vmatpush.bf16.msra.mxu0 %v782
      %1557 = vmatmul.bf16.gmra.mxu0 %v1489
      %v1558 = vpop.f32.mrf.mxu0
      %v1559 = vadd.f32 %v1546, %v1558
      %v1560 = vpop.f32.mrf.mxu0
      %1561 = vdwg.mxu0
      %1562 = vmatpush.bf16.msra.mxu0 %v797
      %1563 = vmatpush.bf16.msra.mxu0 %v796
      %1564 = vmatpush.bf16.msra.mxu0 %v795
      %1565 = vmatpush.bf16.msra.mxu0 %v794
      %1566 = vmatpush.bf16.msra.mxu0 %v793
      %1567 = vmatpush.bf16.msra.mxu0 %v792
      %1568 = vmatpush.bf16.msra.mxu0 %v791
      %1569 = vmatpush.bf16.msra.mxu0 %v790
      %1570 = vmatmul.bf16.gmra.mxu0 %v1468
      %v1571 = vpop.f32.mrf.mxu0
      %v1572 = vadd.f32 %v1559, %v1571
      %v1573 = vpop.f32.mrf.mxu0
      %1574 = vdwg.mxu0
      %1575 = vmatpush.bf16.msra.mxu0 %v805
      %1576 = vmatpush.bf16.msra.mxu0 %v804
      %1577 = vmatpush.bf16.msra.mxu0 %v803
      %1578 = vmatpush.bf16.msra.mxu0 %v802
      %1579 = vmatpush.bf16.msra.mxu0 %v801
      %1580 = vmatpush.bf16.msra.mxu0 %v800
      %1581 = vmatpush.bf16.msra.mxu0 %v799
      %1582 = vmatpush.bf16.msra.mxu0 %v798
      %1583 = vmatmul.bf16.gmra.mxu0 %v1500
      %v1584 = vpop.f32.mrf.mxu0
      %v1585 = vadd.f32 %v1572, %v1584
      %v1586 = vpop.f32.mrf.mxu0
      %1587 = vdwg.mxu0
      %1588 = vmatpush.bf16.msra.mxu0 %v813
      %1589 = vmatpush.bf16.msra.mxu0 %v812
      %1590 = vmatpush.bf16.msra.mxu0 %v811
      %1591 = vmatpush.bf16.msra.mxu0 %v810
      %1592 = vmatpush.bf16.msra.mxu0 %v809
      %1593 = vmatpush.bf16.msra.mxu0 %v808
      %1594 = vmatpush.bf16.msra.mxu0 %v807
      %1595 = vmatpush.bf16.msra.mxu0 %v806
      %1596 = vmatmul.bf16.gmra.mxu0 %v1505
      %v1597 = vpop.f32.mrf.mxu0
      %v1598 = vadd.f32 %v1585, %v1597
      %v1599 = vpop.f32.mrf.mxu0
      %1600 = vdwg.mxu0
      %1601 = vmatpush.bf16.msra.mxu0 %v821
      %1602 = vmatpush.bf16.msra.mxu0 %v820
      %1603 = vmatpush.bf16.msra.mxu0 %v819
      %1604 = vmatpush.bf16.msra.mxu0 %v818
      %1605 = vmatpush.bf16.msra.mxu0 %v817
      %1606 = vmatpush.bf16.msra.mxu0 %v816
      %1607 = vmatpush.bf16.msra.mxu0 %v815
      %1608 = vmatpush.bf16.msra.mxu0 %v814
      %1609 = vmatmul.bf16.gmra.mxu0 %v1472
      %v1610 = vpop.f32.mrf.mxu0
      %v1611 = vadd.f32 %v1598, %v1610
      %v1612 = vpop.f32.mrf.mxu0
      %1613 = vdwg.mxu0
      %1614 = vmatpush.bf16.msra.mxu0 %v829
      %1615 = vmatpush.bf16.msra.mxu0 %v828
      %1616 = vmatpush.bf16.msra.mxu0 %v827
      %1617 = vmatpush.bf16.msra.mxu0 %v826
      %1618 = vmatpush.bf16.msra.mxu0 %v825
      %1619 = vmatpush.bf16.msra.mxu0 %v824
      %1620 = vmatpush.bf16.msra.mxu0 %v823
      %1621 = vmatpush.bf16.msra.mxu0 %v822
      %1622 = vmatmul.bf16.gmra.mxu0 %v1516
      %v1623 = vpop.f32.mrf.mxu0
      %v1624 = vadd.f32 %v1611, %v1623
      %v1625 = vpop.f32.mrf.mxu0
      %1626 = vdwg.mxu0
      %1627 = vmatpush.bf16.msra.mxu0 %v837
      %1628 = vmatpush.bf16.msra.mxu0 %v836
      %1629 = vmatpush.bf16.msra.mxu0 %v835
      %1630 = vmatpush.bf16.msra.mxu0 %v834
      %1631 = vmatpush.bf16.msra.mxu0 %v833
      %1632 = vmatpush.bf16.msra.mxu0 %v832
      %1633 = vmatpush.bf16.msra.mxu0 %v831
      %1634 = vmatpush.bf16.msra.mxu0 %v830
      %1635 = vmatmul.bf16.gmra.mxu0 %v1521
      %v1636 = vpop.f32.mrf.mxu0
      %v1637 = vadd.f32 %v1624, %v1636
      %v1638 = vpop.f32.mrf.mxu0
      %1639 = vdwg.mxu0
      %v1640 = vpack.c.bf16 %v1637, %v1637
      %s1641 = scalar_lea.vmem %s261, 6
      %1642 = vst.msk [vmem:[%s1641] sm:$0x3] %vm1028, %v1640
      %s1643 = sadd.s32 %s1030, 3
      %p1644 = scmp.lt.s32.totalorder %s1643, 4
      %v1645 = vsel %vm1032, %v1637, 0.0
      %v1646 = vrot.slane %v1645, 4
      %v1647 = vadd.f32 %v1645, %v1646
      %v1648 = vrot.slane %v1647, 2
      %v1649 = vadd.f32 %v1647, %v1648
      %v1650 = vrot.slane %v1649, 1
      %v1651 = vadd.f32 %v1649, %v1650
      %s1652 = scalar_select %p1644, 1, 0
      %v1653 = vstv %s1652
      %vm1654 = vcmp.eq.s32.totalorder %v1653, 1
      %v1655 = vsel %vm1654, %v1651, 0.0
      %v1656 = vadd.f32 %v1452, %v1655
      %v1657 = vmul.f32 %v1637, %v1637
      %v1658 = vsel %vm1032, %v1657, 0.0
      %v1659 = vrot.slane %v1658, 4
      %v1660 = vadd.f32 %v1658, %v1659
      %v1661 = vrot.slane %v1660, 2
      %v1662 = vadd.f32 %v1660, %v1661
      %v1663 = vrot.slane %v1662, 1
      %v1664 = vadd.f32 %v1662, %v1663
      %v1665 = vsel %vm1654, %v1664, 0.0
      %v1666 = vadd.f32 %v1462, %v1665
      %vm1667 = vcmask 516096
      %1668 = vst.msk [vmem:[%s268] sm:$0x1] %vm1667, %v1656
      %1669 = vst.msk [vmem:[%s274] sm:$0x1] %vm1667, %v1666
      %s1670 = smul.u32 4, %s21
      %p1671 = scmp.lt.s32.totalorder %s20, 1
      %s1672 = scalar_select %p1671, %s20, 1
      %p1673 = scmp.lt.s32.totalorder %s1670, 3
      %s1674 = scalar_select %p1673, %s1670, 3
      %s1675 = smul.addr %s1672, 4
      %s1676 = sadd.s32 %s1674, %s1675
      %s1677 = smul.addr %s1676, 2
      %s1678 = scalar_lea.vmem %s2, %s1677
      %p1679 = scmp.lt.s32.totalorder %s20, 1
      %s1680 = scalar_select %p1679, %s20, 1
      %p1681 = scmp.lt.s32.totalorder %s21, 0
      %s1682 = scalar_select %p1681, %s21, 0
      %s1683 = sadd.s32 %s1682, %s1680
      %s1684 = scalar_lea.vmem %s3, %s1683
      %p1685 = scmp.lt.s32.totalorder %s20, 1
      %s1686 = scalar_select %p1685, %s20, 1
      %p1687 = scmp.lt.s32.totalorder %s21, 0
      %s1688 = scalar_select %p1687, %s21, 0
      %s1689 = sadd.s32 %s1688, %s1686
      %s1690 = scalar_lea.vmem %s4, %s1689
      // Predicated region
      $region29: #{regseg_forward.16} parent=27 // pred_check
        %p1691 = pneg %p97
      $region30: #{regseg_forward.16} parent=27 // pred_check_branch
        %1693 = sbr.rel (%p1691) target = $region32
      $region31: #{regseg_forward.16} parent=27 // pred_region
        %s1694 = smul.u32 4, %s21
      $region32: #{regseg_forward.16} parent=27 // pred_fallthru
        _
      // Predicated region
      $region33: #{regseg_forward.16} parent=27 // pred_check
        %p1695 = pneg %p125
      $region34: #{regseg_forward.16} parent=27 // pred_check_branch
        %1697 = sbr.rel (%p1695) target = $region36
      $region35: #{regseg_forward.16} parent=27 // pred_region
        _
      $region36: #{regseg_forward.16} parent=27 // pred_fallthru
        _
      // Predicated region
      $region37: #{regseg_forward.16} parent=27 // pred_check
        %p1698 = pneg %p153
      $region38: #{regseg_forward.16} parent=27 // pred_check_branch
        %1700 = sbr.rel (%p1698) target = $region40
      $region39: #{regseg_forward.16} parent=27 // pred_region
        _
      $region40: #{regseg_forward.16} parent=27 // pred_fallthru
        _
    $region28: #{regseg_forward.16} parent=5 // pred_fallthru
      _
    %p1701 = scmp.le.s32.totalorder 2, %s11
    // Predicated region
    $region41: #{regseg_forward.16} parent=5 // pred_check
      %p1702 = pneg %p1701
    $region42: #{regseg_forward.16} parent=5 // pred_check_branch
      %1704 = sbr.rel (%p1702) target = $region44
    $region43: #{regseg_forward.16} parent=5 // pred_region
      %s1705 = ssub.s32 %s11, 2
      // Predicated region
      $region45: #{regseg_forward.16} parent=43 // pred_check
        %p1706 = pneg %p103
      $region46: #{regseg_forward.16} parent=43 // pred_check_branch
        %1708 = sbr.rel (%p1706) target = $region48
      $region47: #{regseg_forward.16} parent=43 // pred_region
        %s1709 = smul.u32 4, %s23
        %p1710 = scmp.lt.s32.totalorder %s22, 1
        %s1711 = scalar_select %p1710, %s22, 1
        %p1712 = scmp.lt.s32.totalorder %s1709, 3
        %s1713 = scalar_select %p1712, %s1709, 3
        %s1714 = smul.addr %s1711, 4
        %s1715 = sadd.s32 %s1713, %s1714
        %s1716 = smul.addr %s1715, 2
        %s1717 = scalar_lea.vmem %s2, %s1716
      $region48: #{regseg_forward.16} parent=43 // pred_fallthru
        _
      // Predicated region
      $region49: #{regseg_forward.16} parent=43 // pred_check
        %p1718 = pneg %p131
      $region50: #{regseg_forward.16} parent=43 // pred_check_branch
        %1720 = sbr.rel (%p1718) target = $region52
      $region51: #{regseg_forward.16} parent=43 // pred_region
        %p1721 = scmp.lt.s32.totalorder %s22, 1
        %s1722 = scalar_select %p1721, %s22, 1
        %p1723 = scmp.lt.s32.totalorder %s23, 0
        %s1724 = scalar_select %p1723, %s23, 0
        %s1725 = sadd.s32 %s1724, %s1722
        %s1726 = scalar_lea.vmem %s3, %s1725
      $region52: #{regseg_forward.16} parent=43 // pred_fallthru
        _
      // Predicated region
      $region53: #{regseg_forward.16} parent=43 // pred_check
        %p1727 = pneg %p159
      $region54: #{regseg_forward.16} parent=43 // pred_check_branch
        %1729 = sbr.rel (%p1727) target = $region56
      $region55: #{regseg_forward.16} parent=43 // pred_region
        %p1730 = scmp.lt.s32.totalorder %s22, 1
        %s1731 = scalar_select %p1730, %s22, 1
        %p1732 = scmp.lt.s32.totalorder %s23, 0
        %s1733 = scalar_select %p1732, %s23, 0
        %s1734 = sadd.s32 %s1733, %s1731
        %s1735 = scalar_lea.vmem %s4, %s1734
      $region56: #{regseg_forward.16} parent=43 // pred_fallthru
        _
    $region44: #{regseg_forward.16} parent=5 // pred_fallthru
      _
  $region6: #{regseg_forward.16} parent=0 // loop_footer
    %s15 = sadd.s32 1, %s11
  $region7: #{regseg_forward.16} parent=0 // loop_footer_branch
    %10 = sbr.rel target = $region3
  $region8: #{regseg_forward.16} parent=0 // loop_exit
    _

// kernel: regseg_forward.19
$region0: #{regseg_forward.19}
  #allocation0 [shape = 'u32[]', space=smem, size = 0x4, offset = 0x4, fixed_abs, tag = 'smem constant byte address 0x4 - core index']
  #allocation1 [shape = 'u32[72,128]{1,0:T(1,128)}', space=vmem, size = 0x9000, scoped, tag = 'internal scratch']
  %s0 = inlined_call_operand.vmem [shape: bf16[2,8,8,64], index: 0, kind: input, shape index: {}]
  %s1 = inlined_call_operand.vmem [shape: f32[1,64], index: 1, kind: input, shape index: {}]
  %s2 = inlined_call_operand.vmem [shape: f32[1,64], index: 2, kind: input, shape index: {}]
  %s3 = inlined_call_operand.vmem [shape: f32[2,64], index: 3, kind: input, shape index: {}]
  %s4 = inlined_call_operand.vmem [shape: f32[32,8], index: 4, kind: input, shape index: {}]
  %s5 = inlined_call_operand.vmem [shape: f32[8,32], index: 5, kind: input, shape index: {}]
  %s6 = inlined_call_operand.hbm [shape: f32[2,2,32,32], index: 6, kind: output, shape index: {}]
  %s7 = sld [smem:[#allocation0]]
  $region57: #{regseg_forward.19} parent=0
    _
  %s9 = ssub.s32 1, %s7
  %s10 = scalar_select 0, %s9, %s7
  $region1: #{regseg_forward.19} parent=0
    #allocation2 [shape = 'u8[65536]{0}', space=vmem, size = 0x10000, scoped, tag = 'output window, operand 0']
    #allocation3 [shape = 's32[2]{0}', space=sflag, size = 0x8, scoped, tag = 'scoped memory for regseg_forward.19']
    %11 = vsyncpa [#allocation3], 0
    %s12 = scalar_lea.sflag [#allocation3], 1
    %13 = vsyncpa %s12, 0
    loop: start=0, step=1, limit=4
    $region2: #{regseg_forward.19} parent=1 // loop_pre_header
      _
    $region3: #{regseg_forward.19} parent=1 // loop_header
      %s15 = sphi 0, %s19
      %p16 = scmp.ge.s32.totalorder %s15, 4
      %s22 = sphi 0, %s34
      %s23 = sphi 0, %s30
      %s24 = sphi 0, %s22
      %s25 = sphi 0, %s23
      %s26 = sphi 0, %s24
      %s27 = sphi 0, %s25
      %s37 = sphi 0, %s39
      %s40 = sphi 0, %s37
      %s41 = sphi 0, %s40
      %s57 = sphi 0, %s41
      %s61 = sphi 0, %s61
      %s63 = sphi 0, %s61
      %s64 = sphi 0, %s63
      %s78 = sphi 0, %s64
      %s82 = sphi 0, %s82
      %s84 = sphi 0, %s82
      %s85 = sphi 0, %s84
      %s99 = sphi 0, %s85
      %s103 = sphi 0, %s103
      %s105 = sphi 0, %s103
      %s106 = sphi 0, %s105
      %s120 = sphi 0, %s106
      %s126 = sphi 0, %s128
      %s129 = sphi 0, %s126
      %s130 = sphi 0, %s129
      %s146 = sphi 0, %s130
      %s150 = sphi 0, %s150
      %s152 = sphi 0, %s150
      %s153 = sphi 0, %s152
      %s167 = sphi 0, %s153
      %s175 = sphi 0, %s177
      %s178 = sphi 0, %s175
      %s179 = sphi 0, %s178
      %s195 = sphi 0, %s179
    $region4: #{regseg_forward.19} parent=1 // loop_header_branch
      %18 = sbr.rel (%p16) target = $region8
    $region5: #{regseg_forward.19} parent=1 // loop_body
      %s20 = ssub.s32 %s15, 1
      %s21 = ssub.s32 %s15, 2
      %s28 = sadd.s32 1, %s23
      %p29 = scmp.ge.s32.totalorder %s28, 1
      %s30 = scalar_select %p29, 0, %s28
      %s31 = sadd.s32 1, %s22
      %s32 = scalar_select %p29, %s31, %s22
      %p33 = scmp.ge.s32.totalorder %s32, 2
      %s34 = scalar_select %p33, 0, %s32
      %s35 = ssub.s32 %s22, %s34
      %p36 = scmp.eq.s32.totalorder %s35, 0
      %s38 = sadd.s32 %s37, 1
      %s39 = scalar_select %p36, %s37, %s38
      %p42 = pneg %p36
      %p43 = scmp.eq.s32.totalorder %s15, 1
      %p44 = por %p42, %p43
      %p45 = scmp.ne.s32.totalorder %s37, %s40
      %p46 = scmp.eq.s32.totalorder %s15, 0
      %p47 = por %p45, %p46
      %p48 = scmp.ne.s32.totalorder %s37, %s40
      %p49 = scmp.eq.s32.totalorder %s20, 1
      %p50 = por %p48, %p49
      %p51 = scmp.ne.s32.totalorder %s40, %s41
      %p52 = scmp.eq.s32.totalorder %s20, 0
      %p53 = por %p51, %p52
      %p54 = scmp.ne.s32.totalorder %s40, %s41
      %p55 = scmp.eq.s32.totalorder %s21, 1
      %p56 = por %p54, %p55
      %p58 = scmp.ne.s32.totalorder %s41, %s57
      %p59 = scmp.eq.s32.totalorder %s21, 0
      %p60 = por %p58, %p59
      %s62 = sadd.s32 %s61, 1
      %p65 = scmp.eq.s32.totalorder %s15, 1
      %p66 = scmp.ne.s32.totalorder %s61, %s63
      %p67 = scmp.eq.s32.totalorder %s15, 0
      %p68 = por %p66, %p67
      %p69 = scmp.ne.s32.totalorder %s61, %s63
      %p70 = scmp.eq.s32.totalorder %s20, 1
      %p71 = por %p69, %p70
      %p72 = scmp.ne.s32.totalorder %s63, %s64
      %p73 = scmp.eq.s32.totalorder %s20, 0
      %p74 = por %p72, %p73
      %p75 = scmp.ne.s32.totalorder %s63, %s64
      %p76 = scmp.eq.s32.totalorder %s21, 1
      %p77 = por %p75, %p76
      %p79 = scmp.ne.s32.totalorder %s64, %s78
      %p80 = scmp.eq.s32.totalorder %s21, 0
      %p81 = por %p79, %p80
      %s83 = sadd.s32 %s82, 1
      %p86 = scmp.eq.s32.totalorder %s15, 1
      %p87 = scmp.ne.s32.totalorder %s82, %s84
      %p88 = scmp.eq.s32.totalorder %s15, 0
      %p89 = por %p87, %p88
      %p90 = scmp.ne.s32.totalorder %s82, %s84
      %p91 = scmp.eq.s32.totalorder %s20, 1
      %p92 = por %p90, %p91
      %p93 = scmp.ne.s32.totalorder %s84, %s85
      %p94 = scmp.eq.s32.totalorder %s20, 0
      %p95 = por %p93, %p94
      %p96 = scmp.ne.s32.totalorder %s84, %s85
      %p97 = scmp.eq.s32.totalorder %s21, 1
      %p98 = por %p96, %p97
      %p100 = scmp.ne.s32.totalorder %s85, %s99
      %p101 = scmp.eq.s32.totalorder %s21, 0
      %p102 = por %p100, %p101
      %s104 = sadd.s32 %s103, 1
      %p107 = scmp.eq.s32.totalorder %s15, 1
      %p108 = scmp.ne.s32.totalorder %s103, %s105
      %p109 = scmp.eq.s32.totalorder %s15, 0
      %p110 = por %p108, %p109
      %p111 = scmp.ne.s32.totalorder %s103, %s105
      %p112 = scmp.eq.s32.totalorder %s20, 1
      %p113 = por %p111, %p112
      %p114 = scmp.ne.s32.totalorder %s105, %s106
      %p115 = scmp.eq.s32.totalorder %s20, 0
      %p116 = por %p114, %p115
      %p117 = scmp.ne.s32.totalorder %s105, %s106
      %p118 = scmp.eq.s32.totalorder %s21, 1
      %p119 = por %p117, %p118
      %p121 = scmp.ne.s32.totalorder %s106, %s120
      %p122 = scmp.eq.s32.totalorder %s21, 0
      %p123 = por %p121, %p122
      %s124 = ssub.s32 %s23, %s30
      %p125 = scmp.eq.s32.totalorder %s124, 0
      %s127 = sadd.s32 %s126, 1
      %s128 = scalar_select %p125, %s126, %s127
      %p131 = pneg %p125
      %p132 = scmp.eq.s32.totalorder %s15, 1
      %p133 = por %p131, %p132
      %p134 = scmp.ne.s32.totalorder %s126, %s129
      %p135 = scmp.eq.s32.totalorder %s15, 0
      %p136 = por %p134, %p135
      %p137 = scmp.ne.s32.totalorder %s126, %s129
      %p138 = scmp.eq.s32.totalorder %s20, 1
      %p139 = por %p137, %p138
      %p140 = scmp.ne.s32.totalorder %s129, %s130
      %p141 = scmp.eq.s32.totalorder %s20, 0
      %p142 = por %p140, %p141
      %p143 = scmp.ne.s32.totalorder %s129, %s130
      %p144 = scmp.eq.s32.totalorder %s21, 1
      %p145 = por %p143, %p144
      %p147 = scmp.ne.s32.totalorder %s130, %s146
      %p148 = scmp.eq.s32.totalorder %s21, 0
      %p149 = por %p147, %p148
      %s151 = sadd.s32 %s150, 1
      %p154 = scmp.eq.s32.totalorder %s15, 1
      %p155 = scmp.ne.s32.totalorder %s150, %s152
      %p156 = scmp.eq.s32.totalorder %s15, 0
      %p157 = por %p155, %p156
      %p158 = scmp.ne.s32.totalorder %s150, %s152
      %p159 = scmp.eq.s32.totalorder %s20, 1
      %p160 = por %p158, %p159
      %p161 = scmp.ne.s32.totalorder %s152, %s153
      %p162 = scmp.eq.s32.totalorder %s20, 0
      %p163 = por %p161, %p162
      %p164 = scmp.ne.s32.totalorder %s152, %s153
      %p165 = scmp.eq.s32.totalorder %s21, 1
      %p166 = por %p164, %p165
      %p168 = scmp.ne.s32.totalorder %s153, %s167
      %p169 = scmp.eq.s32.totalorder %s21, 0
      %p170 = por %p168, %p169
      %s171 = ssub.s32 %s22, %s34
      %s172 = ssub.s32 %s23, %s30
      %s173 = sor.u32 %s171, %s172
      %p174 = scmp.eq.s32.totalorder %s173, 0
      %s176 = sadd.s32 %s175, 1
      %s177 = scalar_select %p174, %s175, %s176
      %p180 = pneg %p174
      %p181 = scmp.eq.s32.totalorder %s15, 1
      %p182 = por %p180, %p181
      %p183 = scmp.ne.s32.totalorder %s175, %s178
      %p184 = scmp.eq.s32.totalorder %s15, 0
      %p185 = por %p183, %p184
      %p186 = scmp.ne.s32.totalorder %s175, %s178
      %p187 = scmp.eq.s32.totalorder %s20, 1
      %p188 = por %p186, %p187
      %p189 = scmp.ne.s32.totalorder %s178, %s179
      %p190 = scmp.eq.s32.totalorder %s20, 0
      %p191 = por %p189, %p190
      %p192 = scmp.ne.s32.totalorder %s178, %s179
      %p193 = scmp.eq.s32.totalorder %s21, 1
      %p194 = por %p192, %p193
      %p196 = scmp.ne.s32.totalorder %s179, %s195
      %p197 = scmp.eq.s32.totalorder %s21, 0
      %p198 = por %p196, %p197
      %p199 = scmp.le.s32.totalorder 1, %s15
      %p200 = scmp.lt.s32.totalorder %s15, 3
      %p201 = pnand %p199, %p200
      %p202 = pneg %p201
      // Predicated region
      $region9: #{regseg_forward.19} parent=5 // pred_check
        _
      $region10: #{regseg_forward.19} parent=5 // pred_check_branch
        %204 = sbr.rel (%p201) target = $region12
      $region11: #{regseg_forward.19} parent=5 // pred_region
        %s205 = ssub.s32 %s15, 1
        // Predicated region
        $region13: #{regseg_forward.19} parent=11 // pred_check
          %p206 = pneg %p74
        $region14: #{regseg_forward.19} parent=11 // pred_check_branch
          %208 = sbr.rel (%p206) target = $region16
        $region15: #{regseg_forward.19} parent=11 // pred_region
          _
        $region16: #{regseg_forward.19} parent=11 // pred_fallthru
          _
        // Predicated region
        $region17: #{regseg_forward.19} parent=11 // pred_check
          %p209 = pneg %p95
        $region18: #{regseg_forward.19} parent=11 // pred_check_branch
          %211 = sbr.rel (%p209) target = $region20
        $region19: #{regseg_forward.19} parent=11 // pred_region
          _
        $region20: #{regseg_forward.19} parent=11 // pred_fallthru
          _
        // Predicated region
        $region21: #{regseg_forward.19} parent=11 // pred_check
          %p212 = pneg %p116
        $region22: #{regseg_forward.19} parent=11 // pred_check_branch
          %214 = sbr.rel (%p212) target = $region24
        $region23: #{regseg_forward.19} parent=11 // pred_region
          _
        $region24: #{regseg_forward.19} parent=11 // pred_fallthru
          _
        // Predicated region
        $region25: #{regseg_forward.19} parent=11 // pred_check
          %p215 = pneg %p142
        $region26: #{regseg_forward.19} parent=11 // pred_check_branch
          %217 = sbr.rel (%p215) target = $region28
        $region27: #{regseg_forward.19} parent=11 // pred_region
          %s218 = smul.u32 4, %s25
          %p219 = scmp.lt.s32.totalorder %s218, 3
          %s220 = scalar_select %p219, %s218, 3
          %s221 = smul.addr %s220, 8
          %s222 = scalar_lea.vmem %s4, %s221
          %s223 = smul.u32 4, %s25
        $region28: #{regseg_forward.19} parent=11 // pred_fallthru
          _
        // Predicated region
        $region29: #{regseg_forward.19} parent=11 // pred_check
          %p224 = pneg %p163
        $region30: #{regseg_forward.19} parent=11 // pred_check_branch
          %226 = sbr.rel (%p224) target = $region32
        $region31: #{regseg_forward.19} parent=11 // pred_region
          _
        $region32: #{regseg_forward.19} parent=11 // pred_fallthru
          _
      $region12: #{regseg_forward.19} parent=5 // pred_fallthru
        _
      %p227 = scmp.lt.s32.totalorder %s15, 2
      // Predicated region
      $region33: #{regseg_forward.19} parent=5 // pred_check
        %p228 = pneg %p227
      $region34: #{regseg_forward.19} parent=5 // pred_check_branch
        %230 = sbr.rel (%p228) target = $region36
      $region35: #{regseg_forward.19} parent=5 // pred_region
        // Predicated region
        $region37: #{regseg_forward.19} parent=35 // pred_check
          %p231 = pneg %p47
        $region38: #{regseg_forward.19} parent=35 // pred_check_branch
          %233 = sbr.rel (%p231) target = $region40
        $region39: #{regseg_forward.19} parent=35 // pred_region
          %p234 = scmp.lt.s32.totalorder %s22, 1
          %s235 = scalar_select %p234, %s22, 1
          %s236 = smul.addr %s235, 8
          %s237 = smul.addr %s236, 4
          %s238 = scalar_lea.vmem %s0, %s237
        $region40: #{regseg_forward.19} parent=35 // pred_fallthru
          _
      $region36: #{regseg_forward.19} parent=5 // pred_fallthru
        _
      %p239 = scmp.le.s32.totalorder 1, %s15
      %p240 = scmp.lt.s32.totalorder %s15, 3
      %p241 = pnand %p239, %p240
      %p242 = pneg %p241
      // Predicated region
      $region41: #{regseg_forward.19} parent=5 // pred_check
        _
      $region42: #{regseg_forward.19} parent=5 // pred_check_branch
        %244 = sbr.rel (%p241) target = $region44
      $region43: #{regseg_forward.19} parent=5 // pred_region
        %s245 = ssub.s32 %s15, 1
        %p246 = scmp.lt.s32.totalorder %s24, 1
        %s247 = scalar_select %p246, %s24, 1
        %s248 = smul.addr %s247, 8
        %s249 = smul.addr %s248, 4
        %s250 = scalar_lea.vmem %s0, %s249
        %p251 = pneg %p53
        %p252 = pneg %p50
        %p253 = pneg %p74
        %p254 = pneg %p71
        %p255 = pneg %p95
        %p256 = pneg %p92
        %p257 = pneg %p116
        %p258 = pneg %p113
        %s259 = smul.u32 4, %s25
        %p260 = scmp.lt.s32.totalorder %s259, 3
        %s261 = scalar_select %p260, %s259, 3
        %s262 = smul.addr %s261, 8
        %s263 = scalar_lea.vmem %s4, %s262
        %p264 = pneg %p142
        %p265 = pneg %p139
        %p266 = pneg %p163
        %p267 = pneg %p160
        %p268 = pneg %p191
        %p269 = pneg %p188
        %s270 = sand.u32 %s178, 1
        %s271 = scalar_lea.sflag [#allocation3], %s270
        %s272 = sand.u32 %s178, 1
        %s273 = smul.addr %s272, 64
        %s274 = scalar_lea.vmem [#allocation2], %s273
        %p275 = scmp.lt.s32.totalorder %s24, 1
        %s276 = scalar_select %p275, %s24, 1
        %s277 = smul.addr %s276, 8
        %s278 = smul.addr %s277, 4
        %s279 = scalar_lea.vmem %s0, %s278
        %s280 = smul.u32 4, %s25
        %p281 = scmp.lt.s32.totalorder %s280, 3
        %s282 = scalar_select %p281, %s280, 3
        %s283 = smul.addr %s282, 8
        %s284 = scalar_lea.vmem %s4, %s283
        %s285 = smul.u32 4, %s25
        %s286 = smul.u32 4, %s25
        %v287 = vld [vmem:[%s279] sm:$0xf]
        %v288 = vld [vmem:[%s279 + $0x4] sm:$0xf]
        %v289 = vld [vmem:[%s279 + $0x8] sm:$0xf]
        %v290 = vld [vmem:[%s279 + $0xc] sm:$0xf]
        %v291 = vld [vmem:[%s279 + $0x10] sm:$0xf]
        %v292 = vld [vmem:[%s279 + $0x14] sm:$0xf]
        %v293 = vld [vmem:[%s279 + $0x18] sm:$0xf]
        %v294 = vld [vmem:[%s279 + $0x1c] sm:$0xf]
        %v295 = vunpack.c.l.bf16 %v287
        %v296 = vunpack.c.l.bf16 %v288
        %v297 = vunpack.c.l.bf16 %v289
        %v298 = vunpack.c.l.bf16 %v290
        %v299 = vunpack.c.l.bf16 %v291
        %v300 = vunpack.c.l.bf16 %v292
        %v301 = vunpack.c.l.bf16 %v293
        %v302 = vunpack.c.l.bf16 %v294
        %v303 = vld [vmem:[%s1] sm:$0x1]
        %v304 = vld [vmem:[%s2] sm:$0x1]
        %v306 = vperm.slane %v303, 0
        %v308 = vmul.f32 %v295, %v306
        %v309 = vmul.f32 %v296, %v306
        %v310 = vmul.f32 %v297, %v306
        %v311 = vmul.f32 %v298, %v306
        %v312 = vmul.f32 %v299, %v306
        %v313 = vmul.f32 %v300, %v306
        %v314 = vmul.f32 %v301, %v306
        %v315 = vmul.f32 %v302, %v306
        %v317 = vperm.slane %v304, 0
        %v319 = vadd.f32 %v308, %v317
        %v320 = vadd.f32 %v309, %v317
        %v321 = vadd.f32 %v310, %v317
        %v322 = vadd.f32 %v311, %v317
        %v323 = vadd.f32 %v312, %v317
        %v324 = vadd.f32 %v313, %v317
        %v325 = vadd.f32 %v314, %v317
        %v326 = vadd.f32 %v315, %v317
        %v327 = vmax.f32 %v319, 0.0
        %v328 = vmax.f32 %v320, 0.0
        %v329 = vmax.f32 %v321, 0.0
        %v330 = vmax.f32 %v322, 0.0
        %v331 = vmax.f32 %v323, 0.0
        %v332 = vmax.f32 %v324, 0.0
        %v333 = vmax.f32 %v325, 0.0
        %v334 = vmax.f32 %v326, 0.0
        %v335 = vld [vmem:[%s284] sm:$0xff]
        %v336 = vld [vmem:[%s284 + $0x8] sm:$0xff]
        %v337 = vld [vmem:[%s284 + $0x10] sm:$0xff]
        %v338 = vld [vmem:[%s284 + $0x18] sm:$0xff]
        %v339 = vld [vmem:[%s5] sm:$0xff]
        %v340 = vld [vmem:[%s3] sm:$0x3]
        %v341 = vperm.slane %v340, 0
        %v342 = vmul.f32 %v327, %v341
        %v343 = vmul.f32 %v328, %v341
        %v344 = vmul.f32 %v329, %v341
        %v345 = vmul.f32 %v330, %v341
        %v346 = vmul.f32 %v331, %v341
        %v347 = vmul.f32 %v332, %v341
        %v348 = vmul.f32 %v333, %v341
        %v349 = vmul.f32 %v334, %v341
        %vm350 = vcmask 523264
        %v351 = vsel %vm350, %v342, 0.0
        %352 = vadd.xlane.f32.xlu0 %v351
        %v353 = vpop.xlane.xlu0 %352
        %v354 = vsel %vm350, %v343, 0.0
        %355 = vadd.xlane.f32.xlu0 %v354
        %v356 = vpop.xlane.xlu0 %355
        %v357 = vsel %vm350, %v344, 0.0
        %358 = vadd.xlane.f32.xlu0 %v357
        %v359 = vpop.xlane.xlu0 %358
        %v360 = vsel %vm350, %v345, 0.0
        %361 = vadd.xlane.f32.xlu0 %v360
        %v362 = vpop.xlane.xlu0 %361
        %v363 = vsel %vm350, %v346, 0.0
        %364 = vadd.xlane.f32.xlu0 %v363
        %v365 = vpop.xlane.xlu0 %364
        %v366 = vsel %vm350, %v347, 0.0
        %367 = vadd.xlane.f32.xlu0 %v366
        %v368 = vpop.xlane.xlu0 %367
        %v369 = vsel %vm350, %v348, 0.0
        %370 = vadd.xlane.f32.xlu0 %v369
        %v371 = vpop.xlane.xlu0 %370
        %v372 = vsel %vm350, %v349, 0.0
        %373 = vadd.xlane.f32.xlu0 %v372
        %v374 = vpop.xlane.xlu0 %373
        %v383 = vlaneseq
        %v384 = vand.u32 %v383, 127
        %v385 = vperm.slane %v353, %v384
        %v386 = vperm.slane %v356, %v384
        %v387 = vperm.slane %v359, %v384
        %v388 = vperm.slane %v362, %v384
        %v389 = vperm.slane %v365, %v384
        %v390 = vperm.slane %v368, %v384
        %v391 = vperm.slane %v371, %v384
        %v392 = vperm.slane %v374, %v384
        %vm393 = vcmask 1041409
        %v394 = vsel %vm393, %v386, %v385
        %vm395 = vcmask 1042434
        %v396 = vsel %vm395, %v387, %v394
        %vm397 = vcmask 1043459
        %v398 = vsel %vm397, %v388, %v396
        %vm399 = vcmask 1044484
        %v400 = vsel %vm399, %v389, %v398
        %vm401 = vcmask 1045509
        %v402 = vsel %vm401, %v390, %v400
        %vm403 = vcmask 1046534
        %v404 = vsel %vm403, %v391, %v402
        %vm405 = vcmask 1047559
        %v406 = vsel %vm405, %v392, %v404
        %vm408 = vcmask 64512
        %v410 = vsel %vm408, %v335, 0
        %v413 = vsel %vm408, %v336, 0
        %v416 = vsel %vm408, %v337, 0
        %v419 = vsel %vm408, %v338, 0
        %421 = vmatpush.msra.mxu0 0.0
        %422 = vmatpush.msra.mxu0 0.0
        %423 = vmatpush.msra.mxu0 0.0
        %424 = vmatpush.msra.mxu0 0.0
        %425 = vmatpush.msra.mxu0 0.0
        %426 = vmatpush.msra.mxu0 0.0
        %427 = vmatpush.msra.mxu0 0.0
        %428 = vmatpush.msra.mxu0 0.0
        %429 = vmatpush.msra.mxu0 0.0
        %430 = vmatpush.msra.mxu0 0.0
        %431 = vmatpush.msra.mxu0 0.0
        %432 = vmatpush.msra.mxu0 0.0
        %433 = vmatpush.msra.mxu0 0.0
        %434 = vmatpush.msra.mxu0 0.0
        %435 = vmatpush.msra.mxu0 0.0
        %436 = vmatpush.msra.mxu0 %v406
        %437 = vmatmul.f32.gmra.mxu0 %v410
        %v438 = vpop.f32.mrf.mxu0
        %v439 = vadd.f32 0.0, %v438
        %440 = vmatmul.f32.gmra.mxu0 %v413
        %v441 = vpop.f32.mrf.mxu0
        %v442 = vadd.f32 0.0, %v441
        %443 = vmatmul.f32.gmra.mxu0 %v416
        %v444 = vpop.f32.mrf.mxu0
        %v445 = vadd.f32 0.0, %v444
        %446 = vmatmul.f32.gmra.mxu0 %v419
        %v447 = vpop.f32.mrf.mxu0
        %v448 = vadd.f32 0.0, %v447
        %449 = vdwg.mxu0
        %v451 = vsel %vm408, %v439, 0
        %v454 = vsel %vm408, %v442, 0
        %v457 = vsel %vm408, %v445, 0
        %v460 = vsel %vm408, %v448, 0
        %462 = vmatpush.msra.mxu0 0.0
        %463 = vmatpush.msra.mxu0 0.0
        %464 = vmatpush.msra.mxu0 0.0
        %465 = vmatpush.msra.mxu0 0.0
        %466 = vmatpush.msra.mxu0 0.0
        %467 = vmatpush.msra.mxu0 0.0
        %468 = vmatpush.msra.mxu0 0.0
        %469 = vmatpush.msra.mxu0 0.0
        %470 = vmatpush.msra.mxu0 0.0
        %471 = vmatpush.msra.mxu0 0.0
        %472 = vmatpush.msra.mxu0 0.0
        %473 = vmatpush.msra.mxu0 0.0
        %474 = vmatpush.msra.mxu0 0.0
        %475 = vmatpush.msra.mxu0 0.0
        %476 = vmatpush.msra.mxu0 0.0
        %477 = vmatpush.msra.mxu0 %v339
        %478 = vmatmul.f32.gmra.mxu0 %v451
        %v479 = vpop.f32.mrf.mxu0
        %v480 = vadd.f32 0.0, %v479
        %481 = vmatmul.f32.gmra.mxu0 %v454
        %v482 = vpop.f32.mrf.mxu0
        %v483 = vadd.f32 0.0, %v482
        %484 = vmatmul.f32.gmra.mxu0 %v457
        %v485 = vpop.f32.mrf.mxu0
        %v486 = vadd.f32 0.0, %v485
        %487 = vmatmul.f32.gmra.mxu0 %v460
        %v488 = vpop.f32.mrf.mxu0
        %v489 = vadd.f32 0.0, %v488
        %490 = vdwg.mxu0
        %v491 = vperm.slane %v340, 1
        %v492 = vmul.f32 %v327, %v491
        %v493 = vmul.f32 %v328, %v491
        %v494 = vmul.f32 %v329, %v491
        %v495 = vmul.f32 %v330, %v491
        %v496 = vmul.f32 %v331, %v491
        %v497 = vmul.f32 %v332, %v491
        %v498 = vmul.f32 %v333, %v491
        %v499 = vmul.f32 %v334, %v491
        %v500 = vsel %vm350, %v492, 0.0
        %501 = vadd.xlane.f32.xlu0 %v500
        %v502 = vpop.xlane.xlu0 %501
        %v503 = vsel %vm350, %v493, 0.0
        %504 = vadd.xlane.f32.xlu0 %v503
        %v505 = vpop.xlane.xlu0 %504
        %v506 = vsel %vm350, %v494, 0.0
        %507 = vadd.xlane.f32.xlu0 %v506
        %v508 = vpop.xlane.xlu0 %507
        %v509 = vsel %vm350, %v495, 0.0
        %510 = vadd.xlane.f32.xlu0 %v509
        %v511 = vpop.xlane.xlu0 %510
        %v512 = vsel %vm350, %v496, 0.0
        %513 = vadd.xlane.f32.xlu0 %v512
        %v514 = vpop.xlane.xlu0 %513
        %v515 = vsel %vm350, %v497, 0.0
        %516 = vadd.xlane.f32.xlu0 %v515
        %v517 = vpop.xlane.xlu0 %516
        %v518 = vsel %vm350, %v498, 0.0
        %519 = vadd.xlane.f32.xlu0 %v518
        %v520 = vpop.xlane.xlu0 %519
        %v521 = vsel %vm350, %v499, 0.0
        %522 = vadd.xlane.f32.xlu0 %v521
        %v523 = vpop.xlane.xlu0 %522
        %v532 = vperm.slane %v502, %v384
        %v533 = vperm.slane %v505, %v384
        %v534 = vperm.slane %v508, %v384
        %v535 = vperm.slane %v511, %v384
        %v536 = vperm.slane %v514, %v384
        %v537 = vperm.slane %v517, %v384
        %v538 = vperm.slane %v520, %v384
        %v539 = vperm.slane %v523, %v384
        %v540 = vsel %vm393, %v533, %v532
        %v541 = vsel %vm395, %v534, %v540
        %v542 = vsel %vm397, %v535, %v541
        %v543 = vsel %vm399, %v536, %v542
        %v544 = vsel %vm401, %v537, %v543
        %v545 = vsel %vm403, %v538, %v544
        %v546 = vsel %vm405, %v539, %v545
        %548 = vmatpush.msra.mxu0 0.0
        %549 = vmatpush.msra.mxu0 0.0
        %550 = vmatpush.msra.mxu0 0.0
        %551 = vmatpush.msra.mxu0 0.0
        %552 = vmatpush.msra.mxu0 0.0
        %553 = vmatpush.msra.mxu0 0.0
        %554 = vmatpush.msra.mxu0 0.0
        %555 = vmatpush.msra.mxu0 0.0
        %556 = vmatpush.msra.mxu0 0.0
        %557 = vmatpush.msra.mxu0 0.0
        %558 = vmatpush.msra.mxu0 0.0
        %559 = vmatpush.msra.mxu0 0.0
        %560 = vmatpush.msra.mxu0 0.0
        %561 = vmatpush.msra.mxu0 0.0
        %562 = vmatpush.msra.mxu0 0.0
        %563 = vmatpush.msra.mxu0 %v546
        %564 = vmatmul.f32.gmra.mxu0 %v410
        %v565 = vpop.f32.mrf.mxu0
        %v566 = vadd.f32 0.0, %v565
        %567 = vmatmul.f32.gmra.mxu0 %v413
        %v568 = vpop.f32.mrf.mxu0
        %v569 = vadd.f32 0.0, %v568
        %570 = vmatmul.f32.gmra.mxu0 %v416
        %v571 = vpop.f32.mrf.mxu0
        %v572 = vadd.f32 0.0, %v571
        %573 = vmatmul.f32.gmra.mxu0 %v419
        %v574 = vpop.f32.mrf.mxu0
        %v575 = vadd.f32 0.0, %v574
        %576 = vdwg.mxu0
        %v578 = vsel %vm408, %v566, 0
        %v581 = vsel %vm408, %v569, 0
        %v584 = vsel %vm408, %v572, 0
        %v587 = vsel %vm408, %v575, 0
        %589 = vmatpush.msra.mxu0 0.0
        %590 = vmatpush.msra.mxu0 0.0
        %591 = vmatpush.msra.mxu0 0.0
        %592 = vmatpush.msra.mxu0 0.0
        %593 = vmatpush.msra.mxu0 0.0
        %594 = vmatpush.msra.mxu0 0.0
        %595 = vmatpush.msra.mxu0 0.0
        %596 = vmatpush.msra.mxu0 0.0
        %597 = vmatpush.msra.mxu0 0.0
        %598 = vmatpush.msra.mxu0 0.0
        %599 = vmatpush.msra.mxu0 0.0
        %600 = vmatpush.msra.mxu0 0.0
        %601 = vmatpush.msra.mxu0 0.0
        %602 = vmatpush.msra.mxu0 0.0
        %603 = vmatpush.msra.mxu0 0.0
        %604 = vmatpush.msra.mxu0 %v339
        %605 = vmatmul.f32.gmra.mxu0 %v578
        %v606 = vpop.f32.mrf.mxu0
        %v607 = vadd.f32 0.0, %v606
        %608 = vmatmul.f32.gmra.mxu0 %v581
        %v609 = vpop.f32.mrf.mxu0
        %v610 = vadd.f32 0.0, %v609
        %611 = vmatmul.f32.gmra.mxu0 %v584
        %v612 = vpop.f32.mrf.mxu0
        %v613 = vadd.f32 0.0, %v612
        %614 = vmatmul.f32.gmra.mxu0 %v587
        %v615 = vpop.f32.mrf.mxu0
        %v616 = vadd.f32 0.0, %v615
        %617 = vdwg.mxu0
        %v618 = vmax.f32 %v480, %v607
        %v619 = vmax.f32 %v483, %v610
        %v620 = vmax.f32 %v486, %v613
        %v621 = vmax.f32 %v489, %v616
        %v622 = vsub.f32 %v480, %v618
        %v623 = vsub.f32 %v483, %v619
        %v624 = vsub.f32 %v486, %v620
        %v625 = vsub.f32 %v489, %v621
        %v626 = vmul.f32 %v622, 1.442695
        %v627 = vpow.pop %v626
        %v628 = vmul.f32 %v623, 1.442695
        %v629 = vpow.pop %v628
        %v630 = vmul.f32 %v624, 1.442695
        %v631 = vpow.pop %v630
        %v632 = vmul.f32 %v625, 1.442695
        %v633 = vpow.pop %v632
        %v634 = vsub.f32 %v607, %v618
        %v635 = vsub.f32 %v610, %v619
        %v636 = vsub.f32 %v613, %v620
        %v637 = vsub.f32 %v616, %v621
        %v638 = vmul.f32 %v634, 1.442695
        %v639 = vpow.pop %v638
        %v640 = vmul.f32 %v635, 1.442695
        %v641 = vpow.pop %v640
        %v642 = vmul.f32 %v636, 1.442695
        %v643 = vpow.pop %v642
        %v644 = vmul.f32 %v637, 1.442695
        %v645 = vpow.pop %v644
        %v646 = vadd.f32 %v627, %v639
        %v647 = vadd.f32 %v629, %v641
        %v648 = vadd.f32 %v631, %v643
        %v649 = vadd.f32 %v633, %v645
        %v650 = vrcp.pop %v646
        %v651 = vmul.f32 %v646, %v650
        %v652 = vsub.f32 1.0, %v651
        %v653 = vmul.f32 %v650, %v652
        %v654 = vadd.f32 %v650, %v653
        %vm655 = vweird.f32 %v646
        %vm656 = vweird.f32 %v650
        %vm657 = vmor %vm655, %vm656
        %v658 = vsel %vm657, %v650, %v654
        %v659 = vand.u32 2147483647, %v646
        %vm660 = vcmp.eq.f32.partialorder %v659, 8.507059e+37
        %v661 = vand.u32 %v646, 2147483648
        %v662 = vor.u32 1.1754944e-38, %v661
        %v663 = vsel %vm660, %v662, %v658
        %v664 = vmul.f32 1.0, %v663
        %v665 = vrcp.pop %v647
        %v666 = vmul.f32 %v647, %v665
        %v667 = vsub.f32 1.0, %v666
        %v668 = vmul.f32 %v665, %v667
        %v669 = vadd.f32 %v665, %v668
        %vm670 = vweird.f32 %v647
        %vm671 = vweird.f32 %v665
        %vm672 = vmor %vm670, %vm671
        %v673 = vsel %vm672, %v665, %v669
        %v674 = vand.u32 2147483647, %v647
        %vm675 = vcmp.eq.f32.partialorder %v674, 8.507059e+37
        %v676 = vand.u32 %v647, 2147483648
        %v677 = vor.u32 1.1754944e-38, %v676
        %v678 = vsel %vm675, %v677, %v673
        %v679 = vmul.f32 1.0, %v678
        %v680 = vrcp.pop %v648
        %v681 = vmul.f32 %v648, %v680
        %v682 = vsub.f32 1.0, %v681
        %v683 = vmul.f32 %v680, %v682
        %v684 = vadd.f32 %v680, %v683
        %vm685 = vweird.f32 %v648
        %vm686 = vweird.f32 %v680
        %vm687 = vmor %vm685, %vm686
        %v688 = vsel %vm687, %v680, %v684
        %v689 = vand.u32 2147483647, %v648
        %vm690 = vcmp.eq.f32.partialorder %v689, 8.507059e+37
        %v691 = vand.u32 %v648, 2147483648
        %v692 = vor.u32 1.1754944e-38, %v691
        %v693 = vsel %vm690, %v692, %v688
        %v694 = vmul.f32 1.0, %v693
        %v695 = vrcp.pop %v649
        %v696 = vmul.f32 %v649, %v695
        %v697 = vsub.f32 1.0, %v696
        %v698 = vmul.f32 %v695, %v697
        %v699 = vadd.f32 %v695, %v698
        %vm700 = vweird.f32 %v649
        %vm701 = vweird.f32 %v695
        %vm702 = vmor %vm700, %vm701
        %v703 = vsel %vm702, %v695, %v699
        %v704 = vand.u32 2147483647, %v649
        %vm705 = vcmp.eq.f32.partialorder %v704, 8.507059e+37
        %v706 = vand.u32 %v649, 2147483648
        %v707 = vor.u32 1.1754944e-38, %v706
        %v708 = vsel %vm705, %v707, %v703
        %v709 = vmul.f32 1.0, %v708
        %v710 = vmul.f32 %v627, %v664
        %v711 = vmul.f32 %v629, %v679
        %v712 = vmul.f32 %v631, %v694
        %v713 = vmul.f32 %v633, %v709
        %vm714 = vcmask 261120
        %715 = vst.msk [vmem:[%s274] sm:$0xff] %vm714, %v710
        %716 = vst.msk [vmem:[%s274 + $0x8] sm:$0xff] %vm714, %v711
        %717 = vst.msk [vmem:[%s274 + $0x10] sm:$0xff] %vm714, %v712
        %718 = vst.msk [vmem:[%s274 + $0x18] sm:$0xff] %vm714, %v713
        %v719 = vmul.f32 %v639, %v664
        %v720 = vmul.f32 %v641, %v679
        %v721 = vmul.f32 %v643, %v694
        %v722 = vmul.f32 %v645, %v709
        %s723 = scalar_lea.vmem %s274, 32 [#allocation2]
        %724 = vst.msk [vmem:[%s723] sm:$0xff] %vm714, %v719
        %725 = vst.msk [vmem:[%s723 + $0x8] sm:$0xff] %vm714, %v720
        %726 = vst.msk [vmem:[%s723 + $0x10] sm:$0xff] %vm714, %v721
        %727 = vst.msk [vmem:[%s723 + $0x18] sm:$0xff] %vm714, %v722
        %s728 = sand.u32 %s178, 1
        %s729 = scalar_lea.sflag [#allocation3], %s728
        %s730 = sand.u32 %s178, 1
        %s731 = smul.addr %s730, 64
        %s732 = scalar_lea.vmem [#allocation2], %s731
        // Predicated region
        $region45: #{regseg_forward.19} parent=43 // pred_check
          %p733 = pneg %p188
        $region46: #{regseg_forward.19} parent=43 // pred_check_branch
          %735 = sbr.rel (%p733) target = $region48
        $region47: #{regseg_forward.19} parent=43 // pred_region
          %s736 = smul.u32 4, %s25
          %738 = vsyncadd %s729, 0
          %s739 = smul.addr %s24, 8
          %s740 = sadd.s32 %s736, %s739
          %s741 = smul.addr %s740, 8
          %s742 = scalar_lea.hbm %s6, %s741
          %s743 = sshll.u32 %s732, 4
          %s744 = int_to_ptr.vmem [resolvable:$true] %s743
          %s745 = sshll.u32 %s742, 4
          %s746 = int_to_ptr.hbm [resolvable:$true] %s745
          %751 = dma.vmem_to_hbm [thread:$0]  %s744, 1024, %s746, %s729, 128, 128, 8
        $region48: #{regseg_forward.19} parent=43 // pred_fallthru
          _
      $region44: #{regseg_forward.19} parent=5 // pred_fallthru
        _
      %p752 = scmp.le.s32.totalorder 2, %s15
      // Predicated region
      $region49: #{regseg_forward.19} parent=5 // pred_check
        %p753 = pneg %p752
      $region50: #{regseg_forward.19} parent=5 // pred_check_branch
        %755 = sbr.rel (%p753) target = $region52
      $region51: #{regseg_forward.19} parent=5 // pred_region
        %s756 = ssub.s32 %s15, 2
        // Predicated region
        $region53: #{regseg_forward.19} parent=51 // pred_check
          %p757 = pneg %p194
        $region54: #{regseg_forward.19} parent=51 // pred_check_branch
          %759 = sbr.rel (%p757) target = $region56
        $region55: #{regseg_forward.19} parent=51 // pred_region
          %s760 = sand.u32 %s179, 1
          %s761 = scalar_lea.sflag [#allocation3], %s760
          %s762 = sand.u32 %s179, 1
          %s763 = smul.addr %s762, 64
          %s764 = scalar_lea.vmem [#allocation2], %s763
          %766 = dma.done %s761, 1024
        $region56: #{regseg_forward.19} parent=51 // pred_fallthru
          _
      $region52: #{regseg_forward.19} parent=5 // pred_fallthru
        _
    $region6: #{regseg_forward.19} parent=1 // loop_footer
      %s19 = sadd.s32 1, %s15
    $region7: #{regseg_forward.19} parent=1 // loop_footer_branch
      %14 = sbr.rel target = $region3
    $region8: #{regseg_forward.19} parent=1 // loop_exit
      _
    %767 = vsyncpa [#allocation3], 1
    %s768 = scalar_lea.sflag [#allocation3], 1
    %769 = vsyncpa %s768, 1

// kernel: regseg_forward.18
$region0: #{regseg_forward.18}
  #allocation0 [shape = 'u32[]', space=smem, size = 0x4, offset = 0x4, fixed_abs, tag = 'smem constant byte address 0x4 - core index']
  #allocation1 [shape = 'u32[72,128]{1,0:T(1,128)}', space=vmem, size = 0x9000, scoped, tag = 'internal scratch']
  %s0 = inlined_call_operand.vmem [shape: bf16[6,8,10,72], index: 0, kind: input, shape index: {}]
  %s1 = inlined_call_operand.vmem [shape: bf16[648,64], index: 1, kind: input, shape index: {}]
  %s2 = inlined_call_operand.vmem [shape: bf16[2,8,8,64], index: 2, kind: output, shape index: {0}]
  %s3 = inlined_call_operand.vmem [shape: f32[2,1,1,64], index: 3, kind: output, shape index: {1}]
  %s4 = inlined_call_operand.vmem [shape: f32[2,1,1,64], index: 4, kind: output, shape index: {2}]
  %5 = xla_tuple %s2, %s3, %s4
  %s6 = sld [smem:[#allocation0]]
  $region57: #{regseg_forward.18} parent=0
    _
  %s8 = ssub.s32 1, %s6
  %s9 = scalar_select 0, %s8, %s6
  loop: start=0, step=1, limit=4
  $region2: #{regseg_forward.18} parent=0 // loop_pre_header
    _
  $region3: #{regseg_forward.18} parent=0 // loop_header
    %s11 = sphi 0, %s15
    %p12 = scmp.ge.s32.totalorder %s11, 4
    %s18 = sphi 0, %s30
    %s19 = sphi 0, %s26
    %s20 = sphi 0, %s18
    %s21 = sphi 0, %s19
    %s22 = sphi 0, %s20
    %s23 = sphi 0, %s21
    %s35 = sphi 0, %s37
    %s38 = sphi 0, %s35
    %s39 = sphi 0, %s38
    %s55 = sphi 0, %s39
    %s59 = sphi 0, %s59
    %s61 = sphi 0, %s59
    %s62 = sphi 0, %s61
    %s76 = sphi 0, %s62
    %s84 = sphi 0, %s86
    %s87 = sphi 0, %s84
    %s88 = sphi 0, %s87
    %s104 = sphi 0, %s88
    %s112 = sphi 0, %s114
    %s115 = sphi 0, %s112
    %s116 = sphi 0, %s115
    %s132 = sphi 0, %s116
    %s140 = sphi 0, %s142
    %s143 = sphi 0, %s140
    %s144 = sphi 0, %s143
    %s160 = sphi 0, %s144
  $region4: #{regseg_forward.18} parent=0 // loop_header_branch
    %14 = sbr.rel (%p12) target = $region8
  $region5: #{regseg_forward.18} parent=0 // loop_body
    %s16 = ssub.s32 %s11, 1
    %s17 = ssub.s32 %s11, 2
    %s24 = sadd.s32 1, %s19
    %p25 = scmp.ge.s32.totalorder %s24, 1
    %s26 = scalar_select %p25, 0, %s24
    %s27 = sadd.s32 1, %s18
    %s28 = scalar_select %p25, %s27, %s18
    %p29 = scmp.ge.s32.totalorder %s28, 2
    %s30 = scalar_select %p29, 0, %s28
    %s31 = ssub.s32 %s18, %s30
    %s32 = ssub.s32 %s19, %s26
    %s33 = sor.u32 %s31, %s32
    %p34 = scmp.eq.s32.totalorder %s33, 0
    %s36 = sadd.s32 %s35, 1
    %s37 = scalar_select %p34, %s35, %s36
    %p40 = pneg %p34
    %p41 = scmp.eq.s32.totalorder %s11, 1
    %p42 = por %p40, %p41
    %p43 = scmp.ne.s32.totalorder %s35, %s38
    %p44 = scmp.eq.s32.totalorder %s11, 0
    %p45 = por %p43, %p44
    %p46 = scmp.ne.s32.totalorder %s35, %s38
    %p47 = scmp.eq.s32.totalorder %s16, 1
    %p48 = por %p46, %p47
    %p49 = scmp.ne.s32.totalorder %s38, %s39
    %p50 = scmp.eq.s32.totalorder %s16, 0
    %p51 = por %p49, %p50
    %p52 = scmp.ne.s32.totalorder %s38, %s39
    %p53 = scmp.eq.s32.totalorder %s17, 1
    %p54 = por %p52, %p53
    %p56 = scmp.ne.s32.totalorder %s39, %s55
    %p57 = scmp.eq.s32.totalorder %s17, 0
    %p58 = por %p56, %p57
    %s60 = sadd.s32 %s59, 1
    %p63 = scmp.eq.s32.totalorder %s11, 1
    %p64 = scmp.ne.s32.totalorder %s59, %s61
    %p65 = scmp.eq.s32.totalorder %s11, 0
    %p66 = por %p64, %p65
    %p67 = scmp.ne.s32.totalorder %s59, %s61
    %p68 = scmp.eq.s32.totalorder %s16, 1
    %p69 = por %p67, %p68
    %p70 = scmp.ne.s32.totalorder %s61, %s62
    %p71 = scmp.eq.s32.totalorder %s16, 0
    %p72 = por %p70, %p71
    %p73 = scmp.ne.s32.totalorder %s61, %s62
    %p74 = scmp.eq.s32.totalorder %s17, 1
    %p75 = por %p73, %p74
    %p77 = scmp.ne.s32.totalorder %s62, %s76
    %p78 = scmp.eq.s32.totalorder %s17, 0
    %p79 = por %p77, %p78
    %s80 = ssub.s32 %s18, %s30
    %s81 = ssub.s32 %s19, %s26
    %s82 = sor.u32 %s80, %s81
    %p83 = scmp.eq.s32.totalorder %s82, 0
    %s85 = sadd.s32 %s84, 1
    %s86 = scalar_select %p83, %s84, %s85
    %p89 = pneg %p83
    %p90 = scmp.eq.s32.totalorder %s11, 1
    %p91 = por %p89, %p90
    %p92 = scmp.ne.s32.totalorder %s84, %s87
    %p93 = scmp.eq.s32.totalorder %s11, 0
    %p94 = por %p92, %p93
    %p95 = scmp.ne.s32.totalorder %s84, %s87
    %p96 = scmp.eq.s32.totalorder %s16, 1
    %p97 = por %p95, %p96
    %p98 = scmp.ne.s32.totalorder %s87, %s88
    %p99 = scmp.eq.s32.totalorder %s16, 0
    %p100 = por %p98, %p99
    %p101 = scmp.ne.s32.totalorder %s87, %s88
    %p102 = scmp.eq.s32.totalorder %s17, 1
    %p103 = por %p101, %p102
    %p105 = scmp.ne.s32.totalorder %s88, %s104
    %p106 = scmp.eq.s32.totalorder %s17, 0
    %p107 = por %p105, %p106
    %s108 = ssub.s32 %s18, %s30
    %s109 = ssub.s32 %s19, %s26
    %s110 = sor.u32 %s108, %s109
    %p111 = scmp.eq.s32.totalorder %s110, 0
    %s113 = sadd.s32 %s112, 1
    %s114 = scalar_select %p111, %s112, %s113
    %p117 = pneg %p111
    %p118 = scmp.eq.s32.totalorder %s11, 1
    %p119 = por %p117, %p118
    %p120 = scmp.ne.s32.totalorder %s112, %s115
    %p121 = scmp.eq.s32.totalorder %s11, 0
    %p122 = por %p120, %p121
    %p123 = scmp.ne.s32.totalorder %s112, %s115
    %p124 = scmp.eq.s32.totalorder %s16, 1
    %p125 = por %p123, %p124
    %p126 = scmp.ne.s32.totalorder %s115, %s116
    %p127 = scmp.eq.s32.totalorder %s16, 0
    %p128 = por %p126, %p127
    %p129 = scmp.ne.s32.totalorder %s115, %s116
    %p130 = scmp.eq.s32.totalorder %s17, 1
    %p131 = por %p129, %p130
    %p133 = scmp.ne.s32.totalorder %s116, %s132
    %p134 = scmp.eq.s32.totalorder %s17, 0
    %p135 = por %p133, %p134
    %s136 = ssub.s32 %s18, %s30
    %s137 = ssub.s32 %s19, %s26
    %s138 = sor.u32 %s136, %s137
    %p139 = scmp.eq.s32.totalorder %s138, 0
    %s141 = sadd.s32 %s140, 1
    %s142 = scalar_select %p139, %s140, %s141
    %p145 = pneg %p139
    %p146 = scmp.eq.s32.totalorder %s11, 1
    %p147 = por %p145, %p146
    %p148 = scmp.ne.s32.totalorder %s140, %s143
    %p149 = scmp.eq.s32.totalorder %s11, 0
    %p150 = por %p148, %p149
    %p151 = scmp.ne.s32.totalorder %s140, %s143
    %p152 = scmp.eq.s32.totalorder %s16, 1
    %p153 = por %p151, %p152
    %p154 = scmp.ne.s32.totalorder %s143, %s144
    %p155 = scmp.eq.s32.totalorder %s16, 0
    %p156 = por %p154, %p155
    %p157 = scmp.ne.s32.totalorder %s143, %s144
    %p158 = scmp.eq.s32.totalorder %s17, 1
    %p159 = por %p157, %p158
    %p161 = scmp.ne.s32.totalorder %s144, %s160
    %p162 = scmp.eq.s32.totalorder %s17, 0
    %p163 = por %p161, %p162
    %p164 = scmp.le.s32.totalorder 1, %s11
    %p165 = scmp.lt.s32.totalorder %s11, 3
    %p166 = pnand %p164, %p165
    %p167 = pneg %p166
    // Predicated region
    $region9: #{regseg_forward.18} parent=5 // pred_check
      _
    $region10: #{regseg_forward.18} parent=5 // pred_check_branch
      %169 = sbr.rel (%p166) target = $region12
    $region11: #{regseg_forward.18} parent=5 // pred_region
      %s170 = ssub.s32 %s11, 1
      // Predicated region
      $region13: #{regseg_forward.18} parent=11 // pred_check
        %p171 = pneg %p72
      $region14: #{regseg_forward.18} parent=11 // pred_check_branch
        %173 = sbr.rel (%p171) target = $region16
      $region15: #{regseg_forward.18} parent=11 // pred_region
        _
      $region16: #{regseg_forward.18} parent=11 // pred_fallthru
        _
    $region12: #{regseg_forward.18} parent=5 // pred_fallthru
      _
    %p174 = scmp.lt.s32.totalorder %s11, 2
    // Predicated region
    $region17: #{regseg_forward.18} parent=5 // pred_check
      %p175 = pneg %p174
    $region18: #{regseg_forward.18} parent=5 // pred_check_branch
      %177 = sbr.rel (%p175) target = $region20
    $region19: #{regseg_forward.18} parent=5 // pred_region
      // Predicated region
      $region21: #{regseg_forward.18} parent=19 // pred_check
        %p178 = pneg %p45
      $region22: #{regseg_forward.18} parent=19 // pred_check_branch
        %180 = sbr.rel (%p178) target = $region24
      $region23: #{regseg_forward.18} parent=19 // pred_region
        %s181 = smul.u32 3, %s18
        %s182 = smul.u32 8, %s19
        %p183 = scmp.lt.s32.totalorder %s181, 5
        %s184 = scalar_select %p183, %s181, 5
        %p185 = scmp.lt.s32.totalorder %s182, 7
        %s186 = scalar_select %p185, %s182, 7
        %s187 = smul.addr %s186, 2
        %s188 = smul.addr %s184, 16
        %s189 = sadd.s32 %s187, %s188
        %s190 = smul.addr %s189, 4
        %s191 = scalar_lea.vmem %s0, %s190
        %s192 = smul.u32 3, %s18
        %s193 = smul.u32 8, %s19
      $region24: #{regseg_forward.18} parent=19 // pred_fallthru
        _
    $region20: #{regseg_forward.18} parent=5 // pred_fallthru
      _
    %p194 = scmp.le.s32.totalorder 1, %s11
    %p195 = scmp.lt.s32.totalorder %s11, 3
    %p196 = pnand %p194, %p195
    %p197 = pneg %p196
    // Predicated region
    $region25: #{regseg_forward.18} parent=5 // pred_check
      _
    $region26: #{regseg_forward.18} parent=5 // pred_check_branch
      %199 = sbr.rel (%p196) target = $region28
    $region27: #{regseg_forward.18} parent=5 // pred_region
      %s200 = ssub.s32 %s11, 1
      %s201 = smul.u32 3, %s20
      %s202 = smul.u32 8, %s21
      %p203 = scmp.lt.s32.totalorder %s201, 5
      %s204 = scalar_select %p203, %s201, 5
      %p205 = scmp.lt.s32.totalorder %s202, 7
      %s206 = scalar_select %p205, %s202, 7
      %s207 = smul.addr %s206, 2
      %s208 = smul.addr %s204, 16
      %s209 = sadd.s32 %s207, %s208
      %s210 = smul.addr %s209, 4
      %s211 = scalar_lea.vmem %s0, %s210
      %p212 = pneg %p51
      %p213 = pneg %p48
      %p214 = pneg %p72
      %p215 = pneg %p69
      %p216 = pneg %p100
      %p217 = pneg %p97
      %s218 = smul.u32 8, %s21
      %p219 = scmp.lt.s32.totalorder %s20, 1
      %s220 = scalar_select %p219, %s20, 1
      %p221 = scmp.lt.s32.totalorder %s218, 7
      %s222 = scalar_select %p221, %s218, 7
      %s223 = smul.addr %s220, 8
      %s224 = sadd.s32 %s222, %s223
      %s225 = smul.addr %s224, 4
      %s226 = scalar_lea.vmem %s2, %s225
      %p227 = pneg %p128
      %p228 = pneg %p125
      %p229 = scmp.lt.s32.totalorder %s20, 1
      %s230 = scalar_select %p229, %s20, 1
      %p231 = scmp.lt.s32.totalorder %s21, 0
      %s232 = scalar_select %p231, %s21, 0
      %s233 = sadd.s32 %s232, %s230
      %s234 = scalar_lea.vmem %s3, %s233
      %p235 = pneg %p156
      %p236 = pneg %p153
      %p237 = scmp.lt.s32.totalorder %s20, 1
      %s238 = scalar_select %p237, %s20, 1
      %p239 = scmp.lt.s32.totalorder %s21, 0
      %s240 = scalar_select %p239, %s21, 0
      %s241 = sadd.s32 %s240, %s238
      %s242 = scalar_lea.vmem %s4, %s241
      %s243 = smul.u32 3, %s20
      %s244 = smul.u32 8, %s21
      %p245 = scmp.lt.s32.totalorder %s243, 5
      %s246 = scalar_select %p245, %s243, 5
      %p247 = scmp.lt.s32.totalorder %s244, 7
      %s248 = scalar_select %p247, %s244, 7
      %s249 = smul.addr %s248, 2
      %s250 = smul.addr %s246, 16
      %s251 = sadd.s32 %s249, %s250
      %s252 = smul.addr %s251, 4
      %s253 = scalar_lea.vmem %s0, %s252
      %s254 = smul.u32 3, %s20
      %s255 = smul.u32 8, %s21
      %s256 = smul.u32 8, %s21
      %p257 = scmp.lt.s32.totalorder %s20, 1
      %s258 = scalar_select %p257, %s20, 1
      %p259 = scmp.lt.s32.totalorder %s256, 7
      %s260 = scalar_select %p259, %s256, 7
      %s261 = smul.addr %s258, 8
      %s262 = sadd.s32 %s260, %s261
      %s263 = smul.addr %s262, 4
      %s264 = scalar_lea.vmem %s2, %s263
      %s265 = smul.u32 8, %s21
      %p266 = scmp.lt.s32.totalorder %s20, 1
      %s267 = scalar_select %p266, %s20, 1
      %p268 = scmp.lt.s32.totalorder %s21, 0
      %s269 = scalar_select %p268, %s21, 0
      %s270 = sadd.s32 %s269, %s267
      %s271 = scalar_lea.vmem %s3, %s270
      %p272 = scmp.lt.s32.totalorder %s20, 1
      %s273 = scalar_select %p272, %s20, 1
      %p274 = scmp.lt.s32.totalorder %s21, 0
      %s275 = scalar_select %p274, %s21, 0
      %s276 = sadd.s32 %s275, %s273
      %s277 = scalar_lea.vmem %s4, %s276
      %v279 = vld [vmem:[%s1] sm:$0xf]
      %v280 = vld [vmem:[%s1 + $0x4] sm:$0xf]
      %v281 = vld [vmem:[%s1 + $0x8] sm:$0xf]
      %v282 = vld [vmem:[%s1 + $0xc] sm:$0xf]
      %v283 = vld [vmem:[%s1 + $0x10] sm:$0xf]
      %v284 = vld [vmem:[%s1 + $0x14] sm:$0xf]
      %v285 = vld [vmem:[%s1 + $0x18] sm:$0xf]
      %v286 = vld [vmem:[%s1 + $0x1c] sm:$0xf]
      %v287 = vld [vmem:[%s1 + $0x20] sm:$0xf]
      %v288 = vld [vmem:[%s1 + $0x24] sm:$0xf]
      %v289 = vld [vmem:[%s1 + $0x28] sm:$0xf]
      %v290 = vld [vmem:[%s1 + $0x2c] sm:$0xf]
      %v291 = vld [vmem:[%s1 + $0x30] sm:$0xf]
      %v292 = vld [vmem:[%s1 + $0x34] sm:$0xf]
      %v293 = vld [vmem:[%s1 + $0x38] sm:$0xf]
      %v294 = vld [vmem:[%s1 + $0x3c] sm:$0xf]
      %v295 = vld [vmem:[%s1 + $0x40] sm:$0xf]
      %v296 = vld [vmem:[%s1 + $0x44] sm:$0xf]
      %v297 = vld [vmem:[%s1 + $0x48] sm:$0xf]
      %v298 = vld [vmem:[%s1 + $0x4c] sm:$0xf]
      %v299 = vld [vmem:[%s1 + $0x50] sm:$0xf]
      %v300 = vld [vmem:[%s1 + $0x54] sm:$0xf]
      %v301 = vld [vmem:[%s1 + $0x58] sm:$0xf]
      %v302 = vld [vmem:[%s1 + $0x5c] sm:$0xf]
      %v303 = vld [vmem:[%s1 + $0x60] sm:$0xf]
      %v304 = vld [vmem:[%s1 + $0x64] sm:$0xf]
      %v305 = vld [vmem:[%s1 + $0x68] sm:$0xf]
      %v306 = vld [vmem:[%s1 + $0x6c] sm:$0xf]
      %v307 = vld [vmem:[%s1 + $0x70] sm:$0xf]
      %v308 = vld [vmem:[%s1 + $0x74] sm:$0xf]
      %v309 = vld [vmem:[%s1 + $0x78] sm:$0xf]
      %v310 = vld [vmem:[%s1 + $0x7c] sm:$0xf]
      %v311 = vld [vmem:[%s1 + $0x80] sm:$0xf]
      %v312 = vld [vmem:[%s1 + $0x84] sm:$0xf]
      %v313 = vld [vmem:[%s1 + $0x88] sm:$0xf]
      %v314 = vld [vmem:[%s1 + $0x8c] sm:$0xf]
      %v315 = vld [vmem:[%s1 + $0x90] sm:$0xf]
      %v316 = vld [vmem:[%s1 + $0x94] sm:$0xf]
      %v317 = vld [vmem:[%s1 + $0x98] sm:$0xf]
      %v318 = vld [vmem:[%s1 + $0x9c] sm:$0xf]
      %v319 = vld [vmem:[%s1 + $0xa0] sm:$0xf]
      %v320 = vld [vmem:[%s1 + $0xa4] sm:$0xf]
      %v321 = vld [vmem:[%s1 + $0xa8] sm:$0xf]
      %v322 = vld [vmem:[%s1 + $0xac] sm:$0xf]
      %v323 = vld [vmem:[%s1 + $0xb0] sm:$0xf]
      %v324 = vld [vmem:[%s1 + $0xb4] sm:$0xf]
      %v325 = vld [vmem:[%s1 + $0xb8] sm:$0xf]
      %v326 = vld [vmem:[%s1 + $0xbc] sm:$0xf]
      %v327 = vld [vmem:[%s1 + $0xc0] sm:$0xf]
      %v328 = vld [vmem:[%s1 + $0xc4] sm:$0xf]
      %v329 = vld [vmem:[%s1 + $0xc8] sm:$0xf]
      %v330 = vld [vmem:[%s1 + $0xcc] sm:$0xf]
      %v331 = vld [vmem:[%s1 + $0xd0] sm:$0xf]
      %v332 = vld [vmem:[%s1 + $0xd4] sm:$0xf]
      %v333 = vld [vmem:[%s1 + $0xd8] sm:$0xf]
      %v334 = vld [vmem:[%s1 + $0xdc] sm:$0xf]
      %v335 = vld [vmem:[%s1 + $0xe0] sm:$0xf]
      %v336 = vld [vmem:[%s1 + $0xe4] sm:$0xf]
      %v337 = vld [vmem:[%s1 + $0xe8] sm:$0xf]
      %v338 = vld [vmem:[%s1 + $0xec] sm:$0xf]
      %v339 = vld [vmem:[%s1 + $0xf0] sm:$0xf]
      %v340 = vld [vmem:[%s1 + $0xf4] sm:$0xf]
      %v341 = vld [vmem:[%s1 + $0xf8] sm:$0xf]
      %v342 = vld [vmem:[%s1 + $0xfc] sm:$0xf]
      %v343 = vld [vmem:[%s1 + $0x100] sm:$0xf]
      %v344 = vld [vmem:[%s1 + $0x104] sm:$0xf]
      %v345 = vld [vmem:[%s1 + $0x108] sm:$0xf]
      %v346 = vld [vmem:[%s1 + $0x10c] sm:$0xf]
      %v347 = vld [vmem:[%s1 + $0x110] sm:$0xf]
      %v348 = vld [vmem:[%s1 + $0x114] sm:$0xf]
      %v349 = vld [vmem:[%s1 + $0x118] sm:$0xf]
      %v350 = vld [vmem:[%s1 + $0x11c] sm:$0xf]
      %v351 = vld [vmem:[%s1 + $0x120] sm:$0xf]
      %v352 = vld [vmem:[%s1 + $0x124] sm:$0xf]
      %v353 = vld [vmem:[%s1 + $0x128] sm:$0xf]
      %v354 = vld [vmem:[%s1 + $0x12c] sm:$0xf]
      %v355 = vld [vmem:[%s1 + $0x130] sm:$0xf]
      %v356 = vld [vmem:[%s1 + $0x134] sm:$0xf]
      %v357 = vld [vmem:[%s1 + $0x138] sm:$0xf]
      %v358 = vld [vmem:[%s1 + $0x13c] sm:$0xf]
      %v359 = vld [vmem:[%s1 + $0x140] sm:$0xf]
      %v360 = vld [vmem:[%s253] sm:$0xf]
      %v361 = vld [vmem:[%s253 + $0x4] sm:$0x1]
      %v362 = vld [vmem:[%s253] sm:$0xe]
      %s363 = scalar_lea.vmem %s253, 64
      %v364 = vld [vmem:[%s363] sm:$0xf]
      %v365 = vld [vmem:[%s363 + $0x4] sm:$0x1]
      %v366 = vld [vmem:[%s363] sm:$0xe]
      %s367 = scalar_lea.vmem %s253, 128
      %v368 = vld [vmem:[%s367] sm:$0xf]
      %v369 = vld [vmem:[%s367 + $0x4] sm:$0x1]
      %v370 = vld [vmem:[%s367] sm:$0xe]
      %v373 = vunpack.c.l.b16 %v360
      %v374 = vunpack.c.l.b16 %v361
      %v375 = vpack.c.b16 %v374, %v373
      %v377 = vshrl.u32 %v375, 16
      %v379 = vshll.u32 %v375, 16
      %v381 = vrot.slane %v379, 1
      %v382 = vor.u32 %v377, %v381
      %383 = vrot.lane.b32.xlu0 %v382, 72
      %v384 = vpop.permute.xlu0 %383
      %v386 = vunpack.c.l.b16 %v362
      %v387 = vpack.c.b16 %v374, %v386
      %v388 = vrot.slane %v387, 1
      %389 = vrot.lane.b32.xlu0 %v388, 16
      %v390 = vpop.permute.xlu0 %389
      %v392 = vunpack.c.l.b16 %v364
      %v393 = vpack.c.b16 %v392, %v392
      %394 = vrot.lane.b32.xlu0 %v393, 88
      %v395 = vpop.permute.xlu0 %394
      %v397 = vunpack.c.l.b16 %v365
      %v398 = vpack.c.b16 %v397, %v392
      %v400 = vshrl.u32 %v398, 16
      %v402 = vshll.u32 %v398, 16
      %v404 = vrot.slane %v402, 1
      %v405 = vor.u32 %v400, %v404
      %406 = vrot.lane.b32.xlu0 %v405, 32
      %v407 = vpop.permute.xlu0 %406
      %v409 = vunpack.c.l.b16 %v366
      %v410 = vpack.c.b16 %v397, %v409
      %v411 = vrot.slane %v410, 1
      %412 = vrot.lane.b32.xlu0 %v411, 104
      %v413 = vpop.permute.xlu0 %412
      %v415 = vunpack.c.l.b16 %v368
      %v416 = vpack.c.b16 %v415, %v415
      %417 = vrot.lane.b32.xlu0 %v416, 48
      %v418 = vpop.permute.xlu0 %417
      %v420 = vunpack.c.l.b16 %v369
      %v421 = vpack.c.b16 %v420, %v415
      %v423 = vshrl.u32 %v421, 16
      %v425 = vshll.u32 %v421, 16
      %v427 = vrot.slane %v425, 1
      %v428 = vor.u32 %v423, %v427
      %429 = vrot.lane.b32.xlu0 %v428, 120
      %v430 = vpop.permute.xlu0 %429
      %v432 = vunpack.c.l.b16 %v370
      %v433 = vpack.c.b16 %v420, %v432
      %v434 = vrot.slane %v433, 1
      %435 = vrot.lane.b32.xlu0 %v434, 64
      %v436 = vpop.permute.xlu0 %435
      %vm437 = vcmask 588800
      %v440 = vsel %vm437, %v360, %v384
      %vm442 = vcmask 130048
      %v444 = vsel %vm442, %v384, %v390
      %vm445 = vcmask 719872
      %v447 = vsel %vm445, %v444, %v395
      %vm449 = vcmask 261120
      %v451 = vsel %vm449, %v395, %v407
      %vm452 = vcmask 850944
      %v454 = vsel %vm452, %v451, %v413
      %vm456 = vcmask 392192
      %v458 = vsel %vm456, %v413, %v418
      %vm459 = vcmask 982016
      %v461 = vsel %vm459, %v458, %v430
      %vm463 = vcmask 523264
      %v465 = vsel %vm463, %v430, %v436
      %v548 = vunpack.c.l.b16 %v279
      %v549 = vunpack.c.l.b16 %v280
      %v550 = vunpack.c.l.b16 %v281
      %v551 = vunpack.c.l.b16 %v282
      %v552 = vunpack.c.l.b16 %v283
      %v553 = vunpack.c.l.b16 %v284
      %v554 = vunpack.c.l.b16 %v285
      %v555 = vunpack.c.l.b16 %v286
      %v556 = vunpack.c.l.b16 %v287
      %v557 = vunpack.c.l.b16 %v288
      %v558 = vunpack.c.l.b16 %v289
      %v559 = vunpack.c.l.b16 %v290
      %v560 = vunpack.c.l.b16 %v291
      %v561 = vunpack.c.l.b16 %v292
      %v562 = vunpack.c.l.b16 %v293
      %v563 = vunpack.c.l.b16 %v294
      %v564 = vunpack.c.l.b16 %v295
      %v565 = vunpack.c.l.b16 %v296
      %v566 = vunpack.c.l.b16 %v297
      %v567 = vunpack.c.l.b16 %v298
      %v568 = vunpack.c.l.b16 %v299
      %v569 = vunpack.c.l.b16 %v300
      %v570 = vunpack.c.l.b16 %v301
      %v571 = vunpack.c.l.b16 %v302
      %v572 = vunpack.c.l.b16 %v303
      %v573 = vunpack.c.l.b16 %v304
      %v574 = vunpack.c.l.b16 %v305
      %v575 = vunpack.c.l.b16 %v306
      %v576 = vunpack.c.l.b16 %v307
      %v577 = vunpack.c.l.b16 %v308
      %v578 = vunpack.c.l.b16 %v309
      %v579 = vunpack.c.l.b16 %v310
      %v580 = vunpack.c.l.b16 %v311
      %v581 = vunpack.c.l.b16 %v312
      %v582 = vunpack.c.l.b16 %v313
      %v583 = vunpack.c.l.b16 %v314
      %v584 = vunpack.c.l.b16 %v315
      %v585 = vunpack.c.l.b16 %v316
      %v586 = vunpack.c.l.b16 %v317
      %v587 = vunpack.c.l.b16 %v318
      %v588 = vunpack.c.l.b16 %v319
      %v589 = vunpack.c.l.b16 %v320
      %v590 = vunpack.c.l.b16 %v321
      %v591 = vunpack.c.l.b16 %v322
      %v592 = vunpack.c.l.b16 %v323
      %v593 = vunpack.c.l.b16 %v324
      %v594 = vunpack.c.l.b16 %v325
      %v595 = vunpack.c.l.b16 %v326
      %v596 = vunpack.c.l.b16 %v327
      %v597 = vunpack.c.l.b16 %v328
      %v598 = vunpack.c.l.b16 %v329
      %v599 = vunpack.c.l.b16 %v330
      %v600 = vunpack.c.l.b16 %v331
      %v601 = vunpack.c.l.b16 %v332
      %v602 = vunpack.c.l.b16 %v333
      %v603 = vunpack.c.l.b16 %v334
      %v604 = vunpack.c.l.b16 %v335
      %v605 = vunpack.c.l.b16 %v336
      %v606 = vunpack.c.l.b16 %v337
      %v607 = vunpack.c.l.b16 %v338
      %v608 = vunpack.c.l.b16 %v339
      %v609 = vunpack.c.l.b16 %v340
      %v610 = vunpack.c.l.b16 %v341
      %v611 = vunpack.c.l.b16 %v342
      %v612 = vunpack.c.l.b16 %v343
      %v613 = vunpack.c.l.b16 %v344
      %v614 = vunpack.c.l.b16 %v345
      %v615 = vunpack.c.l.b16 %v346
      %v616 = vunpack.c.l.b16 %v347
      %v617 = vunpack.c.l.b16 %v348
      %v618 = vunpack.c.l.b16 %v349
      %v619 = vunpack.c.l.b16 %v350
      %v620 = vunpack.c.l.b16 %v351
      %v621 = vunpack.c.l.b16 %v352
      %v622 = vunpack.c.l.b16 %v353
      %v623 = vunpack.c.l.b16 %v354
      %v624 = vunpack.c.l.b16 %v355
      %v625 = vunpack.c.l.b16 %v356
      %v626 = vunpack.c.l.b16 %v357
      %v627 = vunpack.c.l.b16 %v358
      %v628 = vunpack.c.l.b16 %v359
      %v629 = vpack.c.b16 %v549, %v548
      %v630 = vpack.c.b16 %v551, %v550
      %v631 = vpack.c.b16 %v553, %v552
      %v632 = vpack.c.b16 %v555, %v554
      %v633 = vpack.c.b16 %v557, %v556
      %v634 = vpack.c.b16 %v559, %v558
      %v635 = vpack.c.b16 %v561, %v560
      %v636 = vpack.c.b16 %v563, %v562
      %v637 = vpack.c.b16 %v565, %v564
      %v638 = vpack.c.b16 %v567, %v566
      %v639 = vpack.c.b16 %v569, %v568
      %v640 = vpack.c.b16 %v571, %v570
      %v641 = vpack.c.b16 %v573, %v572
      %v642 = vpack.c.b16 %v575, %v574
      %v643 = vpack.c.b16 %v577, %v576
      %v644 = vpack.c.b16 %v579, %v578
      %v645 = vpack.c.b16 %v581, %v580
      %v646 = vpack.c.b16 %v583, %v582
      %v647 = vpack.c.b16 %v585, %v584
      %v648 = vpack.c.b16 %v587, %v586
      %v649 = vpack.c.b16 %v589, %v588
      %v650 = vpack.c.b16 %v591, %v590
      %v651 = vpack.c.b16 %v593, %v592
      %v652 = vpack.c.b16 %v595, %v594
      %v653 = vpack.c.b16 %v597, %v596
      %v654 = vpack.c.b16 %v599, %v598
      %v655 = vpack.c.b16 %v601, %v600
      %v656 = vpack.c.b16 %v603, %v602
      %v657 = vpack.c.b16 %v605, %v604
      %v658 = vpack.c.b16 %v607, %v606
      %v659 = vpack.c.b16 %v609, %v608
      %v660 = vpack.c.b16 %v611, %v610
      %v661 = vpack.c.b16 %v613, %v612
      %v662 = vpack.c.b16 %v615, %v614
      %v663 = vpack.c.b16 %v617, %v616
      %v664 = vpack.c.b16 %v619, %v618
      %v665 = vpack.c.b16 %v621, %v620
      %v666 = vpack.c.b16 %v623, %v622
      %v667 = vpack.c.b16 %v625, %v624
      %v668 = vpack.c.b16 %v627, %v626
      %v669 = vpack.c.b16 %v628, %v628
      %vm710 = vcmask 64512
      %v711 = vsel %vm710, %v436, 0
      %vm713 = vcmask 1043456
      %v715 = vsel %vm713, %v669, 0
      %717 = vmatpush.bf16.msra.mxu0 %v636
      %718 = vmatpush.bf16.msra.mxu0 %v635
      %719 = vmatpush.bf16.msra.mxu0 %v634
      %720 = vmatpush.bf16.msra.mxu0 %v633
      %721 = vmatpush.bf16.msra.mxu0 %v632
      %722 = vmatpush.bf16.msra.mxu0 %v631
      %723 = vmatpush.bf16.msra.mxu0 %v630
      %724 = vmatpush.bf16.msra.mxu0 %v629
      %725 = vmatmul.bf16.gmra.mxu0 %v440
      %v726 = vpop.f32.mrf.mxu0
      %v727 = vadd.f32 0.0, %v726
      %v728 = vpop.f32.mrf.mxu0
      %729 = vdwg.mxu0
      %730 = vmatpush.bf16.msra.mxu0 %v644
      %731 = vmatpush.bf16.msra.mxu0 %v643
      %732 = vmatpush.bf16.msra.mxu0 %v642
      %733 = vmatpush.bf16.msra.mxu0 %v641
      %734 = vmatpush.bf16.msra.mxu0 %v640
      %735 = vmatpush.bf16.msra.mxu0 %v639
      %736 = vmatpush.bf16.msra.mxu0 %v638
      %737 = vmatpush.bf16.msra.mxu0 %v637
      %738 = vmatmul.bf16.gmra.mxu0 %v447
      %v739 = vpop.f32.mrf.mxu0
      %v740 = vadd.f32 %v727, %v739
      %v741 = vpop.f32.mrf.mxu0
      %742 = vdwg.mxu0
      %743 = vmatpush.bf16.msra.mxu0 %v652
      %744 = vmatpush.bf16.msra.mxu0 %v651
      %745 = vmatpush.bf16.msra.mxu0 %v650
      %746 = vmatpush.bf16.msra.mxu0 %v649
      %747 = vmatpush.bf16.msra.mxu0 %v648
      %748 = vmatpush.bf16.msra.mxu0 %v647
      %749 = vmatpush.bf16.msra.mxu0 %v646
      %750 = vmatpush.bf16.msra.mxu0 %v645
      %751 = vmatmul.bf16.gmra.mxu0 %v454
      %v752 = vpop.f32.mrf.mxu0
      %v753 = vadd.f32 %v740, %v752
      %v754 = vpop.f32.mrf.mxu0
      %755 = vdwg.mxu0
      %756 = vmatpush.bf16.msra.mxu0 %v660
      %757 = vmatpush.bf16.msra.mxu0 %v659
      %758 = vmatpush.bf16.msra.mxu0 %v658
      %759 = vmatpush.bf16.msra.mxu0 %v657
      %760 = vmatpush.bf16.msra.mxu0 %v656
      %761 = vmatpush.bf16.msra.mxu0 %v655
      %762 = vmatpush.bf16.msra.mxu0 %v654
      %763 = vmatpush.bf16.msra.mxu0 %v653
      %764 = vmatmul.bf16.gmra.mxu0 %v461
      %v765 = vpop.f32.mrf.mxu0
      %v766 = vadd.f32 %v753, %v765
      %v767 = vpop.f32.mrf.mxu0
      %768 = vdwg.mxu0
      %769 = vmatpush.bf16.msra.mxu0 %v668
      %770 = vmatpush.bf16.msra.mxu0 %v667
      %771 = vmatpush.bf16.msra.mxu0 %v666
      %772 = vmatpush.bf16.msra.mxu0 %v665
      %773 = vmatpush.bf16.msra.mxu0 %v664
      %774 = vmatpush.bf16.msra.mxu0 %v663
      %775 = vmatpush.bf16.msra.mxu0 %v662
      %776 = vmatpush.bf16.msra.mxu0 %v661
      %777 = vmatmul.bf16.gmra.mxu0 %v465
      %v778 = vpop.f32.mrf.mxu0
      %v779 = vadd.f32 %v766, %v778
      %v780 = vpop.f32.mrf.mxu0
      %781 = vdwg.mxu0
      %782 = vmatpush.bf16.msra.mxu0 0
      %783 = vmatpush.bf16.msra.mxu0 0
      %784 = vmatpush.bf16.msra.mxu0 0
      %785 = vmatpush.bf16.msra.mxu0 0
      %786 = vmatpush.bf16.msra.mxu0 0
      %787 = vmatpush.bf16.msra.mxu0 0
      %788 = vmatpush.bf16.msra.mxu0 0
      %789 = vmatpush.bf16.msra.mxu0 %v715
      %790 = vmatmul.bf16.gmra.mxu0 %v711
      %v791 = vpop.f32.mrf.mxu0
      %v792 = vadd.f32 %v779, %v791
      %v793 = vpop.f32.mrf.mxu0
      %794 = vdwg.mxu0
      %v795 = vpack.c.bf16 %v792, %v792
      %vm796 = vcmask 519168
      %797 = vst.msk [vmem:[%s264] sm:$0xf] %vm796, %v795
      %s798 = smul.u32 %s21, 8
      %p799 = scmp.lt.s32.totalorder %s798, 8
      %v800 = vsel %vm463, %v792, 0.0
      %v801 = vrot.slane %v800, 4
      %v802 = vadd.f32 %v800, %v801
      %v803 = vrot.slane %v802, 2
      %v804 = vadd.f32 %v802, %v803
      %v805 = vrot.slane %v804, 1
      %v806 = vadd.f32 %v804, %v805
      %s807 = scalar_select %p799, 1, 0
      %v808 = vstv %s807
      %vm809 = vcmp.eq.s32.totalorder %v808, 1
      %v810 = vsel %vm809, %v806, 0.0
      %v811 = vadd.f32 %v810, 0.0
      %v812 = vmul.f32 %v792, %v792
      %v813 = vsel %vm463, %v812, 0.0
      %v814 = vrot.slane %v813, 4
      %v815 = vadd.f32 %v813, %v814
      %v816 = vrot.slane %v815, 2
      %v817 = vadd.f32 %v815, %v816
      %v818 = vrot.slane %v817, 1
      %v819 = vadd.f32 %v817, %v818
      %v820 = vsel %vm809, %v819, 0.0
      %v821 = vadd.f32 %v820, 0.0
      %s822 = scalar_lea.vmem %s253, 8
      %v823 = vld [vmem:[%s822] sm:$0xf]
      %v824 = vld [vmem:[%s822 + $0x4] sm:$0x1]
      %v825 = vld [vmem:[%s822] sm:$0xe]
      %s826 = scalar_lea.vmem %s253, 72
      %v827 = vld [vmem:[%s826] sm:$0xf]
      %v828 = vld [vmem:[%s826 + $0x4] sm:$0x1]
      %v829 = vld [vmem:[%s826] sm:$0xe]
      %s830 = scalar_lea.vmem %s253, 136
      %v831 = vld [vmem:[%s830] sm:$0xf]
      %v832 = vld [vmem:[%s830 + $0x4] sm:$0x1]
      %v833 = vld [vmem:[%s830] sm:$0xe]
      %v836 = vunpack.c.l.b16 %v823
      %v837 = vunpack.c.l.b16 %v824
      %v838 = vpack.c.b16 %v837, %v836
      %v840 = vshrl.u32 %v838, 16
      %v842 = vshll.u32 %v838, 16
      %v844 = vrot.slane %v842, 1
      %v845 = vor.u32 %v840, %v844
      %846 = vrot.lane.b32.xlu0 %v845, 72
      %v847 = vpop.permute.xlu0 %846
      %v849 = vunpack.c.l.b16 %v825
      %v850 = vpack.c.b16 %v837, %v849
      %v851 = vrot.slane %v850, 1
      %852 = vrot.lane.b32.xlu0 %v851, 16
      %v853 = vpop.permute.xlu0 %852
      %v855 = vunpack.c.l.b16 %v827
      %v856 = vpack.c.b16 %v855, %v855
      %857 = vrot.lane.b32.xlu0 %v856, 88
      %v858 = vpop.permute.xlu0 %857
      %v860 = vunpack.c.l.b16 %v828
      %v861 = vpack.c.b16 %v860, %v855
      %v863 = vshrl.u32 %v861, 16
      %v865 = vshll.u32 %v861, 16
      %v867 = vrot.slane %v865, 1
      %v868 = vor.u32 %v863, %v867
      %869 = vrot.lane.b32.xlu0 %v868, 32
      %v870 = vpop.permute.xlu0 %869
      %v872 = vunpack.c.l.b16 %v829
      %v873 = vpack.c.b16 %v860, %v872
      %v874 = vrot.slane %v873, 1
      %875 = vrot.lane.b32.xlu0 %v874, 104
      %v876 = vpop.permute.xlu0 %875
      %v878 = vunpack.c.l.b16 %v831
      %v879 = vpack.c.b16 %v878, %v878
      %880 = vrot.lane.b32.xlu0 %v879, 48
      %v881 = vpop.permute.xlu0 %880
      %v883 = vunpack.c.l.b16 %v832
      %v884 = vpack.c.b16 %v883, %v878
      %v886 = vshrl.u32 %v884, 16
      %v888 = vshll.u32 %v884, 16
      %v890 = vrot.slane %v888, 1
      %v891 = vor.u32 %v886, %v890
      %892 = vrot.lane.b32.xlu0 %v891, 120
      %v893 = vpop.permute.xlu0 %892
      %v895 = vunpack.c.l.b16 %v833
      %v896 = vpack.c.b16 %v883, %v895
      %v897 = vrot.slane %v896, 1
      %898 = vrot.lane.b32.xlu0 %v897, 64
      %v899 = vpop.permute.xlu0 %898
      %v902 = vsel %vm437, %v823, %v847
      %v905 = vsel %vm442, %v847, %v853
      %v907 = vsel %vm445, %v905, %v858
      %v910 = vsel %vm449, %v858, %v870
      %v912 = vsel %vm452, %v910, %v876
      %v915 = vsel %vm456, %v876, %v881
      %v917 = vsel %vm459, %v915, %v893
      %v920 = vsel %vm463, %v893, %v899
      %v922 = vsel %vm710, %v899, 0
      %924 = vmatpush.bf16.msra.mxu0 %v636
      %925 = vmatpush.bf16.msra.mxu0 %v635
      %926 = vmatpush.bf16.msra.mxu0 %v634
      %927 = vmatpush.bf16.msra.mxu0 %v633
      %928 = vmatpush.bf16.msra.mxu0 %v632
      %929 = vmatpush.bf16.msra.mxu0 %v631
      %930 = vmatpush.bf16.msra.mxu0 %v630
      %931 = vmatpush.bf16.msra.mxu0 %v629
      %932 = vmatmul.bf16.gmra.mxu0 %v902
      %v933 = vpop.f32.mrf.mxu0
      %v934 = vadd.f32 0.0, %v933
      %v935 = vpop.f32.mrf.mxu0
      %936 = vdwg.mxu0
      %937 = vmatpush.bf16.msra.mxu0 %v644
      %938 = vmatpush.bf16.msra.mxu0 %v643
      %939 = vmatpush.bf16.msra.mxu0 %v642
      %940 = vmatpush.bf16.msra.mxu0 %v641
      %941 = vmatpush.bf16.msra.mxu0 %v640
      %942 = vmatpush.bf16.msra.mxu0 %v639
      %943 = vmatpush.bf16.msra.mxu0 %v638
      %944 = vmatpush.bf16.msra.mxu0 %v637
      %945 = vmatmul.bf16.gmra.mxu0 %v907
      %v946 = vpop.f32.mrf.mxu0
      %v947 = vadd.f32 %v934, %v946
      %v948 = vpop.f32.mrf.mxu0
      %949 = vdwg.mxu0
      %950 = vmatpush.bf16.msra.mxu0 %v652
      %951 = vmatpush.bf16.msra.mxu0 %v651
      %952 = vmatpush.bf16.msra.mxu0 %v650
      %953 = vmatpush.bf16.msra.mxu0 %v649
      %954 = vmatpush.bf16.msra.mxu0 %v648
      %955 = vmatpush.bf16.msra.mxu0 %v647
      %956 = vmatpush.bf16.msra.mxu0 %v646
      %957 = vmatpush.bf16.msra.mxu0 %v645
      %958 = vmatmul.bf16.gmra.mxu0 %v912
      %v959 = vpop.f32.mrf.mxu0
      %v960 = vadd.f32 %v947, %v959
      %v961 = vpop.f32.mrf.mxu0
      %962 = vdwg.mxu0
      %963 = vmatpush.bf16.msra.mxu0 %v660
      %964 = vmatpush.bf16.msra.mxu0 %v659
      %965 = vmatpush.bf16.msra.mxu0 %v658
      %966 = vmatpush.bf16.msra.mxu0 %v657
      %967 = vmatpush.bf16.msra.mxu0 %v656
      %968 = vmatpush.bf16.msra.mxu0 %v655
      %969 = vmatpush.bf16.msra.mxu0 %v654
      %970 = vmatpush.bf16.msra.mxu0 %v653
      %971 = vmatmul.bf16.gmra.mxu0 %v917
      %v972 = vpop.f32.mrf.mxu0
      %v973 = vadd.f32 %v960, %v972
      %v974 = vpop.f32.mrf.mxu0
      %975 = vdwg.mxu0
      %976 = vmatpush.bf16.msra.mxu0 %v668
      %977 = vmatpush.bf16.msra.mxu0 %v667
      %978 = vmatpush.bf16.msra.mxu0 %v666
      %979 = vmatpush.bf16.msra.mxu0 %v665
      %980 = vmatpush.bf16.msra.mxu0 %v664
      %981 = vmatpush.bf16.msra.mxu0 %v663
      %982 = vmatpush.bf16.msra.mxu0 %v662
      %983 = vmatpush.bf16.msra.mxu0 %v661
      %984 = vmatmul.bf16.gmra.mxu0 %v920
      %v985 = vpop.f32.mrf.mxu0
      %v986 = vadd.f32 %v973, %v985
      %v987 = vpop.f32.mrf.mxu0
      %988 = vdwg.mxu0
      %989 = vmatpush.bf16.msra.mxu0 0
      %990 = vmatpush.bf16.msra.mxu0 0
      %991 = vmatpush.bf16.msra.mxu0 0
      %992 = vmatpush.bf16.msra.mxu0 0
      %993 = vmatpush.bf16.msra.mxu0 0
      %994 = vmatpush.bf16.msra.mxu0 0
      %995 = vmatpush.bf16.msra.mxu0 0
      %996 = vmatpush.bf16.msra.mxu0 %v715
      %997 = vmatmul.bf16.gmra.mxu0 %v922
      %v998 = vpop.f32.mrf.mxu0
      %v999 = vadd.f32 %v986, %v998
      %v1000 = vpop.f32.mrf.mxu0
      %1001 = vdwg.mxu0
      %v1002 = vpack.c.bf16 %v999, %v999
      %s1003 = scalar_lea.vmem %s264, 4
      %1004 = vst.msk [vmem:[%s1003] sm:$0xf] %vm796, %v1002
      %s1005 = sadd.s32 %s798, 1
      %p1006 = scmp.lt.s32.totalorder %s1005, 8
      %v1007 = vsel %vm463, %v999, 0.0
      %v1008 = vrot.slane %v1007, 4
      %v1009 = vadd.f32 %v1007, %v1008
      %v1010 = vrot.slane %v1009, 2
      %v1011 = vadd.f32 %v1009, %v1010
      %v1012 = vrot.slane %v1011, 1
      %v1013 = vadd.f32 %v1011, %v1012
      %s1014 = scalar_select %p1006, 1, 0
      %v1015 = vstv %s1014
      %vm1016 = vcmp.eq.s32.totalorder %v1015, 1
      %v1017 = vsel %vm1016, %v1013, 0.0
      %v1018 = vadd.f32 %v811, %v1017
      %v1019 = vmul.f32 %v999, %v999
      %v1020 = vsel %vm463, %v1019, 0.0
      %v1021 = vrot.slane %v1020, 4
      %v1022 = vadd.f32 %v1020, %v1021
      %v1023 = vrot.slane %v1022, 2
      %v1024 = vadd.f32 %v1022, %v1023
      %v1025 = vrot.slane %v1024, 1
      %v1026 = vadd.f32 %v1024, %v1025
      %v1027 = vsel %vm1016, %v1026, 0.0
      %v1028 = vadd.f32 %v821, %v1027
      %s1029 = scalar_lea.vmem %s253, 16
      %v1030 = vld [vmem:[%s1029] sm:$0xf]
      %v1031 = vld [vmem:[%s1029 + $0x4] sm:$0x1]
      %v1032 = vld [vmem:[%s1029] sm:$0xe]
      %s1033 = scalar_lea.vmem %s253, 80
      %v1034 = vld [vmem:[%s1033] sm:$0xf]
      %v1035 = vld [vmem:[%s1033 + $0x4] sm:$0x1]
      %v1036 = vld [vmem:[%s1033] sm:$0xe]
      %s1037 = scalar_lea.vmem %s253, 144
      %v1038 = vld [vmem:[%s1037] sm:$0xf]
      %v1039 = vld [vmem:[%s1037 + $0x4] sm:$0x1]
      %v1040 = vld [vmem:[%s1037] sm:$0xe]
      %v1043 = vunpack.c.l.b16 %v1030
      %v1044 = vunpack.c.l.b16 %v1031
      %v1045 = vpack.c.b16 %v1044, %v1043
      %v1047 = vshrl.u32 %v1045, 16
      %v1049 = vshll.u32 %v1045, 16
      %v1051 = vrot.slane %v1049, 1
      %v1052 = vor.u32 %v1047, %v1051
      %1053 = vrot.lane.b32.xlu0 %v1052, 72
      %v1054 = vpop.permute.xlu0 %1053
      %v1056 = vunpack.c.l.b16 %v1032
      %v1057 = vpack.c.b16 %v1044, %v1056
      %v1058 = vrot.slane %v1057, 1
      %1059 = vrot.lane.b32.xlu0 %v1058, 16
      %v1060 = vpop.permute.xlu0 %1059
      %v1062 = vunpack.c.l.b16 %v1034
      %v1063 = vpack.c.b16 %v1062, %v1062
      %1064 = vrot.lane.b32.xlu0 %v1063, 88
      %v1065 = vpop.permute.xlu0 %1064
      %v1067 = vunpack.c.l.b16 %v1035
      %v1068 = vpack.c.b16 %v1067, %v1062
      %v1070 = vshrl.u32 %v1068, 16
      %v1072 = vshll.u32 %v1068, 16
      %v1074 = vrot.slane %v1072, 1
      %v1075 = vor.u32 %v1070, %v1074
      %1076 = vrot.lane.b32.xlu0 %v1075, 32
      %v1077 = vpop.permute.xlu0 %1076
      %v1079 = vunpack.c.l.b16 %v1036
      %v1080 = vpack.c.b16 %v1067, %v1079
      %v1081 = vrot.slane %v1080, 1
      %1082 = vrot.lane.b32.xlu0 %v1081, 104
      %v1083 = vpop.permute.xlu0 %1082
      %v1085 = vunpack.c.l.b16 %v1038
      %v1086 = vpack.c.b16 %v1085, %v1085
      %1087 = vrot.lane.b32.xlu0 %v1086, 48
      %v1088 = vpop.permute.xlu0 %1087
      %v1090 = vunpack.c.l.b16 %v1039
      %v1091 = vpack.c.b16 %v1090, %v1085
      %v1093 = vshrl.u32 %v1091, 16
      %v1095 = vshll.u32 %v1091, 16
      %v1097 = vrot.slane %v1095, 1
      %v1098 = vor.u32 %v1093, %v1097
      %1099 = vrot.lane.b32.xlu0 %v1098, 120
      %v1100 = vpop.permute.xlu0 %1099
      %v1102 = vunpack.c.l.b16 %v1040
      %v1103 = vpack.c.b16 %v1090, %v1102
      %v1104 = vrot.slane %v1103, 1
      %1105 = vrot.lane.b32.xlu0 %v1104, 64
      %v1106 = vpop.permute.xlu0 %1105
      %v1109 = vsel %vm437, %v1030, %v1054
      %v1112 = vsel %vm442, %v1054, %v1060
      %v1114 = vsel %vm445, %v1112, %v1065
      %v1117 = vsel %vm449, %v1065, %v1077
      %v1119 = vsel %vm452, %v1117, %v1083
      %v1122 = vsel %vm456, %v1083, %v1088
      %v1124 = vsel %vm459, %v1122, %v1100
      %v1127 = vsel %vm463, %v1100, %v1106
      %v1129 = vsel %vm710, %v1106, 0
      %1131 = vmatpush.bf16.msra.mxu0 %v636
      %1132 = vmatpush.bf16.msra.mxu0 %v635
      %1133 = vmatpush.bf16.msra.mxu0 %v634
      %1134 = vmatpush.bf16.msra.mxu0 %v633
      %1135 = vmatpush.bf16.msra.mxu0 %v632
      %1136 = vmatpush.bf16.msra.mxu0 %v631
      %1137 = vmatpush.bf16.msra.mxu0 %v630
      %1138 = vmatpush.bf16.msra.mxu0 %v629
      %1139 = vmatmul.bf16.gmra.mxu0 %v1109
      %v1140 = vpop.f32.mrf.mxu0
      %v1141 = vadd.f32 0.0, %v1140
      %v1142 = vpop.f32.mrf.mxu0
      %1143 = vdwg.mxu0
      %1144 = vmatpush.bf16.msra.mxu0 %v644
      %1145 = vmatpush.bf16.msra.mxu0 %v643
      %1146 = vmatpush.bf16.msra.mxu0 %v642
      %1147 = vmatpush.bf16.msra.mxu0 %v641
      %1148 = vmatpush.bf16.msra.mxu0 %v640
      %1149 = vmatpush.bf16.msra.mxu0 %v639
      %1150 = vmatpush.bf16.msra.mxu0 %v638
      %1151 = vmatpush.bf16.msra.mxu0 %v637
      %1152 = vmatmul.bf16.gmra.mxu0 %v1114
      %v1153 = vpop.f32.mrf.mxu0
      %v1154 = vadd.f32 %v1141, %v1153
      %v1155 = vpop.f32.mrf.mxu0
      %1156 = vdwg.mxu0
      %1157 = vmatpush.bf16.msra.mxu0 %v652
      %1158 = vmatpush.bf16.msra.mxu0 %v651
      %1159 = vmatpush.bf16.msra.mxu0 %v650
      %1160 = vmatpush.bf16.msra.mxu0 %v649
      %1161 = vmatpush.bf16.msra.mxu0 %v648
      %1162 = vmatpush.bf16.msra.mxu0 %v647
      %1163 = vmatpush.bf16.msra.mxu0 %v646
      %1164 = vmatpush.bf16.msra.mxu0 %v645
      %1165 = vmatmul.bf16.gmra.mxu0 %v1119
      %v1166 = vpop.f32.mrf.mxu0
      %v1167 = vadd.f32 %v1154, %v1166
      %v1168 = vpop.f32.mrf.mxu0
      %1169 = vdwg.mxu0
      %1170 = vmatpush.bf16.msra.mxu0 %v660
      %1171 = vmatpush.bf16.msra.mxu0 %v659
      %1172 = vmatpush.bf16.msra.mxu0 %v658
      %1173 = vmatpush.bf16.msra.mxu0 %v657
      %1174 = vmatpush.bf16.msra.mxu0 %v656
      %1175 = vmatpush.bf16.msra.mxu0 %v655
      %1176 = vmatpush.bf16.msra.mxu0 %v654
      %1177 = vmatpush.bf16.msra.mxu0 %v653
      %1178 = vmatmul.bf16.gmra.mxu0 %v1124
      %v1179 = vpop.f32.mrf.mxu0
      %v1180 = vadd.f32 %v1167, %v1179
      %v1181 = vpop.f32.mrf.mxu0
      %1182 = vdwg.mxu0
      %1183 = vmatpush.bf16.msra.mxu0 %v668
      %1184 = vmatpush.bf16.msra.mxu0 %v667
      %1185 = vmatpush.bf16.msra.mxu0 %v666
      %1186 = vmatpush.bf16.msra.mxu0 %v665
      %1187 = vmatpush.bf16.msra.mxu0 %v664
      %1188 = vmatpush.bf16.msra.mxu0 %v663
      %1189 = vmatpush.bf16.msra.mxu0 %v662
      %1190 = vmatpush.bf16.msra.mxu0 %v661
      %1191 = vmatmul.bf16.gmra.mxu0 %v1127
      %v1192 = vpop.f32.mrf.mxu0
      %v1193 = vadd.f32 %v1180, %v1192
      %v1194 = vpop.f32.mrf.mxu0
      %1195 = vdwg.mxu0
      %1196 = vmatpush.bf16.msra.mxu0 0
      %1197 = vmatpush.bf16.msra.mxu0 0
      %1198 = vmatpush.bf16.msra.mxu0 0
      %1199 = vmatpush.bf16.msra.mxu0 0
      %1200 = vmatpush.bf16.msra.mxu0 0
      %1201 = vmatpush.bf16.msra.mxu0 0
      %1202 = vmatpush.bf16.msra.mxu0 0
      %1203 = vmatpush.bf16.msra.mxu0 %v715
      %1204 = vmatmul.bf16.gmra.mxu0 %v1129
      %v1205 = vpop.f32.mrf.mxu0
      %v1206 = vadd.f32 %v1193, %v1205
      %v1207 = vpop.f32.mrf.mxu0
      %1208 = vdwg.mxu0
      %v1209 = vpack.c.bf16 %v1206, %v1206
      %s1210 = scalar_lea.vmem %s264, 8
      %1211 = vst.msk [vmem:[%s1210] sm:$0xf] %vm796, %v1209
      %s1212 = sadd.s32 %s798, 2
      %p1213 = scmp.lt.s32.totalorder %s1212, 8
      %v1214 = vsel %vm463, %v1206, 0.0
      %v1215 = vrot.slane %v1214, 4
      %v1216 = vadd.f32 %v1214, %v1215
      %v1217 = vrot.slane %v1216, 2
      %v1218 = vadd.f32 %v1216, %v1217
      %v1219 = vrot.slane %v1218, 1
      %v1220 = vadd.f32 %v1218, %v1219
      %s1221 = scalar_select %p1213, 1, 0
      %v1222 = vstv %s1221
      %vm1223 = vcmp.eq.s32.totalorder %v1222, 1
      %v1224 = vsel %vm1223, %v1220, 0.0
      %v1225 = vadd.f32 %v1018, %v1224
      %v1226 = vmul.f32 %v1206, %v1206
      %v1227 = vsel %vm463, %v1226, 0.0
      %v1228 = vrot.slane %v1227, 4
      %v1229 = vadd.f32 %v1227, %v1228
      %v1230 = vrot.slane %v1229, 2
      %v1231 = vadd.f32 %v1229, %v1230
      %v1232 = vrot.slane %v1231, 1
      %v1233 = vadd.f32 %v1231, %v1232
      %v1234 = vsel %vm1223, %v1233, 0.0
      %v1235 = vadd.f32 %v1028, %v1234
      %s1236 = scalar_lea.vmem %s253, 24
      %v1237 = vld [vmem:[%s1236] sm:$0xf]
      %v1238 = vld [vmem:[%s1236 + $0x4] sm:$0x1]
      %v1239 = vld [vmem:[%s1236] sm:$0xe]
      %s1240 = scalar_lea.vmem %s253, 88
      %v1241 = vld [vmem:[%s1240] sm:$0xf]
      %v1242 = vld [vmem:[%s1240 + $0x4] sm:$0x1]
      %v1243 = vld [vmem:[%s1240] sm:$0xe]
      %s1244 = scalar_lea.vmem %s253, 152
      %v1245 = vld [vmem:[%s1244] sm:$0xf]
      %v1246 = vld [vmem:[%s1244 + $0x4] sm:$0x1]
      %v1247 = vld [vmem:[%s1244] sm:$0xe]
      %v1250 = vunpack.c.l.b16 %v1237
      %v1251 = vunpack.c.l.b16 %v1238
      %v1252 = vpack.c.b16 %v1251, %v1250
      %v1254 = vshrl.u32 %v1252, 16
      %v1256 = vshll.u32 %v1252, 16
      %v1258 = vrot.slane %v1256, 1
      %v1259 = vor.u32 %v1254, %v1258
      %1260 = vrot.lane.b32.xlu0 %v1259, 72
      %v1261 = vpop.permute.xlu0 %1260
      %v1263 = vunpack.c.l.b16 %v1239
      %v1264 = vpack.c.b16 %v1251, %v1263
      %v1265 = vrot.slane %v1264, 1
      %1266 = vrot.lane.b32.xlu0 %v1265, 16
      %v1267 = vpop.permute.xlu0 %1266
      %v1269 = vunpack.c.l.b16 %v1241
      %v1270 = vpack.c.b16 %v1269, %v1269
      %1271 = vrot.lane.b32.xlu0 %v1270, 88
      %v1272 = vpop.permute.xlu0 %1271
      %v1274 = vunpack.c.l.b16 %v1242
      %v1275 = vpack.c.b16 %v1274, %v1269
      %v1277 = vshrl.u32 %v1275, 16
      %v1279 = vshll.u32 %v1275, 16
      %v1281 = vrot.slane %v1279, 1
      %v1282 = vor.u32 %v1277, %v1281
      %1283 = vrot.lane.b32.xlu0 %v1282, 32
      %v1284 = vpop.permute.xlu0 %1283
      %v1286 = vunpack.c.l.b16 %v1243
      %v1287 = vpack.c.b16 %v1274, %v1286
      %v1288 = vrot.slane %v1287, 1
      %1289 = vrot.lane.b32.xlu0 %v1288, 104
      %v1290 = vpop.permute.xlu0 %1289
      %v1292 = vunpack.c.l.b16 %v1245
      %v1293 = vpack.c.b16 %v1292, %v1292
      %1294 = vrot.lane.b32.xlu0 %v1293, 48
      %v1295 = vpop.permute.xlu0 %1294
      %v1297 = vunpack.c.l.b16 %v1246
      %v1298 = vpack.c.b16 %v1297, %v1292
      %v1300 = vshrl.u32 %v1298, 16
      %v1302 = vshll.u32 %v1298, 16
      %v1304 = vrot.slane %v1302, 1
      %v1305 = vor.u32 %v1300, %v1304
      %1306 = vrot.lane.b32.xlu0 %v1305, 120
      %v1307 = vpop.permute.xlu0 %1306
      %v1309 = vunpack.c.l.b16 %v1247
      %v1310 = vpack.c.b16 %v1297, %v1309
      %v1311 = vrot.slane %v1310, 1
      %1312 = vrot.lane.b32.xlu0 %v1311, 64
      %v1313 = vpop.permute.xlu0 %1312
      %v1316 = vsel %vm437, %v1237, %v1261
      %v1319 = vsel %vm442, %v1261, %v1267
      %v1321 = vsel %vm445, %v1319, %v1272
      %v1324 = vsel %vm449, %v1272, %v1284
      %v1326 = vsel %vm452, %v1324, %v1290
      %v1329 = vsel %vm456, %v1290, %v1295
      %v1331 = vsel %vm459, %v1329, %v1307
      %v1334 = vsel %vm463, %v1307, %v1313
      %v1336 = vsel %vm710, %v1313, 0
      %1338 = vmatpush.bf16.msra.mxu0 %v636
      %1339 = vmatpush.bf16.msra.mxu0 %v635
      %1340 = vmatpush.bf16.msra.mxu0 %v634
      %1341 = vmatpush.bf16.msra.mxu0 %v633
      %1342 = vmatpush.bf16.msra.mxu0 %v632
      %1343 = vmatpush.bf16.msra.mxu0 %v631
      %1344 = vmatpush.bf16.msra.mxu0 %v630
      %1345 = vmatpush.bf16.msra.mxu0 %v629
      %1346 = vmatmul.bf16.gmra.mxu0 %v1316
      %v1347 = vpop.f32.mrf.mxu0
      %v1348 = vadd.f32 0.0, %v1347
      %v1349 = vpop.f32.mrf.mxu0
      %1350 = vdwg.mxu0
      %1351 = vmatpush.bf16.msra.mxu0 %v644
      %1352 = vmatpush.bf16.msra.mxu0 %v643
      %1353 = vmatpush.bf16.msra.mxu0 %v642
      %1354 = vmatpush.bf16.msra.mxu0 %v641
      %1355 = vmatpush.bf16.msra.mxu0 %v640
      %1356 = vmatpush.bf16.msra.mxu0 %v639
      %1357 = vmatpush.bf16.msra.mxu0 %v638
      %1358 = vmatpush.bf16.msra.mxu0 %v637
      %1359 = vmatmul.bf16.gmra.mxu0 %v1321
      %v1360 = vpop.f32.mrf.mxu0
      %v1361 = vadd.f32 %v1348, %v1360
      %v1362 = vpop.f32.mrf.mxu0
      %1363 = vdwg.mxu0
      %1364 = vmatpush.bf16.msra.mxu0 %v652
      %1365 = vmatpush.bf16.msra.mxu0 %v651
      %1366 = vmatpush.bf16.msra.mxu0 %v650
      %1367 = vmatpush.bf16.msra.mxu0 %v649
      %1368 = vmatpush.bf16.msra.mxu0 %v648
      %1369 = vmatpush.bf16.msra.mxu0 %v647
      %1370 = vmatpush.bf16.msra.mxu0 %v646
      %1371 = vmatpush.bf16.msra.mxu0 %v645
      %1372 = vmatmul.bf16.gmra.mxu0 %v1326
      %v1373 = vpop.f32.mrf.mxu0
      %v1374 = vadd.f32 %v1361, %v1373
      %v1375 = vpop.f32.mrf.mxu0
      %1376 = vdwg.mxu0
      %1377 = vmatpush.bf16.msra.mxu0 %v660
      %1378 = vmatpush.bf16.msra.mxu0 %v659
      %1379 = vmatpush.bf16.msra.mxu0 %v658
      %1380 = vmatpush.bf16.msra.mxu0 %v657
      %1381 = vmatpush.bf16.msra.mxu0 %v656
      %1382 = vmatpush.bf16.msra.mxu0 %v655
      %1383 = vmatpush.bf16.msra.mxu0 %v654
      %1384 = vmatpush.bf16.msra.mxu0 %v653
      %1385 = vmatmul.bf16.gmra.mxu0 %v1331
      %v1386 = vpop.f32.mrf.mxu0
      %v1387 = vadd.f32 %v1374, %v1386
      %v1388 = vpop.f32.mrf.mxu0
      %1389 = vdwg.mxu0
      %1390 = vmatpush.bf16.msra.mxu0 %v668
      %1391 = vmatpush.bf16.msra.mxu0 %v667
      %1392 = vmatpush.bf16.msra.mxu0 %v666
      %1393 = vmatpush.bf16.msra.mxu0 %v665
      %1394 = vmatpush.bf16.msra.mxu0 %v664
      %1395 = vmatpush.bf16.msra.mxu0 %v663
      %1396 = vmatpush.bf16.msra.mxu0 %v662
      %1397 = vmatpush.bf16.msra.mxu0 %v661
      %1398 = vmatmul.bf16.gmra.mxu0 %v1334
      %v1399 = vpop.f32.mrf.mxu0
      %v1400 = vadd.f32 %v1387, %v1399
      %v1401 = vpop.f32.mrf.mxu0
      %1402 = vdwg.mxu0
      %1403 = vmatpush.bf16.msra.mxu0 0
      %1404 = vmatpush.bf16.msra.mxu0 0
      %1405 = vmatpush.bf16.msra.mxu0 0
      %1406 = vmatpush.bf16.msra.mxu0 0
      %1407 = vmatpush.bf16.msra.mxu0 0
      %1408 = vmatpush.bf16.msra.mxu0 0
      %1409 = vmatpush.bf16.msra.mxu0 0
      %1410 = vmatpush.bf16.msra.mxu0 %v715
      %1411 = vmatmul.bf16.gmra.mxu0 %v1336
      %v1412 = vpop.f32.mrf.mxu0
      %v1413 = vadd.f32 %v1400, %v1412
      %v1414 = vpop.f32.mrf.mxu0
      %1415 = vdwg.mxu0
      %v1416 = vpack.c.bf16 %v1413, %v1413
      %s1417 = scalar_lea.vmem %s264, 12
      %1418 = vst.msk [vmem:[%s1417] sm:$0xf] %vm796, %v1416
      %s1419 = sadd.s32 %s798, 3
      %p1420 = scmp.lt.s32.totalorder %s1419, 8
      %v1421 = vsel %vm463, %v1413, 0.0
      %v1422 = vrot.slane %v1421, 4
      %v1423 = vadd.f32 %v1421, %v1422
      %v1424 = vrot.slane %v1423, 2
      %v1425 = vadd.f32 %v1423, %v1424
      %v1426 = vrot.slane %v1425, 1
      %v1427 = vadd.f32 %v1425, %v1426
      %s1428 = scalar_select %p1420, 1, 0
      %v1429 = vstv %s1428
      %vm1430 = vcmp.eq.s32.totalorder %v1429, 1
      %v1431 = vsel %vm1430, %v1427, 0.0
      %v1432 = vadd.f32 %v1225, %v1431
      %v1433 = vmul.f32 %v1413, %v1413
      %v1434 = vsel %vm463, %v1433, 0.0
      %v1435 = vrot.slane %v1434, 4
      %v1436 = vadd.f32 %v1434, %v1435
      %v1437 = vrot.slane %v1436, 2
      %v1438 = vadd.f32 %v1436, %v1437
      %v1439 = vrot.slane %v1438, 1
      %v1440 = vadd.f32 %v1438, %v1439
      %v1441 = vsel %vm1430, %v1440, 0.0
      %v1442 = vadd.f32 %v1235, %v1441
      %s1443 = scalar_lea.vmem %s253, 32
      %v1444 = vld [vmem:[%s1443] sm:$0xf]
      %v1445 = vld [vmem:[%s1443 + $0x4] sm:$0x1]
      %v1446 = vld [vmem:[%s1443] sm:$0xe]
      %s1447 = scalar_lea.vmem %s253, 96
      %v1448 = vld [vmem:[%s1447] sm:$0xf]
      %v1449 = vld [vmem:[%s1447 + $0x4] sm:$0x1]
      %v1450 = vld [vmem:[%s1447] sm:$0xe]
      %s1451 = scalar_lea.vmem %s253, 160
      %v1452 = vld [vmem:[%s1451] sm:$0xf]
      %v1453 = vld [vmem:[%s1451 + $0x4] sm:$0x1]
      %v1454 = vld [vmem:[%s1451] sm:$0xe]
      %v1457 = vunpack.c.l.b16 %v1444
      %v1458 = vunpack.c.l.b16 %v1445
      %v1459 = vpack.c.b16 %v1458, %v1457
      %v1461 = vshrl.u32 %v1459, 16
      %v1463 = vshll.u32 %v1459, 16
      %v1465 = vrot.slane %v1463, 1
      %v1466 = vor.u32 %v1461, %v1465
      %1467 = vrot.lane.b32.xlu0 %v1466, 72
      %v1468 = vpop.permute.xlu0 %1467
      %v1470 = vunpack.c.l.b16 %v1446
      %v1471 = vpack.c.b16 %v1458, %v1470
      %v1472 = vrot.slane %v1471, 1
      %1473 = vrot.lane.b32.xlu0 %v1472, 16
      %v1474 = vpop.permute.xlu0 %1473
      %v1476 = vunpack.c.l.b16 %v1448
      %v1477 = vpack.c.b16 %v1476, %v1476
      %1478 = vrot.lane.b32.xlu0 %v1477, 88
      %v1479 = vpop.permute.xlu0 %1478
      %v1481 = vunpack.c.l.b16 %v1449
      %v1482 = vpack.c.b16 %v1481, %v1476
      %v1484 = vshrl.u32 %v1482, 16
      %v1486 = vshll.u32 %v1482, 16
      %v1488 = vrot.slane %v1486, 1
      %v1489 = vor.u32 %v1484, %v1488
      %1490 = vrot.lane.b32.xlu0 %v1489, 32
      %v1491 = vpop.permute.xlu0 %1490
      %v1493 = vunpack.c.l.b16 %v1450
      %v1494 = vpack.c.b16 %v1481, %v1493
      %v1495 = vrot.slane %v1494, 1
      %1496 = vrot.lane.b32.xlu0 %v1495, 104
      %v1497 = vpop.permute.xlu0 %1496
      %v1499 = vunpack.c.l.b16 %v1452
      %v1500 = vpack.c.b16 %v1499, %v1499
      %1501 = vrot.lane.b32.xlu0 %v1500, 48
      %v1502 = vpop.permute.xlu0 %1501
      %v1504 = vunpack.c.l.b16 %v1453
      %v1505 = vpack.c.b16 %v1504, %v1499
      %v1507 = vshrl.u32 %v1505, 16
      %v1509 = vshll.u32 %v1505, 16
      %v1511 = vrot.slane %v1509, 1
      %v1512 = vor.u32 %v1507, %v1511
      %1513 = vrot.lane.b32.xlu0 %v1512, 120
      %v1514 = vpop.permute.xlu0 %1513
      %v1516 = vunpack.c.l.b16 %v1454
      %v1517 = vpack.c.b16 %v1504, %v1516
      %v1518 = vrot.slane %v1517, 1
      %1519 = vrot.lane.b32.xlu0 %v1518, 64
      %v1520 = vpop.permute.xlu0 %1519
      %v1523 = vsel %vm437, %v1444, %v1468
      %v1526 = vsel %vm442, %v1468, %v1474
      %v1528 = vsel %vm445, %v1526, %v1479
      %v1531 = vsel %vm449, %v1479, %v1491
      %v1533 = vsel %vm452, %v1531, %v1497
      %v1536 = vsel %vm456, %v1497, %v1502
      %v1538 = vsel %vm459, %v1536, %v1514
      %v1541 = vsel %vm463, %v1514, %v1520
      %v1543 = vsel %vm710, %v1520, 0
      %1545 = vmatpush.bf16.msra.mxu0 %v636
      %1546 = vmatpush.bf16.msra.mxu0 %v635
      %1547 = vmatpush.bf16.msra.mxu0 %v634
      %1548 = vmatpush.bf16.msra.mxu0 %v633
      %1549 = vmatpush.bf16.msra.mxu0 %v632
      %1550 = vmatpush.bf16.msra.mxu0 %v631
      %1551 = vmatpush.bf16.msra.mxu0 %v630
      %1552 = vmatpush.bf16.msra.mxu0 %v629
      %1553 = vmatmul.bf16.gmra.mxu0 %v1523
      %v1554 = vpop.f32.mrf.mxu0
      %v1555 = vadd.f32 0.0, %v1554
      %v1556 = vpop.f32.mrf.mxu0
      %1557 = vdwg.mxu0
      %1558 = vmatpush.bf16.msra.mxu0 %v644
      %1559 = vmatpush.bf16.msra.mxu0 %v643
      %1560 = vmatpush.bf16.msra.mxu0 %v642
      %1561 = vmatpush.bf16.msra.mxu0 %v641
      %1562 = vmatpush.bf16.msra.mxu0 %v640
      %1563 = vmatpush.bf16.msra.mxu0 %v639
      %1564 = vmatpush.bf16.msra.mxu0 %v638
      %1565 = vmatpush.bf16.msra.mxu0 %v637
      %1566 = vmatmul.bf16.gmra.mxu0 %v1528
      %v1567 = vpop.f32.mrf.mxu0
      %v1568 = vadd.f32 %v1555, %v1567
      %v1569 = vpop.f32.mrf.mxu0
      %1570 = vdwg.mxu0
      %1571 = vmatpush.bf16.msra.mxu0 %v652
      %1572 = vmatpush.bf16.msra.mxu0 %v651
      %1573 = vmatpush.bf16.msra.mxu0 %v650
      %1574 = vmatpush.bf16.msra.mxu0 %v649
      %1575 = vmatpush.bf16.msra.mxu0 %v648
      %1576 = vmatpush.bf16.msra.mxu0 %v647
      %1577 = vmatpush.bf16.msra.mxu0 %v646
      %1578 = vmatpush.bf16.msra.mxu0 %v645
      %1579 = vmatmul.bf16.gmra.mxu0 %v1533
      %v1580 = vpop.f32.mrf.mxu0
      %v1581 = vadd.f32 %v1568, %v1580
      %v1582 = vpop.f32.mrf.mxu0
      %1583 = vdwg.mxu0
      %1584 = vmatpush.bf16.msra.mxu0 %v660
      %1585 = vmatpush.bf16.msra.mxu0 %v659
      %1586 = vmatpush.bf16.msra.mxu0 %v658
      %1587 = vmatpush.bf16.msra.mxu0 %v657
      %1588 = vmatpush.bf16.msra.mxu0 %v656
      %1589 = vmatpush.bf16.msra.mxu0 %v655
      %1590 = vmatpush.bf16.msra.mxu0 %v654
      %1591 = vmatpush.bf16.msra.mxu0 %v653
      %1592 = vmatmul.bf16.gmra.mxu0 %v1538
      %v1593 = vpop.f32.mrf.mxu0
      %v1594 = vadd.f32 %v1581, %v1593
      %v1595 = vpop.f32.mrf.mxu0
      %1596 = vdwg.mxu0
      %1597 = vmatpush.bf16.msra.mxu0 %v668
      %1598 = vmatpush.bf16.msra.mxu0 %v667
      %1599 = vmatpush.bf16.msra.mxu0 %v666
      %1600 = vmatpush.bf16.msra.mxu0 %v665
      %1601 = vmatpush.bf16.msra.mxu0 %v664
      %1602 = vmatpush.bf16.msra.mxu0 %v663
      %1603 = vmatpush.bf16.msra.mxu0 %v662
      %1604 = vmatpush.bf16.msra.mxu0 %v661
      %1605 = vmatmul.bf16.gmra.mxu0 %v1541
      %v1606 = vpop.f32.mrf.mxu0
      %v1607 = vadd.f32 %v1594, %v1606
      %v1608 = vpop.f32.mrf.mxu0
      %1609 = vdwg.mxu0
      %1610 = vmatpush.bf16.msra.mxu0 0
      %1611 = vmatpush.bf16.msra.mxu0 0
      %1612 = vmatpush.bf16.msra.mxu0 0
      %1613 = vmatpush.bf16.msra.mxu0 0
      %1614 = vmatpush.bf16.msra.mxu0 0
      %1615 = vmatpush.bf16.msra.mxu0 0
      %1616 = vmatpush.bf16.msra.mxu0 0
      %1617 = vmatpush.bf16.msra.mxu0 %v715
      %1618 = vmatmul.bf16.gmra.mxu0 %v1543
      %v1619 = vpop.f32.mrf.mxu0
      %v1620 = vadd.f32 %v1607, %v1619
      %v1621 = vpop.f32.mrf.mxu0
      %1622 = vdwg.mxu0
      %v1623 = vpack.c.bf16 %v1620, %v1620
      %s1624 = scalar_lea.vmem %s264, 16
      %1625 = vst.msk [vmem:[%s1624] sm:$0xf] %vm796, %v1623
      %s1626 = sadd.s32 %s798, 4
      %p1627 = scmp.lt.s32.totalorder %s1626, 8
      %v1628 = vsel %vm463, %v1620, 0.0
      %v1629 = vrot.slane %v1628, 4
      %v1630 = vadd.f32 %v1628, %v1629
      %v1631 = vrot.slane %v1630, 2
      %v1632 = vadd.f32 %v1630, %v1631
      %v1633 = vrot.slane %v1632, 1
      %v1634 = vadd.f32 %v1632, %v1633
      %s1635 = scalar_select %p1627, 1, 0
      %v1636 = vstv %s1635
      %vm1637 = vcmp.eq.s32.totalorder %v1636, 1
      %v1638 = vsel %vm1637, %v1634, 0.0
      %v1639 = vadd.f32 %v1432, %v1638
      %v1640 = vmul.f32 %v1620, %v1620
      %v1641 = vsel %vm463, %v1640, 0.0
      %v1642 = vrot.slane %v1641, 4
      %v1643 = vadd.f32 %v1641, %v1642
      %v1644 = vrot.slane %v1643, 2
      %v1645 = vadd.f32 %v1643, %v1644
      %v1646 = vrot.slane %v1645, 1
      %v1647 = vadd.f32 %v1645, %v1646
      %v1648 = vsel %vm1637, %v1647, 0.0
      %v1649 = vadd.f32 %v1442, %v1648
      %s1650 = scalar_lea.vmem %s253, 40
      %v1651 = vld [vmem:[%s1650] sm:$0xf]
      %v1652 = vld [vmem:[%s1650 + $0x4] sm:$0x1]
      %v1653 = vld [vmem:[%s1650] sm:$0xe]
      %s1654 = scalar_lea.vmem %s253, 104
      %v1655 = vld [vmem:[%s1654] sm:$0xf]
      %v1656 = vld [vmem:[%s1654 + $0x4] sm:$0x1]
      %v1657 = vld [vmem:[%s1654] sm:$0xe]
      %s1658 = scalar_lea.vmem %s253, 168
      %v1659 = vld [vmem:[%s1658] sm:$0xf]
      %v1660 = vld [vmem:[%s1658 + $0x4] sm:$0x1]
      %v1661 = vld [vmem:[%s1658] sm:$0xe]
      %v1664 = vunpack.c.l.b16 %v1651
      %v1665 = vunpack.c.l.b16 %v1652
      %v1666 = vpack.c.b16 %v1665, %v1664
      %v1668 = vshrl.u32 %v1666, 16
      %v1670 = vshll.u32 %v1666, 16
      %v1672 = vrot.slane %v1670, 1
      %v1673 = vor.u32 %v1668, %v1672
      %1674 = vrot.lane.b32.xlu0 %v1673, 72
      %v1675 = vpop.permute.xlu0 %1674
      %v1677 = vunpack.c.l.b16 %v1653
      %v1678 = vpack.c.b16 %v1665, %v1677
      %v1679 = vrot.slane %v1678, 1
      %1680 = vrot.lane.b32.xlu0 %v1679, 16
      %v1681 = vpop.permute.xlu0 %1680
      %v1683 = vunpack.c.l.b16 %v1655
      %v1684 = vpack.c.b16 %v1683, %v1683
      %1685 = vrot.lane.b32.xlu0 %v1684, 88
      %v1686 = vpop.permute.xlu0 %1685
      %v1688 = vunpack.c.l.b16 %v1656
      %v1689 = vpack.c.b16 %v1688, %v1683
      %v1691 = vshrl.u32 %v1689, 16
      %v1693 = vshll.u32 %v1689, 16
      %v1695 = vrot.slane %v1693, 1
      %v1696 = vor.u32 %v1691, %v1695
      %1697 = vrot.lane.b32.xlu0 %v1696, 32
      %v1698 = vpop.permute.xlu0 %1697
      %v1700 = vunpack.c.l.b16 %v1657
      %v1701 = vpack.c.b16 %v1688, %v1700
      %v1702 = vrot.slane %v1701, 1
      %1703 = vrot.lane.b32.xlu0 %v1702, 104
      %v1704 = vpop.permute.xlu0 %1703
      %v1706 = vunpack.c.l.b16 %v1659
      %v1707 = vpack.c.b16 %v1706, %v1706
      %1708 = vrot.lane.b32.xlu0 %v1707, 48
      %v1709 = vpop.permute.xlu0 %1708
      %v1711 = vunpack.c.l.b16 %v1660
      %v1712 = vpack.c.b16 %v1711, %v1706
      %v1714 = vshrl.u32 %v1712, 16
      %v1716 = vshll.u32 %v1712, 16
      %v1718 = vrot.slane %v1716, 1
      %v1719 = vor.u32 %v1714, %v1718
      %1720 = vrot.lane.b32.xlu0 %v1719, 120
      %v1721 = vpop.permute.xlu0 %1720
      %v1723 = vunpack.c.l.b16 %v1661
      %v1724 = vpack.c.b16 %v1711, %v1723
      %v1725 = vrot.slane %v1724, 1
      %1726 = vrot.lane.b32.xlu0 %v1725, 64
      %v1727 = vpop.permute.xlu0 %1726
      %v1730 = vsel %vm437, %v1651, %v1675
      %v1733 = vsel %vm442, %v1675, %v1681
      %v1735 = vsel %vm445, %v1733, %v1686
      %v1738 = vsel %vm449, %v1686, %v1698
      %v1740 = vsel %vm452, %v1738, %v1704
      %v1743 = vsel %vm456, %v1704, %v1709
      %v1745 = vsel %vm459, %v1743, %v1721
      %v1748 = vsel %vm463, %v1721, %v1727
      %v1750 = vsel %vm710, %v1727, 0
      %1752 = vmatpush.bf16.msra.mxu0 %v636
      %1753 = vmatpush.bf16.msra.mxu0 %v635
      %1754 = vmatpush.bf16.msra.mxu0 %v634
      %1755 = vmatpush.bf16.msra.mxu0 %v633
      %1756 = vmatpush.bf16.msra.mxu0 %v632
      %1757 = vmatpush.bf16.msra.mxu0 %v631
      %1758 = vmatpush.bf16.msra.mxu0 %v630
      %1759 = vmatpush.bf16.msra.mxu0 %v629
      %1760 = vmatmul.bf16.gmra.mxu0 %v1730
      %v1761 = vpop.f32.mrf.mxu0
      %v1762 = vadd.f32 0.0, %v1761
      %v1763 = vpop.f32.mrf.mxu0
      %1764 = vdwg.mxu0
      %1765 = vmatpush.bf16.msra.mxu0 %v644
      %1766 = vmatpush.bf16.msra.mxu0 %v643
      %1767 = vmatpush.bf16.msra.mxu0 %v642
      %1768 = vmatpush.bf16.msra.mxu0 %v641
      %1769 = vmatpush.bf16.msra.mxu0 %v640
      %1770 = vmatpush.bf16.msra.mxu0 %v639
      %1771 = vmatpush.bf16.msra.mxu0 %v638
      %1772 = vmatpush.bf16.msra.mxu0 %v637
      %1773 = vmatmul.bf16.gmra.mxu0 %v1735
      %v1774 = vpop.f32.mrf.mxu0
      %v1775 = vadd.f32 %v1762, %v1774
      %v1776 = vpop.f32.mrf.mxu0
      %1777 = vdwg.mxu0
      %1778 = vmatpush.bf16.msra.mxu0 %v652
      %1779 = vmatpush.bf16.msra.mxu0 %v651
      %1780 = vmatpush.bf16.msra.mxu0 %v650
      %1781 = vmatpush.bf16.msra.mxu0 %v649
      %1782 = vmatpush.bf16.msra.mxu0 %v648
      %1783 = vmatpush.bf16.msra.mxu0 %v647
      %1784 = vmatpush.bf16.msra.mxu0 %v646
      %1785 = vmatpush.bf16.msra.mxu0 %v645
      %1786 = vmatmul.bf16.gmra.mxu0 %v1740
      %v1787 = vpop.f32.mrf.mxu0
      %v1788 = vadd.f32 %v1775, %v1787
      %v1789 = vpop.f32.mrf.mxu0
      %1790 = vdwg.mxu0
      %1791 = vmatpush.bf16.msra.mxu0 %v660
      %1792 = vmatpush.bf16.msra.mxu0 %v659
      %1793 = vmatpush.bf16.msra.mxu0 %v658
      %1794 = vmatpush.bf16.msra.mxu0 %v657
      %1795 = vmatpush.bf16.msra.mxu0 %v656
      %1796 = vmatpush.bf16.msra.mxu0 %v655
      %1797 = vmatpush.bf16.msra.mxu0 %v654
      %1798 = vmatpush.bf16.msra.mxu0 %v653
      %1799 = vmatmul.bf16.gmra.mxu0 %v1745
      %v1800 = vpop.f32.mrf.mxu0
      %v1801 = vadd.f32 %v1788, %v1800
      %v1802 = vpop.f32.mrf.mxu0
      %1803 = vdwg.mxu0
      %1804 = vmatpush.bf16.msra.mxu0 %v668
      %1805 = vmatpush.bf16.msra.mxu0 %v667
      %1806 = vmatpush.bf16.msra.mxu0 %v666
      %1807 = vmatpush.bf16.msra.mxu0 %v665
      %1808 = vmatpush.bf16.msra.mxu0 %v664
      %1809 = vmatpush.bf16.msra.mxu0 %v663
      %1810 = vmatpush.bf16.msra.mxu0 %v662
      %1811 = vmatpush.bf16.msra.mxu0 %v661
      %1812 = vmatmul.bf16.gmra.mxu0 %v1748
      %v1813 = vpop.f32.mrf.mxu0
      %v1814 = vadd.f32 %v1801, %v1813
      %v1815 = vpop.f32.mrf.mxu0
      %1816 = vdwg.mxu0
      %1817 = vmatpush.bf16.msra.mxu0 0
      %1818 = vmatpush.bf16.msra.mxu0 0
      %1819 = vmatpush.bf16.msra.mxu0 0
      %1820 = vmatpush.bf16.msra.mxu0 0
      %1821 = vmatpush.bf16.msra.mxu0 0
      %1822 = vmatpush.bf16.msra.mxu0 0
      %1823 = vmatpush.bf16.msra.mxu0 0
      %1824 = vmatpush.bf16.msra.mxu0 %v715
      %1825 = vmatmul.bf16.gmra.mxu0 %v1750
      %v1826 = vpop.f32.mrf.mxu0
      %v1827 = vadd.f32 %v1814, %v1826
      %v1828 = vpop.f32.mrf.mxu0
      %1829 = vdwg.mxu0
      %v1830 = vpack.c.bf16 %v1827, %v1827
      %s1831 = scalar_lea.vmem %s264, 20
      %1832 = vst.msk [vmem:[%s1831] sm:$0xf] %vm796, %v1830
      %s1833 = sadd.s32 %s798, 5
      %p1834 = scmp.lt.s32.totalorder %s1833, 8
      %v1835 = vsel %vm463, %v1827, 0.0
      %v1836 = vrot.slane %v1835, 4
      %v1837 = vadd.f32 %v1835, %v1836
      %v1838 = vrot.slane %v1837, 2
      %v1839 = vadd.f32 %v1837, %v1838
      %v1840 = vrot.slane %v1839, 1
      %v1841 = vadd.f32 %v1839, %v1840
      %s1842 = scalar_select %p1834, 1, 0
      %v1843 = vstv %s1842
      %vm1844 = vcmp.eq.s32.totalorder %v1843, 1
      %v1845 = vsel %vm1844, %v1841, 0.0
      %v1846 = vadd.f32 %v1639, %v1845
      %v1847 = vmul.f32 %v1827, %v1827
      %v1848 = vsel %vm463, %v1847, 0.0
      %v1849 = vrot.slane %v1848, 4
      %v1850 = vadd.f32 %v1848, %v1849
      %v1851 = vrot.slane %v1850, 2
      %v1852 = vadd.f32 %v1850, %v1851
      %v1853 = vrot.slane %v1852, 1
      %v1854 = vadd.f32 %v1852, %v1853
      %v1855 = vsel %vm1844, %v1854, 0.0
      %v1856 = vadd.f32 %v1649, %v1855
      %s1857 = scalar_lea.vmem %s253, 48
      %v1858 = vld [vmem:[%s1857] sm:$0xf]
      %v1859 = vld [vmem:[%s1857 + $0x4] sm:$0x1]
      %v1860 = vld [vmem:[%s1857] sm:$0xe]
      %s1861 = scalar_lea.vmem %s253, 112
      %v1862 = vld [vmem:[%s1861] sm:$0xf]
      %v1863 = vld [vmem:[%s1861 + $0x4] sm:$0x1]
      %v1864 = vld [vmem:[%s1861] sm:$0xe]
      %s1865 = scalar_lea.vmem %s253, 176
      %v1866 = vld [vmem:[%s1865] sm:$0xf]
      %v1867 = vld [vmem:[%s1865 + $0x4] sm:$0x1]
      %v1868 = vld [vmem:[%s1865] sm:$0xe]
      %v1871 = vunpack.c.l.b16 %v1858
      %v1872 = vunpack.c.l.b16 %v1859
      %v1873 = vpack.c.b16 %v1872, %v1871
      %v1875 = vshrl.u32 %v1873, 16
      %v1877 = vshll.u32 %v1873, 16
      %v1879 = vrot.slane %v1877, 1
      %v1880 = vor.u32 %v1875, %v1879
      %1881 = vrot.lane.b32.xlu0 %v1880, 72
      %v1882 = vpop.permute.xlu0 %1881
      %v1884 = vunpack.c.l.b16 %v1860
      %v1885 = vpack.c.b16 %v1872, %v1884
      %v1886 = vrot.slane %v1885, 1
      %1887 = vrot.lane.b32.xlu0 %v1886, 16
      %v1888 = vpop.permute.xlu0 %1887
      %v1890 = vunpack.c.l.b16 %v1862
      %v1891 = vpack.c.b16 %v1890, %v1890
      %1892 = vrot.lane.b32.xlu0 %v1891, 88
      %v1893 = vpop.permute.xlu0 %1892
      %v1895 = vunpack.c.l.b16 %v1863
      %v1896 = vpack.c.b16 %v1895, %v1890
      %v1898 = vshrl.u32 %v1896, 16
      %v1900 = vshll.u32 %v1896, 16
      %v1902 = vrot.slane %v1900, 1
      %v1903 = vor.u32 %v1898, %v1902
      %1904 = vrot.lane.b32.xlu0 %v1903, 32
      %v1905 = vpop.permute.xlu0 %1904
      %v1907 = vunpack.c.l.b16 %v1864
      %v1908 = vpack.c.b16 %v1895, %v1907
      %v1909 = vrot.slane %v1908, 1
      %1910 = vrot.lane.b32.xlu0 %v1909, 104
      %v1911 = vpop.permute.xlu0 %1910
      %v1913 = vunpack.c.l.b16 %v1866
      %v1914 = vpack.c.b16 %v1913, %v1913
      %1915 = vrot.lane.b32.xlu0 %v1914, 48
      %v1916 = vpop.permute.xlu0 %1915
      %v1918 = vunpack.c.l.b16 %v1867
      %v1919 = vpack.c.b16 %v1918, %v1913
      %v1921 = vshrl.u32 %v1919, 16
      %v1923 = vshll.u32 %v1919, 16
      %v1925 = vrot.slane %v1923, 1
      %v1926 = vor.u32 %v1921, %v1925
      %1927 = vrot.lane.b32.xlu0 %v1926, 120
      %v1928 = vpop.permute.xlu0 %1927
      %v1930 = vunpack.c.l.b16 %v1868
      %v1931 = vpack.c.b16 %v1918, %v1930
      %v1932 = vrot.slane %v1931, 1
      %1933 = vrot.lane.b32.xlu0 %v1932, 64
      %v1934 = vpop.permute.xlu0 %1933
      %v1937 = vsel %vm437, %v1858, %v1882
      %v1940 = vsel %vm442, %v1882, %v1888
      %v1942 = vsel %vm445, %v1940, %v1893
      %v1945 = vsel %vm449, %v1893, %v1905
      %v1947 = vsel %vm452, %v1945, %v1911
      %v1950 = vsel %vm456, %v1911, %v1916
      %v1952 = vsel %vm459, %v1950, %v1928
      %v1955 = vsel %vm463, %v1928, %v1934
      %v1957 = vsel %vm710, %v1934, 0
      %1959 = vmatpush.bf16.msra.mxu0 %v636
      %1960 = vmatpush.bf16.msra.mxu0 %v635
      %1961 = vmatpush.bf16.msra.mxu0 %v634
      %1962 = vmatpush.bf16.msra.mxu0 %v633
      %1963 = vmatpush.bf16.msra.mxu0 %v632
      %1964 = vmatpush.bf16.msra.mxu0 %v631
      %1965 = vmatpush.bf16.msra.mxu0 %v630
      %1966 = vmatpush.bf16.msra.mxu0 %v629
      %1967 = vmatmul.bf16.gmra.mxu0 %v1937
      %v1968 = vpop.f32.mrf.mxu0
      %v1969 = vadd.f32 0.0, %v1968
      %v1970 = vpop.f32.mrf.mxu0
      %1971 = vdwg.mxu0
      %1972 = vmatpush.bf16.msra.mxu0 %v644
      %1973 = vmatpush.bf16.msra.mxu0 %v643
      %1974 = vmatpush.bf16.msra.mxu0 %v642
      %1975 = vmatpush.bf16.msra.mxu0 %v641
      %1976 = vmatpush.bf16.msra.mxu0 %v640
      %1977 = vmatpush.bf16.msra.mxu0 %v639
      %1978 = vmatpush.bf16.msra.mxu0 %v638
      %1979 = vmatpush.bf16.msra.mxu0 %v637
      %1980 = vmatmul.bf16.gmra.mxu0 %v1942
      %v1981 = vpop.f32.mrf.mxu0
      %v1982 = vadd.f32 %v1969, %v1981
      %v1983 = vpop.f32.mrf.mxu0
      %1984 = vdwg.mxu0
      %1985 = vmatpush.bf16.msra.mxu0 %v652
      %1986 = vmatpush.bf16.msra.mxu0 %v651
      %1987 = vmatpush.bf16.msra.mxu0 %v650
      %1988 = vmatpush.bf16.msra.mxu0 %v649
      %1989 = vmatpush.bf16.msra.mxu0 %v648
      %1990 = vmatpush.bf16.msra.mxu0 %v647
      %1991 = vmatpush.bf16.msra.mxu0 %v646
      %1992 = vmatpush.bf16.msra.mxu0 %v645
      %1993 = vmatmul.bf16.gmra.mxu0 %v1947
      %v1994 = vpop.f32.mrf.mxu0
      %v1995 = vadd.f32 %v1982, %v1994
      %v1996 = vpop.f32.mrf.mxu0
      %1997 = vdwg.mxu0
      %1998 = vmatpush.bf16.msra.mxu0 %v660
      %1999 = vmatpush.bf16.msra.mxu0 %v659
      %2000 = vmatpush.bf16.msra.mxu0 %v658
      %2001 = vmatpush.bf16.msra.mxu0 %v657
      %2002 = vmatpush.bf16.msra.mxu0 %v656
      %2003 = vmatpush.bf16.msra.mxu0 %v655
      %2004 = vmatpush.bf16.msra.mxu0 %v654
      %2005 = vmatpush.bf16.msra.mxu0 %v653
      %2006 = vmatmul.bf16.gmra.mxu0 %v1952
      %v2007 = vpop.f32.mrf.mxu0
      %v2008 = vadd.f32 %v1995, %v2007
      %v2009 = vpop.f32.mrf.mxu0
      %2010 = vdwg.mxu0
      %2011 = vmatpush.bf16.msra.mxu0 %v668
      %2012 = vmatpush.bf16.msra.mxu0 %v667
      %2013 = vmatpush.bf16.msra.mxu0 %v666
      %2014 = vmatpush.bf16.msra.mxu0 %v665
      %2015 = vmatpush.bf16.msra.mxu0 %v664
      %2016 = vmatpush.bf16.msra.mxu0 %v663
      %2017 = vmatpush.bf16.msra.mxu0 %v662
      %2018 = vmatpush.bf16.msra.mxu0 %v661
      %2019 = vmatmul.bf16.gmra.mxu0 %v1955
      %v2020 = vpop.f32.mrf.mxu0
      %v2021 = vadd.f32 %v2008, %v2020
      %v2022 = vpop.f32.mrf.mxu0
      %2023 = vdwg.mxu0
      %2024 = vmatpush.bf16.msra.mxu0 0
      %2025 = vmatpush.bf16.msra.mxu0 0
      %2026 = vmatpush.bf16.msra.mxu0 0
      %2027 = vmatpush.bf16.msra.mxu0 0
      %2028 = vmatpush.bf16.msra.mxu0 0
      %2029 = vmatpush.bf16.msra.mxu0 0
      %2030 = vmatpush.bf16.msra.mxu0 0
      %2031 = vmatpush.bf16.msra.mxu0 %v715
      %2032 = vmatmul.bf16.gmra.mxu0 %v1957
      %v2033 = vpop.f32.mrf.mxu0
      %v2034 = vadd.f32 %v2021, %v2033
      %v2035 = vpop.f32.mrf.mxu0
      %2036 = vdwg.mxu0
      %v2037 = vpack.c.bf16 %v2034, %v2034
      %s2038 = scalar_lea.vmem %s264, 24
      %2039 = vst.msk [vmem:[%s2038] sm:$0xf] %vm796, %v2037
      %s2040 = sadd.s32 %s798, 6
      %p2041 = scmp.lt.s32.totalorder %s2040, 8
      %v2042 = vsel %vm463, %v2034, 0.0
      %v2043 = vrot.slane %v2042, 4
      %v2044 = vadd.f32 %v2042, %v2043
      %v2045 = vrot.slane %v2044, 2
      %v2046 = vadd.f32 %v2044, %v2045
      %v2047 = vrot.slane %v2046, 1
      %v2048 = vadd.f32 %v2046, %v2047
      %s2049 = scalar_select %p2041, 1, 0
      %v2050 = vstv %s2049
      %vm2051 = vcmp.eq.s32.totalorder %v2050, 1
      %v2052 = vsel %vm2051, %v2048, 0.0
      %v2053 = vadd.f32 %v1846, %v2052
      %v2054 = vmul.f32 %v2034, %v2034
      %v2055 = vsel %vm463, %v2054, 0.0
      %v2056 = vrot.slane %v2055, 4
      %v2057 = vadd.f32 %v2055, %v2056
      %v2058 = vrot.slane %v2057, 2
      %v2059 = vadd.f32 %v2057, %v2058
      %v2060 = vrot.slane %v2059, 1
      %v2061 = vadd.f32 %v2059, %v2060
      %v2062 = vsel %vm2051, %v2061, 0.0
      %v2063 = vadd.f32 %v1856, %v2062
      %s2064 = scalar_lea.vmem %s253, 56
      %v2065 = vld [vmem:[%s2064] sm:$0xf]
      %v2066 = vld [vmem:[%s2064 + $0x4] sm:$0x1]
      %v2067 = vld [vmem:[%s2064] sm:$0xe]
      %s2068 = scalar_lea.vmem %s253, 120
      %v2069 = vld [vmem:[%s2068] sm:$0xf]
      %v2070 = vld [vmem:[%s2068 + $0x4] sm:$0x1]
      %v2071 = vld [vmem:[%s2068] sm:$0xe]
      %s2072 = scalar_lea.vmem %s253, 184
      %v2073 = vld [vmem:[%s2072] sm:$0xf]
      %v2074 = vld [vmem:[%s2072 + $0x4] sm:$0x1]
      %v2075 = vld [vmem:[%s2072] sm:$0xe]
      %v2078 = vunpack.c.l.b16 %v2065
      %v2079 = vunpack.c.l.b16 %v2066
      %v2080 = vpack.c.b16 %v2079, %v2078
      %v2082 = vshrl.u32 %v2080, 16
      %v2084 = vshll.u32 %v2080, 16
      %v2086 = vrot.slane %v2084, 1
      %v2087 = vor.u32 %v2082, %v2086
      %2088 = vrot.lane.b32.xlu0 %v2087, 72
      %v2089 = vpop.permute.xlu0 %2088
      %v2091 = vunpack.c.l.b16 %v2067
      %v2092 = vpack.c.b16 %v2079, %v2091
      %v2093 = vrot.slane %v2092, 1
      %2094 = vrot.lane.b32.xlu0 %v2093, 16
      %v2095 = vpop.permute.xlu0 %2094
      %v2097 = vunpack.c.l.b16 %v2069
      %v2098 = vpack.c.b16 %v2097, %v2097
      %2099 = vrot.lane.b32.xlu0 %v2098, 88
      %v2100 = vpop.permute.xlu0 %2099
      %v2102 = vunpack.c.l.b16 %v2070
      %v2103 = vpack.c.b16 %v2102, %v2097
      %v2105 = vshrl.u32 %v2103, 16
      %v2107 = vshll.u32 %v2103, 16
      %v2109 = vrot.slane %v2107, 1
      %v2110 = vor.u32 %v2105, %v2109
      %2111 = vrot.lane.b32.xlu0 %v2110, 32
      %v2112 = vpop.permute.xlu0 %2111
      %v2114 = vunpack.c.l.b16 %v2071
      %v2115 = vpack.c.b16 %v2102, %v2114
      %v2116 = vrot.slane %v2115, 1
      %2117 = vrot.lane.b32.xlu0 %v2116, 104
      %v2118 = vpop.permute.xlu0 %2117
      %v2120 = vunpack.c.l.b16 %v2073
      %v2121 = vpack.c.b16 %v2120, %v2120
      %2122 = vrot.lane.b32.xlu0 %v2121, 48
      %v2123 = vpop.permute.xlu0 %2122
      %v2125 = vunpack.c.l.b16 %v2074
      %v2126 = vpack.c.b16 %v2125, %v2120
      %v2128 = vshrl.u32 %v2126, 16
      %v2130 = vshll.u32 %v2126, 16
      %v2132 = vrot.slane %v2130, 1
      %v2133 = vor.u32 %v2128, %v2132
      %2134 = vrot.lane.b32.xlu0 %v2133, 120
      %v2135 = vpop.permute.xlu0 %2134
      %v2137 = vunpack.c.l.b16 %v2075
      %v2138 = vpack.c.b16 %v2125, %v2137
      %v2139 = vrot.slane %v2138, 1
      %2140 = vrot.lane.b32.xlu0 %v2139, 64
      %v2141 = vpop.permute.xlu0 %2140
      %v2144 = vsel %vm437, %v2065, %v2089
      %v2147 = vsel %vm442, %v2089, %v2095
      %v2149 = vsel %vm445, %v2147, %v2100
      %v2152 = vsel %vm449, %v2100, %v2112
      %v2154 = vsel %vm452, %v2152, %v2118
      %v2157 = vsel %vm456, %v2118, %v2123
      %v2159 = vsel %vm459, %v2157, %v2135
      %v2162 = vsel %vm463, %v2135, %v2141
      %v2164 = vsel %vm710, %v2141, 0
      %2166 = vmatpush.bf16.msra.mxu0 %v636
      %2167 = vmatpush.bf16.msra.mxu0 %v635
      %2168 = vmatpush.bf16.msra.mxu0 %v634
      %2169 = vmatpush.bf16.msra.mxu0 %v633
      %2170 = vmatpush.bf16.msra.mxu0 %v632
      %2171 = vmatpush.bf16.msra.mxu0 %v631
      %2172 = vmatpush.bf16.msra.mxu0 %v630
      %2173 = vmatpush.bf16.msra.mxu0 %v629
      %2174 = vmatmul.bf16.gmra.mxu0 %v2144
      %v2175 = vpop.f32.mrf.mxu0
      %v2176 = vadd.f32 0.0, %v2175
      %v2177 = vpop.f32.mrf.mxu0
      %2178 = vdwg.mxu0
      %2179 = vmatpush.bf16.msra.mxu0 %v644
      %2180 = vmatpush.bf16.msra.mxu0 %v643
      %2181 = vmatpush.bf16.msra.mxu0 %v642
      %2182 = vmatpush.bf16.msra.mxu0 %v641
      %2183 = vmatpush.bf16.msra.mxu0 %v640
      %2184 = vmatpush.bf16.msra.mxu0 %v639
      %2185 = vmatpush.bf16.msra.mxu0 %v638
      %2186 = vmatpush.bf16.msra.mxu0 %v637
      %2187 = vmatmul.bf16.gmra.mxu0 %v2149
      %v2188 = vpop.f32.mrf.mxu0
      %v2189 = vadd.f32 %v2176, %v2188
      %v2190 = vpop.f32.mrf.mxu0
      %2191 = vdwg.mxu0
      %2192 = vmatpush.bf16.msra.mxu0 %v652
      %2193 = vmatpush.bf16.msra.mxu0 %v651
      %2194 = vmatpush.bf16.msra.mxu0 %v650
      %2195 = vmatpush.bf16.msra.mxu0 %v649
      %2196 = vmatpush.bf16.msra.mxu0 %v648
      %2197 = vmatpush.bf16.msra.mxu0 %v647
      %2198 = vmatpush.bf16.msra.mxu0 %v646
      %2199 = vmatpush.bf16.msra.mxu0 %v645
      %2200 = vmatmul.bf16.gmra.mxu0 %v2154
      %v2201 = vpop.f32.mrf.mxu0
      %v2202 = vadd.f32 %v2189, %v2201
      %v2203 = vpop.f32.mrf.mxu0
      %2204 = vdwg.mxu0
      %2205 = vmatpush.bf16.msra.mxu0 %v660
      %2206 = vmatpush.bf16.msra.mxu0 %v659
      %2207 = vmatpush.bf16.msra.mxu0 %v658
      %2208 = vmatpush.bf16.msra.mxu0 %v657
      %2209 = vmatpush.bf16.msra.mxu0 %v656
      %2210 = vmatpush.bf16.msra.mxu0 %v655
      %2211 = vmatpush.bf16.msra.mxu0 %v654
      %2212 = vmatpush.bf16.msra.mxu0 %v653
      %2213 = vmatmul.bf16.gmra.mxu0 %v2159
      %v2214 = vpop.f32.mrf.mxu0
      %v2215 = vadd.f32 %v2202, %v2214
      %v2216 = vpop.f32.mrf.mxu0
      %2217 = vdwg.mxu0
      %2218 = vmatpush.bf16.msra.mxu0 %v668
      %2219 = vmatpush.bf16.msra.mxu0 %v667
      %2220 = vmatpush.bf16.msra.mxu0 %v666
      %2221 = vmatpush.bf16.msra.mxu0 %v665
      %2222 = vmatpush.bf16.msra.mxu0 %v664
      %2223 = vmatpush.bf16.msra.mxu0 %v663
      %2224 = vmatpush.bf16.msra.mxu0 %v662
      %2225 = vmatpush.bf16.msra.mxu0 %v661
      %2226 = vmatmul.bf16.gmra.mxu0 %v2162
      %v2227 = vpop.f32.mrf.mxu0
      %v2228 = vadd.f32 %v2215, %v2227
      %v2229 = vpop.f32.mrf.mxu0
      %2230 = vdwg.mxu0
      %2231 = vmatpush.bf16.msra.mxu0 0
      %2232 = vmatpush.bf16.msra.mxu0 0
      %2233 = vmatpush.bf16.msra.mxu0 0
      %2234 = vmatpush.bf16.msra.mxu0 0
      %2235 = vmatpush.bf16.msra.mxu0 0
      %2236 = vmatpush.bf16.msra.mxu0 0
      %2237 = vmatpush.bf16.msra.mxu0 0
      %2238 = vmatpush.bf16.msra.mxu0 %v715
      %2239 = vmatmul.bf16.gmra.mxu0 %v2164
      %v2240 = vpop.f32.mrf.mxu0
      %v2241 = vadd.f32 %v2228, %v2240
      %v2242 = vpop.f32.mrf.mxu0
      %2243 = vdwg.mxu0
      %v2244 = vpack.c.bf16 %v2241, %v2241
      %s2245 = scalar_lea.vmem %s264, 28
      %2246 = vst.msk [vmem:[%s2245] sm:$0xf] %vm796, %v2244
      %s2247 = sadd.s32 %s798, 7
      %p2248 = scmp.lt.s32.totalorder %s2247, 8
      %v2249 = vsel %vm463, %v2241, 0.0
      %v2250 = vrot.slane %v2249, 4
      %v2251 = vadd.f32 %v2249, %v2250
      %v2252 = vrot.slane %v2251, 2
      %v2253 = vadd.f32 %v2251, %v2252
      %v2254 = vrot.slane %v2253, 1
      %v2255 = vadd.f32 %v2253, %v2254
      %s2256 = scalar_select %p2248, 1, 0
      %v2257 = vstv %s2256
      %vm2258 = vcmp.eq.s32.totalorder %v2257, 1
      %v2259 = vsel %vm2258, %v2255, 0.0
      %v2260 = vadd.f32 %v2053, %v2259
      %v2261 = vmul.f32 %v2241, %v2241
      %v2262 = vsel %vm463, %v2261, 0.0
      %v2263 = vrot.slane %v2262, 4
      %v2264 = vadd.f32 %v2262, %v2263
      %v2265 = vrot.slane %v2264, 2
      %v2266 = vadd.f32 %v2264, %v2265
      %v2267 = vrot.slane %v2266, 1
      %v2268 = vadd.f32 %v2266, %v2267
      %v2269 = vsel %vm2258, %v2268, 0.0
      %v2270 = vadd.f32 %v2063, %v2269
      %vm2271 = vcmask 516096
      %2272 = vst.msk [vmem:[%s271] sm:$0x1] %vm2271, %v2260
      %2273 = vst.msk [vmem:[%s277] sm:$0x1] %vm2271, %v2270
      %s2274 = smul.u32 8, %s21
      %p2275 = scmp.lt.s32.totalorder %s20, 1
      %s2276 = scalar_select %p2275, %s20, 1
      %p2277 = scmp.lt.s32.totalorder %s2274, 7
      %s2278 = scalar_select %p2277, %s2274, 7
      %s2279 = smul.addr %s2276, 8
      %s2280 = sadd.s32 %s2278, %s2279
      %s2281 = smul.addr %s2280, 4
      %s2282 = scalar_lea.vmem %s2, %s2281
      %p2283 = scmp.lt.s32.totalorder %s20, 1
      %s2284 = scalar_select %p2283, %s20, 1
      %p2285 = scmp.lt.s32.totalorder %s21, 0
      %s2286 = scalar_select %p2285, %s21, 0
      %s2287 = sadd.s32 %s2286, %s2284
      %s2288 = scalar_lea.vmem %s3, %s2287
      %p2289 = scmp.lt.s32.totalorder %s20, 1
      %s2290 = scalar_select %p2289, %s20, 1
      %p2291 = scmp.lt.s32.totalorder %s21, 0
      %s2292 = scalar_select %p2291, %s21, 0
      %s2293 = sadd.s32 %s2292, %s2290
      %s2294 = scalar_lea.vmem %s4, %s2293
      // Predicated region
      $region29: #{regseg_forward.18} parent=27 // pred_check
        %p2295 = pneg %p97
      $region30: #{regseg_forward.18} parent=27 // pred_check_branch
        %2297 = sbr.rel (%p2295) target = $region32
      $region31: #{regseg_forward.18} parent=27 // pred_region
        %s2298 = smul.u32 8, %s21
      $region32: #{regseg_forward.18} parent=27 // pred_fallthru
        _
      // Predicated region
      $region33: #{regseg_forward.18} parent=27 // pred_check
        %p2299 = pneg %p125
      $region34: #{regseg_forward.18} parent=27 // pred_check_branch
        %2301 = sbr.rel (%p2299) target = $region36
      $region35: #{regseg_forward.18} parent=27 // pred_region
        _
      $region36: #{regseg_forward.18} parent=27 // pred_fallthru
        _
      // Predicated region
      $region37: #{regseg_forward.18} parent=27 // pred_check
        %p2302 = pneg %p153
      $region38: #{regseg_forward.18} parent=27 // pred_check_branch
        %2304 = sbr.rel (%p2302) target = $region40
      $region39: #{regseg_forward.18} parent=27 // pred_region
        _
      $region40: #{regseg_forward.18} parent=27 // pred_fallthru
        _
    $region28: #{regseg_forward.18} parent=5 // pred_fallthru
      _
    %p2305 = scmp.le.s32.totalorder 2, %s11
    // Predicated region
    $region41: #{regseg_forward.18} parent=5 // pred_check
      %p2306 = pneg %p2305
    $region42: #{regseg_forward.18} parent=5 // pred_check_branch
      %2308 = sbr.rel (%p2306) target = $region44
    $region43: #{regseg_forward.18} parent=5 // pred_region
      %s2309 = ssub.s32 %s11, 2
      // Predicated region
      $region45: #{regseg_forward.18} parent=43 // pred_check
        %p2310 = pneg %p103
      $region46: #{regseg_forward.18} parent=43 // pred_check_branch
        %2312 = sbr.rel (%p2310) target = $region48
      $region47: #{regseg_forward.18} parent=43 // pred_region
        %s2313 = smul.u32 8, %s23
        %p2314 = scmp.lt.s32.totalorder %s22, 1
        %s2315 = scalar_select %p2314, %s22, 1
        %p2316 = scmp.lt.s32.totalorder %s2313, 7
        %s2317 = scalar_select %p2316, %s2313, 7
        %s2318 = smul.addr %s2315, 8
        %s2319 = sadd.s32 %s2317, %s2318
        %s2320 = smul.addr %s2319, 4
        %s2321 = scalar_lea.vmem %s2, %s2320
      $region48: #{regseg_forward.18} parent=43 // pred_fallthru
        _
      // Predicated region
      $region49: #{regseg_forward.18} parent=43 // pred_check
        %p2322 = pneg %p131
      $region50: #{regseg_forward.18} parent=43 // pred_check_branch
        %2324 = sbr.rel (%p2322) target = $region52
      $region51: #{regseg_forward.18} parent=43 // pred_region
        %p2325 = scmp.lt.s32.totalorder %s22, 1
        %s2326 = scalar_select %p2325, %s22, 1
        %p2327 = scmp.lt.s32.totalorder %s23, 0
        %s2328 = scalar_select %p2327, %s23, 0
        %s2329 = sadd.s32 %s2328, %s2326
        %s2330 = scalar_lea.vmem %s3, %s2329
      $region52: #{regseg_forward.18} parent=43 // pred_fallthru
        _
      // Predicated region
      $region53: #{regseg_forward.18} parent=43 // pred_check
        %p2331 = pneg %p159
      $region54: #{regseg_forward.18} parent=43 // pred_check_branch
        %2333 = sbr.rel (%p2331) target = $region56
      $region55: #{regseg_forward.18} parent=43 // pred_region
        %p2334 = scmp.lt.s32.totalorder %s22, 1
        %s2335 = scalar_select %p2334, %s22, 1
        %p2336 = scmp.lt.s32.totalorder %s23, 0
        %s2337 = scalar_select %p2336, %s23, 0
        %s2338 = sadd.s32 %s2337, %s2335
        %s2339 = scalar_lea.vmem %s4, %s2338
      $region56: #{regseg_forward.18} parent=43 // pred_fallthru
        _
    $region44: #{regseg_forward.18} parent=5 // pred_fallthru
      _
  $region6: #{regseg_forward.18} parent=0 // loop_footer
    %s15 = sadd.s32 1, %s11
  $region7: #{regseg_forward.18} parent=0 // loop_footer_branch
    %10 = sbr.rel target = $region3
  $region8: #{regseg_forward.18} parent=0 // loop_exit
    _

</llo_original>
